<compile_context>
chip_gen: v7x
topology: tpu7x:2x2x1
jax: 0.10.0
libtpu: 0.0.40
codegen_flags: <defaults>
</compile_context>

<pallas_src>
import jax
import jax.numpy as jnp
from jax import lax
from jax.experimental import pallas as pl
from jax.experimental.pallas import tpu as pltpu

# ---------------------------------------------------------------------------
# Architecture constants (fixed by the PyTorch module)
# ---------------------------------------------------------------------------
C1, C2 = 32, 64          # conv channels
K = 3                    # conv kernel size
H0 = W0 = 28             # input spatial
H1 = W1 = H0 - K + 1     # 26 (after conv1)
H2 = W2 = H1 - K + 1     # 24 (after conv2)
HP = WP = H2 // 2        # 12 (after 2x2 max pool)
M1 = H1 * W1             # 676
MP = HP * WP             # 144
K2 = C1 * K * K          # 288
FLAT = C2 * MP           # 9216
FC1 = 128
NCLS = 10

_VMEM_LIMIT = 32 * 1024 * 1024   # explicit scoped-VMEM budget (safe on v5e/v6e/v7x)


# ---------------------------------------------------------------------------
# Pallas kernels
# ---------------------------------------------------------------------------

def _conv1_relu_kernel(x_ref, w_ref, b_ref, o_ref):
    # x_ref: (1, 9, M1) bf16 -- the 9 shifted 26x26 views of one image
    # w_ref: (C1, 9) bf16, b_ref: (C1, 1) f32, o_ref: (1, C1, M1) bf16
    x = x_ref[0].astype(jnp.float32)          # (9, M1)
    w = w_ref[...].astype(jnp.float32)        # (C1, 9)
    acc = jnp.zeros((C1, M1), jnp.float32)
    # K=9 contraction stays on the VPU: 9 broadcast FMAs over full vregs
    # (a 9-deep MXU pass would waste >90% of the systolic array).
    for t in range(K * K):
        acc = acc + w[:, t:t + 1] * x[t:t + 1, :]
    o_ref[0] = jnp.maximum(acc + b_ref[...], 0.0).astype(o_ref.dtype)


def _conv2_relu_pool_kernel(p_ref, w_ref, b_ref, o_ref):
    # p_ref: (1, 4, K2, MP) bf16 -- im2col patches, one slab per 2x2 pooling quadrant
    # w_ref: (C2, K2) bf16, b_ref: (C2, 1) f32, o_ref: (1, C2, MP) bf16
    w = w_ref[...]
    m = None
    for q in range(4):
        z = jnp.dot(w, p_ref[0, q], preferred_element_type=jnp.float32)  # (C2, MP)
        m = z if m is None else jnp.maximum(m, z)
    # relu(max_q(z_q) + b) == max_q(relu(z_q + b)) (monotone), so bias/relu once.
    o_ref[0] = jnp.maximum(m + b_ref[...], 0.0).astype(o_ref.dtype)


def _fc_head_kernel(a_ref, w1_ref, b1_ref, w2_ref, b2_ref, o_ref):
    # a: (B, 9216) bf16, w1: (9216, 128) bf16, w2: (128, 10) bf16, biases f32
    h = jnp.dot(a_ref[...], w1_ref[...], preferred_element_type=jnp.float32)
    h = jnp.maximum(h + b1_ref[...], 0.0)                          # fc1 + relu (f32)
    z = jnp.dot(h.astype(jnp.bfloat16), w2_ref[...],
                preferred_element_type=jnp.float32) + b2_ref[...]  # fc2
    m = jnp.max(z, axis=-1, keepdims=True)                         # log_softmax
    s = z - m
    lse = jnp.log(jnp.sum(jnp.exp(s), axis=-1, keepdims=True))
    o_ref[...] = s - lse


# ---------------------------------------------------------------------------
# Pallas wrappers
# ---------------------------------------------------------------------------

def conv1_relu(x_taps, w, b):
    B = x_taps.shape[0]
    return pl.pallas_call(
        _conv1_relu_kernel,
        out_shape=jax.ShapeDtypeStruct((B, C1, M1), jnp.bfloat16),
        grid=(B,),
        in_specs=[
            pl.BlockSpec((1, K * K, M1), lambda b: (b, 0, 0)),
            pl.BlockSpec((C1, K * K), lambda b: (0, 0)),
            pl.BlockSpec((C1, 1), lambda b: (0, 0)),
        ],
        out_specs=pl.BlockSpec((1, C1, M1), lambda b: (b, 0, 0)),
        compiler_params=pltpu.CompilerParams(
            dimension_semantics=("parallel",),
            vmem_limit_bytes=_VMEM_LIMIT),
    )(x_taps, w, b)


def conv2_relu_pool(patches, w, b):
    B = patches.shape[0]
    return pl.pallas_call(
        _conv2_relu_pool_kernel,
        out_shape=jax.ShapeDtypeStruct((B, C2, MP), jnp.bfloat16),
        grid=(B,),
        in_specs=[
            pl.BlockSpec((1, 4, K2, MP), lambda b: (b, 0, 0, 0)),
            pl.BlockSpec((C2, K2), lambda b: (0, 0)),
            pl.BlockSpec((C2, 1), lambda b: (0, 0)),
        ],
        out_specs=pl.BlockSpec((1, C2, MP), lambda b: (b, 0, 0)),
        compiler_params=pltpu.CompilerParams(
            dimension_semantics=("parallel",),
            vmem_limit_bytes=_VMEM_LIMIT),
    )(patches, w, b)


def fc_head(a, w1, b1, w2, b2):
    # Whole fc1 weight (2.4 MiB bf16) + activations fit VMEM on all gens: no grid.
    B = a.shape[0]
    return pl.pallas_call(
        _fc_head_kernel,
        out_shape=jax.ShapeDtypeStruct((B, NCLS), jnp.float32),
        compiler_params=pltpu.CompilerParams(vmem_limit_bytes=_VMEM_LIMIT),
    )(a, w1, b1, w2, b2)


# ---------------------------------------------------------------------------
# XLA glue: shifted views / pooled im2col (pure slicing + reshape, bf16)
# ---------------------------------------------------------------------------

def _conv1_taps(x):
    # x: (B, 1, 28, 28) f32 -> (B, 9, 676) bf16; tap t = i*3 + j is x shifted by (i, j)
    xs = x[:, 0]
    taps = jnp.stack([xs[:, i:i + H1, j:j + W1]
                      for i in range(K) for j in range(K)], axis=1)   # (B, 9, 26, 26)
    return taps.reshape(x.shape[0], K * K, M1).astype(jnp.bfloat16)


def _conv2_pool_patches(h1):
    # h1: (B, 32, 676) bf16 -> (B, 4, 288, 144) bf16
    # k index = ci*9 + i*3 + j (matches w2.reshape(64, 288)); m index = h*12 + w.
    B = h1.shape[0]
    h = h1.reshape(B, C1, H1, W1)
    slabs = jnp.stack([h[:, :, i:i + H2, j:j + W2]
                       for i in range(K) for j in range(K)], axis=2)  # (B, C1, 9, 24, 24)
    quads = jnp.stack([slabs[..., dh::2, dw::2]
                       for dh in (0, 1) for dw in (0, 1)], axis=1)    # (B, 4, C1, 9, 12, 12)
    return quads.reshape(B, 4, K2, MP)
    # TODO(synk): for large batch / large feature maps, fold this im2col into the
    # conv kernel as 9 shifted in-kernel matmuls to avoid the HBM expansion.


# ---------------------------------------------------------------------------
# Full forward pass (3 pallas_calls)
# ---------------------------------------------------------------------------

def net_forward(x, params):
    p = params
    B = x.shape[0]
    h1 = conv1_relu(_conv1_taps(x), p["conv1_w2d"], p["conv1_b2d"])        # (B, 32, 676)
    h2 = conv2_relu_pool(_conv2_pool_patches(h1),
                         p["conv2_w2d"], p["conv2_b2d"])                   # (B, 64, 144)
    # dropout1 / dropout2: identity at inference
    # torch.flatten(x, 1) on the NCHW pooled activation == pure reshape here
    a = h2.reshape(B, FLAT)                                                # (B, 9216)
    return fc_head(a, p["fc1_wt"], p["fc1_b2d"], p["fc2_wt"], p["fc2_b2d"])


# ---------------------------------------------------------------------------
# Parameters (PyTorch layouts) + conversion to kernel layouts
# ---------------------------------------------------------------------------

def init_torch_params(key):
    ks = jax.random.split(key, 8)
    s = 0.05
    return {
        "conv1_w": s * jax.random.normal(ks[0], (C1, 1, K, K), jnp.float32),
        "conv1_b": s * jax.random.normal(ks[1], (C1,), jnp.float32),
        "conv2_w": s * jax.random.normal(ks[2], (C2, C1, K, K), jnp.float32),
        "conv2_b": s * jax.random.normal(ks[3], (C2,), jnp.float32),
        "fc1_w": s * jax.random.normal(ks[4], (FC1, FLAT), jnp.float32),
        "fc1_b": s * jax.random.normal(ks[5], (FC1,), jnp.float32),
        "fc2_w": s * jax.random.normal(ks[6], (NCLS, FC1), jnp.float32),
        "fc2_b": s * jax.random.normal(ks[7], (NCLS,), jnp.float32),
    }


def prepare_params(tp):
    return {
        "conv1_w2d": tp["conv1_w"].reshape(C1, K * K).astype(jnp.bfloat16),
        "conv1_b2d": tp["conv1_b"].reshape(C1, 1).astype(jnp.float32),
        "conv2_w2d": tp["conv2_w"].reshape(C2, K2).astype(jnp.bfloat16),
        "conv2_b2d": tp["conv2_b"].reshape(C2, 1).astype(jnp.float32),
        "fc1_wt": tp["fc1_w"].T.astype(jnp.bfloat16),      # (9216, 128)
        "fc1_b2d": tp["fc1_b"].reshape(1, FC1).astype(jnp.float32),
        "fc2_wt": tp["fc2_w"].T.astype(jnp.bfloat16),      # (128, 10)
        "fc2_b2d": tp["fc2_b"].reshape(1, NCLS).astype(jnp.float32),
    }


# ---------------------------------------------------------------------------
# Pure-JAX f32 reference (mirrors the PyTorch forward exactly)
# ---------------------------------------------------------------------------

def net_reference(x, tp):
    dn = ("NCHW", "OIHW", "NCHW")
    h = lax.conv_general_dilated(x, tp["conv1_w"], (1, 1), "VALID", dimension_numbers=dn)
    h = jax.nn.relu(h + tp["conv1_b"][None, :, None, None])
    h = lax.conv_general_dilated(h, tp["conv2_w"], (1, 1), "VALID", dimension_numbers=dn)
    h = jax.nn.relu(h + tp["conv2_b"][None, :, None, None])
    B, C, H, W = h.shape
    h = h.reshape(B, C, H // 2, 2, W // 2, 2).max(axis=(3, 5))
    h = h.reshape(B, -1)
    h = jax.nn.relu(h @ tp["fc1_w"].T + tp["fc1_b"])
    z = h @ tp["fc2_w"].T + tp["fc2_b"]
    return jax.nn.log_softmax(z, axis=-1)


if __name__ == "__main__":
    key = jax.random.PRNGKey(0)
    k_in, k_p = jax.random.split(key)
    B = 2
    # input must be (B, 1, 28, 28) so flatten gives 64*12*12 = 9216
    x = jax.random.normal(k_in, (B, 1, H0, W0), jnp.float32)
    tparams = init_torch_params(k_p)
    params = prepare_params(tparams)

    out = jax.jit(net_forward)(x, params)
    out = jax.block_until_ready(out)

    assert out.shape == (B, NCLS)
    # log_softmax rows exponentiate-and-sum to 1
    assert jnp.allclose(jnp.sum(jnp.exp(out), axis=1), 1.0, atol=1e-4)
    # compare against pure-JAX f32 reference (loose tol: bf16 matmul operands)
    ref = net_reference(x, tparams)
    assert jnp.allclose(out, ref, atol=1e-1), float(jnp.max(jnp.abs(out - ref)))
    print("KERNEL_OK")
</pallas_src>

<mosaic_0001>
module attributes {stable_mosaic.version = 11 : i64} {
  func.func @_conv1_relu_kernel(%arg0: i32, %arg1: memref<1x9x676xbf16, #tpu.memory_space<vmem>>, %arg2: memref<32x9xbf16, #tpu.memory_space<vmem>>, %arg3: memref<32x1xf32, #tpu.memory_space<vmem>>, %arg4: memref<1x32x676xbf16, #tpu.memory_space<vmem>>) attributes {dimension_semantics = [#tpu.dimension_semantics<parallel>], iteration_bounds = array<i64: 2>, scalar_prefetch = 0 : i64, scratch_operands = 0 : i64, tpu.core_type = #tpu.core_type<tc>, window_params = [{transform_indices = @transform_0, window_bounds = array<i64: 1, 9, 676>}, {pipeline_mode = #tpu.pipeline_mode<synchronous>, transform_indices = @transform_1, window_bounds = array<i64: 32, 9>}, {pipeline_mode = #tpu.pipeline_mode<synchronous>, transform_indices = @transform_2, window_bounds = array<i64: 32, 1>}, {transform_indices = @transform_3, window_bounds = array<i64: 1, 32, 676>}]} {
    %c0 = arith.constant 0 : index
    %c0_0 = arith.constant 0 : index
    %c0_1 = arith.constant 0 : index
    %0 = vector.load %arg1[%c0, %c0_0, %c0_1] : memref<1x9x676xbf16, #tpu.memory_space<vmem>>, vector<1x9x676xbf16>
    %1 = vector.shape_cast %0 : vector<1x9x676xbf16> to vector<9x676xbf16>
    %2 = arith.extf %1 : vector<9x676xbf16> to vector<9x676xf32>
    %c0_2 = arith.constant 0 : index
    %c0_3 = arith.constant 0 : index
    %3 = vector.load %arg2[%c0_2, %c0_3] : memref<32x9xbf16, #tpu.memory_space<vmem>>, vector<32x9xbf16>
    %4 = arith.extf %3 : vector<32x9xbf16> to vector<32x9xf32>
    %cst = arith.constant 0.000000e+00 : f32
    %5 = vector.broadcast %cst : f32 to vector<32x676xf32>
    %6 = vector.extract_strided_slice %4 {offsets = [0, 0], sizes = [32, 1], strides = [1, 1]} : vector<32x9xf32> to vector<32x1xf32>
    %7 = vector.extract_strided_slice %2 {offsets = [0, 0], sizes = [1, 676], strides = [1, 1]} : vector<9x676xf32> to vector<1x676xf32>
    %8 = vector.broadcast %6 : vector<32x1xf32> to vector<32x676xf32>
    %9 = vector.broadcast %7 : vector<1x676xf32> to vector<32x676xf32>
    %10 = arith.mulf %8, %9 : vector<32x676xf32>
    %11 = arith.addf %5, %10 : vector<32x676xf32>
    %12 = vector.extract_strided_slice %4 {offsets = [0, 1], sizes = [32, 1], strides = [1, 1]} : vector<32x9xf32> to vector<32x1xf32>
    %13 = vector.extract_strided_slice %2 {offsets = [1, 0], sizes = [1, 676], strides = [1, 1]} : vector<9x676xf32> to vector<1x676xf32>
    %14 = vector.broadcast %12 : vector<32x1xf32> to vector<32x676xf32>
    %15 = vector.broadcast %13 : vector<1x676xf32> to vector<32x676xf32>
    %16 = arith.mulf %14, %15 : vector<32x676xf32>
    %17 = arith.addf %11, %16 : vector<32x676xf32>
    %18 = vector.extract_strided_slice %4 {offsets = [0, 2], sizes = [32, 1], strides = [1, 1]} : vector<32x9xf32> to vector<32x1xf32>
    %19 = vector.extract_strided_slice %2 {offsets = [2, 0], sizes = [1, 676], strides = [1, 1]} : vector<9x676xf32> to vector<1x676xf32>
    %20 = vector.broadcast %18 : vector<32x1xf32> to vector<32x676xf32>
    %21 = vector.broadcast %19 : vector<1x676xf32> to vector<32x676xf32>
    %22 = arith.mulf %20, %21 : vector<32x676xf32>
    %23 = arith.addf %17, %22 : vector<32x676xf32>
    %24 = vector.extract_strided_slice %4 {offsets = [0, 3], sizes = [32, 1], strides = [1, 1]} : vector<32x9xf32> to vector<32x1xf32>
    %25 = vector.extract_strided_slice %2 {offsets = [3, 0], sizes = [1, 676], strides = [1, 1]} : vector<9x676xf32> to vector<1x676xf32>
    %26 = vector.broadcast %24 : vector<32x1xf32> to vector<32x676xf32>
    %27 = vector.broadcast %25 : vector<1x676xf32> to vector<32x676xf32>
    %28 = arith.mulf %26, %27 : vector<32x676xf32>
    %29 = arith.addf %23, %28 : vector<32x676xf32>
    %30 = vector.extract_strided_slice %4 {offsets = [0, 4], sizes = [32, 1], strides = [1, 1]} : vector<32x9xf32> to vector<32x1xf32>
    %31 = vector.extract_strided_slice %2 {offsets = [4, 0], sizes = [1, 676], strides = [1, 1]} : vector<9x676xf32> to vector<1x676xf32>
    %32 = vector.broadcast %30 : vector<32x1xf32> to vector<32x676xf32>
    %33 = vector.broadcast %31 : vector<1x676xf32> to vector<32x676xf32>
    %34 = arith.mulf %32, %33 : vector<32x676xf32>
    %35 = arith.addf %29, %34 : vector<32x676xf32>
    %36 = vector.extract_strided_slice %4 {offsets = [0, 5], sizes = [32, 1], strides = [1, 1]} : vector<32x9xf32> to vector<32x1xf32>
    %37 = vector.extract_strided_slice %2 {offsets = [5, 0], sizes = [1, 676], strides = [1, 1]} : vector<9x676xf32> to vector<1x676xf32>
    %38 = vector.broadcast %36 : vector<32x1xf32> to vector<32x676xf32>
    %39 = vector.broadcast %37 : vector<1x676xf32> to vector<32x676xf32>
    %40 = arith.mulf %38, %39 : vector<32x676xf32>
    %41 = arith.addf %35, %40 : vector<32x676xf32>
    %42 = vector.extract_strided_slice %4 {offsets = [0, 6], sizes = [32, 1], strides = [1, 1]} : vector<32x9xf32> to vector<32x1xf32>
    %43 = vector.extract_strided_slice %2 {offsets = [6, 0], sizes = [1, 676], strides = [1, 1]} : vector<9x676xf32> to vector<1x676xf32>
    %44 = vector.broadcast %42 : vector<32x1xf32> to vector<32x676xf32>
    %45 = vector.broadcast %43 : vector<1x676xf32> to vector<32x676xf32>
    %46 = arith.mulf %44, %45 : vector<32x676xf32>
    %47 = arith.addf %41, %46 : vector<32x676xf32>
    %48 = vector.extract_strided_slice %4 {offsets = [0, 7], sizes = [32, 1], strides = [1, 1]} : vector<32x9xf32> to vector<32x1xf32>
    %49 = vector.extract_strided_slice %2 {offsets = [7, 0], sizes = [1, 676], strides = [1, 1]} : vector<9x676xf32> to vector<1x676xf32>
    %50 = vector.broadcast %48 : vector<32x1xf32> to vector<32x676xf32>
    %51 = vector.broadcast %49 : vector<1x676xf32> to vector<32x676xf32>
    %52 = arith.mulf %50, %51 : vector<32x676xf32>
    %53 = arith.addf %47, %52 : vector<32x676xf32>
    %54 = vector.extract_strided_slice %4 {offsets = [0, 8], sizes = [32, 1], strides = [1, 1]} : vector<32x9xf32> to vector<32x1xf32>
    %55 = vector.extract_strided_slice %2 {offsets = [8, 0], sizes = [1, 676], strides = [1, 1]} : vector<9x676xf32> to vector<1x676xf32>
    %56 = vector.broadcast %54 : vector<32x1xf32> to vector<32x676xf32>
    %57 = vector.broadcast %55 : vector<1x676xf32> to vector<32x676xf32>
    %58 = arith.mulf %56, %57 : vector<32x676xf32>
    %59 = arith.addf %53, %58 : vector<32x676xf32>
    %c0_4 = arith.constant 0 : index
    %c0_5 = arith.constant 0 : index
    %60 = vector.load %arg3[%c0_4, %c0_5] : memref<32x1xf32, #tpu.memory_space<vmem>>, vector<32x1xf32>
    %61 = vector.broadcast %60 : vector<32x1xf32> to vector<32x676xf32>
    %62 = arith.addf %59, %61 : vector<32x676xf32>
    %cst_6 = arith.constant 0.000000e+00 : f32
    %63 = vector.broadcast %cst_6 : f32 to vector<32x676xf32>
    %64 = arith.maximumf %62, %63 : vector<32x676xf32>
    %65 = arith.truncf %64 : vector<32x676xf32> to vector<32x676xbf16>
    %c0_7 = arith.constant 0 : index
    %c0_8 = arith.constant 0 : index
    %c0_9 = arith.constant 0 : index
    %66 = vector.load %arg4[%c0_7, %c0_8, %c0_9] : memref<1x32x676xbf16, #tpu.memory_space<vmem>>, vector<1x32x676xbf16>
    %67 = vector.shape_cast %66 : vector<1x32x676xbf16> to vector<32x676xbf16>
    %68 = vector.shape_cast %65 : vector<32x676xbf16> to vector<1x32x676xbf16>
    tpu.vector_store %arg4[%c0_7, %c0_8, %c0_9], %68 {strides = array<i32>} : memref<1x32x676xbf16, #tpu.memory_space<vmem>>, vector<1x32x676xbf16>,
    return
  }
  func.func @transform_0(%arg0: i32) -> (i32, i32, i32) {
    %c0_i32 = arith.constant 0 : i32
    %c0_i32_0 = arith.constant 0 : i32
    %c0_i32_1 = arith.constant 0 : i32
    return %arg0, %c0_i32, %c0_i32_0 : i32, i32, i32
  }
  func.func @transform_1(%arg0: i32) -> (i32, i32) {
    %c0_i32 = arith.constant 0 : i32
    %c0_i32_0 = arith.constant 0 : i32
    %c0_i32_1 = arith.constant 0 : i32
    return %c0_i32, %c0_i32_0 : i32, i32
  }
  func.func @transform_2(%arg0: i32) -> (i32, i32) {
    %c0_i32 = arith.constant 0 : i32
    %c0_i32_0 = arith.constant 0 : i32
    %c0_i32_1 = arith.constant 0 : i32
    return %c0_i32, %c0_i32_0 : i32, i32
  }
  func.func @transform_3(%arg0: i32) -> (i32, i32, i32) {
    %c0_i32 = arith.constant 0 : i32
    %c0_i32_0 = arith.constant 0 : i32
    %c0_i32_1 = arith.constant 0 : i32
    return %arg0, %c0_i32, %c0_i32_0 : i32, i32, i32
  }
}

module attributes {stable_mosaic.version = 11 : i64} {
  func.func @_conv2_relu_pool_kernel(%arg0: i32, %arg1: memref<1x4x288x144xbf16, #tpu.memory_space<vmem>>, %arg2: memref<64x288xbf16, #tpu.memory_space<vmem>>, %arg3: memref<64x1xf32, #tpu.memory_space<vmem>>, %arg4: memref<1x64x144xbf16, #tpu.memory_space<vmem>>) attributes {dimension_semantics = [#tpu.dimension_semantics<parallel>], iteration_bounds = array<i64: 2>, scalar_prefetch = 0 : i64, scratch_operands = 0 : i64, tpu.core_type = #tpu.core_type<tc>, window_params = [{transform_indices = @transform_0, window_bounds = array<i64: 1, 4, 288, 144>}, {pipeline_mode = #tpu.pipeline_mode<synchronous>, transform_indices = @transform_1, window_bounds = array<i64: 64, 288>}, {pipeline_mode = #tpu.pipeline_mode<synchronous>, transform_indices = @transform_2, window_bounds = array<i64: 64, 1>}, {transform_indices = @transform_3, window_bounds = array<i64: 1, 64, 144>}]} {
    %c0 = arith.constant 0 : index
    %c0_0 = arith.constant 0 : index
    %0 = vector.load %arg2[%c0, %c0_0] : memref<64x288xbf16, #tpu.memory_space<vmem>>, vector<64x288xbf16>
    %c0_1 = arith.constant 0 : index
    %c0_2 = arith.constant 0 : index
    %c0_3 = arith.constant 0 : index
    %c0_4 = arith.constant 0 : index
    %1 = vector.load %arg1[%c0_1, %c0_2, %c0_3, %c0_4] : memref<1x4x288x144xbf16, #tpu.memory_space<vmem>>, vector<1x1x288x144xbf16>
    %2 = vector.shape_cast %1 : vector<1x1x288x144xbf16> to vector<288x144xbf16>
    %cst = arith.constant dense<0.000000e+00> : vector<64x144xf32>
    %3 = tpu.matmul %0, %2, %cst {dimension_numbers = #tpu.dot_dimension_numbers<[1], [0], [0], [1], [0, 0, 1, 1], [], []>} : vector<64x288xbf16>, vector<288x144xbf16>, vector<64x144xf32> -> vector<64x144xf32>
    %c0_5 = arith.constant 0 : index
    %c1 = arith.constant 1 : index
    %c0_6 = arith.constant 0 : index
    %c0_7 = arith.constant 0 : index
    %4 = vector.load %arg1[%c0_5, %c1, %c0_6, %c0_7] : memref<1x4x288x144xbf16, #tpu.memory_space<vmem>>, vector<1x1x288x144xbf16>
    %5 = vector.shape_cast %4 : vector<1x1x288x144xbf16> to vector<288x144xbf16>
    %cst_8 = arith.constant dense<0.000000e+00> : vector<64x144xf32>
    %6 = tpu.matmul %0, %5, %cst_8 {dimension_numbers = #tpu.dot_dimension_numbers<[1], [0], [0], [1], [0, 0, 1, 1], [], []>} : vector<64x288xbf16>, vector<288x144xbf16>, vector<64x144xf32> -> vector<64x144xf32>
    %7 = arith.maximumf %3, %6 : vector<64x144xf32>
    %c0_9 = arith.constant 0 : index
    %c2 = arith.constant 2 : index
    %c0_10 = arith.constant 0 : index
    %c0_11 = arith.constant 0 : index
    %8 = vector.load %arg1[%c0_9, %c2, %c0_10, %c0_11] : memref<1x4x288x144xbf16, #tpu.memory_space<vmem>>, vector<1x1x288x144xbf16>
    %9 = vector.shape_cast %8 : vector<1x1x288x144xbf16> to vector<288x144xbf16>
    %cst_12 = arith.constant dense<0.000000e+00> : vector<64x144xf32>
    %10 = tpu.matmul %0, %9, %cst_12 {dimension_numbers = #tpu.dot_dimension_numbers<[1], [0], [0], [1], [0, 0, 1, 1], [], []>} : vector<64x288xbf16>, vector<288x144xbf16>, vector<64x144xf32> -> vector<64x144xf32>
    %11 = arith.maximumf %7, %10 : vector<64x144xf32>
    %c0_13 = arith.constant 0 : index
    %c3 = arith.constant 3 : index
    %c0_14 = arith.constant 0 : index
    %c0_15 = arith.constant 0 : index
    %12 = vector.load %arg1[%c0_13, %c3, %c0_14, %c0_15] : memref<1x4x288x144xbf16, #tpu.memory_space<vmem>>, vector<1x1x288x144xbf16>
    %13 = vector.shape_cast %12 : vector<1x1x288x144xbf16> to vector<288x144xbf16>
    %cst_16 = arith.constant dense<0.000000e+00> : vector<64x144xf32>
    %14 = tpu.matmul %0, %13, %cst_16 {dimension_numbers = #tpu.dot_dimension_numbers<[1], [0], [0], [1], [0, 0, 1, 1], [], []>} : vector<64x288xbf16>, vector<288x144xbf16>, vector<64x144xf32> -> vector<64x144xf32>
    %15 = arith.maximumf %11, %14 : vector<64x144xf32>
    %c0_17 = arith.constant 0 : index
    %c0_18 = arith.constant 0 : index
    %16 = vector.load %arg3[%c0_17, %c0_18] : memref<64x1xf32, #tpu.memory_space<vmem>>, vector<64x1xf32>
    %17 = vector.broadcast %16 : vector<64x1xf32> to vector<64x144xf32>
    %18 = arith.addf %15, %17 : vector<64x144xf32>
    %cst_19 = arith.constant 0.000000e+00 : f32
    %19 = vector.broadcast %cst_19 : f32 to vector<64x144xf32>
    %20 = arith.maximumf %18, %19 : vector<64x144xf32>
    %21 = arith.truncf %20 : vector<64x144xf32> to vector<64x144xbf16>
    %c0_20 = arith.constant 0 : index
    %c0_21 = arith.constant 0 : index
    %c0_22 = arith.constant 0 : index
    %22 = vector.load %arg4[%c0_20, %c0_21, %c0_22] : memref<1x64x144xbf16, #tpu.memory_space<vmem>>, vector<1x64x144xbf16>
    %23 = vector.shape_cast %22 : vector<1x64x144xbf16> to vector<64x144xbf16>
    %24 = vector.shape_cast %21 : vector<64x144xbf16> to vector<1x64x144xbf16>
    tpu.vector_store %arg4[%c0_20, %c0_21, %c0_22], %24 {strides = array<i32>} : memref<1x64x144xbf16, #tpu.memory_space<vmem>>, vector<1x64x144xbf16>,
    return
  }
  func.func @transform_0(%arg0: i32) -> (i32, i32, i32, i32) {
    %c0_i32 = arith.constant 0 : i32
    %c0_i32_0 = arith.constant 0 : i32
    %c0_i32_1 = arith.constant 0 : i32
    %c0_i32_2 = arith.constant 0 : i32
    return %arg0, %c0_i32, %c0_i32_0, %c0_i32_1 : i32, i32, i32, i32
  }
  func.func @transform_1(%arg0: i32) -> (i32, i32) {
    %c0_i32 = arith.constant 0 : i32
    %c0_i32_0 = arith.constant 0 : i32
    %c0_i32_1 = arith.constant 0 : i32
    return %c0_i32, %c0_i32_0 : i32, i32
  }
  func.func @transform_2(%arg0: i32) -> (i32, i32) {
    %c0_i32 = arith.constant 0 : i32
    %c0_i32_0 = arith.constant 0 : i32
    %c0_i32_1 = arith.constant 0 : i32
    return %c0_i32, %c0_i32_0 : i32, i32
  }
  func.func @transform_3(%arg0: i32) -> (i32, i32, i32) {
    %c0_i32 = arith.constant 0 : i32
    %c0_i32_0 = arith.constant 0 : i32
    %c0_i32_1 = arith.constant 0 : i32
    return %arg0, %c0_i32, %c0_i32_0 : i32, i32, i32
  }
}

module attributes {stable_mosaic.version = 11 : i64} {
  func.func @_fc_head_kernel(%arg0: memref<2x9216xbf16, #tpu.memory_space<vmem>>, %arg1: memref<9216x128xbf16, #tpu.memory_space<vmem>>, %arg2: memref<1x128xf32, #tpu.memory_space<vmem>>, %arg3: memref<128x10xbf16, #tpu.memory_space<vmem>>, %arg4: memref<1x10xf32, #tpu.memory_space<vmem>>, %arg5: memref<2x10xf32, #tpu.memory_space<vmem>>) attributes {dimension_semantics = [], scalar_prefetch = 0 : i64, scratch_operands = 0 : i64, tpu.core_type = #tpu.core_type<tc>} {
    %c0 = arith.constant 0 : index
    %c0_0 = arith.constant 0 : index
    %0 = vector.load %arg0[%c0, %c0_0] : memref<2x9216xbf16, #tpu.memory_space<vmem>>, vector<2x9216xbf16>
    %c0_1 = arith.constant 0 : index
    %c0_2 = arith.constant 0 : index
    %1 = vector.load %arg1[%c0_1, %c0_2] : memref<9216x128xbf16, #tpu.memory_space<vmem>>, vector<9216x128xbf16>
    %cst = arith.constant dense<0.000000e+00> : vector<2x128xf32>
    %2 = tpu.matmul %0, %1, %cst {dimension_numbers = #tpu.dot_dimension_numbers<[1], [0], [0], [1], [0, 0, 1, 1], [], []>} : vector<2x9216xbf16>, vector<9216x128xbf16>, vector<2x128xf32> -> vector<2x128xf32>
    %c0_3 = arith.constant 0 : index
    %c0_4 = arith.constant 0 : index
    %3 = vector.load %arg2[%c0_3, %c0_4] : memref<1x128xf32, #tpu.memory_space<vmem>>, vector<1x128xf32>
    %4 = vector.broadcast %3 : vector<1x128xf32> to vector<2x128xf32>
    %5 = arith.addf %2, %4 : vector<2x128xf32>
    %cst_5 = arith.constant 0.000000e+00 : f32
    %6 = vector.broadcast %cst_5 : f32 to vector<2x128xf32>
    %7 = arith.maximumf %5, %6 : vector<2x128xf32>
    %8 = arith.truncf %7 : vector<2x128xf32> to vector<2x128xbf16>
    %c0_6 = arith.constant 0 : index
    %c0_7 = arith.constant 0 : index
    %9 = vector.load %arg3[%c0_6, %c0_7] : memref<128x10xbf16, #tpu.memory_space<vmem>>, vector<128x10xbf16>
    %cst_8 = arith.constant dense<0.000000e+00> : vector<2x10xf32>
    %10 = tpu.matmul %8, %9, %cst_8 {dimension_numbers = #tpu.dot_dimension_numbers<[1], [0], [0], [1], [0, 0, 1, 1], [], []>} : vector<2x128xbf16>, vector<128x10xbf16>, vector<2x10xf32> -> vector<2x10xf32>
    %c0_9 = arith.constant 0 : index
    %c0_10 = arith.constant 0 : index
    %11 = vector.load %arg4[%c0_9, %c0_10] : memref<1x10xf32, #tpu.memory_space<vmem>>, vector<1x10xf32>
    %12 = vector.broadcast %11 : vector<1x10xf32> to vector<2x10xf32>
    %13 = arith.addf %10, %12 : vector<2x10xf32>
    %cst_11 = arith.constant dense<0xFF800000> : vector<2xf32>
    %14 = vector.multi_reduction <maximumf>, %13, %cst_11 [1] : vector<2x10xf32> to vector<2xf32>
    %15 = vector.shape_cast %14 : vector<2xf32> to vector<2x1xf32>
    %16 = vector.broadcast %15 : vector<2x1xf32> to vector<2x10xf32>
    %17 = arith.subf %13, %16 : vector<2x10xf32>
    %18 = math.exp %17 : vector<2x10xf32>
    %cst_12 = arith.constant dense<0.000000e+00> : vector<2xf32>
    %19 = vector.multi_reduction <add>, %18, %cst_12 [1] : vector<2x10xf32> to vector<2xf32>
    %20 = vector.shape_cast %19 : vector<2xf32> to vector<2x1xf32>
    %21 = math.log %20 : vector<2x1xf32>
    %22 = vector.broadcast %21 : vector<2x1xf32> to vector<2x10xf32>
    %23 = arith.subf %17, %22 : vector<2x10xf32>
    %c0_13 = arith.constant 0 : index
    %c0_14 = arith.constant 0 : index
    %24 = vector.load %arg5[%c0_13, %c0_14] : memref<2x10xf32, #tpu.memory_space<vmem>>, vector<2x10xf32>
    tpu.vector_store %arg5[%c0_13, %c0_14], %23 {strides = array<i32>} : memref<2x10xf32, #tpu.memory_space<vmem>>, vector<2x10xf32>,
    return
  }
}

</mosaic_0001>

<llo_original>
// kernel: net_forward.3
$region0: #{net_forward.3}
  #allocation0 [shape = 'u32[]', space=smem, size = 0x4, offset = 0x4, fixed_abs, tag = 'smem constant byte address 0x4 - core index']
  #allocation1 [shape = 'u32[144,128]{1,0:T(1,128)}', space=vmem, size = 0x12000, scoped, tag = 'internal scratch']
  %s0 = inlined_call_operand.vmem [shape: bf16[2,9,676], index: 0, kind: input, shape index: {}]
  %s1 = inlined_call_operand.vmem [shape: bf16[32,9], index: 1, kind: input, shape index: {}]
  %s2 = inlined_call_operand.vmem [shape: f32[32,1], index: 2, kind: input, shape index: {}]
  %s3 = inlined_call_operand.vmem [shape: bf16[2,32,676], index: 3, kind: output, shape index: {}]
  %s4 = sld [smem:[#allocation0]]
  $region45: #{net_forward.3} parent=0
    _
  %s6 = ssub.s32 1, %s4
  %s7 = scalar_select 0, %s6, %s4
  loop: start=0, step=1, limit=4
  $region2: #{net_forward.3} parent=0 // loop_pre_header
    _
  $region3: #{net_forward.3} parent=0 // loop_header
    %s9 = sphi 0, %s13
    %p10 = scmp.ge.s32.totalorder %s9, 4
    %s19 = sphi 0, %s21
    %s22 = sphi 0, %s19
    %s23 = sphi 0, %s22
    %s39 = sphi 0, %s23
    %s43 = sphi 0, %s43
    %s45 = sphi 0, %s43
    %s46 = sphi 0, %s45
    %s60 = sphi 0, %s46
    %s64 = sphi 0, %s64
    %s66 = sphi 0, %s64
    %s67 = sphi 0, %s66
    %s81 = sphi 0, %s67
    %s87 = sphi 0, %s89
    %s90 = sphi 0, %s87
    %s91 = sphi 0, %s90
    %s107 = sphi 0, %s91
  $region4: #{net_forward.3} parent=0 // loop_header_branch
    %12 = sbr.rel (%p10) target = $region8
  $region5: #{net_forward.3} parent=0 // loop_body
    %s14 = ssub.s32 %s9, 1
    %s15 = ssub.s32 %s9, 2
    %s16 = sadd.s32 %s9, 1
    %s17 = ssub.s32 %s9, %s16
    %p18 = scmp.eq.s32.totalorder %s17, 0
    %s20 = sadd.s32 %s19, 1
    %s21 = scalar_select %p18, %s19, %s20
    %p24 = pneg %p18
    %p25 = scmp.eq.s32.totalorder %s9, 1
    %p26 = por %p24, %p25
    %p27 = scmp.ne.s32.totalorder %s19, %s22
    %p28 = scmp.eq.s32.totalorder %s9, 0
    %p29 = por %p27, %p28
    %p30 = scmp.ne.s32.totalorder %s19, %s22
    %p31 = scmp.eq.s32.totalorder %s14, 1
    %p32 = por %p30, %p31
    %p33 = scmp.ne.s32.totalorder %s22, %s23
    %p34 = scmp.eq.s32.totalorder %s14, 0
    %p35 = por %p33, %p34
    %p36 = scmp.ne.s32.totalorder %s22, %s23
    %p37 = scmp.eq.s32.totalorder %s15, 1
    %p38 = por %p36, %p37
    %p40 = scmp.ne.s32.totalorder %s23, %s39
    %p41 = scmp.eq.s32.totalorder %s15, 0
    %p42 = por %p40, %p41
    %s44 = sadd.s32 %s43, 1
    %p47 = scmp.eq.s32.totalorder %s9, 1
    %p48 = scmp.ne.s32.totalorder %s43, %s45
    %p49 = scmp.eq.s32.totalorder %s9, 0
    %p50 = por %p48, %p49
    %p51 = scmp.ne.s32.totalorder %s43, %s45
    %p52 = scmp.eq.s32.totalorder %s14, 1
    %p53 = por %p51, %p52
    %p54 = scmp.ne.s32.totalorder %s45, %s46
    %p55 = scmp.eq.s32.totalorder %s14, 0
    %p56 = por %p54, %p55
    %p57 = scmp.ne.s32.totalorder %s45, %s46
    %p58 = scmp.eq.s32.totalorder %s15, 1
    %p59 = por %p57, %p58
    %p61 = scmp.ne.s32.totalorder %s46, %s60
    %p62 = scmp.eq.s32.totalorder %s15, 0
    %p63 = por %p61, %p62
    %s65 = sadd.s32 %s64, 1
    %p68 = scmp.eq.s32.totalorder %s9, 1
    %p69 = scmp.ne.s32.totalorder %s64, %s66
    %p70 = scmp.eq.s32.totalorder %s9, 0
    %p71 = por %p69, %p70
    %p72 = scmp.ne.s32.totalorder %s64, %s66
    %p73 = scmp.eq.s32.totalorder %s14, 1
    %p74 = por %p72, %p73
    %p75 = scmp.ne.s32.totalorder %s66, %s67
    %p76 = scmp.eq.s32.totalorder %s14, 0
    %p77 = por %p75, %p76
    %p78 = scmp.ne.s32.totalorder %s66, %s67
    %p79 = scmp.eq.s32.totalorder %s15, 1
    %p80 = por %p78, %p79
    %p82 = scmp.ne.s32.totalorder %s67, %s81
    %p83 = scmp.eq.s32.totalorder %s15, 0
    %p84 = por %p82, %p83
    %s85 = ssub.s32 %s9, %s16
    %p86 = scmp.eq.s32.totalorder %s85, 0
    %s88 = sadd.s32 %s87, 1
    %s89 = scalar_select %p86, %s87, %s88
    %p92 = pneg %p86
    %p93 = scmp.eq.s32.totalorder %s9, 1
    %p94 = por %p92, %p93
    %p95 = scmp.ne.s32.totalorder %s87, %s90
    %p96 = scmp.eq.s32.totalorder %s9, 0
    %p97 = por %p95, %p96
    %p98 = scmp.ne.s32.totalorder %s87, %s90
    %p99 = scmp.eq.s32.totalorder %s14, 1
    %p100 = por %p98, %p99
    %p101 = scmp.ne.s32.totalorder %s90, %s91
    %p102 = scmp.eq.s32.totalorder %s14, 0
    %p103 = por %p101, %p102
    %p104 = scmp.ne.s32.totalorder %s90, %s91
    %p105 = scmp.eq.s32.totalorder %s15, 1
    %p106 = por %p104, %p105
    %p108 = scmp.ne.s32.totalorder %s91, %s107
    %p109 = scmp.eq.s32.totalorder %s15, 0
    %p110 = por %p108, %p109
    %p111 = scmp.le.s32.totalorder 1, %s9
    %p112 = scmp.lt.s32.totalorder %s9, 3
    %p113 = pnand %p111, %p112
    %p114 = pneg %p113
    // Predicated region
    $region9: #{net_forward.3} parent=5 // pred_check
      _
    $region10: #{net_forward.3} parent=5 // pred_check_branch
      %116 = sbr.rel (%p113) target = $region12
    $region11: #{net_forward.3} parent=5 // pred_region
      %s117 = ssub.s32 %s9, 1
      // Predicated region
      $region13: #{net_forward.3} parent=11 // pred_check
        %p118 = pneg %p56
      $region14: #{net_forward.3} parent=11 // pred_check_branch
        %120 = sbr.rel (%p118) target = $region16
      $region15: #{net_forward.3} parent=11 // pred_region
        _
      $region16: #{net_forward.3} parent=11 // pred_fallthru
        _
      // Predicated region
      $region17: #{net_forward.3} parent=11 // pred_check
        %p121 = pneg %p77
      $region18: #{net_forward.3} parent=11 // pred_check_branch
        %123 = sbr.rel (%p121) target = $region20
      $region19: #{net_forward.3} parent=11 // pred_region
        _
      $region20: #{net_forward.3} parent=11 // pred_fallthru
        _
    $region12: #{net_forward.3} parent=5 // pred_fallthru
      _
    %p124 = scmp.lt.s32.totalorder %s9, 2
    // Predicated region
    $region21: #{net_forward.3} parent=5 // pred_check
      %p125 = pneg %p124
    $region22: #{net_forward.3} parent=5 // pred_check_branch
      %127 = sbr.rel (%p125) target = $region24
    $region23: #{net_forward.3} parent=5 // pred_region
      // Predicated region
      $region25: #{net_forward.3} parent=23 // pred_check
        %p128 = pneg %p29
      $region26: #{net_forward.3} parent=23 // pred_check_branch
        %130 = sbr.rel (%p128) target = $region28
      $region27: #{net_forward.3} parent=23 // pred_region
        %p131 = scmp.lt.s32.totalorder %s9, 1
        %s132 = scalar_select %p131, %s9, 1
        %s133 = smul.addr %s132, 12
        %s134 = smul.addr %s133, 4
        %s135 = scalar_lea.vmem %s0, %s134
      $region28: #{net_forward.3} parent=23 // pred_fallthru
        _
    $region24: #{net_forward.3} parent=5 // pred_fallthru
      _
    %p136 = scmp.le.s32.totalorder 1, %s9
    %p137 = scmp.lt.s32.totalorder %s9, 3
    %p138 = pnand %p136, %p137
    %p139 = pneg %p138
    // Predicated region
    $region29: #{net_forward.3} parent=5 // pred_check
      _
    $region30: #{net_forward.3} parent=5 // pred_check_branch
      %141 = sbr.rel (%p138) target = $region32
    $region31: #{net_forward.3} parent=5 // pred_region
      %s142 = ssub.s32 %s9, 1
      %p143 = scmp.lt.s32.totalorder %s14, 1
      %s144 = scalar_select %p143, %s14, 1
      %s145 = smul.addr %s144, 12
      %s146 = smul.addr %s145, 4
      %s147 = scalar_lea.vmem %s0, %s146
      %p148 = pneg %p35
      %p149 = pneg %p32
      %p150 = pneg %p56
      %p151 = pneg %p53
      %p152 = pneg %p77
      %p153 = pneg %p74
      %p154 = pneg %p103
      %p155 = pneg %p100
      %p156 = scmp.lt.s32.totalorder %s14, 1
      %s157 = scalar_select %p156, %s14, 1
      %s158 = smul.addr %s157, 24
      %s159 = smul.addr %s158, 4
      %s160 = scalar_lea.vmem %s3, %s159
      %p161 = scmp.lt.s32.totalorder %s14, 1
      %s162 = scalar_select %p161, %s14, 1
      %s163 = smul.addr %s162, 12
      %s164 = smul.addr %s163, 4
      %s165 = scalar_lea.vmem %s0, %s164
      %p166 = scmp.lt.s32.totalorder %s14, 1
      %s167 = scalar_select %p166, %s14, 1
      %s168 = smul.addr %s167, 24
      %s169 = smul.addr %s168, 4
      %s170 = scalar_lea.vmem %s3, %s169
      %v171 = vld [vmem:[%s165] sm:$0xff]
      %v172 = vld [vmem:[%s165 + $0x8] sm:$0xff]
      %v173 = vld [vmem:[%s165 + $0x10] sm:$0xff]
      %v174 = vld [vmem:[%s165 + $0x18] sm:$0x11]
      %v175 = vld [vmem:[%s165 + $0x20] sm:$0x11]
      %v176 = vld [vmem:[%s165 + $0x28] sm:$0x11]
      %v177 = vunpack.c.l.bf16 %v171
      %v178 = vunpack.c.h.bf16 %v171
      %v179 = vunpack.c.l.bf16 %v172
      %v180 = vunpack.c.h.bf16 %v172
      %v181 = vunpack.c.l.bf16 %v173
      %v182 = vunpack.c.h.bf16 %v173
      %v183 = vunpack.c.l.bf16 %v174
      %v184 = vunpack.c.h.bf16 %v174
      %v185 = vunpack.c.l.bf16 %v175
      %v186 = vunpack.c.h.bf16 %v175
      %v187 = vunpack.c.l.bf16 %v176
      %v188 = vunpack.c.h.bf16 %v176
      %v189 = vld [vmem:[%s1] sm:$0xf]
      %v190 = vld [vmem:[%s1 + $0x4] sm:$0xf]
      %v191 = vld [vmem:[%s1 + $0x8] sm:$0xf]
      %v192 = vld [vmem:[%s1 + $0xc] sm:$0xf]
      %v193 = vunpack.c.l.bf16 %v189
      %v194 = vunpack.c.l.bf16 %v190
      %v195 = vunpack.c.l.bf16 %v191
      %v196 = vunpack.c.l.bf16 %v192
      %198 = vset.pattern.permute.xlu0 0
      %199 = vperm.xlu0 %198, %v193
      %v200 = vpop.permute.xlu0 %199
      %203 = vset.pattern.permute.xlu0 0
      %204 = vperm.xlu0 %203, %v194
      %v205 = vpop.permute.xlu0 %204
      %208 = vset.pattern.permute.xlu0 0
      %209 = vperm.xlu0 %208, %v195
      %v210 = vpop.permute.xlu0 %209
      %213 = vset.pattern.permute.xlu0 0
      %214 = vperm.xlu0 %213, %v196
      %v215 = vpop.permute.xlu0 %214
      %v217 = vlaneseq
      %v218 = vshrl.u32 %v217, 7
      %v219 = vsub.s32 0, %v218
      %v220 = vrot.slane %v177, %v219
      %v221 = vlaneseq
      %v222 = vshrl.u32 %v221, 7
      %v223 = vsub.s32 0, %v222
      %v224 = vrot.slane %v178, %v223
      %v225 = vlaneseq
      %v226 = vshrl.u32 %v225, 7
      %v227 = vsub.s32 0, %v226
      %v228 = vrot.slane %v179, %v227
      %v229 = vlaneseq
      %v230 = vshrl.u32 %v229, 7
      %v231 = vsub.s32 0, %v230
      %v232 = vrot.slane %v180, %v231
      %v233 = vlaneseq
      %v234 = vshrl.u32 %v233, 7
      %v235 = vsub.s32 0, %v234
      %v236 = vrot.slane %v181, %v235
      %v237 = vlaneseq
      %v238 = vshrl.u32 %v237, 7
      %v239 = vsub.s32 0, %v238
      %v240 = vrot.slane %v182, %v239
      %v241 = vmul.f32 %v200, %v220
      %v242 = vmul.f32 %v200, %v224
      %v243 = vmul.f32 %v200, %v228
      %v244 = vmul.f32 %v200, %v232
      %v245 = vmul.f32 %v200, %v236
      %v246 = vmul.f32 %v200, %v240
      %v247 = vmul.f32 %v205, %v220
      %v248 = vmul.f32 %v205, %v224
      %v249 = vmul.f32 %v205, %v228
      %v250 = vmul.f32 %v205, %v232
      %v251 = vmul.f32 %v205, %v236
      %v252 = vmul.f32 %v205, %v240
      %v253 = vmul.f32 %v210, %v220
      %v254 = vmul.f32 %v210, %v224
      %v255 = vmul.f32 %v210, %v228
      %v256 = vmul.f32 %v210, %v232
      %v257 = vmul.f32 %v210, %v236
      %v258 = vmul.f32 %v210, %v240
      %v259 = vmul.f32 %v215, %v220
      %v260 = vmul.f32 %v215, %v224
      %v261 = vmul.f32 %v215, %v228
      %v262 = vmul.f32 %v215, %v232
      %v263 = vmul.f32 %v215, %v236
      %v264 = vmul.f32 %v215, %v240
      %v265 = vadd.f32 %v241, 0.0
      %v266 = vadd.f32 %v242, 0.0
      %v267 = vadd.f32 %v243, 0.0
      %v268 = vadd.f32 %v244, 0.0
      %v269 = vadd.f32 %v245, 0.0
      %v270 = vadd.f32 %v246, 0.0
      %v271 = vadd.f32 %v247, 0.0
      %v272 = vadd.f32 %v248, 0.0
      %v273 = vadd.f32 %v249, 0.0
      %v274 = vadd.f32 %v250, 0.0
      %v275 = vadd.f32 %v251, 0.0
      %v276 = vadd.f32 %v252, 0.0
      %v277 = vadd.f32 %v253, 0.0
      %v278 = vadd.f32 %v254, 0.0
      %v279 = vadd.f32 %v255, 0.0
      %v280 = vadd.f32 %v256, 0.0
      %v281 = vadd.f32 %v257, 0.0
      %v282 = vadd.f32 %v258, 0.0
      %v283 = vadd.f32 %v259, 0.0
      %v284 = vadd.f32 %v260, 0.0
      %v285 = vadd.f32 %v261, 0.0
      %v286 = vadd.f32 %v262, 0.0
      %v287 = vadd.f32 %v263, 0.0
      %v288 = vadd.f32 %v264, 0.0
      %289 = vset.pattern.permute.xlu0 1
      %290 = vperm.xlu0 %289, %v193
      %v291 = vpop.permute.xlu0 %290
      %293 = vset.pattern.permute.xlu0 1
      %294 = vperm.xlu0 %293, %v194
      %v295 = vpop.permute.xlu0 %294
      %297 = vset.pattern.permute.xlu0 1
      %298 = vperm.xlu0 %297, %v195
      %v299 = vpop.permute.xlu0 %298
      %301 = vset.pattern.permute.xlu0 1
      %302 = vperm.xlu0 %301, %v196
      %v303 = vpop.permute.xlu0 %302
      %v305 = vlaneseq
      %v306 = vshrl.u32 %v305, 7
      %v307 = vsub.s32 1, %v306
      %v308 = vrot.slane %v177, %v307
      %v309 = vlaneseq
      %v310 = vshrl.u32 %v309, 7
      %v311 = vsub.s32 1, %v310
      %v312 = vrot.slane %v178, %v311
      %v313 = vlaneseq
      %v314 = vshrl.u32 %v313, 7
      %v315 = vsub.s32 1, %v314
      %v316 = vrot.slane %v179, %v315
      %v317 = vlaneseq
      %v318 = vshrl.u32 %v317, 7
      %v319 = vsub.s32 1, %v318
      %v320 = vrot.slane %v180, %v319
      %v321 = vlaneseq
      %v322 = vshrl.u32 %v321, 7
      %v323 = vsub.s32 1, %v322
      %v324 = vrot.slane %v181, %v323
      %v325 = vlaneseq
      %v326 = vshrl.u32 %v325, 7
      %v327 = vsub.s32 1, %v326
      %v328 = vrot.slane %v182, %v327
      %v329 = vmul.f32 %v291, %v308
      %v330 = vmul.f32 %v291, %v312
      %v331 = vmul.f32 %v291, %v316
      %v332 = vmul.f32 %v291, %v320
      %v333 = vmul.f32 %v291, %v324
      %v334 = vmul.f32 %v291, %v328
      %v335 = vmul.f32 %v295, %v308
      %v336 = vmul.f32 %v295, %v312
      %v337 = vmul.f32 %v295, %v316
      %v338 = vmul.f32 %v295, %v320
      %v339 = vmul.f32 %v295, %v324
      %v340 = vmul.f32 %v295, %v328
      %v341 = vmul.f32 %v299, %v308
      %v342 = vmul.f32 %v299, %v312
      %v343 = vmul.f32 %v299, %v316
      %v344 = vmul.f32 %v299, %v320
      %v345 = vmul.f32 %v299, %v324
      %v346 = vmul.f32 %v299, %v328
      %v347 = vmul.f32 %v303, %v308
      %v348 = vmul.f32 %v303, %v312
      %v349 = vmul.f32 %v303, %v316
      %v350 = vmul.f32 %v303, %v320
      %v351 = vmul.f32 %v303, %v324
      %v352 = vmul.f32 %v303, %v328
      %v353 = vadd.f32 %v265, %v329
      %v354 = vadd.f32 %v266, %v330
      %v355 = vadd.f32 %v267, %v331
      %v356 = vadd.f32 %v268, %v332
      %v357 = vadd.f32 %v269, %v333
      %v358 = vadd.f32 %v270, %v334
      %v359 = vadd.f32 %v271, %v335
      %v360 = vadd.f32 %v272, %v336
      %v361 = vadd.f32 %v273, %v337
      %v362 = vadd.f32 %v274, %v338
      %v363 = vadd.f32 %v275, %v339
      %v364 = vadd.f32 %v276, %v340
      %v365 = vadd.f32 %v277, %v341
      %v366 = vadd.f32 %v278, %v342
      %v367 = vadd.f32 %v279, %v343
      %v368 = vadd.f32 %v280, %v344
      %v369 = vadd.f32 %v281, %v345
      %v370 = vadd.f32 %v282, %v346
      %v371 = vadd.f32 %v283, %v347
      %v372 = vadd.f32 %v284, %v348
      %v373 = vadd.f32 %v285, %v349
      %v374 = vadd.f32 %v286, %v350
      %v375 = vadd.f32 %v287, %v351
      %v376 = vadd.f32 %v288, %v352
      %377 = vset.pattern.permute.xlu0 2
      %378 = vperm.xlu0 %377, %v193
      %v379 = vpop.permute.xlu0 %378
      %381 = vset.pattern.permute.xlu0 2
      %382 = vperm.xlu0 %381, %v194
      %v383 = vpop.permute.xlu0 %382
      %385 = vset.pattern.permute.xlu0 2
      %386 = vperm.xlu0 %385, %v195
      %v387 = vpop.permute.xlu0 %386
      %389 = vset.pattern.permute.xlu0 2
      %390 = vperm.xlu0 %389, %v196
      %v391 = vpop.permute.xlu0 %390
      %v393 = vlaneseq
      %v394 = vshrl.u32 %v393, 7
      %v395 = vsub.s32 2, %v394
      %v396 = vrot.slane %v177, %v395
      %v397 = vlaneseq
      %v398 = vshrl.u32 %v397, 7
      %v399 = vsub.s32 2, %v398
      %v400 = vrot.slane %v178, %v399
      %v401 = vlaneseq
      %v402 = vshrl.u32 %v401, 7
      %v403 = vsub.s32 2, %v402
      %v404 = vrot.slane %v179, %v403
      %v405 = vlaneseq
      %v406 = vshrl.u32 %v405, 7
      %v407 = vsub.s32 2, %v406
      %v408 = vrot.slane %v180, %v407
      %v409 = vlaneseq
      %v410 = vshrl.u32 %v409, 7
      %v411 = vsub.s32 2, %v410
      %v412 = vrot.slane %v181, %v411
      %v413 = vlaneseq
      %v414 = vshrl.u32 %v413, 7
      %v415 = vsub.s32 2, %v414
      %v416 = vrot.slane %v182, %v415
      %v417 = vmul.f32 %v379, %v396
      %v418 = vmul.f32 %v379, %v400
      %v419 = vmul.f32 %v379, %v404
      %v420 = vmul.f32 %v379, %v408
      %v421 = vmul.f32 %v379, %v412
      %v422 = vmul.f32 %v379, %v416
      %v423 = vmul.f32 %v383, %v396
      %v424 = vmul.f32 %v383, %v400
      %v425 = vmul.f32 %v383, %v404
      %v426 = vmul.f32 %v383, %v408
      %v427 = vmul.f32 %v383, %v412
      %v428 = vmul.f32 %v383, %v416
      %v429 = vmul.f32 %v387, %v396
      %v430 = vmul.f32 %v387, %v400
      %v431 = vmul.f32 %v387, %v404
      %v432 = vmul.f32 %v387, %v408
      %v433 = vmul.f32 %v387, %v412
      %v434 = vmul.f32 %v387, %v416
      %v435 = vmul.f32 %v391, %v396
      %v436 = vmul.f32 %v391, %v400
      %v437 = vmul.f32 %v391, %v404
      %v438 = vmul.f32 %v391, %v408
      %v439 = vmul.f32 %v391, %v412
      %v440 = vmul.f32 %v391, %v416
      %v441 = vadd.f32 %v353, %v417
      %v442 = vadd.f32 %v354, %v418
      %v443 = vadd.f32 %v355, %v419
      %v444 = vadd.f32 %v356, %v420
      %v445 = vadd.f32 %v357, %v421
      %v446 = vadd.f32 %v358, %v422
      %v447 = vadd.f32 %v359, %v423
      %v448 = vadd.f32 %v360, %v424
      %v449 = vadd.f32 %v361, %v425
      %v450 = vadd.f32 %v362, %v426
      %v451 = vadd.f32 %v363, %v427
      %v452 = vadd.f32 %v364, %v428
      %v453 = vadd.f32 %v365, %v429
      %v454 = vadd.f32 %v366, %v430
      %v455 = vadd.f32 %v367, %v431
      %v456 = vadd.f32 %v368, %v432
      %v457 = vadd.f32 %v369, %v433
      %v458 = vadd.f32 %v370, %v434
      %v459 = vadd.f32 %v371, %v435
      %v460 = vadd.f32 %v372, %v436
      %v461 = vadd.f32 %v373, %v437
      %v462 = vadd.f32 %v374, %v438
      %v463 = vadd.f32 %v375, %v439
      %v464 = vadd.f32 %v376, %v440
      %465 = vset.pattern.permute.xlu0 3
      %466 = vperm.xlu0 %465, %v193
      %v467 = vpop.permute.xlu0 %466
      %469 = vset.pattern.permute.xlu0 3
      %470 = vperm.xlu0 %469, %v194
      %v471 = vpop.permute.xlu0 %470
      %473 = vset.pattern.permute.xlu0 3
      %474 = vperm.xlu0 %473, %v195
      %v475 = vpop.permute.xlu0 %474
      %477 = vset.pattern.permute.xlu0 3
      %478 = vperm.xlu0 %477, %v196
      %v479 = vpop.permute.xlu0 %478
      %v481 = vlaneseq
      %v482 = vshrl.u32 %v481, 7
      %v483 = vsub.s32 3, %v482
      %v484 = vrot.slane %v177, %v483
      %v485 = vlaneseq
      %v486 = vshrl.u32 %v485, 7
      %v487 = vsub.s32 3, %v486
      %v488 = vrot.slane %v178, %v487
      %v489 = vlaneseq
      %v490 = vshrl.u32 %v489, 7
      %v491 = vsub.s32 3, %v490
      %v492 = vrot.slane %v179, %v491
      %v493 = vlaneseq
      %v494 = vshrl.u32 %v493, 7
      %v495 = vsub.s32 3, %v494
      %v496 = vrot.slane %v180, %v495
      %v497 = vlaneseq
      %v498 = vshrl.u32 %v497, 7
      %v499 = vsub.s32 3, %v498
      %v500 = vrot.slane %v181, %v499
      %v501 = vlaneseq
      %v502 = vshrl.u32 %v501, 7
      %v503 = vsub.s32 3, %v502
      %v504 = vrot.slane %v182, %v503
      %v505 = vmul.f32 %v467, %v484
      %v506 = vmul.f32 %v467, %v488
      %v507 = vmul.f32 %v467, %v492
      %v508 = vmul.f32 %v467, %v496
      %v509 = vmul.f32 %v467, %v500
      %v510 = vmul.f32 %v467, %v504
      %v511 = vmul.f32 %v471, %v484
      %v512 = vmul.f32 %v471, %v488
      %v513 = vmul.f32 %v471, %v492
      %v514 = vmul.f32 %v471, %v496
      %v515 = vmul.f32 %v471, %v500
      %v516 = vmul.f32 %v471, %v504
      %v517 = vmul.f32 %v475, %v484
      %v518 = vmul.f32 %v475, %v488
      %v519 = vmul.f32 %v475, %v492
      %v520 = vmul.f32 %v475, %v496
      %v521 = vmul.f32 %v475, %v500
      %v522 = vmul.f32 %v475, %v504
      %v523 = vmul.f32 %v479, %v484
      %v524 = vmul.f32 %v479, %v488
      %v525 = vmul.f32 %v479, %v492
      %v526 = vmul.f32 %v479, %v496
      %v527 = vmul.f32 %v479, %v500
      %v528 = vmul.f32 %v479, %v504
      %v529 = vadd.f32 %v441, %v505
      %v530 = vadd.f32 %v442, %v506
      %v531 = vadd.f32 %v443, %v507
      %v532 = vadd.f32 %v444, %v508
      %v533 = vadd.f32 %v445, %v509
      %v534 = vadd.f32 %v446, %v510
      %v535 = vadd.f32 %v447, %v511
      %v536 = vadd.f32 %v448, %v512
      %v537 = vadd.f32 %v449, %v513
      %v538 = vadd.f32 %v450, %v514
      %v539 = vadd.f32 %v451, %v515
      %v540 = vadd.f32 %v452, %v516
      %v541 = vadd.f32 %v453, %v517
      %v542 = vadd.f32 %v454, %v518
      %v543 = vadd.f32 %v455, %v519
      %v544 = vadd.f32 %v456, %v520
      %v545 = vadd.f32 %v457, %v521
      %v546 = vadd.f32 %v458, %v522
      %v547 = vadd.f32 %v459, %v523
      %v548 = vadd.f32 %v460, %v524
      %v549 = vadd.f32 %v461, %v525
      %v550 = vadd.f32 %v462, %v526
      %v551 = vadd.f32 %v463, %v527
      %v552 = vadd.f32 %v464, %v528
      %553 = vset.pattern.permute.xlu0 4
      %554 = vperm.xlu0 %553, %v193
      %v555 = vpop.permute.xlu0 %554
      %557 = vset.pattern.permute.xlu0 4
      %558 = vperm.xlu0 %557, %v194
      %v559 = vpop.permute.xlu0 %558
      %561 = vset.pattern.permute.xlu0 4
      %562 = vperm.xlu0 %561, %v195
      %v563 = vpop.permute.xlu0 %562
      %565 = vset.pattern.permute.xlu0 4
      %566 = vperm.xlu0 %565, %v196
      %v567 = vpop.permute.xlu0 %566
      %v569 = vlaneseq
      %v570 = vshrl.u32 %v569, 7
      %v571 = vsub.s32 4, %v570
      %v572 = vrot.slane %v177, %v571
      %v573 = vlaneseq
      %v574 = vshrl.u32 %v573, 7
      %v575 = vsub.s32 4, %v574
      %v576 = vrot.slane %v178, %v575
      %v577 = vlaneseq
      %v578 = vshrl.u32 %v577, 7
      %v579 = vsub.s32 4, %v578
      %v580 = vrot.slane %v179, %v579
      %v581 = vlaneseq
      %v582 = vshrl.u32 %v581, 7
      %v583 = vsub.s32 4, %v582
      %v584 = vrot.slane %v180, %v583
      %v585 = vlaneseq
      %v586 = vshrl.u32 %v585, 7
      %v587 = vsub.s32 4, %v586
      %v588 = vrot.slane %v181, %v587
      %v589 = vlaneseq
      %v590 = vshrl.u32 %v589, 7
      %v591 = vsub.s32 4, %v590
      %v592 = vrot.slane %v182, %v591
      %v593 = vmul.f32 %v555, %v572
      %v594 = vmul.f32 %v555, %v576
      %v595 = vmul.f32 %v555, %v580
      %v596 = vmul.f32 %v555, %v584
      %v597 = vmul.f32 %v555, %v588
      %v598 = vmul.f32 %v555, %v592
      %v599 = vmul.f32 %v559, %v572
      %v600 = vmul.f32 %v559, %v576
      %v601 = vmul.f32 %v559, %v580
      %v602 = vmul.f32 %v559, %v584
      %v603 = vmul.f32 %v559, %v588
      %v604 = vmul.f32 %v559, %v592
      %v605 = vmul.f32 %v563, %v572
      %v606 = vmul.f32 %v563, %v576
      %v607 = vmul.f32 %v563, %v580
      %v608 = vmul.f32 %v563, %v584
      %v609 = vmul.f32 %v563, %v588
      %v610 = vmul.f32 %v563, %v592
      %v611 = vmul.f32 %v567, %v572
      %v612 = vmul.f32 %v567, %v576
      %v613 = vmul.f32 %v567, %v580
      %v614 = vmul.f32 %v567, %v584
      %v615 = vmul.f32 %v567, %v588
      %v616 = vmul.f32 %v567, %v592
      %v617 = vadd.f32 %v529, %v593
      %v618 = vadd.f32 %v530, %v594
      %v619 = vadd.f32 %v531, %v595
      %v620 = vadd.f32 %v532, %v596
      %v621 = vadd.f32 %v533, %v597
      %v622 = vadd.f32 %v534, %v598
      %v623 = vadd.f32 %v535, %v599
      %v624 = vadd.f32 %v536, %v600
      %v625 = vadd.f32 %v537, %v601
      %v626 = vadd.f32 %v538, %v602
      %v627 = vadd.f32 %v539, %v603
      %v628 = vadd.f32 %v540, %v604
      %v629 = vadd.f32 %v541, %v605
      %v630 = vadd.f32 %v542, %v606
      %v631 = vadd.f32 %v543, %v607
      %v632 = vadd.f32 %v544, %v608
      %v633 = vadd.f32 %v545, %v609
      %v634 = vadd.f32 %v546, %v610
      %v635 = vadd.f32 %v547, %v611
      %v636 = vadd.f32 %v548, %v612
      %v637 = vadd.f32 %v549, %v613
      %v638 = vadd.f32 %v550, %v614
      %v639 = vadd.f32 %v551, %v615
      %v640 = vadd.f32 %v552, %v616
      %641 = vset.pattern.permute.xlu0 5
      %642 = vperm.xlu0 %641, %v193
      %v643 = vpop.permute.xlu0 %642
      %645 = vset.pattern.permute.xlu0 5
      %646 = vperm.xlu0 %645, %v194
      %v647 = vpop.permute.xlu0 %646
      %649 = vset.pattern.permute.xlu0 5
      %650 = vperm.xlu0 %649, %v195
      %v651 = vpop.permute.xlu0 %650
      %653 = vset.pattern.permute.xlu0 5
      %654 = vperm.xlu0 %653, %v196
      %v655 = vpop.permute.xlu0 %654
      %v657 = vlaneseq
      %v658 = vshrl.u32 %v657, 7
      %v659 = vsub.s32 5, %v658
      %v660 = vrot.slane %v177, %v659
      %v661 = vlaneseq
      %v662 = vshrl.u32 %v661, 7
      %v663 = vsub.s32 5, %v662
      %v664 = vrot.slane %v178, %v663
      %v665 = vlaneseq
      %v666 = vshrl.u32 %v665, 7
      %v667 = vsub.s32 5, %v666
      %v668 = vrot.slane %v179, %v667
      %v669 = vlaneseq
      %v670 = vshrl.u32 %v669, 7
      %v671 = vsub.s32 5, %v670
      %v672 = vrot.slane %v180, %v671
      %v673 = vlaneseq
      %v674 = vshrl.u32 %v673, 7
      %v675 = vsub.s32 5, %v674
      %v676 = vrot.slane %v181, %v675
      %v677 = vlaneseq
      %v678 = vshrl.u32 %v677, 7
      %v679 = vsub.s32 5, %v678
      %v680 = vrot.slane %v182, %v679
      %v681 = vmul.f32 %v643, %v660
      %v682 = vmul.f32 %v643, %v664
      %v683 = vmul.f32 %v643, %v668
      %v684 = vmul.f32 %v643, %v672
      %v685 = vmul.f32 %v643, %v676
      %v686 = vmul.f32 %v643, %v680
      %v687 = vmul.f32 %v647, %v660
      %v688 = vmul.f32 %v647, %v664
      %v689 = vmul.f32 %v647, %v668
      %v690 = vmul.f32 %v647, %v672
      %v691 = vmul.f32 %v647, %v676
      %v692 = vmul.f32 %v647, %v680
      %v693 = vmul.f32 %v651, %v660
      %v694 = vmul.f32 %v651, %v664
      %v695 = vmul.f32 %v651, %v668
      %v696 = vmul.f32 %v651, %v672
      %v697 = vmul.f32 %v651, %v676
      %v698 = vmul.f32 %v651, %v680
      %v699 = vmul.f32 %v655, %v660
      %v700 = vmul.f32 %v655, %v664
      %v701 = vmul.f32 %v655, %v668
      %v702 = vmul.f32 %v655, %v672
      %v703 = vmul.f32 %v655, %v676
      %v704 = vmul.f32 %v655, %v680
      %v705 = vadd.f32 %v617, %v681
      %v706 = vadd.f32 %v618, %v682
      %v707 = vadd.f32 %v619, %v683
      %v708 = vadd.f32 %v620, %v684
      %v709 = vadd.f32 %v621, %v685
      %v710 = vadd.f32 %v622, %v686
      %v711 = vadd.f32 %v623, %v687
      %v712 = vadd.f32 %v624, %v688
      %v713 = vadd.f32 %v625, %v689
      %v714 = vadd.f32 %v626, %v690
      %v715 = vadd.f32 %v627, %v691
      %v716 = vadd.f32 %v628, %v692
      %v717 = vadd.f32 %v629, %v693
      %v718 = vadd.f32 %v630, %v694
      %v719 = vadd.f32 %v631, %v695
      %v720 = vadd.f32 %v632, %v696
      %v721 = vadd.f32 %v633, %v697
      %v722 = vadd.f32 %v634, %v698
      %v723 = vadd.f32 %v635, %v699
      %v724 = vadd.f32 %v636, %v700
      %v725 = vadd.f32 %v637, %v701
      %v726 = vadd.f32 %v638, %v702
      %v727 = vadd.f32 %v639, %v703
      %v728 = vadd.f32 %v640, %v704
      %729 = vset.pattern.permute.xlu0 6
      %730 = vperm.xlu0 %729, %v193
      %v731 = vpop.permute.xlu0 %730
      %733 = vset.pattern.permute.xlu0 6
      %734 = vperm.xlu0 %733, %v194
      %v735 = vpop.permute.xlu0 %734
      %737 = vset.pattern.permute.xlu0 6
      %738 = vperm.xlu0 %737, %v195
      %v739 = vpop.permute.xlu0 %738
      %741 = vset.pattern.permute.xlu0 6
      %742 = vperm.xlu0 %741, %v196
      %v743 = vpop.permute.xlu0 %742
      %v745 = vlaneseq
      %v746 = vshrl.u32 %v745, 7
      %v747 = vsub.s32 6, %v746
      %v748 = vrot.slane %v177, %v747
      %v749 = vlaneseq
      %v750 = vshrl.u32 %v749, 7
      %v751 = vsub.s32 6, %v750
      %v752 = vrot.slane %v178, %v751
      %v753 = vlaneseq
      %v754 = vshrl.u32 %v753, 7
      %v755 = vsub.s32 6, %v754
      %v756 = vrot.slane %v179, %v755
      %v757 = vlaneseq
      %v758 = vshrl.u32 %v757, 7
      %v759 = vsub.s32 6, %v758
      %v760 = vrot.slane %v180, %v759
      %v761 = vlaneseq
      %v762 = vshrl.u32 %v761, 7
      %v763 = vsub.s32 6, %v762
      %v764 = vrot.slane %v181, %v763
      %v765 = vlaneseq
      %v766 = vshrl.u32 %v765, 7
      %v767 = vsub.s32 6, %v766
      %v768 = vrot.slane %v182, %v767
      %v769 = vmul.f32 %v731, %v748
      %v770 = vmul.f32 %v731, %v752
      %v771 = vmul.f32 %v731, %v756
      %v772 = vmul.f32 %v731, %v760
      %v773 = vmul.f32 %v731, %v764
      %v774 = vmul.f32 %v731, %v768
      %v775 = vmul.f32 %v735, %v748
      %v776 = vmul.f32 %v735, %v752
      %v777 = vmul.f32 %v735, %v756
      %v778 = vmul.f32 %v735, %v760
      %v779 = vmul.f32 %v735, %v764
      %v780 = vmul.f32 %v735, %v768
      %v781 = vmul.f32 %v739, %v748
      %v782 = vmul.f32 %v739, %v752
      %v783 = vmul.f32 %v739, %v756
      %v784 = vmul.f32 %v739, %v760
      %v785 = vmul.f32 %v739, %v764
      %v786 = vmul.f32 %v739, %v768
      %v787 = vmul.f32 %v743, %v748
      %v788 = vmul.f32 %v743, %v752
      %v789 = vmul.f32 %v743, %v756
      %v790 = vmul.f32 %v743, %v760
      %v791 = vmul.f32 %v743, %v764
      %v792 = vmul.f32 %v743, %v768
      %v793 = vadd.f32 %v705, %v769
      %v794 = vadd.f32 %v706, %v770
      %v795 = vadd.f32 %v707, %v771
      %v796 = vadd.f32 %v708, %v772
      %v797 = vadd.f32 %v709, %v773
      %v798 = vadd.f32 %v710, %v774
      %v799 = vadd.f32 %v711, %v775
      %v800 = vadd.f32 %v712, %v776
      %v801 = vadd.f32 %v713, %v777
      %v802 = vadd.f32 %v714, %v778
      %v803 = vadd.f32 %v715, %v779
      %v804 = vadd.f32 %v716, %v780
      %v805 = vadd.f32 %v717, %v781
      %v806 = vadd.f32 %v718, %v782
      %v807 = vadd.f32 %v719, %v783
      %v808 = vadd.f32 %v720, %v784
      %v809 = vadd.f32 %v721, %v785
      %v810 = vadd.f32 %v722, %v786
      %v811 = vadd.f32 %v723, %v787
      %v812 = vadd.f32 %v724, %v788
      %v813 = vadd.f32 %v725, %v789
      %v814 = vadd.f32 %v726, %v790
      %v815 = vadd.f32 %v727, %v791
      %v816 = vadd.f32 %v728, %v792
      %817 = vset.pattern.permute.xlu0 7
      %818 = vperm.xlu0 %817, %v193
      %v819 = vpop.permute.xlu0 %818
      %821 = vset.pattern.permute.xlu0 7
      %822 = vperm.xlu0 %821, %v194
      %v823 = vpop.permute.xlu0 %822
      %825 = vset.pattern.permute.xlu0 7
      %826 = vperm.xlu0 %825, %v195
      %v827 = vpop.permute.xlu0 %826
      %829 = vset.pattern.permute.xlu0 7
      %830 = vperm.xlu0 %829, %v196
      %v831 = vpop.permute.xlu0 %830
      %v833 = vlaneseq
      %v834 = vshrl.u32 %v833, 7
      %v835 = vsub.s32 7, %v834
      %v836 = vrot.slane %v177, %v835
      %v837 = vlaneseq
      %v838 = vshrl.u32 %v837, 7
      %v839 = vsub.s32 7, %v838
      %v840 = vrot.slane %v178, %v839
      %v841 = vlaneseq
      %v842 = vshrl.u32 %v841, 7
      %v843 = vsub.s32 7, %v842
      %v844 = vrot.slane %v179, %v843
      %v845 = vlaneseq
      %v846 = vshrl.u32 %v845, 7
      %v847 = vsub.s32 7, %v846
      %v848 = vrot.slane %v180, %v847
      %v849 = vlaneseq
      %v850 = vshrl.u32 %v849, 7
      %v851 = vsub.s32 7, %v850
      %v852 = vrot.slane %v181, %v851
      %v853 = vlaneseq
      %v854 = vshrl.u32 %v853, 7
      %v855 = vsub.s32 7, %v854
      %v856 = vrot.slane %v182, %v855
      %v857 = vmul.f32 %v819, %v836
      %v858 = vmul.f32 %v819, %v840
      %v859 = vmul.f32 %v819, %v844
      %v860 = vmul.f32 %v819, %v848
      %v861 = vmul.f32 %v819, %v852
      %v862 = vmul.f32 %v819, %v856
      %v863 = vmul.f32 %v823, %v836
      %v864 = vmul.f32 %v823, %v840
      %v865 = vmul.f32 %v823, %v844
      %v866 = vmul.f32 %v823, %v848
      %v867 = vmul.f32 %v823, %v852
      %v868 = vmul.f32 %v823, %v856
      %v869 = vmul.f32 %v827, %v836
      %v870 = vmul.f32 %v827, %v840
      %v871 = vmul.f32 %v827, %v844
      %v872 = vmul.f32 %v827, %v848
      %v873 = vmul.f32 %v827, %v852
      %v874 = vmul.f32 %v827, %v856
      %v875 = vmul.f32 %v831, %v836
      %v876 = vmul.f32 %v831, %v840
      %v877 = vmul.f32 %v831, %v844
      %v878 = vmul.f32 %v831, %v848
      %v879 = vmul.f32 %v831, %v852
      %v880 = vmul.f32 %v831, %v856
      %v881 = vadd.f32 %v793, %v857
      %v882 = vadd.f32 %v794, %v858
      %v883 = vadd.f32 %v795, %v859
      %v884 = vadd.f32 %v796, %v860
      %v885 = vadd.f32 %v797, %v861
      %v886 = vadd.f32 %v798, %v862
      %v887 = vadd.f32 %v799, %v863
      %v888 = vadd.f32 %v800, %v864
      %v889 = vadd.f32 %v801, %v865
      %v890 = vadd.f32 %v802, %v866
      %v891 = vadd.f32 %v803, %v867
      %v892 = vadd.f32 %v804, %v868
      %v893 = vadd.f32 %v805, %v869
      %v894 = vadd.f32 %v806, %v870
      %v895 = vadd.f32 %v807, %v871
      %v896 = vadd.f32 %v808, %v872
      %v897 = vadd.f32 %v809, %v873
      %v898 = vadd.f32 %v810, %v874
      %v899 = vadd.f32 %v811, %v875
      %v900 = vadd.f32 %v812, %v876
      %v901 = vadd.f32 %v813, %v877
      %v902 = vadd.f32 %v814, %v878
      %v903 = vadd.f32 %v815, %v879
      %v904 = vadd.f32 %v816, %v880
      %905 = vset.pattern.permute.xlu0 8
      %906 = vperm.xlu0 %905, %v193
      %v907 = vpop.permute.xlu0 %906
      %909 = vset.pattern.permute.xlu0 8
      %910 = vperm.xlu0 %909, %v194
      %v911 = vpop.permute.xlu0 %910
      %913 = vset.pattern.permute.xlu0 8
      %914 = vperm.xlu0 %913, %v195
      %v915 = vpop.permute.xlu0 %914
      %917 = vset.pattern.permute.xlu0 8
      %918 = vperm.xlu0 %917, %v196
      %v919 = vpop.permute.xlu0 %918
      %v921 = vlaneseq
      %v922 = vshrl.u32 %v921, 7
      %v923 = vsub.s32 0, %v922
      %v924 = vrot.slane %v183, %v923
      %v925 = vlaneseq
      %v926 = vshrl.u32 %v925, 7
      %v927 = vsub.s32 0, %v926
      %v928 = vrot.slane %v184, %v927
      %v929 = vlaneseq
      %v930 = vshrl.u32 %v929, 7
      %v931 = vsub.s32 0, %v930
      %v932 = vrot.slane %v185, %v931
      %v933 = vlaneseq
      %v934 = vshrl.u32 %v933, 7
      %v935 = vsub.s32 0, %v934
      %v936 = vrot.slane %v186, %v935
      %v937 = vlaneseq
      %v938 = vshrl.u32 %v937, 7
      %v939 = vsub.s32 0, %v938
      %v940 = vrot.slane %v187, %v939
      %v941 = vlaneseq
      %v942 = vshrl.u32 %v941, 7
      %v943 = vsub.s32 0, %v942
      %v944 = vrot.slane %v188, %v943
      %v945 = vmul.f32 %v907, %v924
      %v946 = vmul.f32 %v907, %v928
      %v947 = vmul.f32 %v907, %v932
      %v948 = vmul.f32 %v907, %v936
      %v949 = vmul.f32 %v907, %v940
      %v950 = vmul.f32 %v907, %v944
      %v951 = vmul.f32 %v911, %v924
      %v952 = vmul.f32 %v911, %v928
      %v953 = vmul.f32 %v911, %v932
      %v954 = vmul.f32 %v911, %v936
      %v955 = vmul.f32 %v911, %v940
      %v956 = vmul.f32 %v911, %v944
      %v957 = vmul.f32 %v915, %v924
      %v958 = vmul.f32 %v915, %v928
      %v959 = vmul.f32 %v915, %v932
      %v960 = vmul.f32 %v915, %v936
      %v961 = vmul.f32 %v915, %v940
      %v962 = vmul.f32 %v915, %v944
      %v963 = vmul.f32 %v919, %v924
      %v964 = vmul.f32 %v919, %v928
      %v965 = vmul.f32 %v919, %v932
      %v966 = vmul.f32 %v919, %v936
      %v967 = vmul.f32 %v919, %v940
      %v968 = vmul.f32 %v919, %v944
      %v969 = vadd.f32 %v881, %v945
      %v970 = vadd.f32 %v882, %v946
      %v971 = vadd.f32 %v883, %v947
      %v972 = vadd.f32 %v884, %v948
      %v973 = vadd.f32 %v885, %v949
      %v974 = vadd.f32 %v886, %v950
      %v975 = vadd.f32 %v887, %v951
      %v976 = vadd.f32 %v888, %v952
      %v977 = vadd.f32 %v889, %v953
      %v978 = vadd.f32 %v890, %v954
      %v979 = vadd.f32 %v891, %v955
      %v980 = vadd.f32 %v892, %v956
      %v981 = vadd.f32 %v893, %v957
      %v982 = vadd.f32 %v894, %v958
      %v983 = vadd.f32 %v895, %v959
      %v984 = vadd.f32 %v896, %v960
      %v985 = vadd.f32 %v897, %v961
      %v986 = vadd.f32 %v898, %v962
      %v987 = vadd.f32 %v899, %v963
      %v988 = vadd.f32 %v900, %v964
      %v989 = vadd.f32 %v901, %v965
      %v990 = vadd.f32 %v902, %v966
      %v991 = vadd.f32 %v903, %v967
      %v992 = vadd.f32 %v904, %v968
      %v993 = vld [vmem:[%s2] sm:$0xff]
      %v994 = vld [vmem:[%s2 + $0x8] sm:$0xff]
      %v995 = vld [vmem:[%s2 + $0x10] sm:$0xff]
      %v996 = vld [vmem:[%s2 + $0x18] sm:$0xff]
      %998 = vset.pattern.permute.xlu0 0
      %999 = vperm.xlu0 %998, %v993
      %v1000 = vpop.permute.xlu0 %999
      %1003 = vset.pattern.permute.xlu0 0
      %1004 = vperm.xlu0 %1003, %v994
      %v1005 = vpop.permute.xlu0 %1004
      %1008 = vset.pattern.permute.xlu0 0
      %1009 = vperm.xlu0 %1008, %v995
      %v1010 = vpop.permute.xlu0 %1009
      %1013 = vset.pattern.permute.xlu0 0
      %1014 = vperm.xlu0 %1013, %v996
      %v1015 = vpop.permute.xlu0 %1014
      %v1017 = vadd.f32 %v969, %v1000
      %v1018 = vadd.f32 %v970, %v1000
      %v1019 = vadd.f32 %v971, %v1000
      %v1020 = vadd.f32 %v972, %v1000
      %v1021 = vadd.f32 %v973, %v1000
      %v1022 = vadd.f32 %v974, %v1000
      %v1023 = vadd.f32 %v975, %v1005
      %v1024 = vadd.f32 %v976, %v1005
      %v1025 = vadd.f32 %v977, %v1005
      %v1026 = vadd.f32 %v978, %v1005
      %v1027 = vadd.f32 %v979, %v1005
      %v1028 = vadd.f32 %v980, %v1005
      %v1029 = vadd.f32 %v981, %v1010
      %v1030 = vadd.f32 %v982, %v1010
      %v1031 = vadd.f32 %v983, %v1010
      %v1032 = vadd.f32 %v984, %v1010
      %v1033 = vadd.f32 %v985, %v1010
      %v1034 = vadd.f32 %v986, %v1010
      %v1035 = vadd.f32 %v987, %v1015
      %v1036 = vadd.f32 %v988, %v1015
      %v1037 = vadd.f32 %v989, %v1015
      %v1038 = vadd.f32 %v990, %v1015
      %v1039 = vadd.f32 %v991, %v1015
      %v1040 = vadd.f32 %v992, %v1015
      %v1041 = vmax.f32 %v1017, 0.0
      %v1042 = vmax.f32 %v1018, 0.0
      %v1043 = vmax.f32 %v1019, 0.0
      %v1044 = vmax.f32 %v1020, 0.0
      %v1045 = vmax.f32 %v1021, 0.0
      %v1046 = vmax.f32 %v1022, 0.0
      %v1047 = vmax.f32 %v1023, 0.0
      %v1048 = vmax.f32 %v1024, 0.0
      %v1049 = vmax.f32 %v1025, 0.0
      %v1050 = vmax.f32 %v1026, 0.0
      %v1051 = vmax.f32 %v1027, 0.0
      %v1052 = vmax.f32 %v1028, 0.0
      %v1053 = vmax.f32 %v1029, 0.0
      %v1054 = vmax.f32 %v1030, 0.0
      %v1055 = vmax.f32 %v1031, 0.0
      %v1056 = vmax.f32 %v1032, 0.0
      %v1057 = vmax.f32 %v1033, 0.0
      %v1058 = vmax.f32 %v1034, 0.0
      %v1059 = vmax.f32 %v1035, 0.0
      %v1060 = vmax.f32 %v1036, 0.0
      %v1061 = vmax.f32 %v1037, 0.0
      %v1062 = vmax.f32 %v1038, 0.0
      %v1063 = vmax.f32 %v1039, 0.0
      %v1064 = vmax.f32 %v1040, 0.0
      %v1065 = vpack.c.bf16 %v1047, %v1041
      %v1066 = vpack.c.bf16 %v1048, %v1042
      %v1067 = vpack.c.bf16 %v1049, %v1043
      %v1068 = vpack.c.bf16 %v1050, %v1044
      %v1069 = vpack.c.bf16 %v1051, %v1045
      %v1070 = vpack.c.bf16 %v1052, %v1046
      %v1071 = vpack.c.bf16 %v1059, %v1053
      %v1072 = vpack.c.bf16 %v1060, %v1054
      %v1073 = vpack.c.bf16 %v1061, %v1055
      %v1074 = vpack.c.bf16 %v1062, %v1056
      %v1075 = vpack.c.bf16 %v1063, %v1057
      %v1076 = vpack.c.bf16 %v1064, %v1058
      %v1089 = vunpack.c.l.b16 %v1065
      %v1090 = vunpack.c.l.b16 %v1066
      %v1091 = vunpack.c.l.b16 %v1067
      %v1092 = vunpack.c.l.b16 %v1068
      %v1093 = vunpack.c.l.b16 %v1069
      %v1094 = vunpack.c.l.b16 %v1070
      %v1095 = vunpack.c.h.b16 %v1065
      %v1096 = vunpack.c.h.b16 %v1066
      %v1097 = vunpack.c.h.b16 %v1067
      %v1098 = vunpack.c.h.b16 %v1068
      %v1099 = vunpack.c.h.b16 %v1069
      %v1100 = vunpack.c.h.b16 %v1070
      %v1101 = vunpack.c.l.b16 %v1071
      %v1102 = vunpack.c.l.b16 %v1072
      %v1103 = vunpack.c.l.b16 %v1073
      %v1104 = vunpack.c.l.b16 %v1074
      %v1105 = vunpack.c.l.b16 %v1075
      %v1106 = vunpack.c.l.b16 %v1076
      %v1107 = vunpack.c.h.b16 %v1071
      %v1108 = vunpack.c.h.b16 %v1072
      %v1109 = vunpack.c.h.b16 %v1073
      %v1110 = vunpack.c.h.b16 %v1074
      %v1111 = vunpack.c.h.b16 %v1075
      %v1112 = vunpack.c.h.b16 %v1076
      %v1113 = vpack.c.b16 %v1090, %v1089
      %v1114 = vpack.c.b16 %v1092, %v1091
      %v1115 = vpack.c.b16 %v1094, %v1093
      %v1116 = vpack.c.b16 %v1096, %v1095
      %v1117 = vpack.c.b16 %v1098, %v1097
      %v1118 = vpack.c.b16 %v1100, %v1099
      %v1119 = vpack.c.b16 %v1102, %v1101
      %v1120 = vpack.c.b16 %v1104, %v1103
      %v1121 = vpack.c.b16 %v1106, %v1105
      %v1122 = vpack.c.b16 %v1108, %v1107
      %v1123 = vpack.c.b16 %v1110, %v1109
      %v1124 = vpack.c.b16 %v1112, %v1111
      %1137 = vst [vmem:[%s170] sm:$0xff] %v1113
      %1138 = vst [vmem:[%s170 + $0x8] sm:$0xff] %v1114
      %vm1139 = vcmask 1043456
      %vm1140 = vcmask 293892
      %vm1141 = vmor %vm1140, %vm1139
      %1142 = vst.msk [vmem:[%s170 + $0x10] sm:$0xff] %vm1141, %v1115
      %1143 = vst [vmem:[%s170 + $0x18] sm:$0xff] %v1116
      %1144 = vst [vmem:[%s170 + $0x20] sm:$0xff] %v1117
      %1145 = vst.msk [vmem:[%s170 + $0x28] sm:$0xff] %vm1141, %v1118
      %1146 = vst [vmem:[%s170 + $0x30] sm:$0xff] %v1119
      %1147 = vst [vmem:[%s170 + $0x38] sm:$0xff] %v1120
      %1148 = vst.msk [vmem:[%s170 + $0x40] sm:$0xff] %vm1141, %v1121
      %1149 = vst [vmem:[%s170 + $0x48] sm:$0xff] %v1122
      %1150 = vst [vmem:[%s170 + $0x50] sm:$0xff] %v1123
      %1151 = vst.msk [vmem:[%s170 + $0x58] sm:$0xff] %vm1141, %v1124
      %p1152 = scmp.lt.s32.totalorder %s14, 1
      %s1153 = scalar_select %p1152, %s14, 1
      %s1154 = smul.addr %s1153, 24
      %s1155 = smul.addr %s1154, 4
      %s1156 = scalar_lea.vmem %s3, %s1155
      // Predicated region
      $region33: #{net_forward.3} parent=31 // pred_check
        %p1157 = pneg %p100
      $region34: #{net_forward.3} parent=31 // pred_check_branch
        %1159 = sbr.rel (%p1157) target = $region36
      $region35: #{net_forward.3} parent=31 // pred_region
        _
      $region36: #{net_forward.3} parent=31 // pred_fallthru
        _
    $region32: #{net_forward.3} parent=5 // pred_fallthru
      _
    %p1160 = scmp.le.s32.totalorder 2, %s9
    // Predicated region
    $region37: #{net_forward.3} parent=5 // pred_check
      %p1161 = pneg %p1160
    $region38: #{net_forward.3} parent=5 // pred_check_branch
      %1163 = sbr.rel (%p1161) target = $region40
    $region39: #{net_forward.3} parent=5 // pred_region
      %s1164 = ssub.s32 %s9, 2
      // Predicated region
      $region41: #{net_forward.3} parent=39 // pred_check
        %p1165 = pneg %p106
      $region42: #{net_forward.3} parent=39 // pred_check_branch
        %1167 = sbr.rel (%p1165) target = $region44
      $region43: #{net_forward.3} parent=39 // pred_region
        %p1168 = scmp.lt.s32.totalorder %s15, 1
        %s1169 = scalar_select %p1168, %s15, 1
        %s1170 = smul.addr %s1169, 24
        %s1171 = smul.addr %s1170, 4
        %s1172 = scalar_lea.vmem %s3, %s1171
      $region44: #{net_forward.3} parent=39 // pred_fallthru
        _
    $region40: #{net_forward.3} parent=5 // pred_fallthru
      _
  $region6: #{net_forward.3} parent=0 // loop_footer
    %s13 = sadd.s32 1, %s9
  $region7: #{net_forward.3} parent=0 // loop_footer_branch
    %8 = sbr.rel target = $region3
  $region8: #{net_forward.3} parent=0 // loop_exit
    _

// kernel: net_forward.4
$region0: #{net_forward.4}
  #allocation0 [shape = 'u32[]', space=smem, size = 0x4, offset = 0x4, fixed_abs, tag = 'smem constant byte address 0x4 - core index']
  #allocation1 [shape = 'u32[144,128]{1,0:T(1,128)}', space=vmem, size = 0x12000, scoped, tag = 'internal scratch']
  %s0 = inlined_call_operand.vmem [shape: bf16[2,4,288,144], index: 0, kind: input, shape index: {}]
  %s1 = inlined_call_operand.vmem [shape: bf16[64,288], index: 1, kind: input, shape index: {}]
  %s2 = inlined_call_operand.vmem [shape: f32[64,1], index: 2, kind: input, shape index: {}]
  %s3 = inlined_call_operand.vmem [shape: bf16[2,64,144], index: 3, kind: output, shape index: {}]
  %s4 = sld [smem:[#allocation0]]
  $region45: #{net_forward.4} parent=0
    _
  %s6 = ssub.s32 1, %s4
  %s7 = scalar_select 0, %s6, %s4
  loop: start=0, step=1, limit=4
  $region2: #{net_forward.4} parent=0 // loop_pre_header
    _
  $region3: #{net_forward.4} parent=0 // loop_header
    %s9 = sphi 0, %s13
    %p10 = scmp.ge.s32.totalorder %s9, 4
    %s19 = sphi 0, %s21
    %s22 = sphi 0, %s19
    %s23 = sphi 0, %s22
    %s39 = sphi 0, %s23
    %s43 = sphi 0, %s43
    %s45 = sphi 0, %s43
    %s46 = sphi 0, %s45
    %s60 = sphi 0, %s46
    %s64 = sphi 0, %s64
    %s66 = sphi 0, %s64
    %s67 = sphi 0, %s66
    %s81 = sphi 0, %s67
    %s87 = sphi 0, %s89
    %s90 = sphi 0, %s87
    %s91 = sphi 0, %s90
    %s107 = sphi 0, %s91
  $region4: #{net_forward.4} parent=0 // loop_header_branch
    %12 = sbr.rel (%p10) target = $region8
  $region5: #{net_forward.4} parent=0 // loop_body
    %s14 = ssub.s32 %s9, 1
    %s15 = ssub.s32 %s9, 2
    %s16 = sadd.s32 %s9, 1
    %s17 = ssub.s32 %s9, %s16
    %p18 = scmp.eq.s32.totalorder %s17, 0
    %s20 = sadd.s32 %s19, 1
    %s21 = scalar_select %p18, %s19, %s20
    %p24 = pneg %p18
    %p25 = scmp.eq.s32.totalorder %s9, 1
    %p26 = por %p24, %p25
    %p27 = scmp.ne.s32.totalorder %s19, %s22
    %p28 = scmp.eq.s32.totalorder %s9, 0
    %p29 = por %p27, %p28
    %p30 = scmp.ne.s32.totalorder %s19, %s22
    %p31 = scmp.eq.s32.totalorder %s14, 1
    %p32 = por %p30, %p31
    %p33 = scmp.ne.s32.totalorder %s22, %s23
    %p34 = scmp.eq.s32.totalorder %s14, 0
    %p35 = por %p33, %p34
    %p36 = scmp.ne.s32.totalorder %s22, %s23
    %p37 = scmp.eq.s32.totalorder %s15, 1
    %p38 = por %p36, %p37
    %p40 = scmp.ne.s32.totalorder %s23, %s39
    %p41 = scmp.eq.s32.totalorder %s15, 0
    %p42 = por %p40, %p41
    %s44 = sadd.s32 %s43, 1
    %p47 = scmp.eq.s32.totalorder %s9, 1
    %p48 = scmp.ne.s32.totalorder %s43, %s45
    %p49 = scmp.eq.s32.totalorder %s9, 0
    %p50 = por %p48, %p49
    %p51 = scmp.ne.s32.totalorder %s43, %s45
    %p52 = scmp.eq.s32.totalorder %s14, 1
    %p53 = por %p51, %p52
    %p54 = scmp.ne.s32.totalorder %s45, %s46
    %p55 = scmp.eq.s32.totalorder %s14, 0
    %p56 = por %p54, %p55
    %p57 = scmp.ne.s32.totalorder %s45, %s46
    %p58 = scmp.eq.s32.totalorder %s15, 1
    %p59 = por %p57, %p58
    %p61 = scmp.ne.s32.totalorder %s46, %s60
    %p62 = scmp.eq.s32.totalorder %s15, 0
    %p63 = por %p61, %p62
    %s65 = sadd.s32 %s64, 1
    %p68 = scmp.eq.s32.totalorder %s9, 1
    %p69 = scmp.ne.s32.totalorder %s64, %s66
    %p70 = scmp.eq.s32.totalorder %s9, 0
    %p71 = por %p69, %p70
    %p72 = scmp.ne.s32.totalorder %s64, %s66
    %p73 = scmp.eq.s32.totalorder %s14, 1
    %p74 = por %p72, %p73
    %p75 = scmp.ne.s32.totalorder %s66, %s67
    %p76 = scmp.eq.s32.totalorder %s14, 0
    %p77 = por %p75, %p76
    %p78 = scmp.ne.s32.totalorder %s66, %s67
    %p79 = scmp.eq.s32.totalorder %s15, 1
    %p80 = por %p78, %p79
    %p82 = scmp.ne.s32.totalorder %s67, %s81
    %p83 = scmp.eq.s32.totalorder %s15, 0
    %p84 = por %p82, %p83
    %s85 = ssub.s32 %s9, %s16
    %p86 = scmp.eq.s32.totalorder %s85, 0
    %s88 = sadd.s32 %s87, 1
    %s89 = scalar_select %p86, %s87, %s88
    %p92 = pneg %p86
    %p93 = scmp.eq.s32.totalorder %s9, 1
    %p94 = por %p92, %p93
    %p95 = scmp.ne.s32.totalorder %s87, %s90
    %p96 = scmp.eq.s32.totalorder %s9, 0
    %p97 = por %p95, %p96
    %p98 = scmp.ne.s32.totalorder %s87, %s90
    %p99 = scmp.eq.s32.totalorder %s14, 1
    %p100 = por %p98, %p99
    %p101 = scmp.ne.s32.totalorder %s90, %s91
    %p102 = scmp.eq.s32.totalorder %s14, 0
    %p103 = por %p101, %p102
    %p104 = scmp.ne.s32.totalorder %s90, %s91
    %p105 = scmp.eq.s32.totalorder %s15, 1
    %p106 = por %p104, %p105
    %p108 = scmp.ne.s32.totalorder %s91, %s107
    %p109 = scmp.eq.s32.totalorder %s15, 0
    %p110 = por %p108, %p109
    %p111 = scmp.le.s32.totalorder 1, %s9
    %p112 = scmp.lt.s32.totalorder %s9, 3
    %p113 = pnand %p111, %p112
    %p114 = pneg %p113
    // Predicated region
    $region9: #{net_forward.4} parent=5 // pred_check
      _
    $region10: #{net_forward.4} parent=5 // pred_check_branch
      %116 = sbr.rel (%p113) target = $region12
    $region11: #{net_forward.4} parent=5 // pred_region
      %s117 = ssub.s32 %s9, 1
      // Predicated region
      $region13: #{net_forward.4} parent=11 // pred_check
        %p118 = pneg %p56
      $region14: #{net_forward.4} parent=11 // pred_check_branch
        %120 = sbr.rel (%p118) target = $region16
      $region15: #{net_forward.4} parent=11 // pred_region
        _
      $region16: #{net_forward.4} parent=11 // pred_fallthru
        _
      // Predicated region
      $region17: #{net_forward.4} parent=11 // pred_check
        %p121 = pneg %p77
      $region18: #{net_forward.4} parent=11 // pred_check_branch
        %123 = sbr.rel (%p121) target = $region20
      $region19: #{net_forward.4} parent=11 // pred_region
        _
      $region20: #{net_forward.4} parent=11 // pred_fallthru
        _
    $region12: #{net_forward.4} parent=5 // pred_fallthru
      _
    %p124 = scmp.lt.s32.totalorder %s9, 2
    // Predicated region
    $region21: #{net_forward.4} parent=5 // pred_check
      %p125 = pneg %p124
    $region22: #{net_forward.4} parent=5 // pred_check_branch
      %127 = sbr.rel (%p125) target = $region24
    $region23: #{net_forward.4} parent=5 // pred_region
      // Predicated region
      $region25: #{net_forward.4} parent=23 // pred_check
        %p128 = pneg %p29
      $region26: #{net_forward.4} parent=23 // pred_check_branch
        %130 = sbr.rel (%p128) target = $region28
      $region27: #{net_forward.4} parent=23 // pred_region
        %p131 = scmp.lt.s32.totalorder %s9, 1
        %s132 = scalar_select %p131, %s9, 1
        %s133 = smul.addr %s132, 288
        %s134 = smul.addr %s133, 4
        %s135 = scalar_lea.vmem %s0, %s134
      $region28: #{net_forward.4} parent=23 // pred_fallthru
        _
    $region24: #{net_forward.4} parent=5 // pred_fallthru
      _
    %p136 = scmp.le.s32.totalorder 1, %s9
    %p137 = scmp.lt.s32.totalorder %s9, 3
    %p138 = pnand %p136, %p137
    %p139 = pneg %p138
    // Predicated region
    $region29: #{net_forward.4} parent=5 // pred_check
      _
    $region30: #{net_forward.4} parent=5 // pred_check_branch
      %141 = sbr.rel (%p138) target = $region32
    $region31: #{net_forward.4} parent=5 // pred_region
      %s142 = ssub.s32 %s9, 1
      %p143 = scmp.lt.s32.totalorder %s14, 1
      %s144 = scalar_select %p143, %s14, 1
      %s145 = smul.addr %s144, 288
      %s146 = smul.addr %s145, 4
      %s147 = scalar_lea.vmem %s0, %s146
      %p148 = pneg %p35
      %p149 = pneg %p32
      %p150 = pneg %p56
      %p151 = pneg %p53
      %p152 = pneg %p77
      %p153 = pneg %p74
      %p154 = pneg %p103
      %p155 = pneg %p100
      %p156 = scmp.lt.s32.totalorder %s14, 1
      %s157 = scalar_select %p156, %s14, 1
      %s158 = smul.addr %s157, 16
      %s159 = smul.addr %s158, 4
      %s160 = scalar_lea.vmem %s3, %s159
      %p161 = scmp.lt.s32.totalorder %s14, 1
      %s162 = scalar_select %p161, %s14, 1
      %s163 = smul.addr %s162, 288
      %s164 = smul.addr %s163, 4
      %s165 = scalar_lea.vmem %s0, %s164
      %p166 = scmp.lt.s32.totalorder %s14, 1
      %s167 = scalar_select %p166, %s14, 1
      %s168 = smul.addr %s167, 16
      %s169 = smul.addr %s168, 4
      %s170 = scalar_lea.vmem %s3, %s169
      %v172 = vld [vmem:[%s1] sm:$0xff]
      %v173 = vld [vmem:[%s1 + $0x8] sm:$0xf]
      %v174 = vld [vmem:[%s1 + $0xc] sm:$0xff]
      %v175 = vld [vmem:[%s1 + $0x14] sm:$0xf]
      %v176 = vld [vmem:[%s1 + $0x18] sm:$0xff]
      %v177 = vld [vmem:[%s1 + $0x20] sm:$0xf]
      %v178 = vld [vmem:[%s1 + $0x24] sm:$0xff]
      %v179 = vld [vmem:[%s1 + $0x2c] sm:$0xf]
      %v180 = vld [vmem:[%s1 + $0x30] sm:$0xff]
      %v181 = vld [vmem:[%s1 + $0x38] sm:$0xf]
      %v182 = vld [vmem:[%s1 + $0x3c] sm:$0xff]
      %v183 = vld [vmem:[%s1 + $0x44] sm:$0xf]
      %v184 = vld [vmem:[%s1 + $0x48] sm:$0xff]
      %v185 = vld [vmem:[%s1 + $0x50] sm:$0xf]
      %v186 = vld [vmem:[%s1 + $0x54] sm:$0xff]
      %v187 = vld [vmem:[%s1 + $0x5c] sm:$0xf]
      %v188 = vld [vmem:[%s165] sm:$0xff]
      %v189 = vld [vmem:[%s165 + $0x8] sm:$0xff]
      %v190 = vld [vmem:[%s165 + $0x10] sm:$0xff]
      %v191 = vld [vmem:[%s165 + $0x18] sm:$0xff]
      %v192 = vld [vmem:[%s165 + $0x20] sm:$0xff]
      %v193 = vld [vmem:[%s165 + $0x28] sm:$0xff]
      %v194 = vld [vmem:[%s165 + $0x30] sm:$0xff]
      %v195 = vld [vmem:[%s165 + $0x38] sm:$0xff]
      %v196 = vld [vmem:[%s165 + $0x40] sm:$0xff]
      %v197 = vld [vmem:[%s165 + $0x48] sm:$0xff]
      %v198 = vld [vmem:[%s165 + $0x50] sm:$0xff]
      %v199 = vld [vmem:[%s165 + $0x58] sm:$0xff]
      %v200 = vld [vmem:[%s165 + $0x60] sm:$0xff]
      %v201 = vld [vmem:[%s165 + $0x68] sm:$0xff]
      %v202 = vld [vmem:[%s165 + $0x70] sm:$0xff]
      %v203 = vld [vmem:[%s165 + $0x78] sm:$0xff]
      %v204 = vld [vmem:[%s165 + $0x80] sm:$0xff]
      %v205 = vld [vmem:[%s165 + $0x88] sm:$0xff]
      %v206 = vld [vmem:[%s165 + $0x90] sm:$0xff]
      %v207 = vld [vmem:[%s165 + $0x98] sm:$0xff]
      %v208 = vld [vmem:[%s165 + $0xa0] sm:$0xff]
      %v209 = vld [vmem:[%s165 + $0xa8] sm:$0xff]
      %v210 = vld [vmem:[%s165 + $0xb0] sm:$0xff]
      %v211 = vld [vmem:[%s165 + $0xb8] sm:$0xff]
      %v212 = vld [vmem:[%s165 + $0xc0] sm:$0xff]
      %v213 = vld [vmem:[%s165 + $0xc8] sm:$0xff]
      %v214 = vld [vmem:[%s165 + $0xd0] sm:$0xff]
      %v215 = vld [vmem:[%s165 + $0xd8] sm:$0xff]
      %v216 = vld [vmem:[%s165 + $0xe0] sm:$0xff]
      %v217 = vld [vmem:[%s165 + $0xe8] sm:$0xff]
      %v218 = vld [vmem:[%s165 + $0xf0] sm:$0xff]
      %v219 = vld [vmem:[%s165 + $0xf8] sm:$0xff]
      %v220 = vld [vmem:[%s165 + $0x100] sm:$0xff]
      %v221 = vld [vmem:[%s165 + $0x108] sm:$0xff]
      %v222 = vld [vmem:[%s165 + $0x110] sm:$0xff]
      %v223 = vld [vmem:[%s165 + $0x118] sm:$0xff]
      %v240 = vunpack.c.l.b16 %v172
      %v241 = vunpack.c.h.b16 %v172
      %v242 = vunpack.c.l.b16 %v173
      %v243 = vunpack.c.l.b16 %v174
      %v244 = vunpack.c.h.b16 %v174
      %v245 = vunpack.c.l.b16 %v175
      %v246 = vunpack.c.l.b16 %v176
      %v247 = vunpack.c.h.b16 %v176
      %v248 = vunpack.c.l.b16 %v177
      %v249 = vunpack.c.l.b16 %v178
      %v250 = vunpack.c.h.b16 %v178
      %v251 = vunpack.c.l.b16 %v179
      %v252 = vunpack.c.l.b16 %v180
      %v253 = vunpack.c.h.b16 %v180
      %v254 = vunpack.c.l.b16 %v181
      %v255 = vunpack.c.l.b16 %v182
      %v256 = vunpack.c.h.b16 %v182
      %v257 = vunpack.c.l.b16 %v183
      %v258 = vunpack.c.l.b16 %v184
      %v259 = vunpack.c.h.b16 %v184
      %v260 = vunpack.c.l.b16 %v185
      %v261 = vunpack.c.l.b16 %v186
      %v262 = vunpack.c.h.b16 %v186
      %v263 = vunpack.c.l.b16 %v187
      %v264 = vpack.c.b16 %v243, %v240
      %v265 = vpack.c.b16 %v244, %v241
      %v266 = vpack.c.b16 %v245, %v242
      %v267 = vpack.c.b16 %v249, %v246
      %v268 = vpack.c.b16 %v250, %v247
      %v269 = vpack.c.b16 %v251, %v248
      %v270 = vpack.c.b16 %v255, %v252
      %v271 = vpack.c.b16 %v256, %v253
      %v272 = vpack.c.b16 %v257, %v254
      %v273 = vpack.c.b16 %v261, %v258
      %v274 = vpack.c.b16 %v262, %v259
      %v275 = vpack.c.b16 %v263, %v260
      %v320 = vunpack.c.l.b16 %v188
      %v321 = vunpack.c.h.b16 %v188
      %v322 = vunpack.c.l.b16 %v189
      %v323 = vunpack.c.h.b16 %v189
      %v324 = vunpack.c.l.b16 %v190
      %v325 = vunpack.c.h.b16 %v190
      %v326 = vunpack.c.l.b16 %v191
      %v327 = vunpack.c.h.b16 %v191
      %v328 = vunpack.c.l.b16 %v192
      %v329 = vunpack.c.h.b16 %v192
      %v330 = vunpack.c.l.b16 %v193
      %v331 = vunpack.c.h.b16 %v193
      %v332 = vunpack.c.l.b16 %v194
      %v333 = vunpack.c.h.b16 %v194
      %v334 = vunpack.c.l.b16 %v195
      %v335 = vunpack.c.h.b16 %v195
      %v336 = vunpack.c.l.b16 %v196
      %v337 = vunpack.c.h.b16 %v196
      %v338 = vunpack.c.l.b16 %v197
      %v339 = vunpack.c.h.b16 %v197
      %v340 = vunpack.c.l.b16 %v198
      %v341 = vunpack.c.h.b16 %v198
      %v342 = vunpack.c.l.b16 %v199
      %v343 = vunpack.c.h.b16 %v199
      %v344 = vunpack.c.l.b16 %v200
      %v345 = vunpack.c.h.b16 %v200
      %v346 = vunpack.c.l.b16 %v201
      %v347 = vunpack.c.h.b16 %v201
      %v348 = vunpack.c.l.b16 %v202
      %v349 = vunpack.c.h.b16 %v202
      %v350 = vunpack.c.l.b16 %v203
      %v351 = vunpack.c.h.b16 %v203
      %v352 = vunpack.c.l.b16 %v204
      %v353 = vunpack.c.h.b16 %v204
      %v354 = vunpack.c.l.b16 %v205
      %v355 = vunpack.c.h.b16 %v205
      %v356 = vunpack.c.l.b16 %v206
      %v357 = vunpack.c.h.b16 %v206
      %v358 = vunpack.c.l.b16 %v207
      %v359 = vunpack.c.h.b16 %v207
      %v360 = vunpack.c.l.b16 %v208
      %v361 = vunpack.c.h.b16 %v208
      %v362 = vunpack.c.l.b16 %v209
      %v363 = vunpack.c.h.b16 %v209
      %v364 = vunpack.c.l.b16 %v210
      %v365 = vunpack.c.h.b16 %v210
      %v366 = vunpack.c.l.b16 %v211
      %v367 = vunpack.c.h.b16 %v211
      %v368 = vunpack.c.l.b16 %v212
      %v369 = vunpack.c.h.b16 %v212
      %v370 = vunpack.c.l.b16 %v213
      %v371 = vunpack.c.h.b16 %v213
      %v372 = vunpack.c.l.b16 %v214
      %v373 = vunpack.c.h.b16 %v214
      %v374 = vunpack.c.l.b16 %v215
      %v375 = vunpack.c.h.b16 %v215
      %v376 = vunpack.c.l.b16 %v216
      %v377 = vunpack.c.h.b16 %v216
      %v378 = vunpack.c.l.b16 %v217
      %v379 = vunpack.c.h.b16 %v217
      %v380 = vunpack.c.l.b16 %v218
      %v381 = vunpack.c.h.b16 %v218
      %v382 = vunpack.c.l.b16 %v219
      %v383 = vunpack.c.h.b16 %v219
      %v384 = vunpack.c.l.b16 %v220
      %v385 = vunpack.c.h.b16 %v220
      %v386 = vunpack.c.l.b16 %v221
      %v387 = vunpack.c.h.b16 %v221
      %v388 = vunpack.c.l.b16 %v222
      %v389 = vunpack.c.h.b16 %v222
      %v390 = vunpack.c.l.b16 %v223
      %v391 = vunpack.c.h.b16 %v223
      %v392 = vpack.c.b16 %v322, %v320
      %v393 = vpack.c.b16 %v323, %v321
      %v394 = vpack.c.b16 %v326, %v324
      %v395 = vpack.c.b16 %v327, %v325
      %v396 = vpack.c.b16 %v330, %v328
      %v397 = vpack.c.b16 %v331, %v329
      %v398 = vpack.c.b16 %v334, %v332
      %v399 = vpack.c.b16 %v335, %v333
      %v400 = vpack.c.b16 %v338, %v336
      %v401 = vpack.c.b16 %v339, %v337
      %v402 = vpack.c.b16 %v342, %v340
      %v403 = vpack.c.b16 %v343, %v341
      %v404 = vpack.c.b16 %v346, %v344
      %v405 = vpack.c.b16 %v347, %v345
      %v406 = vpack.c.b16 %v350, %v348
      %v407 = vpack.c.b16 %v351, %v349
      %v408 = vpack.c.b16 %v354, %v352
      %v409 = vpack.c.b16 %v355, %v353
      %v410 = vpack.c.b16 %v358, %v356
      %v411 = vpack.c.b16 %v359, %v357
      %v412 = vpack.c.b16 %v362, %v360
      %v413 = vpack.c.b16 %v363, %v361
      %v414 = vpack.c.b16 %v366, %v364
      %v415 = vpack.c.b16 %v367, %v365
      %v416 = vpack.c.b16 %v370, %v368
      %v417 = vpack.c.b16 %v371, %v369
      %v418 = vpack.c.b16 %v374, %v372
      %v419 = vpack.c.b16 %v375, %v373
      %v420 = vpack.c.b16 %v378, %v376
      %v421 = vpack.c.b16 %v379, %v377
      %v422 = vpack.c.b16 %v382, %v380
      %v423 = vpack.c.b16 %v383, %v381
      %v424 = vpack.c.b16 %v386, %v384
      %v425 = vpack.c.b16 %v387, %v385
      %v426 = vpack.c.b16 %v390, %v388
      %v427 = vpack.c.b16 %v391, %v389
      %vm464 = vcmask 261120
      %v466 = vsel %vm464, %v266, 0
      %v469 = vsel %vm464, %v269, 0
      %v472 = vsel %vm464, %v272, 0
      %v475 = vsel %vm464, %v275, 0
      %477 = vmatprep.subr.bf16.mxu0 %v393
      %478 = vmatpush1.bf16.msra.mxu0 %v392
      %479 = vmatprep.subr.bf16.mxu0 %v395
      %480 = vmatpush1.bf16.msra.mxu0 %v394
      %481 = vmatprep.subr.bf16.mxu0 %v397
      %482 = vmatpush1.bf16.msra.mxu0 %v396
      %483 = vmatprep.subr.bf16.mxu0 %v399
      %484 = vmatpush1.bf16.msra.mxu0 %v398
      %485 = vmatprep.subr.bf16.mxu0 %v401
      %486 = vmatpush1.bf16.msra.mxu0 %v400
      %487 = vmatprep.subr.bf16.mxu0 %v403
      %488 = vmatpush1.bf16.msra.mxu0 %v402
      %489 = vmatprep.subr.bf16.mxu0 %v405
      %490 = vmatpush1.bf16.msra.mxu0 %v404
      %491 = vmatprep.subr.bf16.mxu0 %v407
      %492 = vmatpush1.bf16.msra.mxu0 %v406
      %493 = vmatprep.subr.bf16.mxu0 %v409
      %494 = vmatpush1.bf16.msra.mxu0 %v408
      %495 = vmatprep.subr.bf16.mxu0 %v411
      %496 = vmatpush1.bf16.msra.mxu0 %v410
      %497 = vmatprep.subr.bf16.mxu0 %v413
      %498 = vmatpush1.bf16.msra.mxu0 %v412
      %499 = vmatprep.subr.bf16.mxu0 %v415
      %500 = vmatpush1.bf16.msra.mxu0 %v414
      %501 = vmatprep.subr.bf16.mxu0 %v417
      %502 = vmatpush1.bf16.msra.mxu0 %v416
      %503 = vmatprep.subr.bf16.mxu0 %v419
      %504 = vmatpush1.bf16.msra.mxu0 %v418
      %505 = vmatprep.subr.bf16.mxu0 %v421
      %506 = vmatpush1.bf16.msra.mxu0 %v420
      %507 = vmatprep.subr.bf16.mxu0 %v423
      %508 = vmatpush1.bf16.msra.mxu0 %v422
      %509 = vmatprep.mubr.bf16.mxu0 %v265
      %510 = vmatmul.mubr.bf16.gmra.mrb[0].mxu0 %v264
      %v511 = vpop.f32.mrb[0].mxu0
      %v512 = vadd.f32 0.0, %v511
      %v513 = vpop.f32.mrb[0].mxu0
      %v514 = vadd.f32 0.0, %v513
      %v515 = vpop.f32.mrb[0].mxu0
      %v516 = vadd.f32 0.0, %v515
      %v517 = vpop.f32.mrb[0].mxu0
      %v518 = vadd.f32 0.0, %v517
      %519 = vmatprep.mubr.bf16.mxu0 %v268
      %520 = vmatmul.mubr.bf16.gmra.mrb[0].mxu0 %v267
      %v521 = vpop.f32.mrb[0].mxu0
      %v522 = vadd.f32 0.0, %v521
      %v523 = vpop.f32.mrb[0].mxu0
      %v524 = vadd.f32 0.0, %v523
      %v525 = vpop.f32.mrb[0].mxu0
      %v526 = vadd.f32 0.0, %v525
      %v527 = vpop.f32.mrb[0].mxu0
      %v528 = vadd.f32 0.0, %v527
      %529 = vmatprep.mubr.bf16.mxu0 %v271
      %530 = vmatmul.mubr.bf16.gmra.mrb[0].mxu0 %v270
      %v531 = vpop.f32.mrb[0].mxu0
      %v532 = vadd.f32 0.0, %v531
      %v533 = vpop.f32.mrb[0].mxu0
      %v534 = vadd.f32 0.0, %v533
      %v535 = vpop.f32.mrb[0].mxu0
      %v536 = vadd.f32 0.0, %v535
      %v537 = vpop.f32.mrb[0].mxu0
      %v538 = vadd.f32 0.0, %v537
      %539 = vmatprep.mubr.bf16.mxu0 %v274
      %540 = vmatmul.mubr.bf16.gmra.mrb[0].mxu0 %v273
      %v541 = vpop.f32.mrb[0].mxu0
      %v542 = vadd.f32 0.0, %v541
      %v543 = vpop.f32.mrb[0].mxu0
      %v544 = vadd.f32 0.0, %v543
      %v545 = vpop.f32.mrb[0].mxu0
      %v546 = vadd.f32 0.0, %v545
      %v547 = vpop.f32.mrb[0].mxu0
      %v548 = vadd.f32 0.0, %v547
      %549 = vdwg.mxu0
      %550 = vmatprep.subr.bf16.mxu0 %v425
      %551 = vmatpush1.bf16.msra.mxu0 %v424
      %552 = vmatprep.subr.bf16.mxu0 %v427
      %553 = vmatpush1.bf16.msra.mxu0 %v426
      %554 = vmatprep.subr.bf16.mxu0 0
      %555 = vmatpush1.bf16.msra.mxu0 0
      %556 = vmatprep.subr.bf16.mxu0 0
      %557 = vmatpush1.bf16.msra.mxu0 0
      %558 = vmatprep.subr.bf16.mxu0 0
      %559 = vmatpush1.bf16.msra.mxu0 0
      %560 = vmatprep.subr.bf16.mxu0 0
      %561 = vmatpush1.bf16.msra.mxu0 0
      %562 = vmatprep.subr.bf16.mxu0 0
      %563 = vmatpush1.bf16.msra.mxu0 0
      %564 = vmatprep.subr.bf16.mxu0 0
      %565 = vmatpush1.bf16.msra.mxu0 0
      %566 = vmatprep.subr.bf16.mxu0 0
      %567 = vmatpush1.bf16.msra.mxu0 0
      %568 = vmatprep.subr.bf16.mxu0 0
      %569 = vmatpush1.bf16.msra.mxu0 0
      %570 = vmatprep.subr.bf16.mxu0 0
      %571 = vmatpush1.bf16.msra.mxu0 0
      %572 = vmatprep.subr.bf16.mxu0 0
      %573 = vmatpush1.bf16.msra.mxu0 0
      %574 = vmatprep.subr.bf16.mxu0 0
      %575 = vmatpush1.bf16.msra.mxu0 0
      %576 = vmatprep.subr.bf16.mxu0 0
      %577 = vmatpush1.bf16.msra.mxu0 0
      %578 = vmatprep.subr.bf16.mxu0 0
      %579 = vmatpush1.bf16.msra.mxu0 0
      %580 = vmatprep.subr.bf16.mxu0 0
      %581 = vmatpush1.bf16.msra.mxu0 0
      %582 = vmatprep.mubr.bf16.mxu0 0
      %583 = vmatmul.mubr.bf16.gmra.mrb[0].mxu0 %v466
      %v584 = vpop.f32.mrb[0].mxu0
      %v585 = vadd.f32 %v512, %v584
      %v586 = vpop.f32.mrb[0].mxu0
      %v587 = vadd.f32 %v514, %v586
      %v588 = vpop.f32.mrb[0].mxu0
      %v589 = vadd.f32 %v516, %v588
      %v590 = vpop.f32.mrb[0].mxu0
      %v591 = vadd.f32 %v518, %v590
      %592 = vmatprep.mubr.bf16.mxu0 0
      %593 = vmatmul.mubr.bf16.gmra.mrb[0].mxu0 %v469
      %v594 = vpop.f32.mrb[0].mxu0
      %v595 = vadd.f32 %v522, %v594
      %v596 = vpop.f32.mrb[0].mxu0
      %v597 = vadd.f32 %v524, %v596
      %v598 = vpop.f32.mrb[0].mxu0
      %v599 = vadd.f32 %v526, %v598
      %v600 = vpop.f32.mrb[0].mxu0
      %v601 = vadd.f32 %v528, %v600
      %602 = vmatprep.mubr.bf16.mxu0 0
      %603 = vmatmul.mubr.bf16.gmra.mrb[0].mxu0 %v472
      %v604 = vpop.f32.mrb[0].mxu0
      %v605 = vadd.f32 %v532, %v604
      %v606 = vpop.f32.mrb[0].mxu0
      %v607 = vadd.f32 %v534, %v606
      %v608 = vpop.f32.mrb[0].mxu0
      %v609 = vadd.f32 %v536, %v608
      %v610 = vpop.f32.mrb[0].mxu0
      %v611 = vadd.f32 %v538, %v610
      %612 = vmatprep.mubr.bf16.mxu0 0
      %613 = vmatmul.mubr.bf16.gmra.mrb[0].mxu0 %v475
      %v614 = vpop.f32.mrb[0].mxu0
      %v615 = vadd.f32 %v542, %v614
      %v616 = vpop.f32.mrb[0].mxu0
      %v617 = vadd.f32 %v544, %v616
      %v618 = vpop.f32.mrb[0].mxu0
      %v619 = vadd.f32 %v546, %v618
      %v620 = vpop.f32.mrb[0].mxu0
      %v621 = vadd.f32 %v548, %v620
      %622 = vdwg.mxu0
      %s623 = scalar_lea.vmem %s165, 288
      %v624 = vld [vmem:[%s623] sm:$0xff]
      %v625 = vld [vmem:[%s623 + $0x8] sm:$0xff]
      %v626 = vld [vmem:[%s623 + $0x10] sm:$0xff]
      %v627 = vld [vmem:[%s623 + $0x18] sm:$0xff]
      %v628 = vld [vmem:[%s623 + $0x20] sm:$0xff]
      %v629 = vld [vmem:[%s623 + $0x28] sm:$0xff]
      %v630 = vld [vmem:[%s623 + $0x30] sm:$0xff]
      %v631 = vld [vmem:[%s623 + $0x38] sm:$0xff]
      %v632 = vld [vmem:[%s623 + $0x40] sm:$0xff]
      %v633 = vld [vmem:[%s623 + $0x48] sm:$0xff]
      %v634 = vld [vmem:[%s623 + $0x50] sm:$0xff]
      %v635 = vld [vmem:[%s623 + $0x58] sm:$0xff]
      %v636 = vld [vmem:[%s623 + $0x60] sm:$0xff]
      %v637 = vld [vmem:[%s623 + $0x68] sm:$0xff]
      %v638 = vld [vmem:[%s623 + $0x70] sm:$0xff]
      %v639 = vld [vmem:[%s623 + $0x78] sm:$0xff]
      %v640 = vld [vmem:[%s623 + $0x80] sm:$0xff]
      %v641 = vld [vmem:[%s623 + $0x88] sm:$0xff]
      %v642 = vld [vmem:[%s623 + $0x90] sm:$0xff]
      %v643 = vld [vmem:[%s623 + $0x98] sm:$0xff]
      %v644 = vld [vmem:[%s623 + $0xa0] sm:$0xff]
      %v645 = vld [vmem:[%s623 + $0xa8] sm:$0xff]
      %v646 = vld [vmem:[%s623 + $0xb0] sm:$0xff]
      %v647 = vld [vmem:[%s623 + $0xb8] sm:$0xff]
      %v648 = vld [vmem:[%s623 + $0xc0] sm:$0xff]
      %v649 = vld [vmem:[%s623 + $0xc8] sm:$0xff]
      %v650 = vld [vmem:[%s623 + $0xd0] sm:$0xff]
      %v651 = vld [vmem:[%s623 + $0xd8] sm:$0xff]
      %v652 = vld [vmem:[%s623 + $0xe0] sm:$0xff]
      %v653 = vld [vmem:[%s623 + $0xe8] sm:$0xff]
      %v654 = vld [vmem:[%s623 + $0xf0] sm:$0xff]
      %v655 = vld [vmem:[%s623 + $0xf8] sm:$0xff]
      %v656 = vld [vmem:[%s623 + $0x100] sm:$0xff]
      %v657 = vld [vmem:[%s623 + $0x108] sm:$0xff]
      %v658 = vld [vmem:[%s623 + $0x110] sm:$0xff]
      %v659 = vld [vmem:[%s623 + $0x118] sm:$0xff]
      %v696 = vunpack.c.l.b16 %v624
      %v697 = vunpack.c.h.b16 %v624
      %v698 = vunpack.c.l.b16 %v625
      %v699 = vunpack.c.h.b16 %v625
      %v700 = vunpack.c.l.b16 %v626
      %v701 = vunpack.c.h.b16 %v626
      %v702 = vunpack.c.l.b16 %v627
      %v703 = vunpack.c.h.b16 %v627
      %v704 = vunpack.c.l.b16 %v628
      %v705 = vunpack.c.h.b16 %v628
      %v706 = vunpack.c.l.b16 %v629
      %v707 = vunpack.c.h.b16 %v629
      %v708 = vunpack.c.l.b16 %v630
      %v709 = vunpack.c.h.b16 %v630
      %v710 = vunpack.c.l.b16 %v631
      %v711 = vunpack.c.h.b16 %v631
      %v712 = vunpack.c.l.b16 %v632
      %v713 = vunpack.c.h.b16 %v632
      %v714 = vunpack.c.l.b16 %v633
      %v715 = vunpack.c.h.b16 %v633
      %v716 = vunpack.c.l.b16 %v634
      %v717 = vunpack.c.h.b16 %v634
      %v718 = vunpack.c.l.b16 %v635
      %v719 = vunpack.c.h.b16 %v635
      %v720 = vunpack.c.l.b16 %v636
      %v721 = vunpack.c.h.b16 %v636
      %v722 = vunpack.c.l.b16 %v637
      %v723 = vunpack.c.h.b16 %v637
      %v724 = vunpack.c.l.b16 %v638
      %v725 = vunpack.c.h.b16 %v638
      %v726 = vunpack.c.l.b16 %v639
      %v727 = vunpack.c.h.b16 %v639
      %v728 = vunpack.c.l.b16 %v640
      %v729 = vunpack.c.h.b16 %v640
      %v730 = vunpack.c.l.b16 %v641
      %v731 = vunpack.c.h.b16 %v641
      %v732 = vunpack.c.l.b16 %v642
      %v733 = vunpack.c.h.b16 %v642
      %v734 = vunpack.c.l.b16 %v643
      %v735 = vunpack.c.h.b16 %v643
      %v736 = vunpack.c.l.b16 %v644
      %v737 = vunpack.c.h.b16 %v644
      %v738 = vunpack.c.l.b16 %v645
      %v739 = vunpack.c.h.b16 %v645
      %v740 = vunpack.c.l.b16 %v646
      %v741 = vunpack.c.h.b16 %v646
      %v742 = vunpack.c.l.b16 %v647
      %v743 = vunpack.c.h.b16 %v647
      %v744 = vunpack.c.l.b16 %v648
      %v745 = vunpack.c.h.b16 %v648
      %v746 = vunpack.c.l.b16 %v649
      %v747 = vunpack.c.h.b16 %v649
      %v748 = vunpack.c.l.b16 %v650
      %v749 = vunpack.c.h.b16 %v650
      %v750 = vunpack.c.l.b16 %v651
      %v751 = vunpack.c.h.b16 %v651
      %v752 = vunpack.c.l.b16 %v652
      %v753 = vunpack.c.h.b16 %v652
      %v754 = vunpack.c.l.b16 %v653
      %v755 = vunpack.c.h.b16 %v653
      %v756 = vunpack.c.l.b16 %v654
      %v757 = vunpack.c.h.b16 %v654
      %v758 = vunpack.c.l.b16 %v655
      %v759 = vunpack.c.h.b16 %v655
      %v760 = vunpack.c.l.b16 %v656
      %v761 = vunpack.c.h.b16 %v656
      %v762 = vunpack.c.l.b16 %v657
      %v763 = vunpack.c.h.b16 %v657
      %v764 = vunpack.c.l.b16 %v658
      %v765 = vunpack.c.h.b16 %v658
      %v766 = vunpack.c.l.b16 %v659
      %v767 = vunpack.c.h.b16 %v659
      %v768 = vpack.c.b16 %v698, %v696
      %v769 = vpack.c.b16 %v699, %v697
      %v770 = vpack.c.b16 %v702, %v700
      %v771 = vpack.c.b16 %v703, %v701
      %v772 = vpack.c.b16 %v706, %v704
      %v773 = vpack.c.b16 %v707, %v705
      %v774 = vpack.c.b16 %v710, %v708
      %v775 = vpack.c.b16 %v711, %v709
      %v776 = vpack.c.b16 %v714, %v712
      %v777 = vpack.c.b16 %v715, %v713
      %v778 = vpack.c.b16 %v718, %v716
      %v779 = vpack.c.b16 %v719, %v717
      %v780 = vpack.c.b16 %v722, %v720
      %v781 = vpack.c.b16 %v723, %v721
      %v782 = vpack.c.b16 %v726, %v724
      %v783 = vpack.c.b16 %v727, %v725
      %v784 = vpack.c.b16 %v730, %v728
      %v785 = vpack.c.b16 %v731, %v729
      %v786 = vpack.c.b16 %v734, %v732
      %v787 = vpack.c.b16 %v735, %v733
      %v788 = vpack.c.b16 %v738, %v736
      %v789 = vpack.c.b16 %v739, %v737
      %v790 = vpack.c.b16 %v742, %v740
      %v791 = vpack.c.b16 %v743, %v741
      %v792 = vpack.c.b16 %v746, %v744
      %v793 = vpack.c.b16 %v747, %v745
      %v794 = vpack.c.b16 %v750, %v748
      %v795 = vpack.c.b16 %v751, %v749
      %v796 = vpack.c.b16 %v754, %v752
      %v797 = vpack.c.b16 %v755, %v753
      %v798 = vpack.c.b16 %v758, %v756
      %v799 = vpack.c.b16 %v759, %v757
      %v800 = vpack.c.b16 %v762, %v760
      %v801 = vpack.c.b16 %v763, %v761
      %v802 = vpack.c.b16 %v766, %v764
      %v803 = vpack.c.b16 %v767, %v765
      %840 = vmatprep.subr.bf16.mxu0 %v769
      %841 = vmatpush1.bf16.msra.mxu0 %v768
      %842 = vmatprep.subr.bf16.mxu0 %v771
      %843 = vmatpush1.bf16.msra.mxu0 %v770
      %844 = vmatprep.subr.bf16.mxu0 %v773
      %845 = vmatpush1.bf16.msra.mxu0 %v772
      %846 = vmatprep.subr.bf16.mxu0 %v775
      %847 = vmatpush1.bf16.msra.mxu0 %v774
      %848 = vmatprep.subr.bf16.mxu0 %v777
      %849 = vmatpush1.bf16.msra.mxu0 %v776
      %850 = vmatprep.subr.bf16.mxu0 %v779
      %851 = vmatpush1.bf16.msra.mxu0 %v778
      %852 = vmatprep.subr.bf16.mxu0 %v781
      %853 = vmatpush1.bf16.msra.mxu0 %v780
      %854 = vmatprep.subr.bf16.mxu0 %v783
      %855 = vmatpush1.bf16.msra.mxu0 %v782
      %856 = vmatprep.subr.bf16.mxu0 %v785
      %857 = vmatpush1.bf16.msra.mxu0 %v784
      %858 = vmatprep.subr.bf16.mxu0 %v787
      %859 = vmatpush1.bf16.msra.mxu0 %v786
      %860 = vmatprep.subr.bf16.mxu0 %v789
      %861 = vmatpush1.bf16.msra.mxu0 %v788
      %862 = vmatprep.subr.bf16.mxu0 %v791
      %863 = vmatpush1.bf16.msra.mxu0 %v790
      %864 = vmatprep.subr.bf16.mxu0 %v793
      %865 = vmatpush1.bf16.msra.mxu0 %v792
      %866 = vmatprep.subr.bf16.mxu0 %v795
      %867 = vmatpush1.bf16.msra.mxu0 %v794
      %868 = vmatprep.subr.bf16.mxu0 %v797
      %869 = vmatpush1.bf16.msra.mxu0 %v796
      %870 = vmatprep.subr.bf16.mxu0 %v799
      %871 = vmatpush1.bf16.msra.mxu0 %v798
      %872 = vmatprep.mubr.bf16.mxu0 %v265
      %873 = vmatmul.mubr.bf16.gmra.mrb[0].mxu0 %v264
      %v874 = vpop.f32.mrb[0].mxu0
      %v875 = vadd.f32 0.0, %v874
      %v876 = vpop.f32.mrb[0].mxu0
      %v877 = vadd.f32 0.0, %v876
      %v878 = vpop.f32.mrb[0].mxu0
      %v879 = vadd.f32 0.0, %v878
      %v880 = vpop.f32.mrb[0].mxu0
      %v881 = vadd.f32 0.0, %v880
      %882 = vmatprep.mubr.bf16.mxu0 %v268
      %883 = vmatmul.mubr.bf16.gmra.mrb[0].mxu0 %v267
      %v884 = vpop.f32.mrb[0].mxu0
      %v885 = vadd.f32 0.0, %v884
      %v886 = vpop.f32.mrb[0].mxu0
      %v887 = vadd.f32 0.0, %v886
      %v888 = vpop.f32.mrb[0].mxu0
      %v889 = vadd.f32 0.0, %v888
      %v890 = vpop.f32.mrb[0].mxu0
      %v891 = vadd.f32 0.0, %v890
      %892 = vmatprep.mubr.bf16.mxu0 %v271
      %893 = vmatmul.mubr.bf16.gmra.mrb[0].mxu0 %v270
      %v894 = vpop.f32.mrb[0].mxu0
      %v895 = vadd.f32 0.0, %v894
      %v896 = vpop.f32.mrb[0].mxu0
      %v897 = vadd.f32 0.0, %v896
      %v898 = vpop.f32.mrb[0].mxu0
      %v899 = vadd.f32 0.0, %v898
      %v900 = vpop.f32.mrb[0].mxu0
      %v901 = vadd.f32 0.0, %v900
      %902 = vmatprep.mubr.bf16.mxu0 %v274
      %903 = vmatmul.mubr.bf16.gmra.mrb[0].mxu0 %v273
      %v904 = vpop.f32.mrb[0].mxu0
      %v905 = vadd.f32 0.0, %v904
      %v906 = vpop.f32.mrb[0].mxu0
      %v907 = vadd.f32 0.0, %v906
      %v908 = vpop.f32.mrb[0].mxu0
      %v909 = vadd.f32 0.0, %v908
      %v910 = vpop.f32.mrb[0].mxu0
      %v911 = vadd.f32 0.0, %v910
      %912 = vdwg.mxu0
      %913 = vmatprep.subr.bf16.mxu0 %v801
      %914 = vmatpush1.bf16.msra.mxu0 %v800
      %915 = vmatprep.subr.bf16.mxu0 %v803
      %916 = vmatpush1.bf16.msra.mxu0 %v802
      %917 = vmatprep.subr.bf16.mxu0 0
      %918 = vmatpush1.bf16.msra.mxu0 0
      %919 = vmatprep.subr.bf16.mxu0 0
      %920 = vmatpush1.bf16.msra.mxu0 0
      %921 = vmatprep.subr.bf16.mxu0 0
      %922 = vmatpush1.bf16.msra.mxu0 0
      %923 = vmatprep.subr.bf16.mxu0 0
      %924 = vmatpush1.bf16.msra.mxu0 0
      %925 = vmatprep.subr.bf16.mxu0 0
      %926 = vmatpush1.bf16.msra.mxu0 0
      %927 = vmatprep.subr.bf16.mxu0 0
      %928 = vmatpush1.bf16.msra.mxu0 0
      %929 = vmatprep.subr.bf16.mxu0 0
      %930 = vmatpush1.bf16.msra.mxu0 0
      %931 = vmatprep.subr.bf16.mxu0 0
      %932 = vmatpush1.bf16.msra.mxu0 0
      %933 = vmatprep.subr.bf16.mxu0 0
      %934 = vmatpush1.bf16.msra.mxu0 0
      %935 = vmatprep.subr.bf16.mxu0 0
      %936 = vmatpush1.bf16.msra.mxu0 0
      %937 = vmatprep.subr.bf16.mxu0 0
      %938 = vmatpush1.bf16.msra.mxu0 0
      %939 = vmatprep.subr.bf16.mxu0 0
      %940 = vmatpush1.bf16.msra.mxu0 0
      %941 = vmatprep.subr.bf16.mxu0 0
      %942 = vmatpush1.bf16.msra.mxu0 0
      %943 = vmatprep.subr.bf16.mxu0 0
      %944 = vmatpush1.bf16.msra.mxu0 0
      %945 = vmatprep.mubr.bf16.mxu0 0
      %946 = vmatmul.mubr.bf16.gmra.mrb[0].mxu0 %v466
      %v947 = vpop.f32.mrb[0].mxu0
      %v948 = vadd.f32 %v875, %v947
      %v949 = vpop.f32.mrb[0].mxu0
      %v950 = vadd.f32 %v877, %v949
      %v951 = vpop.f32.mrb[0].mxu0
      %v952 = vadd.f32 %v879, %v951
      %v953 = vpop.f32.mrb[0].mxu0
      %v954 = vadd.f32 %v881, %v953
      %955 = vmatprep.mubr.bf16.mxu0 0
      %956 = vmatmul.mubr.bf16.gmra.mrb[0].mxu0 %v469
      %v957 = vpop.f32.mrb[0].mxu0
      %v958 = vadd.f32 %v885, %v957
      %v959 = vpop.f32.mrb[0].mxu0
      %v960 = vadd.f32 %v887, %v959
      %v961 = vpop.f32.mrb[0].mxu0
      %v962 = vadd.f32 %v889, %v961
      %v963 = vpop.f32.mrb[0].mxu0
      %v964 = vadd.f32 %v891, %v963
      %965 = vmatprep.mubr.bf16.mxu0 0
      %966 = vmatmul.mubr.bf16.gmra.mrb[0].mxu0 %v472
      %v967 = vpop.f32.mrb[0].mxu0
      %v968 = vadd.f32 %v895, %v967
      %v969 = vpop.f32.mrb[0].mxu0
      %v970 = vadd.f32 %v897, %v969
      %v971 = vpop.f32.mrb[0].mxu0
      %v972 = vadd.f32 %v899, %v971
      %v973 = vpop.f32.mrb[0].mxu0
      %v974 = vadd.f32 %v901, %v973
      %975 = vmatprep.mubr.bf16.mxu0 0
      %976 = vmatmul.mubr.bf16.gmra.mrb[0].mxu0 %v475
      %v977 = vpop.f32.mrb[0].mxu0
      %v978 = vadd.f32 %v905, %v977
      %v979 = vpop.f32.mrb[0].mxu0
      %v980 = vadd.f32 %v907, %v979
      %v981 = vpop.f32.mrb[0].mxu0
      %v982 = vadd.f32 %v909, %v981
      %v983 = vpop.f32.mrb[0].mxu0
      %v984 = vadd.f32 %v911, %v983
      %985 = vdwg.mxu0
      %v986 = vmax.f32 %v585, %v948
      %v987 = vmax.f32 %v587, %v950
      %v988 = vmax.f32 %v589, %v952
      %v989 = vmax.f32 %v591, %v954
      %v990 = vmax.f32 %v595, %v958
      %v991 = vmax.f32 %v597, %v960
      %v992 = vmax.f32 %v599, %v962
      %v993 = vmax.f32 %v601, %v964
      %v994 = vmax.f32 %v605, %v968
      %v995 = vmax.f32 %v607, %v970
      %v996 = vmax.f32 %v609, %v972
      %v997 = vmax.f32 %v611, %v974
      %v998 = vmax.f32 %v615, %v978
      %v999 = vmax.f32 %v617, %v980
      %v1000 = vmax.f32 %v619, %v982
      %v1001 = vmax.f32 %v621, %v984
      %s1002 = scalar_lea.vmem %s165, 576
      %v1003 = vld [vmem:[%s1002] sm:$0xff]
      %v1004 = vld [vmem:[%s1002 + $0x8] sm:$0xff]
      %v1005 = vld [vmem:[%s1002 + $0x10] sm:$0xff]
      %v1006 = vld [vmem:[%s1002 + $0x18] sm:$0xff]
      %v1007 = vld [vmem:[%s1002 + $0x20] sm:$0xff]
      %v1008 = vld [vmem:[%s1002 + $0x28] sm:$0xff]
      %v1009 = vld [vmem:[%s1002 + $0x30] sm:$0xff]
      %v1010 = vld [vmem:[%s1002 + $0x38] sm:$0xff]
      %v1011 = vld [vmem:[%s1002 + $0x40] sm:$0xff]
      %v1012 = vld [vmem:[%s1002 + $0x48] sm:$0xff]
      %v1013 = vld [vmem:[%s1002 + $0x50] sm:$0xff]
      %v1014 = vld [vmem:[%s1002 + $0x58] sm:$0xff]
      %v1015 = vld [vmem:[%s1002 + $0x60] sm:$0xff]
      %v1016 = vld [vmem:[%s1002 + $0x68] sm:$0xff]
      %v1017 = vld [vmem:[%s1002 + $0x70] sm:$0xff]
      %v1018 = vld [vmem:[%s1002 + $0x78] sm:$0xff]
      %v1019 = vld [vmem:[%s1002 + $0x80] sm:$0xff]
      %v1020 = vld [vmem:[%s1002 + $0x88] sm:$0xff]
      %v1021 = vld [vmem:[%s1002 + $0x90] sm:$0xff]
      %v1022 = vld [vmem:[%s1002 + $0x98] sm:$0xff]
      %v1023 = vld [vmem:[%s1002 + $0xa0] sm:$0xff]
      %v1024 = vld [vmem:[%s1002 + $0xa8] sm:$0xff]
      %v1025 = vld [vmem:[%s1002 + $0xb0] sm:$0xff]
      %v1026 = vld [vmem:[%s1002 + $0xb8] sm:$0xff]
      %v1027 = vld [vmem:[%s1002 + $0xc0] sm:$0xff]
      %v1028 = vld [vmem:[%s1002 + $0xc8] sm:$0xff]
      %v1029 = vld [vmem:[%s1002 + $0xd0] sm:$0xff]
      %v1030 = vld [vmem:[%s1002 + $0xd8] sm:$0xff]
      %v1031 = vld [vmem:[%s1002 + $0xe0] sm:$0xff]
      %v1032 = vld [vmem:[%s1002 + $0xe8] sm:$0xff]
      %v1033 = vld [vmem:[%s1002 + $0xf0] sm:$0xff]
      %v1034 = vld [vmem:[%s1002 + $0xf8] sm:$0xff]
      %v1035 = vld [vmem:[%s1002 + $0x100] sm:$0xff]
      %v1036 = vld [vmem:[%s1002 + $0x108] sm:$0xff]
      %v1037 = vld [vmem:[%s1002 + $0x110] sm:$0xff]
      %v1038 = vld [vmem:[%s1002 + $0x118] sm:$0xff]
      %v1075 = vunpack.c.l.b16 %v1003
      %v1076 = vunpack.c.h.b16 %v1003
      %v1077 = vunpack.c.l.b16 %v1004
      %v1078 = vunpack.c.h.b16 %v1004
      %v1079 = vunpack.c.l.b16 %v1005
      %v1080 = vunpack.c.h.b16 %v1005
      %v1081 = vunpack.c.l.b16 %v1006
      %v1082 = vunpack.c.h.b16 %v1006
      %v1083 = vunpack.c.l.b16 %v1007
      %v1084 = vunpack.c.h.b16 %v1007
      %v1085 = vunpack.c.l.b16 %v1008
      %v1086 = vunpack.c.h.b16 %v1008
      %v1087 = vunpack.c.l.b16 %v1009
      %v1088 = vunpack.c.h.b16 %v1009
      %v1089 = vunpack.c.l.b16 %v1010
      %v1090 = vunpack.c.h.b16 %v1010
      %v1091 = vunpack.c.l.b16 %v1011
      %v1092 = vunpack.c.h.b16 %v1011
      %v1093 = vunpack.c.l.b16 %v1012
      %v1094 = vunpack.c.h.b16 %v1012
      %v1095 = vunpack.c.l.b16 %v1013
      %v1096 = vunpack.c.h.b16 %v1013
      %v1097 = vunpack.c.l.b16 %v1014
      %v1098 = vunpack.c.h.b16 %v1014
      %v1099 = vunpack.c.l.b16 %v1015
      %v1100 = vunpack.c.h.b16 %v1015
      %v1101 = vunpack.c.l.b16 %v1016
      %v1102 = vunpack.c.h.b16 %v1016
      %v1103 = vunpack.c.l.b16 %v1017
      %v1104 = vunpack.c.h.b16 %v1017
      %v1105 = vunpack.c.l.b16 %v1018
      %v1106 = vunpack.c.h.b16 %v1018
      %v1107 = vunpack.c.l.b16 %v1019
      %v1108 = vunpack.c.h.b16 %v1019
      %v1109 = vunpack.c.l.b16 %v1020
      %v1110 = vunpack.c.h.b16 %v1020
      %v1111 = vunpack.c.l.b16 %v1021
      %v1112 = vunpack.c.h.b16 %v1021
      %v1113 = vunpack.c.l.b16 %v1022
      %v1114 = vunpack.c.h.b16 %v1022
      %v1115 = vunpack.c.l.b16 %v1023
      %v1116 = vunpack.c.h.b16 %v1023
      %v1117 = vunpack.c.l.b16 %v1024
      %v1118 = vunpack.c.h.b16 %v1024
      %v1119 = vunpack.c.l.b16 %v1025
      %v1120 = vunpack.c.h.b16 %v1025
      %v1121 = vunpack.c.l.b16 %v1026
      %v1122 = vunpack.c.h.b16 %v1026
      %v1123 = vunpack.c.l.b16 %v1027
      %v1124 = vunpack.c.h.b16 %v1027
      %v1125 = vunpack.c.l.b16 %v1028
      %v1126 = vunpack.c.h.b16 %v1028
      %v1127 = vunpack.c.l.b16 %v1029
      %v1128 = vunpack.c.h.b16 %v1029
      %v1129 = vunpack.c.l.b16 %v1030
      %v1130 = vunpack.c.h.b16 %v1030
      %v1131 = vunpack.c.l.b16 %v1031
      %v1132 = vunpack.c.h.b16 %v1031
      %v1133 = vunpack.c.l.b16 %v1032
      %v1134 = vunpack.c.h.b16 %v1032
      %v1135 = vunpack.c.l.b16 %v1033
      %v1136 = vunpack.c.h.b16 %v1033
      %v1137 = vunpack.c.l.b16 %v1034
      %v1138 = vunpack.c.h.b16 %v1034
      %v1139 = vunpack.c.l.b16 %v1035
      %v1140 = vunpack.c.h.b16 %v1035
      %v1141 = vunpack.c.l.b16 %v1036
      %v1142 = vunpack.c.h.b16 %v1036
      %v1143 = vunpack.c.l.b16 %v1037
      %v1144 = vunpack.c.h.b16 %v1037
      %v1145 = vunpack.c.l.b16 %v1038
      %v1146 = vunpack.c.h.b16 %v1038
      %v1147 = vpack.c.b16 %v1077, %v1075
      %v1148 = vpack.c.b16 %v1078, %v1076
      %v1149 = vpack.c.b16 %v1081, %v1079
      %v1150 = vpack.c.b16 %v1082, %v1080
      %v1151 = vpack.c.b16 %v1085, %v1083
      %v1152 = vpack.c.b16 %v1086, %v1084
      %v1153 = vpack.c.b16 %v1089, %v1087
      %v1154 = vpack.c.b16 %v1090, %v1088
      %v1155 = vpack.c.b16 %v1093, %v1091
      %v1156 = vpack.c.b16 %v1094, %v1092
      %v1157 = vpack.c.b16 %v1097, %v1095
      %v1158 = vpack.c.b16 %v1098, %v1096
      %v1159 = vpack.c.b16 %v1101, %v1099
      %v1160 = vpack.c.b16 %v1102, %v1100
      %v1161 = vpack.c.b16 %v1105, %v1103
      %v1162 = vpack.c.b16 %v1106, %v1104
      %v1163 = vpack.c.b16 %v1109, %v1107
      %v1164 = vpack.c.b16 %v1110, %v1108
      %v1165 = vpack.c.b16 %v1113, %v1111
      %v1166 = vpack.c.b16 %v1114, %v1112
      %v1167 = vpack.c.b16 %v1117, %v1115
      %v1168 = vpack.c.b16 %v1118, %v1116
      %v1169 = vpack.c.b16 %v1121, %v1119
      %v1170 = vpack.c.b16 %v1122, %v1120
      %v1171 = vpack.c.b16 %v1125, %v1123
      %v1172 = vpack.c.b16 %v1126, %v1124
      %v1173 = vpack.c.b16 %v1129, %v1127
      %v1174 = vpack.c.b16 %v1130, %v1128
      %v1175 = vpack.c.b16 %v1133, %v1131
      %v1176 = vpack.c.b16 %v1134, %v1132
      %v1177 = vpack.c.b16 %v1137, %v1135
      %v1178 = vpack.c.b16 %v1138, %v1136
      %v1179 = vpack.c.b16 %v1141, %v1139
      %v1180 = vpack.c.b16 %v1142, %v1140
      %v1181 = vpack.c.b16 %v1145, %v1143
      %v1182 = vpack.c.b16 %v1146, %v1144
      %1219 = vmatprep.subr.bf16.mxu0 %v1148
      %1220 = vmatpush1.bf16.msra.mxu0 %v1147
      %1221 = vmatprep.subr.bf16.mxu0 %v1150
      %1222 = vmatpush1.bf16.msra.mxu0 %v1149
      %1223 = vmatprep.subr.bf16.mxu0 %v1152
      %1224 = vmatpush1.bf16.msra.mxu0 %v1151
      %1225 = vmatprep.subr.bf16.mxu0 %v1154
      %1226 = vmatpush1.bf16.msra.mxu0 %v1153
      %1227 = vmatprep.subr.bf16.mxu0 %v1156
      %1228 = vmatpush1.bf16.msra.mxu0 %v1155
      %1229 = vmatprep.subr.bf16.mxu0 %v1158
      %1230 = vmatpush1.bf16.msra.mxu0 %v1157
      %1231 = vmatprep.subr.bf16.mxu0 %v1160
      %1232 = vmatpush1.bf16.msra.mxu0 %v1159
      %1233 = vmatprep.subr.bf16.mxu0 %v1162
      %1234 = vmatpush1.bf16.msra.mxu0 %v1161
      %1235 = vmatprep.subr.bf16.mxu0 %v1164
      %1236 = vmatpush1.bf16.msra.mxu0 %v1163
      %1237 = vmatprep.subr.bf16.mxu0 %v1166
      %1238 = vmatpush1.bf16.msra.mxu0 %v1165
      %1239 = vmatprep.subr.bf16.mxu0 %v1168
      %1240 = vmatpush1.bf16.msra.mxu0 %v1167
      %1241 = vmatprep.subr.bf16.mxu0 %v1170
      %1242 = vmatpush1.bf16.msra.mxu0 %v1169
      %1243 = vmatprep.subr.bf16.mxu0 %v1172
      %1244 = vmatpush1.bf16.msra.mxu0 %v1171
      %1245 = vmatprep.subr.bf16.mxu0 %v1174
      %1246 = vmatpush1.bf16.msra.mxu0 %v1173
      %1247 = vmatprep.subr.bf16.mxu0 %v1176
      %1248 = vmatpush1.bf16.msra.mxu0 %v1175
      %1249 = vmatprep.subr.bf16.mxu0 %v1178
      %1250 = vmatpush1.bf16.msra.mxu0 %v1177
      %1251 = vmatprep.mubr.bf16.mxu0 %v265
      %1252 = vmatmul.mubr.bf16.gmra.mrb[0].mxu0 %v264
      %v1253 = vpop.f32.mrb[0].mxu0
      %v1254 = vadd.f32 0.0, %v1253
      %v1255 = vpop.f32.mrb[0].mxu0
      %v1256 = vadd.f32 0.0, %v1255
      %v1257 = vpop.f32.mrb[0].mxu0
      %v1258 = vadd.f32 0.0, %v1257
      %v1259 = vpop.f32.mrb[0].mxu0
      %v1260 = vadd.f32 0.0, %v1259
      %1261 = vmatprep.mubr.bf16.mxu0 %v268
      %1262 = vmatmul.mubr.bf16.gmra.mrb[0].mxu0 %v267
      %v1263 = vpop.f32.mrb[0].mxu0
      %v1264 = vadd.f32 0.0, %v1263
      %v1265 = vpop.f32.mrb[0].mxu0
      %v1266 = vadd.f32 0.0, %v1265
      %v1267 = vpop.f32.mrb[0].mxu0
      %v1268 = vadd.f32 0.0, %v1267
      %v1269 = vpop.f32.mrb[0].mxu0
      %v1270 = vadd.f32 0.0, %v1269
      %1271 = vmatprep.mubr.bf16.mxu0 %v271
      %1272 = vmatmul.mubr.bf16.gmra.mrb[0].mxu0 %v270
      %v1273 = vpop.f32.mrb[0].mxu0
      %v1274 = vadd.f32 0.0, %v1273
      %v1275 = vpop.f32.mrb[0].mxu0
      %v1276 = vadd.f32 0.0, %v1275
      %v1277 = vpop.f32.mrb[0].mxu0
      %v1278 = vadd.f32 0.0, %v1277
      %v1279 = vpop.f32.mrb[0].mxu0
      %v1280 = vadd.f32 0.0, %v1279
      %1281 = vmatprep.mubr.bf16.mxu0 %v274
      %1282 = vmatmul.mubr.bf16.gmra.mrb[0].mxu0 %v273
      %v1283 = vpop.f32.mrb[0].mxu0
      %v1284 = vadd.f32 0.0, %v1283
      %v1285 = vpop.f32.mrb[0].mxu0
      %v1286 = vadd.f32 0.0, %v1285
      %v1287 = vpop.f32.mrb[0].mxu0
      %v1288 = vadd.f32 0.0, %v1287
      %v1289 = vpop.f32.mrb[0].mxu0
      %v1290 = vadd.f32 0.0, %v1289
      %1291 = vdwg.mxu0
      %1292 = vmatprep.subr.bf16.mxu0 %v1180
      %1293 = vmatpush1.bf16.msra.mxu0 %v1179
      %1294 = vmatprep.subr.bf16.mxu0 %v1182
      %1295 = vmatpush1.bf16.msra.mxu0 %v1181
      %1296 = vmatprep.subr.bf16.mxu0 0
      %1297 = vmatpush1.bf16.msra.mxu0 0
      %1298 = vmatprep.subr.bf16.mxu0 0
      %1299 = vmatpush1.bf16.msra.mxu0 0
      %1300 = vmatprep.subr.bf16.mxu0 0
      %1301 = vmatpush1.bf16.msra.mxu0 0
      %1302 = vmatprep.subr.bf16.mxu0 0
      %1303 = vmatpush1.bf16.msra.mxu0 0
      %1304 = vmatprep.subr.bf16.mxu0 0
      %1305 = vmatpush1.bf16.msra.mxu0 0
      %1306 = vmatprep.subr.bf16.mxu0 0
      %1307 = vmatpush1.bf16.msra.mxu0 0
      %1308 = vmatprep.subr.bf16.mxu0 0
      %1309 = vmatpush1.bf16.msra.mxu0 0
      %1310 = vmatprep.subr.bf16.mxu0 0
      %1311 = vmatpush1.bf16.msra.mxu0 0
      %1312 = vmatprep.subr.bf16.mxu0 0
      %1313 = vmatpush1.bf16.msra.mxu0 0
      %1314 = vmatprep.subr.bf16.mxu0 0
      %1315 = vmatpush1.bf16.msra.mxu0 0
      %1316 = vmatprep.subr.bf16.mxu0 0
      %1317 = vmatpush1.bf16.msra.mxu0 0
      %1318 = vmatprep.subr.bf16.mxu0 0
      %1319 = vmatpush1.bf16.msra.mxu0 0
      %1320 = vmatprep.subr.bf16.mxu0 0
      %1321 = vmatpush1.bf16.msra.mxu0 0
      %1322 = vmatprep.subr.bf16.mxu0 0
      %1323 = vmatpush1.bf16.msra.mxu0 0
      %1324 = vmatprep.mubr.bf16.mxu0 0
      %1325 = vmatmul.mubr.bf16.gmra.mrb[0].mxu0 %v466
      %v1326 = vpop.f32.mrb[0].mxu0
      %v1327 = vadd.f32 %v1254, %v1326
      %v1328 = vpop.f32.mrb[0].mxu0
      %v1329 = vadd.f32 %v1256, %v1328
      %v1330 = vpop.f32.mrb[0].mxu0
      %v1331 = vadd.f32 %v1258, %v1330
      %v1332 = vpop.f32.mrb[0].mxu0
      %v1333 = vadd.f32 %v1260, %v1332
      %1334 = vmatprep.mubr.bf16.mxu0 0
      %1335 = vmatmul.mubr.bf16.gmra.mrb[0].mxu0 %v469
      %v1336 = vpop.f32.mrb[0].mxu0
      %v1337 = vadd.f32 %v1264, %v1336
      %v1338 = vpop.f32.mrb[0].mxu0
      %v1339 = vadd.f32 %v1266, %v1338
      %v1340 = vpop.f32.mrb[0].mxu0
      %v1341 = vadd.f32 %v1268, %v1340
      %v1342 = vpop.f32.mrb[0].mxu0
      %v1343 = vadd.f32 %v1270, %v1342
      %1344 = vmatprep.mubr.bf16.mxu0 0
      %1345 = vmatmul.mubr.bf16.gmra.mrb[0].mxu0 %v472
      %v1346 = vpop.f32.mrb[0].mxu0
      %v1347 = vadd.f32 %v1274, %v1346
      %v1348 = vpop.f32.mrb[0].mxu0
      %v1349 = vadd.f32 %v1276, %v1348
      %v1350 = vpop.f32.mrb[0].mxu0
      %v1351 = vadd.f32 %v1278, %v1350
      %v1352 = vpop.f32.mrb[0].mxu0
      %v1353 = vadd.f32 %v1280, %v1352
      %1354 = vmatprep.mubr.bf16.mxu0 0
      %1355 = vmatmul.mubr.bf16.gmra.mrb[0].mxu0 %v475
      %v1356 = vpop.f32.mrb[0].mxu0
      %v1357 = vadd.f32 %v1284, %v1356
      %v1358 = vpop.f32.mrb[0].mxu0
      %v1359 = vadd.f32 %v1286, %v1358
      %v1360 = vpop.f32.mrb[0].mxu0
      %v1361 = vadd.f32 %v1288, %v1360
      %v1362 = vpop.f32.mrb[0].mxu0
      %v1363 = vadd.f32 %v1290, %v1362
      %1364 = vdwg.mxu0
      %v1365 = vmax.f32 %v986, %v1327
      %v1366 = vmax.f32 %v987, %v1329
      %v1367 = vmax.f32 %v988, %v1331
      %v1368 = vmax.f32 %v989, %v1333
      %v1369 = vmax.f32 %v990, %v1337
      %v1370 = vmax.f32 %v991, %v1339
      %v1371 = vmax.f32 %v992, %v1341
      %v1372 = vmax.f32 %v993, %v1343
      %v1373 = vmax.f32 %v994, %v1347
      %v1374 = vmax.f32 %v995, %v1349
      %v1375 = vmax.f32 %v996, %v1351
      %v1376 = vmax.f32 %v997, %v1353
      %v1377 = vmax.f32 %v998, %v1357
      %v1378 = vmax.f32 %v999, %v1359
      %v1379 = vmax.f32 %v1000, %v1361
      %v1380 = vmax.f32 %v1001, %v1363
      %s1381 = scalar_lea.vmem %s165, 864
      %v1382 = vld [vmem:[%s1381] sm:$0xff]
      %v1383 = vld [vmem:[%s1381 + $0x8] sm:$0xff]
      %v1384 = vld [vmem:[%s1381 + $0x10] sm:$0xff]
      %v1385 = vld [vmem:[%s1381 + $0x18] sm:$0xff]
      %v1386 = vld [vmem:[%s1381 + $0x20] sm:$0xff]
      %v1387 = vld [vmem:[%s1381 + $0x28] sm:$0xff]
      %v1388 = vld [vmem:[%s1381 + $0x30] sm:$0xff]
      %v1389 = vld [vmem:[%s1381 + $0x38] sm:$0xff]
      %v1390 = vld [vmem:[%s1381 + $0x40] sm:$0xff]
      %v1391 = vld [vmem:[%s1381 + $0x48] sm:$0xff]
      %v1392 = vld [vmem:[%s1381 + $0x50] sm:$0xff]
      %v1393 = vld [vmem:[%s1381 + $0x58] sm:$0xff]
      %v1394 = vld [vmem:[%s1381 + $0x60] sm:$0xff]
      %v1395 = vld [vmem:[%s1381 + $0x68] sm:$0xff]
      %v1396 = vld [vmem:[%s1381 + $0x70] sm:$0xff]
      %v1397 = vld [vmem:[%s1381 + $0x78] sm:$0xff]
      %v1398 = vld [vmem:[%s1381 + $0x80] sm:$0xff]
      %v1399 = vld [vmem:[%s1381 + $0x88] sm:$0xff]
      %v1400 = vld [vmem:[%s1381 + $0x90] sm:$0xff]
      %v1401 = vld [vmem:[%s1381 + $0x98] sm:$0xff]
      %v1402 = vld [vmem:[%s1381 + $0xa0] sm:$0xff]
      %v1403 = vld [vmem:[%s1381 + $0xa8] sm:$0xff]
      %v1404 = vld [vmem:[%s1381 + $0xb0] sm:$0xff]
      %v1405 = vld [vmem:[%s1381 + $0xb8] sm:$0xff]
      %v1406 = vld [vmem:[%s1381 + $0xc0] sm:$0xff]
      %v1407 = vld [vmem:[%s1381 + $0xc8] sm:$0xff]
      %v1408 = vld [vmem:[%s1381 + $0xd0] sm:$0xff]
      %v1409 = vld [vmem:[%s1381 + $0xd8] sm:$0xff]
      %v1410 = vld [vmem:[%s1381 + $0xe0] sm:$0xff]
      %v1411 = vld [vmem:[%s1381 + $0xe8] sm:$0xff]
      %v1412 = vld [vmem:[%s1381 + $0xf0] sm:$0xff]
      %v1413 = vld [vmem:[%s1381 + $0xf8] sm:$0xff]
      %v1414 = vld [vmem:[%s1381 + $0x100] sm:$0xff]
      %v1415 = vld [vmem:[%s1381 + $0x108] sm:$0xff]
      %v1416 = vld [vmem:[%s1381 + $0x110] sm:$0xff]
      %v1417 = vld [vmem:[%s1381 + $0x118] sm:$0xff]
      %v1454 = vunpack.c.l.b16 %v1382
      %v1455 = vunpack.c.h.b16 %v1382
      %v1456 = vunpack.c.l.b16 %v1383
      %v1457 = vunpack.c.h.b16 %v1383
      %v1458 = vunpack.c.l.b16 %v1384
      %v1459 = vunpack.c.h.b16 %v1384
      %v1460 = vunpack.c.l.b16 %v1385
      %v1461 = vunpack.c.h.b16 %v1385
      %v1462 = vunpack.c.l.b16 %v1386
      %v1463 = vunpack.c.h.b16 %v1386
      %v1464 = vunpack.c.l.b16 %v1387
      %v1465 = vunpack.c.h.b16 %v1387
      %v1466 = vunpack.c.l.b16 %v1388
      %v1467 = vunpack.c.h.b16 %v1388
      %v1468 = vunpack.c.l.b16 %v1389
      %v1469 = vunpack.c.h.b16 %v1389
      %v1470 = vunpack.c.l.b16 %v1390
      %v1471 = vunpack.c.h.b16 %v1390
      %v1472 = vunpack.c.l.b16 %v1391
      %v1473 = vunpack.c.h.b16 %v1391
      %v1474 = vunpack.c.l.b16 %v1392
      %v1475 = vunpack.c.h.b16 %v1392
      %v1476 = vunpack.c.l.b16 %v1393
      %v1477 = vunpack.c.h.b16 %v1393
      %v1478 = vunpack.c.l.b16 %v1394
      %v1479 = vunpack.c.h.b16 %v1394
      %v1480 = vunpack.c.l.b16 %v1395
      %v1481 = vunpack.c.h.b16 %v1395
      %v1482 = vunpack.c.l.b16 %v1396
      %v1483 = vunpack.c.h.b16 %v1396
      %v1484 = vunpack.c.l.b16 %v1397
      %v1485 = vunpack.c.h.b16 %v1397
      %v1486 = vunpack.c.l.b16 %v1398
      %v1487 = vunpack.c.h.b16 %v1398
      %v1488 = vunpack.c.l.b16 %v1399
      %v1489 = vunpack.c.h.b16 %v1399
      %v1490 = vunpack.c.l.b16 %v1400
      %v1491 = vunpack.c.h.b16 %v1400
      %v1492 = vunpack.c.l.b16 %v1401
      %v1493 = vunpack.c.h.b16 %v1401
      %v1494 = vunpack.c.l.b16 %v1402
      %v1495 = vunpack.c.h.b16 %v1402
      %v1496 = vunpack.c.l.b16 %v1403
      %v1497 = vunpack.c.h.b16 %v1403
      %v1498 = vunpack.c.l.b16 %v1404
      %v1499 = vunpack.c.h.b16 %v1404
      %v1500 = vunpack.c.l.b16 %v1405
      %v1501 = vunpack.c.h.b16 %v1405
      %v1502 = vunpack.c.l.b16 %v1406
      %v1503 = vunpack.c.h.b16 %v1406
      %v1504 = vunpack.c.l.b16 %v1407
      %v1505 = vunpack.c.h.b16 %v1407
      %v1506 = vunpack.c.l.b16 %v1408
      %v1507 = vunpack.c.h.b16 %v1408
      %v1508 = vunpack.c.l.b16 %v1409
      %v1509 = vunpack.c.h.b16 %v1409
      %v1510 = vunpack.c.l.b16 %v1410
      %v1511 = vunpack.c.h.b16 %v1410
      %v1512 = vunpack.c.l.b16 %v1411
      %v1513 = vunpack.c.h.b16 %v1411
      %v1514 = vunpack.c.l.b16 %v1412
      %v1515 = vunpack.c.h.b16 %v1412
      %v1516 = vunpack.c.l.b16 %v1413
      %v1517 = vunpack.c.h.b16 %v1413
      %v1518 = vunpack.c.l.b16 %v1414
      %v1519 = vunpack.c.h.b16 %v1414
      %v1520 = vunpack.c.l.b16 %v1415
      %v1521 = vunpack.c.h.b16 %v1415
      %v1522 = vunpack.c.l.b16 %v1416
      %v1523 = vunpack.c.h.b16 %v1416
      %v1524 = vunpack.c.l.b16 %v1417
      %v1525 = vunpack.c.h.b16 %v1417
      %v1526 = vpack.c.b16 %v1456, %v1454
      %v1527 = vpack.c.b16 %v1457, %v1455
      %v1528 = vpack.c.b16 %v1460, %v1458
      %v1529 = vpack.c.b16 %v1461, %v1459
      %v1530 = vpack.c.b16 %v1464, %v1462
      %v1531 = vpack.c.b16 %v1465, %v1463
      %v1532 = vpack.c.b16 %v1468, %v1466
      %v1533 = vpack.c.b16 %v1469, %v1467
      %v1534 = vpack.c.b16 %v1472, %v1470
      %v1535 = vpack.c.b16 %v1473, %v1471
      %v1536 = vpack.c.b16 %v1476, %v1474
      %v1537 = vpack.c.b16 %v1477, %v1475
      %v1538 = vpack.c.b16 %v1480, %v1478
      %v1539 = vpack.c.b16 %v1481, %v1479
      %v1540 = vpack.c.b16 %v1484, %v1482
      %v1541 = vpack.c.b16 %v1485, %v1483
      %v1542 = vpack.c.b16 %v1488, %v1486
      %v1543 = vpack.c.b16 %v1489, %v1487
      %v1544 = vpack.c.b16 %v1492, %v1490
      %v1545 = vpack.c.b16 %v1493, %v1491
      %v1546 = vpack.c.b16 %v1496, %v1494
      %v1547 = vpack.c.b16 %v1497, %v1495
      %v1548 = vpack.c.b16 %v1500, %v1498
      %v1549 = vpack.c.b16 %v1501, %v1499
      %v1550 = vpack.c.b16 %v1504, %v1502
      %v1551 = vpack.c.b16 %v1505, %v1503
      %v1552 = vpack.c.b16 %v1508, %v1506
      %v1553 = vpack.c.b16 %v1509, %v1507
      %v1554 = vpack.c.b16 %v1512, %v1510
      %v1555 = vpack.c.b16 %v1513, %v1511
      %v1556 = vpack.c.b16 %v1516, %v1514
      %v1557 = vpack.c.b16 %v1517, %v1515
      %v1558 = vpack.c.b16 %v1520, %v1518
      %v1559 = vpack.c.b16 %v1521, %v1519
      %v1560 = vpack.c.b16 %v1524, %v1522
      %v1561 = vpack.c.b16 %v1525, %v1523
      %1598 = vmatprep.subr.bf16.mxu0 %v1527
      %1599 = vmatpush1.bf16.msra.mxu0 %v1526
      %1600 = vmatprep.subr.bf16.mxu0 %v1529
      %1601 = vmatpush1.bf16.msra.mxu0 %v1528
      %1602 = vmatprep.subr.bf16.mxu0 %v1531
      %1603 = vmatpush1.bf16.msra.mxu0 %v1530
      %1604 = vmatprep.subr.bf16.mxu0 %v1533
      %1605 = vmatpush1.bf16.msra.mxu0 %v1532
      %1606 = vmatprep.subr.bf16.mxu0 %v1535
      %1607 = vmatpush1.bf16.msra.mxu0 %v1534
      %1608 = vmatprep.subr.bf16.mxu0 %v1537
      %1609 = vmatpush1.bf16.msra.mxu0 %v1536
      %1610 = vmatprep.subr.bf16.mxu0 %v1539
      %1611 = vmatpush1.bf16.msra.mxu0 %v1538
      %1612 = vmatprep.subr.bf16.mxu0 %v1541
      %1613 = vmatpush1.bf16.msra.mxu0 %v1540
      %1614 = vmatprep.subr.bf16.mxu0 %v1543
      %1615 = vmatpush1.bf16.msra.mxu0 %v1542
      %1616 = vmatprep.subr.bf16.mxu0 %v1545
      %1617 = vmatpush1.bf16.msra.mxu0 %v1544
      %1618 = vmatprep.subr.bf16.mxu0 %v1547
      %1619 = vmatpush1.bf16.msra.mxu0 %v1546
      %1620 = vmatprep.subr.bf16.mxu0 %v1549
      %1621 = vmatpush1.bf16.msra.mxu0 %v1548
      %1622 = vmatprep.subr.bf16.mxu0 %v1551
      %1623 = vmatpush1.bf16.msra.mxu0 %v1550
      %1624 = vmatprep.subr.bf16.mxu0 %v1553
      %1625 = vmatpush1.bf16.msra.mxu0 %v1552
      %1626 = vmatprep.subr.bf16.mxu0 %v1555
      %1627 = vmatpush1.bf16.msra.mxu0 %v1554
      %1628 = vmatprep.subr.bf16.mxu0 %v1557
      %1629 = vmatpush1.bf16.msra.mxu0 %v1556
      %1630 = vmatprep.mubr.bf16.mxu0 %v265
      %1631 = vmatmul.mubr.bf16.gmra.mrb[0].mxu0 %v264
      %v1632 = vpop.f32.mrb[0].mxu0
      %v1633 = vadd.f32 0.0, %v1632
      %v1634 = vpop.f32.mrb[0].mxu0
      %v1635 = vadd.f32 0.0, %v1634
      %v1636 = vpop.f32.mrb[0].mxu0
      %v1637 = vadd.f32 0.0, %v1636
      %v1638 = vpop.f32.mrb[0].mxu0
      %v1639 = vadd.f32 0.0, %v1638
      %1640 = vmatprep.mubr.bf16.mxu0 %v268
      %1641 = vmatmul.mubr.bf16.gmra.mrb[0].mxu0 %v267
      %v1642 = vpop.f32.mrb[0].mxu0
      %v1643 = vadd.f32 0.0, %v1642
      %v1644 = vpop.f32.mrb[0].mxu0
      %v1645 = vadd.f32 0.0, %v1644
      %v1646 = vpop.f32.mrb[0].mxu0
      %v1647 = vadd.f32 0.0, %v1646
      %v1648 = vpop.f32.mrb[0].mxu0
      %v1649 = vadd.f32 0.0, %v1648
      %1650 = vmatprep.mubr.bf16.mxu0 %v271
      %1651 = vmatmul.mubr.bf16.gmra.mrb[0].mxu0 %v270
      %v1652 = vpop.f32.mrb[0].mxu0
      %v1653 = vadd.f32 0.0, %v1652
      %v1654 = vpop.f32.mrb[0].mxu0
      %v1655 = vadd.f32 0.0, %v1654
      %v1656 = vpop.f32.mrb[0].mxu0
      %v1657 = vadd.f32 0.0, %v1656
      %v1658 = vpop.f32.mrb[0].mxu0
      %v1659 = vadd.f32 0.0, %v1658
      %1660 = vmatprep.mubr.bf16.mxu0 %v274
      %1661 = vmatmul.mubr.bf16.gmra.mrb[0].mxu0 %v273
      %v1662 = vpop.f32.mrb[0].mxu0
      %v1663 = vadd.f32 0.0, %v1662
      %v1664 = vpop.f32.mrb[0].mxu0
      %v1665 = vadd.f32 0.0, %v1664
      %v1666 = vpop.f32.mrb[0].mxu0
      %v1667 = vadd.f32 0.0, %v1666
      %v1668 = vpop.f32.mrb[0].mxu0
      %v1669 = vadd.f32 0.0, %v1668
      %1670 = vdwg.mxu0
      %1671 = vmatprep.subr.bf16.mxu0 %v1559
      %1672 = vmatpush1.bf16.msra.mxu0 %v1558
      %1673 = vmatprep.subr.bf16.mxu0 %v1561
      %1674 = vmatpush1.bf16.msra.mxu0 %v1560
      %1675 = vmatprep.subr.bf16.mxu0 0
      %1676 = vmatpush1.bf16.msra.mxu0 0
      %1677 = vmatprep.subr.bf16.mxu0 0
      %1678 = vmatpush1.bf16.msra.mxu0 0
      %1679 = vmatprep.subr.bf16.mxu0 0
      %1680 = vmatpush1.bf16.msra.mxu0 0
      %1681 = vmatprep.subr.bf16.mxu0 0
      %1682 = vmatpush1.bf16.msra.mxu0 0
      %1683 = vmatprep.subr.bf16.mxu0 0
      %1684 = vmatpush1.bf16.msra.mxu0 0
      %1685 = vmatprep.subr.bf16.mxu0 0
      %1686 = vmatpush1.bf16.msra.mxu0 0
      %1687 = vmatprep.subr.bf16.mxu0 0
      %1688 = vmatpush1.bf16.msra.mxu0 0
      %1689 = vmatprep.subr.bf16.mxu0 0
      %1690 = vmatpush1.bf16.msra.mxu0 0
      %1691 = vmatprep.subr.bf16.mxu0 0
      %1692 = vmatpush1.bf16.msra.mxu0 0
      %1693 = vmatprep.subr.bf16.mxu0 0
      %1694 = vmatpush1.bf16.msra.mxu0 0
      %1695 = vmatprep.subr.bf16.mxu0 0
      %1696 = vmatpush1.bf16.msra.mxu0 0
      %1697 = vmatprep.subr.bf16.mxu0 0
      %1698 = vmatpush1.bf16.msra.mxu0 0
      %1699 = vmatprep.subr.bf16.mxu0 0
      %1700 = vmatpush1.bf16.msra.mxu0 0
      %1701 = vmatprep.subr.bf16.mxu0 0
      %1702 = vmatpush1.bf16.msra.mxu0 0
      %1703 = vmatprep.mubr.bf16.mxu0 0
      %1704 = vmatmul.mubr.bf16.gmra.mrb[0].mxu0 %v466
      %v1705 = vpop.f32.mrb[0].mxu0
      %v1706 = vadd.f32 %v1633, %v1705
      %v1707 = vpop.f32.mrb[0].mxu0
      %v1708 = vadd.f32 %v1635, %v1707
      %v1709 = vpop.f32.mrb[0].mxu0
      %v1710 = vadd.f32 %v1637, %v1709
      %v1711 = vpop.f32.mrb[0].mxu0
      %v1712 = vadd.f32 %v1639, %v1711
      %1713 = vmatprep.mubr.bf16.mxu0 0
      %1714 = vmatmul.mubr.bf16.gmra.mrb[0].mxu0 %v469
      %v1715 = vpop.f32.mrb[0].mxu0
      %v1716 = vadd.f32 %v1643, %v1715
      %v1717 = vpop.f32.mrb[0].mxu0
      %v1718 = vadd.f32 %v1645, %v1717
      %v1719 = vpop.f32.mrb[0].mxu0
      %v1720 = vadd.f32 %v1647, %v1719
      %v1721 = vpop.f32.mrb[0].mxu0
      %v1722 = vadd.f32 %v1649, %v1721
      %1723 = vmatprep.mubr.bf16.mxu0 0
      %1724 = vmatmul.mubr.bf16.gmra.mrb[0].mxu0 %v472
      %v1725 = vpop.f32.mrb[0].mxu0
      %v1726 = vadd.f32 %v1653, %v1725
      %v1727 = vpop.f32.mrb[0].mxu0
      %v1728 = vadd.f32 %v1655, %v1727
      %v1729 = vpop.f32.mrb[0].mxu0
      %v1730 = vadd.f32 %v1657, %v1729
      %v1731 = vpop.f32.mrb[0].mxu0
      %v1732 = vadd.f32 %v1659, %v1731
      %1733 = vmatprep.mubr.bf16.mxu0 0
      %1734 = vmatmul.mubr.bf16.gmra.mrb[0].mxu0 %v475
      %v1735 = vpop.f32.mrb[0].mxu0
      %v1736 = vadd.f32 %v1663, %v1735
      %v1737 = vpop.f32.mrb[0].mxu0
      %v1738 = vadd.f32 %v1665, %v1737
      %v1739 = vpop.f32.mrb[0].mxu0
      %v1740 = vadd.f32 %v1667, %v1739
      %v1741 = vpop.f32.mrb[0].mxu0
      %v1742 = vadd.f32 %v1669, %v1741
      %1743 = vdwg.mxu0
      %v1744 = vmax.f32 %v1365, %v1706
      %v1745 = vmax.f32 %v1366, %v1708
      %v1746 = vmax.f32 %v1367, %v1710
      %v1747 = vmax.f32 %v1368, %v1712
      %v1748 = vmax.f32 %v1369, %v1716
      %v1749 = vmax.f32 %v1370, %v1718
      %v1750 = vmax.f32 %v1371, %v1720
      %v1751 = vmax.f32 %v1372, %v1722
      %v1752 = vmax.f32 %v1373, %v1726
      %v1753 = vmax.f32 %v1374, %v1728
      %v1754 = vmax.f32 %v1375, %v1730
      %v1755 = vmax.f32 %v1376, %v1732
      %v1756 = vmax.f32 %v1377, %v1736
      %v1757 = vmax.f32 %v1378, %v1738
      %v1758 = vmax.f32 %v1379, %v1740
      %v1759 = vmax.f32 %v1380, %v1742
      %v1760 = vld [vmem:[%s2] sm:$0xff]
      %v1761 = vld [vmem:[%s2 + $0x8] sm:$0xff]
      %v1762 = vld [vmem:[%s2 + $0x10] sm:$0xff]
      %v1763 = vld [vmem:[%s2 + $0x18] sm:$0xff]
      %v1764 = vld [vmem:[%s2 + $0x20] sm:$0xff]
      %v1765 = vld [vmem:[%s2 + $0x28] sm:$0xff]
      %v1766 = vld [vmem:[%s2 + $0x30] sm:$0xff]
      %v1767 = vld [vmem:[%s2 + $0x38] sm:$0xff]
      %1769 = vset.pattern.permute.xlu0 0
      %1770 = vperm.xlu0 %1769, %v1760
      %v1771 = vpop.permute.xlu0 %1770
      %1774 = vset.pattern.permute.xlu0 0
      %1775 = vperm.xlu0 %1774, %v1761
      %v1776 = vpop.permute.xlu0 %1775
      %1779 = vset.pattern.permute.xlu0 0
      %1780 = vperm.xlu0 %1779, %v1762
      %v1781 = vpop.permute.xlu0 %1780
      %1784 = vset.pattern.permute.xlu0 0
      %1785 = vperm.xlu0 %1784, %v1763
      %v1786 = vpop.permute.xlu0 %1785
      %1789 = vset.pattern.permute.xlu0 0
      %1790 = vperm.xlu0 %1789, %v1764
      %v1791 = vpop.permute.xlu0 %1790
      %1794 = vset.pattern.permute.xlu0 0
      %1795 = vperm.xlu0 %1794, %v1765
      %v1796 = vpop.permute.xlu0 %1795
      %1799 = vset.pattern.permute.xlu0 0
      %1800 = vperm.xlu0 %1799, %v1766
      %v1801 = vpop.permute.xlu0 %1800
      %1804 = vset.pattern.permute.xlu0 0
      %1805 = vperm.xlu0 %1804, %v1767
      %v1806 = vpop.permute.xlu0 %1805
      %v1808 = vadd.f32 %v1744, %v1771
      %v1809 = vadd.f32 %v1745, %v1771
      %v1810 = vadd.f32 %v1746, %v1776
      %v1811 = vadd.f32 %v1747, %v1776
      %v1812 = vadd.f32 %v1748, %v1781
      %v1813 = vadd.f32 %v1749, %v1781
      %v1814 = vadd.f32 %v1750, %v1786
      %v1815 = vadd.f32 %v1751, %v1786
      %v1816 = vadd.f32 %v1752, %v1791
      %v1817 = vadd.f32 %v1753, %v1791
      %v1818 = vadd.f32 %v1754, %v1796
      %v1819 = vadd.f32 %v1755, %v1796
      %v1820 = vadd.f32 %v1756, %v1801
      %v1821 = vadd.f32 %v1757, %v1801
      %v1822 = vadd.f32 %v1758, %v1806
      %v1823 = vadd.f32 %v1759, %v1806
      %v1824 = vmax.f32 %v1808, 0.0
      %v1825 = vmax.f32 %v1809, 0.0
      %v1826 = vmax.f32 %v1810, 0.0
      %v1827 = vmax.f32 %v1811, 0.0
      %v1828 = vmax.f32 %v1812, 0.0
      %v1829 = vmax.f32 %v1813, 0.0
      %v1830 = vmax.f32 %v1814, 0.0
      %v1831 = vmax.f32 %v1815, 0.0
      %v1832 = vmax.f32 %v1816, 0.0
      %v1833 = vmax.f32 %v1817, 0.0
      %v1834 = vmax.f32 %v1818, 0.0
      %v1835 = vmax.f32 %v1819, 0.0
      %v1836 = vmax.f32 %v1820, 0.0
      %v1837 = vmax.f32 %v1821, 0.0
      %v1838 = vmax.f32 %v1822, 0.0
      %v1839 = vmax.f32 %v1823, 0.0
      %v1840 = vpack.c.bf16 %v1826, %v1824
      %v1841 = vpack.c.bf16 %v1827, %v1825
      %v1842 = vpack.c.bf16 %v1830, %v1828
      %v1843 = vpack.c.bf16 %v1831, %v1829
      %v1844 = vpack.c.bf16 %v1834, %v1832
      %v1845 = vpack.c.bf16 %v1835, %v1833
      %v1846 = vpack.c.bf16 %v1838, %v1836
      %v1847 = vpack.c.bf16 %v1839, %v1837
      %v1856 = vunpack.c.l.b16 %v1840
      %v1857 = vunpack.c.l.b16 %v1841
      %v1858 = vunpack.c.h.b16 %v1840
      %v1859 = vunpack.c.h.b16 %v1841
      %v1860 = vunpack.c.l.b16 %v1842
      %v1861 = vunpack.c.l.b16 %v1843
      %v1862 = vunpack.c.h.b16 %v1842
      %v1863 = vunpack.c.h.b16 %v1843
      %v1864 = vunpack.c.l.b16 %v1844
      %v1865 = vunpack.c.l.b16 %v1845
      %v1866 = vunpack.c.h.b16 %v1844
      %v1867 = vunpack.c.h.b16 %v1845
      %v1868 = vunpack.c.l.b16 %v1846
      %v1869 = vunpack.c.l.b16 %v1847
      %v1870 = vunpack.c.h.b16 %v1846
      %v1871 = vunpack.c.h.b16 %v1847
      %v1872 = vpack.c.b16 %v1857, %v1856
      %v1873 = vpack.c.b16 %v1859, %v1858
      %v1874 = vpack.c.b16 %v1861, %v1860
      %v1875 = vpack.c.b16 %v1863, %v1862
      %v1876 = vpack.c.b16 %v1865, %v1864
      %v1877 = vpack.c.b16 %v1867, %v1866
      %v1878 = vpack.c.b16 %v1869, %v1868
      %v1879 = vpack.c.b16 %v1871, %v1870
      %vm1888 = vcmask 1043456
      %vm1889 = vcmask 130052
      %vm1890 = vmor %vm1889, %vm1888
      %1891 = vst.msk [vmem:[%s170] sm:$0xff] %vm1890, %v1872
      %1892 = vst.msk [vmem:[%s170 + $0x8] sm:$0xff] %vm1890, %v1873
      %1893 = vst.msk [vmem:[%s170 + $0x10] sm:$0xff] %vm1890, %v1874
      %1894 = vst.msk [vmem:[%s170 + $0x18] sm:$0xff] %vm1890, %v1875
      %1895 = vst.msk [vmem:[%s170 + $0x20] sm:$0xff] %vm1890, %v1876
      %1896 = vst.msk [vmem:[%s170 + $0x28] sm:$0xff] %vm1890, %v1877
      %1897 = vst.msk [vmem:[%s170 + $0x30] sm:$0xff] %vm1890, %v1878
      %1898 = vst.msk [vmem:[%s170 + $0x38] sm:$0xff] %vm1890, %v1879
      %p1899 = scmp.lt.s32.totalorder %s14, 1
      %s1900 = scalar_select %p1899, %s14, 1
      %s1901 = smul.addr %s1900, 16
      %s1902 = smul.addr %s1901, 4
      %s1903 = scalar_lea.vmem %s3, %s1902
      // Predicated region
      $region33: #{net_forward.4} parent=31 // pred_check
        %p1904 = pneg %p100
      $region34: #{net_forward.4} parent=31 // pred_check_branch
        %1906 = sbr.rel (%p1904) target = $region36
      $region35: #{net_forward.4} parent=31 // pred_region
        _
      $region36: #{net_forward.4} parent=31 // pred_fallthru
        _
    $region32: #{net_forward.4} parent=5 // pred_fallthru
      _
    %p1907 = scmp.le.s32.totalorder 2, %s9
    // Predicated region
    $region37: #{net_forward.4} parent=5 // pred_check
      %p1908 = pneg %p1907
    $region38: #{net_forward.4} parent=5 // pred_check_branch
      %1910 = sbr.rel (%p1908) target = $region40
    $region39: #{net_forward.4} parent=5 // pred_region
      %s1911 = ssub.s32 %s9, 2
      // Predicated region
      $region41: #{net_forward.4} parent=39 // pred_check
        %p1912 = pneg %p106
      $region42: #{net_forward.4} parent=39 // pred_check_branch
        %1914 = sbr.rel (%p1912) target = $region44
      $region43: #{net_forward.4} parent=39 // pred_region
        %p1915 = scmp.lt.s32.totalorder %s15, 1
        %s1916 = scalar_select %p1915, %s15, 1
        %s1917 = smul.addr %s1916, 16
        %s1918 = smul.addr %s1917, 4
        %s1919 = scalar_lea.vmem %s3, %s1918
      $region44: #{net_forward.4} parent=39 // pred_fallthru
        _
    $region40: #{net_forward.4} parent=5 // pred_fallthru
      _
  $region6: #{net_forward.4} parent=0 // loop_footer
    %s13 = sadd.s32 1, %s9
  $region7: #{net_forward.4} parent=0 // loop_footer_branch
    %8 = sbr.rel target = $region3
  $region8: #{net_forward.4} parent=0 // loop_exit
    _

// kernel: net_forward.5
$region0: #{net_forward.5}
  #allocation0 [shape = 'u32[]', space=smem, size = 0x4, offset = 0x4, fixed_abs, tag = 'smem constant byte address 0x4 - core index']
  #allocation1 [shape = 'u32[144,128]{1,0:T(1,128)}', space=vmem, size = 0x12000, scoped, tag = 'internal scratch']
  %s0 = inlined_call_operand.vmem [shape: bf16[2,9216], index: 0, kind: input, shape index: {}]
  %s1 = inlined_call_operand.vmem [shape: bf16[9216,128], index: 1, kind: input, shape index: {}]
  %s2 = inlined_call_operand.vmem [shape: f32[1,128], index: 2, kind: input, shape index: {}]
  %s3 = inlined_call_operand.vmem [shape: bf16[128,10], index: 3, kind: input, shape index: {}]
  %s4 = inlined_call_operand.vmem [shape: f32[1,10], index: 4, kind: input, shape index: {}]
  %s5 = inlined_call_operand.hbm [shape: f32[2,10], index: 5, kind: output, shape index: {}]
  %s6 = sld [smem:[#allocation0]]
  $region30: #{net_forward.5} parent=0
    _
  %s8 = ssub.s32 1, %s6
  %s9 = scalar_select 0, %s8, %s6
  $region1: #{net_forward.5} parent=0
    #allocation2 [shape = 'u8[1024]{0}', space=vmem, size = 0x400, scoped, tag = 'output window, operand 0, single buffered']
    #allocation3 [shape = 's32[1]{0}', space=sflag, size = 0x4, scoped, tag = 'scoped memory for net_forward.5']
    %10 = vsyncpa [#allocation3], 0
    // Predicated region
    $region2: #{net_forward.5} parent=1 // pred_check
      _
    $region3: #{net_forward.5} parent=1 // pred_check_branch
      %12 = sbr.rel (0) target = $region5
    $region4: #{net_forward.5} parent=1 // pred_region
      _
    $region5: #{net_forward.5} parent=1 // pred_fallthru
      _
    // Predicated region
    $region6: #{net_forward.5} parent=1 // pred_check
      _
    $region7: #{net_forward.5} parent=1 // pred_check_branch
      %14 = sbr.rel (0) target = $region9
    $region8: #{net_forward.5} parent=1 // pred_region
      _
    $region9: #{net_forward.5} parent=1 // pred_fallthru
      _
    // Predicated region
    $region10: #{net_forward.5} parent=1 // pred_check
      _
    $region11: #{net_forward.5} parent=1 // pred_check_branch
      %16 = sbr.rel (0) target = $region13
    $region12: #{net_forward.5} parent=1 // pred_region
      _
    $region13: #{net_forward.5} parent=1 // pred_fallthru
      _
    // Predicated region
    $region14: #{net_forward.5} parent=1 // pred_check
      _
    $region15: #{net_forward.5} parent=1 // pred_check_branch
      %18 = sbr.rel (0) target = $region17
    $region16: #{net_forward.5} parent=1 // pred_region
      _
    $region17: #{net_forward.5} parent=1 // pred_fallthru
      _
    // Predicated region
    $region18: #{net_forward.5} parent=1 // pred_check
      _
    $region19: #{net_forward.5} parent=1 // pred_check_branch
      %20 = sbr.rel (0) target = $region21
    $region20: #{net_forward.5} parent=1 // pred_region
      _
    $region21: #{net_forward.5} parent=1 // pred_fallthru
      _
    %v22 = vld [vmem:[%s0] sm:$0xff]
    %v23 = vld [vmem:[%s0 + $0x8] sm:$0xff]
    %v24 = vld [vmem:[%s0 + $0x10] sm:$0xff]
    %v25 = vld [vmem:[%s0 + $0x18] sm:$0xff]
    %v26 = vld [vmem:[%s0 + $0x20] sm:$0xff]
    %v27 = vld [vmem:[%s0 + $0x28] sm:$0xff]
    %v28 = vld [vmem:[%s0 + $0x30] sm:$0xff]
    %v29 = vld [vmem:[%s0 + $0x38] sm:$0xff]
    %v30 = vld [vmem:[%s0 + $0x40] sm:$0xff]
    %v31 = vld [vmem:[%s1] sm:$0xf]
    %v32 = vld [vmem:[%s1 + $0x4] sm:$0xf]
    %v33 = vld [vmem:[%s1 + $0x8] sm:$0xf]
    %v34 = vld [vmem:[%s1 + $0xc] sm:$0xf]
    %v35 = vld [vmem:[%s1 + $0x10] sm:$0xf]
    %v36 = vld [vmem:[%s1 + $0x14] sm:$0xf]
    %v37 = vld [vmem:[%s1 + $0x18] sm:$0xf]
    %v38 = vld [vmem:[%s1 + $0x1c] sm:$0xf]
    %v39 = vld [vmem:[%s1 + $0x20] sm:$0xf]
    %v40 = vld [vmem:[%s1 + $0x24] sm:$0xf]
    %v41 = vld [vmem:[%s1 + $0x28] sm:$0xf]
    %v42 = vld [vmem:[%s1 + $0x2c] sm:$0xf]
    %v43 = vld [vmem:[%s1 + $0x30] sm:$0xf]
    %v44 = vld [vmem:[%s1 + $0x34] sm:$0xf]
    %v45 = vld [vmem:[%s1 + $0x38] sm:$0xf]
    %v46 = vld [vmem:[%s1 + $0x3c] sm:$0xf]
    %v47 = vld [vmem:[%s1 + $0x40] sm:$0xf]
    %v48 = vld [vmem:[%s1 + $0x44] sm:$0xf]
    %v49 = vld [vmem:[%s1 + $0x48] sm:$0xf]
    %v50 = vld [vmem:[%s1 + $0x4c] sm:$0xf]
    %v51 = vld [vmem:[%s1 + $0x50] sm:$0xf]
    %v52 = vld [vmem:[%s1 + $0x54] sm:$0xf]
    %v53 = vld [vmem:[%s1 + $0x58] sm:$0xf]
    %v54 = vld [vmem:[%s1 + $0x5c] sm:$0xf]
    %v55 = vld [vmem:[%s1 + $0x60] sm:$0xf]
    %v56 = vld [vmem:[%s1 + $0x64] sm:$0xf]
    %v57 = vld [vmem:[%s1 + $0x68] sm:$0xf]
    %v58 = vld [vmem:[%s1 + $0x6c] sm:$0xf]
    %v59 = vld [vmem:[%s1 + $0x70] sm:$0xf]
    %v60 = vld [vmem:[%s1 + $0x74] sm:$0xf]
    %v61 = vld [vmem:[%s1 + $0x78] sm:$0xf]
    %v62 = vld [vmem:[%s1 + $0x7c] sm:$0xf]
    %v63 = vld [vmem:[%s1 + $0x80] sm:$0xf]
    %v64 = vld [vmem:[%s1 + $0x84] sm:$0xf]
    %v65 = vld [vmem:[%s1 + $0x88] sm:$0xf]
    %v66 = vld [vmem:[%s1 + $0x8c] sm:$0xf]
    %v67 = vld [vmem:[%s1 + $0x90] sm:$0xf]
    %v68 = vld [vmem:[%s1 + $0x94] sm:$0xf]
    %v69 = vld [vmem:[%s1 + $0x98] sm:$0xf]
    %v70 = vld [vmem:[%s1 + $0x9c] sm:$0xf]
    %v71 = vld [vmem:[%s1 + $0xa0] sm:$0xf]
    %v72 = vld [vmem:[%s1 + $0xa4] sm:$0xf]
    %v73 = vld [vmem:[%s1 + $0xa8] sm:$0xf]
    %v74 = vld [vmem:[%s1 + $0xac] sm:$0xf]
    %v75 = vld [vmem:[%s1 + $0xb0] sm:$0xf]
    %v76 = vld [vmem:[%s1 + $0xb4] sm:$0xf]
    %v77 = vld [vmem:[%s1 + $0xb8] sm:$0xf]
    %v78 = vld [vmem:[%s1 + $0xbc] sm:$0xf]
    %v79 = vld [vmem:[%s1 + $0xc0] sm:$0xf]
    %v80 = vld [vmem:[%s1 + $0xc4] sm:$0xf]
    %v81 = vld [vmem:[%s1 + $0xc8] sm:$0xf]
    %v82 = vld [vmem:[%s1 + $0xcc] sm:$0xf]
    %v83 = vld [vmem:[%s1 + $0xd0] sm:$0xf]
    %v84 = vld [vmem:[%s1 + $0xd4] sm:$0xf]
    %v85 = vld [vmem:[%s1 + $0xd8] sm:$0xf]
    %v86 = vld [vmem:[%s1 + $0xdc] sm:$0xf]
    %v87 = vld [vmem:[%s1 + $0xe0] sm:$0xf]
    %v88 = vld [vmem:[%s1 + $0xe4] sm:$0xf]
    %v89 = vld [vmem:[%s1 + $0xe8] sm:$0xf]
    %v90 = vld [vmem:[%s1 + $0xec] sm:$0xf]
    %v91 = vld [vmem:[%s1 + $0xf0] sm:$0xf]
    %v92 = vld [vmem:[%s1 + $0xf4] sm:$0xf]
    %v93 = vld [vmem:[%s1 + $0xf8] sm:$0xf]
    %v94 = vld [vmem:[%s1 + $0xfc] sm:$0xf]
    %v95 = vld [vmem:[%s1 + $0x100] sm:$0xf]
    %v96 = vld [vmem:[%s1 + $0x104] sm:$0xf]
    %v97 = vld [vmem:[%s1 + $0x108] sm:$0xf]
    %v98 = vld [vmem:[%s1 + $0x10c] sm:$0xf]
    %v99 = vld [vmem:[%s1 + $0x110] sm:$0xf]
    %v100 = vld [vmem:[%s1 + $0x114] sm:$0xf]
    %v101 = vld [vmem:[%s1 + $0x118] sm:$0xf]
    %v102 = vld [vmem:[%s1 + $0x11c] sm:$0xf]
    %v103 = vld [vmem:[%s1 + $0x120] sm:$0xf]
    %v104 = vld [vmem:[%s1 + $0x124] sm:$0xf]
    %v105 = vld [vmem:[%s1 + $0x128] sm:$0xf]
    %v106 = vld [vmem:[%s1 + $0x12c] sm:$0xf]
    %v107 = vld [vmem:[%s1 + $0x130] sm:$0xf]
    %v108 = vld [vmem:[%s1 + $0x134] sm:$0xf]
    %v109 = vld [vmem:[%s1 + $0x138] sm:$0xf]
    %v110 = vld [vmem:[%s1 + $0x13c] sm:$0xf]
    %v111 = vld [vmem:[%s1 + $0x140] sm:$0xf]
    %v112 = vld [vmem:[%s1 + $0x144] sm:$0xf]
    %v113 = vld [vmem:[%s1 + $0x148] sm:$0xf]
    %v114 = vld [vmem:[%s1 + $0x14c] sm:$0xf]
    %v115 = vld [vmem:[%s1 + $0x150] sm:$0xf]
    %v116 = vld [vmem:[%s1 + $0x154] sm:$0xf]
    %v117 = vld [vmem:[%s1 + $0x158] sm:$0xf]
    %v118 = vld [vmem:[%s1 + $0x15c] sm:$0xf]
    %v119 = vld [vmem:[%s1 + $0x160] sm:$0xf]
    %v120 = vld [vmem:[%s1 + $0x164] sm:$0xf]
    %v121 = vld [vmem:[%s1 + $0x168] sm:$0xf]
    %v122 = vld [vmem:[%s1 + $0x16c] sm:$0xf]
    %v123 = vld [vmem:[%s1 + $0x170] sm:$0xf]
    %v124 = vld [vmem:[%s1 + $0x174] sm:$0xf]
    %v125 = vld [vmem:[%s1 + $0x178] sm:$0xf]
    %v126 = vld [vmem:[%s1 + $0x17c] sm:$0xf]
    %v127 = vld [vmem:[%s1 + $0x180] sm:$0xf]
    %v128 = vld [vmem:[%s1 + $0x184] sm:$0xf]
    %v129 = vld [vmem:[%s1 + $0x188] sm:$0xf]
    %v130 = vld [vmem:[%s1 + $0x18c] sm:$0xf]
    %v131 = vld [vmem:[%s1 + $0x190] sm:$0xf]
    %v132 = vld [vmem:[%s1 + $0x194] sm:$0xf]
    %v133 = vld [vmem:[%s1 + $0x198] sm:$0xf]
    %v134 = vld [vmem:[%s1 + $0x19c] sm:$0xf]
    %v135 = vld [vmem:[%s1 + $0x1a0] sm:$0xf]
    %v136 = vld [vmem:[%s1 + $0x1a4] sm:$0xf]
    %v137 = vld [vmem:[%s1 + $0x1a8] sm:$0xf]
    %v138 = vld [vmem:[%s1 + $0x1ac] sm:$0xf]
    %v139 = vld [vmem:[%s1 + $0x1b0] sm:$0xf]
    %v140 = vld [vmem:[%s1 + $0x1b4] sm:$0xf]
    %v141 = vld [vmem:[%s1 + $0x1b8] sm:$0xf]
    %v142 = vld [vmem:[%s1 + $0x1bc] sm:$0xf]
    %v143 = vld [vmem:[%s1 + $0x1c0] sm:$0xf]
    %v144 = vld [vmem:[%s1 + $0x1c4] sm:$0xf]
    %v145 = vld [vmem:[%s1 + $0x1c8] sm:$0xf]
    %v146 = vld [vmem:[%s1 + $0x1cc] sm:$0xf]
    %v147 = vld [vmem:[%s1 + $0x1d0] sm:$0xf]
    %v148 = vld [vmem:[%s1 + $0x1d4] sm:$0xf]
    %v149 = vld [vmem:[%s1 + $0x1d8] sm:$0xf]
    %v150 = vld [vmem:[%s1 + $0x1dc] sm:$0xf]
    %v151 = vld [vmem:[%s1 + $0x1e0] sm:$0xf]
    %v152 = vld [vmem:[%s1 + $0x1e4] sm:$0xf]
    %v153 = vld [vmem:[%s1 + $0x1e8] sm:$0xf]
    %v154 = vld [vmem:[%s1 + $0x1ec] sm:$0xf]
    %v155 = vld [vmem:[%s1 + $0x1f0] sm:$0xf]
    %v156 = vld [vmem:[%s1 + $0x1f4] sm:$0xf]
    %v157 = vld [vmem:[%s1 + $0x1f8] sm:$0xf]
    %v158 = vld [vmem:[%s1 + $0x1fc] sm:$0xf]
    %v159 = vld [vmem:[%s1 + $0x200] sm:$0xf]
    %v160 = vld [vmem:[%s1 + $0x204] sm:$0xf]
    %v161 = vld [vmem:[%s1 + $0x208] sm:$0xf]
    %v162 = vld [vmem:[%s1 + $0x20c] sm:$0xf]
    %v163 = vld [vmem:[%s1 + $0x210] sm:$0xf]
    %v164 = vld [vmem:[%s1 + $0x214] sm:$0xf]
    %v165 = vld [vmem:[%s1 + $0x218] sm:$0xf]
    %v166 = vld [vmem:[%s1 + $0x21c] sm:$0xf]
    %v167 = vld [vmem:[%s1 + $0x220] sm:$0xf]
    %v168 = vld [vmem:[%s1 + $0x224] sm:$0xf]
    %v169 = vld [vmem:[%s1 + $0x228] sm:$0xf]
    %v170 = vld [vmem:[%s1 + $0x22c] sm:$0xf]
    %v171 = vld [vmem:[%s1 + $0x230] sm:$0xf]
    %v172 = vld [vmem:[%s1 + $0x234] sm:$0xf]
    %v173 = vld [vmem:[%s1 + $0x238] sm:$0xf]
    %v174 = vld [vmem:[%s1 + $0x23c] sm:$0xf]
    %v175 = vld [vmem:[%s1 + $0x240] sm:$0xf]
    %v176 = vld [vmem:[%s1 + $0x244] sm:$0xf]
    %v177 = vld [vmem:[%s1 + $0x248] sm:$0xf]
    %v178 = vld [vmem:[%s1 + $0x24c] sm:$0xf]
    %v179 = vld [vmem:[%s1 + $0x250] sm:$0xf]
    %v180 = vld [vmem:[%s1 + $0x254] sm:$0xf]
    %v181 = vld [vmem:[%s1 + $0x258] sm:$0xf]
    %v182 = vld [vmem:[%s1 + $0x25c] sm:$0xf]
    %v183 = vld [vmem:[%s1 + $0x260] sm:$0xf]
    %v184 = vld [vmem:[%s1 + $0x264] sm:$0xf]
    %v185 = vld [vmem:[%s1 + $0x268] sm:$0xf]
    %v186 = vld [vmem:[%s1 + $0x26c] sm:$0xf]
    %v187 = vld [vmem:[%s1 + $0x270] sm:$0xf]
    %v188 = vld [vmem:[%s1 + $0x274] sm:$0xf]
    %v189 = vld [vmem:[%s1 + $0x278] sm:$0xf]
    %v190 = vld [vmem:[%s1 + $0x27c] sm:$0xf]
    %v191 = vld [vmem:[%s1 + $0x280] sm:$0xf]
    %v192 = vld [vmem:[%s1 + $0x284] sm:$0xf]
    %v193 = vld [vmem:[%s1 + $0x288] sm:$0xf]
    %v194 = vld [vmem:[%s1 + $0x28c] sm:$0xf]
    %v195 = vld [vmem:[%s1 + $0x290] sm:$0xf]
    %v196 = vld [vmem:[%s1 + $0x294] sm:$0xf]
    %v197 = vld [vmem:[%s1 + $0x298] sm:$0xf]
    %v198 = vld [vmem:[%s1 + $0x29c] sm:$0xf]
    %v199 = vld [vmem:[%s1 + $0x2a0] sm:$0xf]
    %v200 = vld [vmem:[%s1 + $0x2a4] sm:$0xf]
    %v201 = vld [vmem:[%s1 + $0x2a8] sm:$0xf]
    %v202 = vld [vmem:[%s1 + $0x2ac] sm:$0xf]
    %v203 = vld [vmem:[%s1 + $0x2b0] sm:$0xf]
    %v204 = vld [vmem:[%s1 + $0x2b4] sm:$0xf]
    %v205 = vld [vmem:[%s1 + $0x2b8] sm:$0xf]
    %v206 = vld [vmem:[%s1 + $0x2bc] sm:$0xf]
    %v207 = vld [vmem:[%s1 + $0x2c0] sm:$0xf]
    %v208 = vld [vmem:[%s1 + $0x2c4] sm:$0xf]
    %v209 = vld [vmem:[%s1 + $0x2c8] sm:$0xf]
    %v210 = vld [vmem:[%s1 + $0x2cc] sm:$0xf]
    %v211 = vld [vmem:[%s1 + $0x2d0] sm:$0xf]
    %v212 = vld [vmem:[%s1 + $0x2d4] sm:$0xf]
    %v213 = vld [vmem:[%s1 + $0x2d8] sm:$0xf]
    %v214 = vld [vmem:[%s1 + $0x2dc] sm:$0xf]
    %v215 = vld [vmem:[%s1 + $0x2e0] sm:$0xf]
    %v216 = vld [vmem:[%s1 + $0x2e4] sm:$0xf]
    %v217 = vld [vmem:[%s1 + $0x2e8] sm:$0xf]
    %v218 = vld [vmem:[%s1 + $0x2ec] sm:$0xf]
    %v219 = vld [vmem:[%s1 + $0x2f0] sm:$0xf]
    %v220 = vld [vmem:[%s1 + $0x2f4] sm:$0xf]
    %v221 = vld [vmem:[%s1 + $0x2f8] sm:$0xf]
    %v222 = vld [vmem:[%s1 + $0x2fc] sm:$0xf]
    %v223 = vld [vmem:[%s1 + $0x300] sm:$0xf]
    %v224 = vld [vmem:[%s1 + $0x304] sm:$0xf]
    %v225 = vld [vmem:[%s1 + $0x308] sm:$0xf]
    %v226 = vld [vmem:[%s1 + $0x30c] sm:$0xf]
    %v227 = vld [vmem:[%s1 + $0x310] sm:$0xf]
    %v228 = vld [vmem:[%s1 + $0x314] sm:$0xf]
    %v229 = vld [vmem:[%s1 + $0x318] sm:$0xf]
    %v230 = vld [vmem:[%s1 + $0x31c] sm:$0xf]
    %v231 = vld [vmem:[%s1 + $0x320] sm:$0xf]
    %v232 = vld [vmem:[%s1 + $0x324] sm:$0xf]
    %v233 = vld [vmem:[%s1 + $0x328] sm:$0xf]
    %v234 = vld [vmem:[%s1 + $0x32c] sm:$0xf]
    %v235 = vld [vmem:[%s1 + $0x330] sm:$0xf]
    %v236 = vld [vmem:[%s1 + $0x334] sm:$0xf]
    %v237 = vld [vmem:[%s1 + $0x338] sm:$0xf]
    %v238 = vld [vmem:[%s1 + $0x33c] sm:$0xf]
    %v239 = vld [vmem:[%s1 + $0x340] sm:$0xf]
    %v240 = vld [vmem:[%s1 + $0x344] sm:$0xf]
    %v241 = vld [vmem:[%s1 + $0x348] sm:$0xf]
    %v242 = vld [vmem:[%s1 + $0x34c] sm:$0xf]
    %v243 = vld [vmem:[%s1 + $0x350] sm:$0xf]
    %v244 = vld [vmem:[%s1 + $0x354] sm:$0xf]
    %v245 = vld [vmem:[%s1 + $0x358] sm:$0xf]
    %v246 = vld [vmem:[%s1 + $0x35c] sm:$0xf]
    %v247 = vld [vmem:[%s1 + $0x360] sm:$0xf]
    %v248 = vld [vmem:[%s1 + $0x364] sm:$0xf]
    %v249 = vld [vmem:[%s1 + $0x368] sm:$0xf]
    %v250 = vld [vmem:[%s1 + $0x36c] sm:$0xf]
    %v251 = vld [vmem:[%s1 + $0x370] sm:$0xf]
    %v252 = vld [vmem:[%s1 + $0x374] sm:$0xf]
    %v253 = vld [vmem:[%s1 + $0x378] sm:$0xf]
    %v254 = vld [vmem:[%s1 + $0x37c] sm:$0xf]
    %v255 = vld [vmem:[%s1 + $0x380] sm:$0xf]
    %v256 = vld [vmem:[%s1 + $0x384] sm:$0xf]
    %v257 = vld [vmem:[%s1 + $0x388] sm:$0xf]
    %v258 = vld [vmem:[%s1 + $0x38c] sm:$0xf]
    %v259 = vld [vmem:[%s1 + $0x390] sm:$0xf]
    %v260 = vld [vmem:[%s1 + $0x394] sm:$0xf]
    %v261 = vld [vmem:[%s1 + $0x398] sm:$0xf]
    %v262 = vld [vmem:[%s1 + $0x39c] sm:$0xf]
    %v263 = vld [vmem:[%s1 + $0x3a0] sm:$0xf]
    %v264 = vld [vmem:[%s1 + $0x3a4] sm:$0xf]
    %v265 = vld [vmem:[%s1 + $0x3a8] sm:$0xf]
    %v266 = vld [vmem:[%s1 + $0x3ac] sm:$0xf]
    %v267 = vld [vmem:[%s1 + $0x3b0] sm:$0xf]
    %v268 = vld [vmem:[%s1 + $0x3b4] sm:$0xf]
    %v269 = vld [vmem:[%s1 + $0x3b8] sm:$0xf]
    %v270 = vld [vmem:[%s1 + $0x3bc] sm:$0xf]
    %v271 = vld [vmem:[%s1 + $0x3c0] sm:$0xf]
    %v272 = vld [vmem:[%s1 + $0x3c4] sm:$0xf]
    %v273 = vld [vmem:[%s1 + $0x3c8] sm:$0xf]
    %v274 = vld [vmem:[%s1 + $0x3cc] sm:$0xf]
    %v275 = vld [vmem:[%s1 + $0x3d0] sm:$0xf]
    %v276 = vld [vmem:[%s1 + $0x3d4] sm:$0xf]
    %v277 = vld [vmem:[%s1 + $0x3d8] sm:$0xf]
    %v278 = vld [vmem:[%s1 + $0x3dc] sm:$0xf]
    %v279 = vld [vmem:[%s1 + $0x3e0] sm:$0xf]
    %v280 = vld [vmem:[%s1 + $0x3e4] sm:$0xf]
    %v281 = vld [vmem:[%s1 + $0x3e8] sm:$0xf]
    %v282 = vld [vmem:[%s1 + $0x3ec] sm:$0xf]
    %v283 = vld [vmem:[%s1 + $0x3f0] sm:$0xf]
    %v284 = vld [vmem:[%s1 + $0x3f4] sm:$0xf]
    %v285 = vld [vmem:[%s1 + $0x3f8] sm:$0xf]
    %v286 = vld [vmem:[%s1 + $0x3fc] sm:$0xf]
    %v287 = vld [vmem:[%s1 + $0x400] sm:$0xf]
    %v288 = vld [vmem:[%s1 + $0x404] sm:$0xf]
    %v289 = vld [vmem:[%s1 + $0x408] sm:$0xf]
    %v290 = vld [vmem:[%s1 + $0x40c] sm:$0xf]
    %v291 = vld [vmem:[%s1 + $0x410] sm:$0xf]
    %v292 = vld [vmem:[%s1 + $0x414] sm:$0xf]
    %v293 = vld [vmem:[%s1 + $0x418] sm:$0xf]
    %v294 = vld [vmem:[%s1 + $0x41c] sm:$0xf]
    %v295 = vld [vmem:[%s1 + $0x420] sm:$0xf]
    %v296 = vld [vmem:[%s1 + $0x424] sm:$0xf]
    %v297 = vld [vmem:[%s1 + $0x428] sm:$0xf]
    %v298 = vld [vmem:[%s1 + $0x42c] sm:$0xf]
    %v299 = vld [vmem:[%s1 + $0x430] sm:$0xf]
    %v300 = vld [vmem:[%s1 + $0x434] sm:$0xf]
    %v301 = vld [vmem:[%s1 + $0x438] sm:$0xf]
    %v302 = vld [vmem:[%s1 + $0x43c] sm:$0xf]
    %v303 = vld [vmem:[%s1 + $0x440] sm:$0xf]
    %v304 = vld [vmem:[%s1 + $0x444] sm:$0xf]
    %v305 = vld [vmem:[%s1 + $0x448] sm:$0xf]
    %v306 = vld [vmem:[%s1 + $0x44c] sm:$0xf]
    %v307 = vld [vmem:[%s1 + $0x450] sm:$0xf]
    %v308 = vld [vmem:[%s1 + $0x454] sm:$0xf]
    %v309 = vld [vmem:[%s1 + $0x458] sm:$0xf]
    %v310 = vld [vmem:[%s1 + $0x45c] sm:$0xf]
    %v311 = vld [vmem:[%s1 + $0x460] sm:$0xf]
    %v312 = vld [vmem:[%s1 + $0x464] sm:$0xf]
    %v313 = vld [vmem:[%s1 + $0x468] sm:$0xf]
    %v314 = vld [vmem:[%s1 + $0x46c] sm:$0xf]
    %v315 = vld [vmem:[%s1 + $0x470] sm:$0xf]
    %v316 = vld [vmem:[%s1 + $0x474] sm:$0xf]
    %v317 = vld [vmem:[%s1 + $0x478] sm:$0xf]
    %v318 = vld [vmem:[%s1 + $0x47c] sm:$0xf]
    %v319 = vld [vmem:[%s1 + $0x480] sm:$0xf]
    %v320 = vld [vmem:[%s1 + $0x484] sm:$0xf]
    %v321 = vld [vmem:[%s1 + $0x488] sm:$0xf]
    %v322 = vld [vmem:[%s1 + $0x48c] sm:$0xf]
    %v323 = vld [vmem:[%s1 + $0x490] sm:$0xf]
    %v324 = vld [vmem:[%s1 + $0x494] sm:$0xf]
    %v325 = vld [vmem:[%s1 + $0x498] sm:$0xf]
    %v326 = vld [vmem:[%s1 + $0x49c] sm:$0xf]
    %v327 = vld [vmem:[%s1 + $0x4a0] sm:$0xf]
    %v328 = vld [vmem:[%s1 + $0x4a4] sm:$0xf]
    %v329 = vld [vmem:[%s1 + $0x4a8] sm:$0xf]
    %v330 = vld [vmem:[%s1 + $0x4ac] sm:$0xf]
    %v331 = vld [vmem:[%s1 + $0x4b0] sm:$0xf]
    %v332 = vld [vmem:[%s1 + $0x4b4] sm:$0xf]
    %v333 = vld [vmem:[%s1 + $0x4b8] sm:$0xf]
    %v334 = vld [vmem:[%s1 + $0x4bc] sm:$0xf]
    %v335 = vld [vmem:[%s1 + $0x4c0] sm:$0xf]
    %v336 = vld [vmem:[%s1 + $0x4c4] sm:$0xf]
    %v337 = vld [vmem:[%s1 + $0x4c8] sm:$0xf]
    %v338 = vld [vmem:[%s1 + $0x4cc] sm:$0xf]
    %v339 = vld [vmem:[%s1 + $0x4d0] sm:$0xf]
    %v340 = vld [vmem:[%s1 + $0x4d4] sm:$0xf]
    %v341 = vld [vmem:[%s1 + $0x4d8] sm:$0xf]
    %v342 = vld [vmem:[%s1 + $0x4dc] sm:$0xf]
    %v343 = vld [vmem:[%s1 + $0x4e0] sm:$0xf]
    %v344 = vld [vmem:[%s1 + $0x4e4] sm:$0xf]
    %v345 = vld [vmem:[%s1 + $0x4e8] sm:$0xf]
    %v346 = vld [vmem:[%s1 + $0x4ec] sm:$0xf]
    %v347 = vld [vmem:[%s1 + $0x4f0] sm:$0xf]
    %v348 = vld [vmem:[%s1 + $0x4f4] sm:$0xf]
    %v349 = vld [vmem:[%s1 + $0x4f8] sm:$0xf]
    %v350 = vld [vmem:[%s1 + $0x4fc] sm:$0xf]
    %v351 = vld [vmem:[%s1 + $0x500] sm:$0xf]
    %v352 = vld [vmem:[%s1 + $0x504] sm:$0xf]
    %v353 = vld [vmem:[%s1 + $0x508] sm:$0xf]
    %v354 = vld [vmem:[%s1 + $0x50c] sm:$0xf]
    %v355 = vld [vmem:[%s1 + $0x510] sm:$0xf]
    %v356 = vld [vmem:[%s1 + $0x514] sm:$0xf]
    %v357 = vld [vmem:[%s1 + $0x518] sm:$0xf]
    %v358 = vld [vmem:[%s1 + $0x51c] sm:$0xf]
    %v359 = vld [vmem:[%s1 + $0x520] sm:$0xf]
    %v360 = vld [vmem:[%s1 + $0x524] sm:$0xf]
    %v361 = vld [vmem:[%s1 + $0x528] sm:$0xf]
    %v362 = vld [vmem:[%s1 + $0x52c] sm:$0xf]
    %v363 = vld [vmem:[%s1 + $0x530] sm:$0xf]
    %v364 = vld [vmem:[%s1 + $0x534] sm:$0xf]
    %v365 = vld [vmem:[%s1 + $0x538] sm:$0xf]
    %v366 = vld [vmem:[%s1 + $0x53c] sm:$0xf]
    %v367 = vld [vmem:[%s1 + $0x540] sm:$0xf]
    %v368 = vld [vmem:[%s1 + $0x544] sm:$0xf]
    %v369 = vld [vmem:[%s1 + $0x548] sm:$0xf]
    %v370 = vld [vmem:[%s1 + $0x54c] sm:$0xf]
    %v371 = vld [vmem:[%s1 + $0x550] sm:$0xf]
    %v372 = vld [vmem:[%s1 + $0x554] sm:$0xf]
    %v373 = vld [vmem:[%s1 + $0x558] sm:$0xf]
    %v374 = vld [vmem:[%s1 + $0x55c] sm:$0xf]
    %v375 = vld [vmem:[%s1 + $0x560] sm:$0xf]
    %v376 = vld [vmem:[%s1 + $0x564] sm:$0xf]
    %v377 = vld [vmem:[%s1 + $0x568] sm:$0xf]
    %v378 = vld [vmem:[%s1 + $0x56c] sm:$0xf]
    %v379 = vld [vmem:[%s1 + $0x570] sm:$0xf]
    %v380 = vld [vmem:[%s1 + $0x574] sm:$0xf]
    %v381 = vld [vmem:[%s1 + $0x578] sm:$0xf]
    %v382 = vld [vmem:[%s1 + $0x57c] sm:$0xf]
    %v383 = vld [vmem:[%s1 + $0x580] sm:$0xf]
    %v384 = vld [vmem:[%s1 + $0x584] sm:$0xf]
    %v385 = vld [vmem:[%s1 + $0x588] sm:$0xf]
    %v386 = vld [vmem:[%s1 + $0x58c] sm:$0xf]
    %v387 = vld [vmem:[%s1 + $0x590] sm:$0xf]
    %v388 = vld [vmem:[%s1 + $0x594] sm:$0xf]
    %v389 = vld [vmem:[%s1 + $0x598] sm:$0xf]
    %v390 = vld [vmem:[%s1 + $0x59c] sm:$0xf]
    %v391 = vld [vmem:[%s1 + $0x5a0] sm:$0xf]
    %v392 = vld [vmem:[%s1 + $0x5a4] sm:$0xf]
    %v393 = vld [vmem:[%s1 + $0x5a8] sm:$0xf]
    %v394 = vld [vmem:[%s1 + $0x5ac] sm:$0xf]
    %v395 = vld [vmem:[%s1 + $0x5b0] sm:$0xf]
    %v396 = vld [vmem:[%s1 + $0x5b4] sm:$0xf]
    %v397 = vld [vmem:[%s1 + $0x5b8] sm:$0xf]
    %v398 = vld [vmem:[%s1 + $0x5bc] sm:$0xf]
    %v399 = vld [vmem:[%s1 + $0x5c0] sm:$0xf]
    %v400 = vld [vmem:[%s1 + $0x5c4] sm:$0xf]
    %v401 = vld [vmem:[%s1 + $0x5c8] sm:$0xf]
    %v402 = vld [vmem:[%s1 + $0x5cc] sm:$0xf]
    %v403 = vld [vmem:[%s1 + $0x5d0] sm:$0xf]
    %v404 = vld [vmem:[%s1 + $0x5d4] sm:$0xf]
    %v405 = vld [vmem:[%s1 + $0x5d8] sm:$0xf]
    %v406 = vld [vmem:[%s1 + $0x5dc] sm:$0xf]
    %v407 = vld [vmem:[%s1 + $0x5e0] sm:$0xf]
    %v408 = vld [vmem:[%s1 + $0x5e4] sm:$0xf]
    %v409 = vld [vmem:[%s1 + $0x5e8] sm:$0xf]
    %v410 = vld [vmem:[%s1 + $0x5ec] sm:$0xf]
    %v411 = vld [vmem:[%s1 + $0x5f0] sm:$0xf]
    %v412 = vld [vmem:[%s1 + $0x5f4] sm:$0xf]
    %v413 = vld [vmem:[%s1 + $0x5f8] sm:$0xf]
    %v414 = vld [vmem:[%s1 + $0x5fc] sm:$0xf]
    %v415 = vld [vmem:[%s1 + $0x600] sm:$0xf]
    %v416 = vld [vmem:[%s1 + $0x604] sm:$0xf]
    %v417 = vld [vmem:[%s1 + $0x608] sm:$0xf]
    %v418 = vld [vmem:[%s1 + $0x60c] sm:$0xf]
    %v419 = vld [vmem:[%s1 + $0x610] sm:$0xf]
    %v420 = vld [vmem:[%s1 + $0x614] sm:$0xf]
    %v421 = vld [vmem:[%s1 + $0x618] sm:$0xf]
    %v422 = vld [vmem:[%s1 + $0x61c] sm:$0xf]
    %v423 = vld [vmem:[%s1 + $0x620] sm:$0xf]
    %v424 = vld [vmem:[%s1 + $0x624] sm:$0xf]
    %v425 = vld [vmem:[%s1 + $0x628] sm:$0xf]
    %v426 = vld [vmem:[%s1 + $0x62c] sm:$0xf]
    %v427 = vld [vmem:[%s1 + $0x630] sm:$0xf]
    %v428 = vld [vmem:[%s1 + $0x634] sm:$0xf]
    %v429 = vld [vmem:[%s1 + $0x638] sm:$0xf]
    %v430 = vld [vmem:[%s1 + $0x63c] sm:$0xf]
    %v431 = vld [vmem:[%s1 + $0x640] sm:$0xf]
    %v432 = vld [vmem:[%s1 + $0x644] sm:$0xf]
    %v433 = vld [vmem:[%s1 + $0x648] sm:$0xf]
    %v434 = vld [vmem:[%s1 + $0x64c] sm:$0xf]
    %v435 = vld [vmem:[%s1 + $0x650] sm:$0xf]
    %v436 = vld [vmem:[%s1 + $0x654] sm:$0xf]
    %v437 = vld [vmem:[%s1 + $0x658] sm:$0xf]
    %v438 = vld [vmem:[%s1 + $0x65c] sm:$0xf]
    %v439 = vld [vmem:[%s1 + $0x660] sm:$0xf]
    %v440 = vld [vmem:[%s1 + $0x664] sm:$0xf]
    %v441 = vld [vmem:[%s1 + $0x668] sm:$0xf]
    %v442 = vld [vmem:[%s1 + $0x66c] sm:$0xf]
    %v443 = vld [vmem:[%s1 + $0x670] sm:$0xf]
    %v444 = vld [vmem:[%s1 + $0x674] sm:$0xf]
    %v445 = vld [vmem:[%s1 + $0x678] sm:$0xf]
    %v446 = vld [vmem:[%s1 + $0x67c] sm:$0xf]
    %v447 = vld [vmem:[%s1 + $0x680] sm:$0xf]
    %v448 = vld [vmem:[%s1 + $0x684] sm:$0xf]
    %v449 = vld [vmem:[%s1 + $0x688] sm:$0xf]
    %v450 = vld [vmem:[%s1 + $0x68c] sm:$0xf]
    %v451 = vld [vmem:[%s1 + $0x690] sm:$0xf]
    %v452 = vld [vmem:[%s1 + $0x694] sm:$0xf]
    %v453 = vld [vmem:[%s1 + $0x698] sm:$0xf]
    %v454 = vld [vmem:[%s1 + $0x69c] sm:$0xf]
    %v455 = vld [vmem:[%s1 + $0x6a0] sm:$0xf]
    %v456 = vld [vmem:[%s1 + $0x6a4] sm:$0xf]
    %v457 = vld [vmem:[%s1 + $0x6a8] sm:$0xf]
    %v458 = vld [vmem:[%s1 + $0x6ac] sm:$0xf]
    %v459 = vld [vmem:[%s1 + $0x6b0] sm:$0xf]
    %v460 = vld [vmem:[%s1 + $0x6b4] sm:$0xf]
    %v461 = vld [vmem:[%s1 + $0x6b8] sm:$0xf]
    %v462 = vld [vmem:[%s1 + $0x6bc] sm:$0xf]
    %v463 = vld [vmem:[%s1 + $0x6c0] sm:$0xf]
    %v464 = vld [vmem:[%s1 + $0x6c4] sm:$0xf]
    %v465 = vld [vmem:[%s1 + $0x6c8] sm:$0xf]
    %v466 = vld [vmem:[%s1 + $0x6cc] sm:$0xf]
    %v467 = vld [vmem:[%s1 + $0x6d0] sm:$0xf]
    %v468 = vld [vmem:[%s1 + $0x6d4] sm:$0xf]
    %v469 = vld [vmem:[%s1 + $0x6d8] sm:$0xf]
    %v470 = vld [vmem:[%s1 + $0x6dc] sm:$0xf]
    %v471 = vld [vmem:[%s1 + $0x6e0] sm:$0xf]
    %v472 = vld [vmem:[%s1 + $0x6e4] sm:$0xf]
    %v473 = vld [vmem:[%s1 + $0x6e8] sm:$0xf]
    %v474 = vld [vmem:[%s1 + $0x6ec] sm:$0xf]
    %v475 = vld [vmem:[%s1 + $0x6f0] sm:$0xf]
    %v476 = vld [vmem:[%s1 + $0x6f4] sm:$0xf]
    %v477 = vld [vmem:[%s1 + $0x6f8] sm:$0xf]
    %v478 = vld [vmem:[%s1 + $0x6fc] sm:$0xf]
    %v479 = vld [vmem:[%s1 + $0x700] sm:$0xf]
    %v480 = vld [vmem:[%s1 + $0x704] sm:$0xf]
    %v481 = vld [vmem:[%s1 + $0x708] sm:$0xf]
    %v482 = vld [vmem:[%s1 + $0x70c] sm:$0xf]
    %v483 = vld [vmem:[%s1 + $0x710] sm:$0xf]
    %v484 = vld [vmem:[%s1 + $0x714] sm:$0xf]
    %v485 = vld [vmem:[%s1 + $0x718] sm:$0xf]
    %v486 = vld [vmem:[%s1 + $0x71c] sm:$0xf]
    %v487 = vld [vmem:[%s1 + $0x720] sm:$0xf]
    %v488 = vld [vmem:[%s1 + $0x724] sm:$0xf]
    %v489 = vld [vmem:[%s1 + $0x728] sm:$0xf]
    %v490 = vld [vmem:[%s1 + $0x72c] sm:$0xf]
    %v491 = vld [vmem:[%s1 + $0x730] sm:$0xf]
    %v492 = vld [vmem:[%s1 + $0x734] sm:$0xf]
    %v493 = vld [vmem:[%s1 + $0x738] sm:$0xf]
    %v494 = vld [vmem:[%s1 + $0x73c] sm:$0xf]
    %v495 = vld [vmem:[%s1 + $0x740] sm:$0xf]
    %v496 = vld [vmem:[%s1 + $0x744] sm:$0xf]
    %v497 = vld [vmem:[%s1 + $0x748] sm:$0xf]
    %v498 = vld [vmem:[%s1 + $0x74c] sm:$0xf]
    %v499 = vld [vmem:[%s1 + $0x750] sm:$0xf]
    %v500 = vld [vmem:[%s1 + $0x754] sm:$0xf]
    %v501 = vld [vmem:[%s1 + $0x758] sm:$0xf]
    %v502 = vld [vmem:[%s1 + $0x75c] sm:$0xf]
    %v503 = vld [vmem:[%s1 + $0x760] sm:$0xf]
    %v504 = vld [vmem:[%s1 + $0x764] sm:$0xf]
    %v505 = vld [vmem:[%s1 + $0x768] sm:$0xf]
    %v506 = vld [vmem:[%s1 + $0x76c] sm:$0xf]
    %v507 = vld [vmem:[%s1 + $0x770] sm:$0xf]
    %v508 = vld [vmem:[%s1 + $0x774] sm:$0xf]
    %v509 = vld [vmem:[%s1 + $0x778] sm:$0xf]
    %v510 = vld [vmem:[%s1 + $0x77c] sm:$0xf]
    %v511 = vld [vmem:[%s1 + $0x780] sm:$0xf]
    %v512 = vld [vmem:[%s1 + $0x784] sm:$0xf]
    %v513 = vld [vmem:[%s1 + $0x788] sm:$0xf]
    %v514 = vld [vmem:[%s1 + $0x78c] sm:$0xf]
    %v515 = vld [vmem:[%s1 + $0x790] sm:$0xf]
    %v516 = vld [vmem:[%s1 + $0x794] sm:$0xf]
    %v517 = vld [vmem:[%s1 + $0x798] sm:$0xf]
    %v518 = vld [vmem:[%s1 + $0x79c] sm:$0xf]
    %v519 = vld [vmem:[%s1 + $0x7a0] sm:$0xf]
    %v520 = vld [vmem:[%s1 + $0x7a4] sm:$0xf]
    %v521 = vld [vmem:[%s1 + $0x7a8] sm:$0xf]
    %v522 = vld [vmem:[%s1 + $0x7ac] sm:$0xf]
    %v523 = vld [vmem:[%s1 + $0x7b0] sm:$0xf]
    %v524 = vld [vmem:[%s1 + $0x7b4] sm:$0xf]
    %v525 = vld [vmem:[%s1 + $0x7b8] sm:$0xf]
    %v526 = vld [vmem:[%s1 + $0x7bc] sm:$0xf]
    %v527 = vld [vmem:[%s1 + $0x7c0] sm:$0xf]
    %v528 = vld [vmem:[%s1 + $0x7c4] sm:$0xf]
    %v529 = vld [vmem:[%s1 + $0x7c8] sm:$0xf]
    %v530 = vld [vmem:[%s1 + $0x7cc] sm:$0xf]
    %v531 = vld [vmem:[%s1 + $0x7d0] sm:$0xf]
    %v532 = vld [vmem:[%s1 + $0x7d4] sm:$0xf]
    %v533 = vld [vmem:[%s1 + $0x7d8] sm:$0xf]
    %v534 = vld [vmem:[%s1 + $0x7dc] sm:$0xf]
    %v535 = vld [vmem:[%s1 + $0x7e0] sm:$0xf]
    %v536 = vld [vmem:[%s1 + $0x7e4] sm:$0xf]
    %v537 = vld [vmem:[%s1 + $0x7e8] sm:$0xf]
    %v538 = vld [vmem:[%s1 + $0x7ec] sm:$0xf]
    %v539 = vld [vmem:[%s1 + $0x7f0] sm:$0xf]
    %v540 = vld [vmem:[%s1 + $0x7f4] sm:$0xf]
    %v541 = vld [vmem:[%s1 + $0x7f8] sm:$0xf]
    %v542 = vld [vmem:[%s1 + $0x7fc] sm:$0xf]
    %v543 = vld [vmem:[%s1 + $0x800] sm:$0xf]
    %v544 = vld [vmem:[%s1 + $0x804] sm:$0xf]
    %v545 = vld [vmem:[%s1 + $0x808] sm:$0xf]
    %v546 = vld [vmem:[%s1 + $0x80c] sm:$0xf]
    %v547 = vld [vmem:[%s1 + $0x810] sm:$0xf]
    %v548 = vld [vmem:[%s1 + $0x814] sm:$0xf]
    %v549 = vld [vmem:[%s1 + $0x818] sm:$0xf]
    %v550 = vld [vmem:[%s1 + $0x81c] sm:$0xf]
    %v551 = vld [vmem:[%s1 + $0x820] sm:$0xf]
    %v552 = vld [vmem:[%s1 + $0x824] sm:$0xf]
    %v553 = vld [vmem:[%s1 + $0x828] sm:$0xf]
    %v554 = vld [vmem:[%s1 + $0x82c] sm:$0xf]
    %v555 = vld [vmem:[%s1 + $0x830] sm:$0xf]
    %v556 = vld [vmem:[%s1 + $0x834] sm:$0xf]
    %v557 = vld [vmem:[%s1 + $0x838] sm:$0xf]
    %v558 = vld [vmem:[%s1 + $0x83c] sm:$0xf]
    %v559 = vld [vmem:[%s1 + $0x840] sm:$0xf]
    %v560 = vld [vmem:[%s1 + $0x844] sm:$0xf]
    %v561 = vld [vmem:[%s1 + $0x848] sm:$0xf]
    %v562 = vld [vmem:[%s1 + $0x84c] sm:$0xf]
    %v563 = vld [vmem:[%s1 + $0x850] sm:$0xf]
    %v564 = vld [vmem:[%s1 + $0x854] sm:$0xf]
    %v565 = vld [vmem:[%s1 + $0x858] sm:$0xf]
    %v566 = vld [vmem:[%s1 + $0x85c] sm:$0xf]
    %v567 = vld [vmem:[%s1 + $0x860] sm:$0xf]
    %v568 = vld [vmem:[%s1 + $0x864] sm:$0xf]
    %v569 = vld [vmem:[%s1 + $0x868] sm:$0xf]
    %v570 = vld [vmem:[%s1 + $0x86c] sm:$0xf]
    %v571 = vld [vmem:[%s1 + $0x870] sm:$0xf]
    %v572 = vld [vmem:[%s1 + $0x874] sm:$0xf]
    %v573 = vld [vmem:[%s1 + $0x878] sm:$0xf]
    %v574 = vld [vmem:[%s1 + $0x87c] sm:$0xf]
    %v575 = vld [vmem:[%s1 + $0x880] sm:$0xf]
    %v576 = vld [vmem:[%s1 + $0x884] sm:$0xf]
    %v577 = vld [vmem:[%s1 + $0x888] sm:$0xf]
    %v578 = vld [vmem:[%s1 + $0x88c] sm:$0xf]
    %v579 = vld [vmem:[%s1 + $0x890] sm:$0xf]
    %v580 = vld [vmem:[%s1 + $0x894] sm:$0xf]
    %v581 = vld [vmem:[%s1 + $0x898] sm:$0xf]
    %v582 = vld [vmem:[%s1 + $0x89c] sm:$0xf]
    %v583 = vld [vmem:[%s1 + $0x8a0] sm:$0xf]
    %v584 = vld [vmem:[%s1 + $0x8a4] sm:$0xf]
    %v585 = vld [vmem:[%s1 + $0x8a8] sm:$0xf]
    %v586 = vld [vmem:[%s1 + $0x8ac] sm:$0xf]
    %v587 = vld [vmem:[%s1 + $0x8b0] sm:$0xf]
    %v588 = vld [vmem:[%s1 + $0x8b4] sm:$0xf]
    %v589 = vld [vmem:[%s1 + $0x8b8] sm:$0xf]
    %v590 = vld [vmem:[%s1 + $0x8bc] sm:$0xf]
    %v591 = vld [vmem:[%s1 + $0x8c0] sm:$0xf]
    %v592 = vld [vmem:[%s1 + $0x8c4] sm:$0xf]
    %v593 = vld [vmem:[%s1 + $0x8c8] sm:$0xf]
    %v594 = vld [vmem:[%s1 + $0x8cc] sm:$0xf]
    %v595 = vld [vmem:[%s1 + $0x8d0] sm:$0xf]
    %v596 = vld [vmem:[%s1 + $0x8d4] sm:$0xf]
    %v597 = vld [vmem:[%s1 + $0x8d8] sm:$0xf]
    %v598 = vld [vmem:[%s1 + $0x8dc] sm:$0xf]
    %v599 = vld [vmem:[%s1 + $0x8e0] sm:$0xf]
    %v600 = vld [vmem:[%s1 + $0x8e4] sm:$0xf]
    %v601 = vld [vmem:[%s1 + $0x8e8] sm:$0xf]
    %v602 = vld [vmem:[%s1 + $0x8ec] sm:$0xf]
    %v603 = vld [vmem:[%s1 + $0x8f0] sm:$0xf]
    %v604 = vld [vmem:[%s1 + $0x8f4] sm:$0xf]
    %v605 = vld [vmem:[%s1 + $0x8f8] sm:$0xf]
    %v606 = vld [vmem:[%s1 + $0x8fc] sm:$0xf]
    %v607 = vld [vmem:[%s1 + $0x900] sm:$0xf]
    %v608 = vld [vmem:[%s1 + $0x904] sm:$0xf]
    %v609 = vld [vmem:[%s1 + $0x908] sm:$0xf]
    %v610 = vld [vmem:[%s1 + $0x90c] sm:$0xf]
    %v611 = vld [vmem:[%s1 + $0x910] sm:$0xf]
    %v612 = vld [vmem:[%s1 + $0x914] sm:$0xf]
    %v613 = vld [vmem:[%s1 + $0x918] sm:$0xf]
    %v614 = vld [vmem:[%s1 + $0x91c] sm:$0xf]
    %v615 = vld [vmem:[%s1 + $0x920] sm:$0xf]
    %v616 = vld [vmem:[%s1 + $0x924] sm:$0xf]
    %v617 = vld [vmem:[%s1 + $0x928] sm:$0xf]
    %v618 = vld [vmem:[%s1 + $0x92c] sm:$0xf]
    %v619 = vld [vmem:[%s1 + $0x930] sm:$0xf]
    %v620 = vld [vmem:[%s1 + $0x934] sm:$0xf]
    %v621 = vld [vmem:[%s1 + $0x938] sm:$0xf]
    %v622 = vld [vmem:[%s1 + $0x93c] sm:$0xf]
    %v623 = vld [vmem:[%s1 + $0x940] sm:$0xf]
    %v624 = vld [vmem:[%s1 + $0x944] sm:$0xf]
    %v625 = vld [vmem:[%s1 + $0x948] sm:$0xf]
    %v626 = vld [vmem:[%s1 + $0x94c] sm:$0xf]
    %v627 = vld [vmem:[%s1 + $0x950] sm:$0xf]
    %v628 = vld [vmem:[%s1 + $0x954] sm:$0xf]
    %v629 = vld [vmem:[%s1 + $0x958] sm:$0xf]
    %v630 = vld [vmem:[%s1 + $0x95c] sm:$0xf]
    %v631 = vld [vmem:[%s1 + $0x960] sm:$0xf]
    %v632 = vld [vmem:[%s1 + $0x964] sm:$0xf]
    %v633 = vld [vmem:[%s1 + $0x968] sm:$0xf]
    %v634 = vld [vmem:[%s1 + $0x96c] sm:$0xf]
    %v635 = vld [vmem:[%s1 + $0x970] sm:$0xf]
    %v636 = vld [vmem:[%s1 + $0x974] sm:$0xf]
    %v637 = vld [vmem:[%s1 + $0x978] sm:$0xf]
    %v638 = vld [vmem:[%s1 + $0x97c] sm:$0xf]
    %v639 = vld [vmem:[%s1 + $0x980] sm:$0xf]
    %v640 = vld [vmem:[%s1 + $0x984] sm:$0xf]
    %v641 = vld [vmem:[%s1 + $0x988] sm:$0xf]
    %v642 = vld [vmem:[%s1 + $0x98c] sm:$0xf]
    %v643 = vld [vmem:[%s1 + $0x990] sm:$0xf]
    %v644 = vld [vmem:[%s1 + $0x994] sm:$0xf]
    %v645 = vld [vmem:[%s1 + $0x998] sm:$0xf]
    %v646 = vld [vmem:[%s1 + $0x99c] sm:$0xf]
    %v647 = vld [vmem:[%s1 + $0x9a0] sm:$0xf]
    %v648 = vld [vmem:[%s1 + $0x9a4] sm:$0xf]
    %v649 = vld [vmem:[%s1 + $0x9a8] sm:$0xf]
    %v650 = vld [vmem:[%s1 + $0x9ac] sm:$0xf]
    %v651 = vld [vmem:[%s1 + $0x9b0] sm:$0xf]
    %v652 = vld [vmem:[%s1 + $0x9b4] sm:$0xf]
    %v653 = vld [vmem:[%s1 + $0x9b8] sm:$0xf]
    %v654 = vld [vmem:[%s1 + $0x9bc] sm:$0xf]
    %v655 = vld [vmem:[%s1 + $0x9c0] sm:$0xf]
    %v656 = vld [vmem:[%s1 + $0x9c4] sm:$0xf]
    %v657 = vld [vmem:[%s1 + $0x9c8] sm:$0xf]
    %v658 = vld [vmem:[%s1 + $0x9cc] sm:$0xf]
    %v659 = vld [vmem:[%s1 + $0x9d0] sm:$0xf]
    %v660 = vld [vmem:[%s1 + $0x9d4] sm:$0xf]
    %v661 = vld [vmem:[%s1 + $0x9d8] sm:$0xf]
    %v662 = vld [vmem:[%s1 + $0x9dc] sm:$0xf]
    %v663 = vld [vmem:[%s1 + $0x9e0] sm:$0xf]
    %v664 = vld [vmem:[%s1 + $0x9e4] sm:$0xf]
    %v665 = vld [vmem:[%s1 + $0x9e8] sm:$0xf]
    %v666 = vld [vmem:[%s1 + $0x9ec] sm:$0xf]
    %v667 = vld [vmem:[%s1 + $0x9f0] sm:$0xf]
    %v668 = vld [vmem:[%s1 + $0x9f4] sm:$0xf]
    %v669 = vld [vmem:[%s1 + $0x9f8] sm:$0xf]
    %v670 = vld [vmem:[%s1 + $0x9fc] sm:$0xf]
    %v671 = vld [vmem:[%s1 + $0xa00] sm:$0xf]
    %v672 = vld [vmem:[%s1 + $0xa04] sm:$0xf]
    %v673 = vld [vmem:[%s1 + $0xa08] sm:$0xf]
    %v674 = vld [vmem:[%s1 + $0xa0c] sm:$0xf]
    %v675 = vld [vmem:[%s1 + $0xa10] sm:$0xf]
    %v676 = vld [vmem:[%s1 + $0xa14] sm:$0xf]
    %v677 = vld [vmem:[%s1 + $0xa18] sm:$0xf]
    %v678 = vld [vmem:[%s1 + $0xa1c] sm:$0xf]
    %v679 = vld [vmem:[%s1 + $0xa20] sm:$0xf]
    %v680 = vld [vmem:[%s1 + $0xa24] sm:$0xf]
    %v681 = vld [vmem:[%s1 + $0xa28] sm:$0xf]
    %v682 = vld [vmem:[%s1 + $0xa2c] sm:$0xf]
    %v683 = vld [vmem:[%s1 + $0xa30] sm:$0xf]
    %v684 = vld [vmem:[%s1 + $0xa34] sm:$0xf]
    %v685 = vld [vmem:[%s1 + $0xa38] sm:$0xf]
    %v686 = vld [vmem:[%s1 + $0xa3c] sm:$0xf]
    %v687 = vld [vmem:[%s1 + $0xa40] sm:$0xf]
    %v688 = vld [vmem:[%s1 + $0xa44] sm:$0xf]
    %v689 = vld [vmem:[%s1 + $0xa48] sm:$0xf]
    %v690 = vld [vmem:[%s1 + $0xa4c] sm:$0xf]
    %v691 = vld [vmem:[%s1 + $0xa50] sm:$0xf]
    %v692 = vld [vmem:[%s1 + $0xa54] sm:$0xf]
    %v693 = vld [vmem:[%s1 + $0xa58] sm:$0xf]
    %v694 = vld [vmem:[%s1 + $0xa5c] sm:$0xf]
    %v695 = vld [vmem:[%s1 + $0xa60] sm:$0xf]
    %v696 = vld [vmem:[%s1 + $0xa64] sm:$0xf]
    %v697 = vld [vmem:[%s1 + $0xa68] sm:$0xf]
    %v698 = vld [vmem:[%s1 + $0xa6c] sm:$0xf]
    %v699 = vld [vmem:[%s1 + $0xa70] sm:$0xf]
    %v700 = vld [vmem:[%s1 + $0xa74] sm:$0xf]
    %v701 = vld [vmem:[%s1 + $0xa78] sm:$0xf]
    %v702 = vld [vmem:[%s1 + $0xa7c] sm:$0xf]
    %v703 = vld [vmem:[%s1 + $0xa80] sm:$0xf]
    %v704 = vld [vmem:[%s1 + $0xa84] sm:$0xf]
    %v705 = vld [vmem:[%s1 + $0xa88] sm:$0xf]
    %v706 = vld [vmem:[%s1 + $0xa8c] sm:$0xf]
    %v707 = vld [vmem:[%s1 + $0xa90] sm:$0xf]
    %v708 = vld [vmem:[%s1 + $0xa94] sm:$0xf]
    %v709 = vld [vmem:[%s1 + $0xa98] sm:$0xf]
    %v710 = vld [vmem:[%s1 + $0xa9c] sm:$0xf]
    %v711 = vld [vmem:[%s1 + $0xaa0] sm:$0xf]
    %v712 = vld [vmem:[%s1 + $0xaa4] sm:$0xf]
    %v713 = vld [vmem:[%s1 + $0xaa8] sm:$0xf]
    %v714 = vld [vmem:[%s1 + $0xaac] sm:$0xf]
    %v715 = vld [vmem:[%s1 + $0xab0] sm:$0xf]
    %v716 = vld [vmem:[%s1 + $0xab4] sm:$0xf]
    %v717 = vld [vmem:[%s1 + $0xab8] sm:$0xf]
    %v718 = vld [vmem:[%s1 + $0xabc] sm:$0xf]
    %v719 = vld [vmem:[%s1 + $0xac0] sm:$0xf]
    %v720 = vld [vmem:[%s1 + $0xac4] sm:$0xf]
    %v721 = vld [vmem:[%s1 + $0xac8] sm:$0xf]
    %v722 = vld [vmem:[%s1 + $0xacc] sm:$0xf]
    %v723 = vld [vmem:[%s1 + $0xad0] sm:$0xf]
    %v724 = vld [vmem:[%s1 + $0xad4] sm:$0xf]
    %v725 = vld [vmem:[%s1 + $0xad8] sm:$0xf]
    %v726 = vld [vmem:[%s1 + $0xadc] sm:$0xf]
    %v727 = vld [vmem:[%s1 + $0xae0] sm:$0xf]
    %v728 = vld [vmem:[%s1 + $0xae4] sm:$0xf]
    %v729 = vld [vmem:[%s1 + $0xae8] sm:$0xf]
    %v730 = vld [vmem:[%s1 + $0xaec] sm:$0xf]
    %v731 = vld [vmem:[%s1 + $0xaf0] sm:$0xf]
    %v732 = vld [vmem:[%s1 + $0xaf4] sm:$0xf]
    %v733 = vld [vmem:[%s1 + $0xaf8] sm:$0xf]
    %v734 = vld [vmem:[%s1 + $0xafc] sm:$0xf]
    %v735 = vld [vmem:[%s1 + $0xb00] sm:$0xf]
    %v736 = vld [vmem:[%s1 + $0xb04] sm:$0xf]
    %v737 = vld [vmem:[%s1 + $0xb08] sm:$0xf]
    %v738 = vld [vmem:[%s1 + $0xb0c] sm:$0xf]
    %v739 = vld [vmem:[%s1 + $0xb10] sm:$0xf]
    %v740 = vld [vmem:[%s1 + $0xb14] sm:$0xf]
    %v741 = vld [vmem:[%s1 + $0xb18] sm:$0xf]
    %v742 = vld [vmem:[%s1 + $0xb1c] sm:$0xf]
    %v743 = vld [vmem:[%s1 + $0xb20] sm:$0xf]
    %v744 = vld [vmem:[%s1 + $0xb24] sm:$0xf]
    %v745 = vld [vmem:[%s1 + $0xb28] sm:$0xf]
    %v746 = vld [vmem:[%s1 + $0xb2c] sm:$0xf]
    %v747 = vld [vmem:[%s1 + $0xb30] sm:$0xf]
    %v748 = vld [vmem:[%s1 + $0xb34] sm:$0xf]
    %v749 = vld [vmem:[%s1 + $0xb38] sm:$0xf]
    %v750 = vld [vmem:[%s1 + $0xb3c] sm:$0xf]
    %v751 = vld [vmem:[%s1 + $0xb40] sm:$0xf]
    %v752 = vld [vmem:[%s1 + $0xb44] sm:$0xf]
    %v753 = vld [vmem:[%s1 + $0xb48] sm:$0xf]
    %v754 = vld [vmem:[%s1 + $0xb4c] sm:$0xf]
    %v755 = vld [vmem:[%s1 + $0xb50] sm:$0xf]
    %v756 = vld [vmem:[%s1 + $0xb54] sm:$0xf]
    %v757 = vld [vmem:[%s1 + $0xb58] sm:$0xf]
    %v758 = vld [vmem:[%s1 + $0xb5c] sm:$0xf]
    %v759 = vld [vmem:[%s1 + $0xb60] sm:$0xf]
    %v760 = vld [vmem:[%s1 + $0xb64] sm:$0xf]
    %v761 = vld [vmem:[%s1 + $0xb68] sm:$0xf]
    %v762 = vld [vmem:[%s1 + $0xb6c] sm:$0xf]
    %v763 = vld [vmem:[%s1 + $0xb70] sm:$0xf]
    %v764 = vld [vmem:[%s1 + $0xb74] sm:$0xf]
    %v765 = vld [vmem:[%s1 + $0xb78] sm:$0xf]
    %v766 = vld [vmem:[%s1 + $0xb7c] sm:$0xf]
    %v767 = vld [vmem:[%s1 + $0xb80] sm:$0xf]
    %v768 = vld [vmem:[%s1 + $0xb84] sm:$0xf]
    %v769 = vld [vmem:[%s1 + $0xb88] sm:$0xf]
    %v770 = vld [vmem:[%s1 + $0xb8c] sm:$0xf]
    %v771 = vld [vmem:[%s1 + $0xb90] sm:$0xf]
    %v772 = vld [vmem:[%s1 + $0xb94] sm:$0xf]
    %v773 = vld [vmem:[%s1 + $0xb98] sm:$0xf]
    %v774 = vld [vmem:[%s1 + $0xb9c] sm:$0xf]
    %v775 = vld [vmem:[%s1 + $0xba0] sm:$0xf]
    %v776 = vld [vmem:[%s1 + $0xba4] sm:$0xf]
    %v777 = vld [vmem:[%s1 + $0xba8] sm:$0xf]
    %v778 = vld [vmem:[%s1 + $0xbac] sm:$0xf]
    %v779 = vld [vmem:[%s1 + $0xbb0] sm:$0xf]
    %v780 = vld [vmem:[%s1 + $0xbb4] sm:$0xf]
    %v781 = vld [vmem:[%s1 + $0xbb8] sm:$0xf]
    %v782 = vld [vmem:[%s1 + $0xbbc] sm:$0xf]
    %v783 = vld [vmem:[%s1 + $0xbc0] sm:$0xf]
    %v784 = vld [vmem:[%s1 + $0xbc4] sm:$0xf]
    %v785 = vld [vmem:[%s1 + $0xbc8] sm:$0xf]
    %v786 = vld [vmem:[%s1 + $0xbcc] sm:$0xf]
    %v787 = vld [vmem:[%s1 + $0xbd0] sm:$0xf]
    %v788 = vld [vmem:[%s1 + $0xbd4] sm:$0xf]
    %v789 = vld [vmem:[%s1 + $0xbd8] sm:$0xf]
    %v790 = vld [vmem:[%s1 + $0xbdc] sm:$0xf]
    %v791 = vld [vmem:[%s1 + $0xbe0] sm:$0xf]
    %v792 = vld [vmem:[%s1 + $0xbe4] sm:$0xf]
    %v793 = vld [vmem:[%s1 + $0xbe8] sm:$0xf]
    %v794 = vld [vmem:[%s1 + $0xbec] sm:$0xf]
    %v795 = vld [vmem:[%s1 + $0xbf0] sm:$0xf]
    %v796 = vld [vmem:[%s1 + $0xbf4] sm:$0xf]
    %v797 = vld [vmem:[%s1 + $0xbf8] sm:$0xf]
    %v798 = vld [vmem:[%s1 + $0xbfc] sm:$0xf]
    %v799 = vld [vmem:[%s1 + $0xc00] sm:$0xf]
    %v800 = vld [vmem:[%s1 + $0xc04] sm:$0xf]
    %v801 = vld [vmem:[%s1 + $0xc08] sm:$0xf]
    %v802 = vld [vmem:[%s1 + $0xc0c] sm:$0xf]
    %v803 = vld [vmem:[%s1 + $0xc10] sm:$0xf]
    %v804 = vld [vmem:[%s1 + $0xc14] sm:$0xf]
    %v805 = vld [vmem:[%s1 + $0xc18] sm:$0xf]
    %v806 = vld [vmem:[%s1 + $0xc1c] sm:$0xf]
    %v807 = vld [vmem:[%s1 + $0xc20] sm:$0xf]
    %v808 = vld [vmem:[%s1 + $0xc24] sm:$0xf]
    %v809 = vld [vmem:[%s1 + $0xc28] sm:$0xf]
    %v810 = vld [vmem:[%s1 + $0xc2c] sm:$0xf]
    %v811 = vld [vmem:[%s1 + $0xc30] sm:$0xf]
    %v812 = vld [vmem:[%s1 + $0xc34] sm:$0xf]
    %v813 = vld [vmem:[%s1 + $0xc38] sm:$0xf]
    %v814 = vld [vmem:[%s1 + $0xc3c] sm:$0xf]
    %v815 = vld [vmem:[%s1 + $0xc40] sm:$0xf]
    %v816 = vld [vmem:[%s1 + $0xc44] sm:$0xf]
    %v817 = vld [vmem:[%s1 + $0xc48] sm:$0xf]
    %v818 = vld [vmem:[%s1 + $0xc4c] sm:$0xf]
    %v819 = vld [vmem:[%s1 + $0xc50] sm:$0xf]
    %v820 = vld [vmem:[%s1 + $0xc54] sm:$0xf]
    %v821 = vld [vmem:[%s1 + $0xc58] sm:$0xf]
    %v822 = vld [vmem:[%s1 + $0xc5c] sm:$0xf]
    %v823 = vld [vmem:[%s1 + $0xc60] sm:$0xf]
    %v824 = vld [vmem:[%s1 + $0xc64] sm:$0xf]
    %v825 = vld [vmem:[%s1 + $0xc68] sm:$0xf]
    %v826 = vld [vmem:[%s1 + $0xc6c] sm:$0xf]
    %v827 = vld [vmem:[%s1 + $0xc70] sm:$0xf]
    %v828 = vld [vmem:[%s1 + $0xc74] sm:$0xf]
    %v829 = vld [vmem:[%s1 + $0xc78] sm:$0xf]
    %v830 = vld [vmem:[%s1 + $0xc7c] sm:$0xf]
    %v831 = vld [vmem:[%s1 + $0xc80] sm:$0xf]
    %v832 = vld [vmem:[%s1 + $0xc84] sm:$0xf]
    %v833 = vld [vmem:[%s1 + $0xc88] sm:$0xf]
    %v834 = vld [vmem:[%s1 + $0xc8c] sm:$0xf]
    %v835 = vld [vmem:[%s1 + $0xc90] sm:$0xf]
    %v836 = vld [vmem:[%s1 + $0xc94] sm:$0xf]
    %v837 = vld [vmem:[%s1 + $0xc98] sm:$0xf]
    %v838 = vld [vmem:[%s1 + $0xc9c] sm:$0xf]
    %v839 = vld [vmem:[%s1 + $0xca0] sm:$0xf]
    %v840 = vld [vmem:[%s1 + $0xca4] sm:$0xf]
    %v841 = vld [vmem:[%s1 + $0xca8] sm:$0xf]
    %v842 = vld [vmem:[%s1 + $0xcac] sm:$0xf]
    %v843 = vld [vmem:[%s1 + $0xcb0] sm:$0xf]
    %v844 = vld [vmem:[%s1 + $0xcb4] sm:$0xf]
    %v845 = vld [vmem:[%s1 + $0xcb8] sm:$0xf]
    %v846 = vld [vmem:[%s1 + $0xcbc] sm:$0xf]
    %v847 = vld [vmem:[%s1 + $0xcc0] sm:$0xf]
    %v848 = vld [vmem:[%s1 + $0xcc4] sm:$0xf]
    %v849 = vld [vmem:[%s1 + $0xcc8] sm:$0xf]
    %v850 = vld [vmem:[%s1 + $0xccc] sm:$0xf]
    %v851 = vld [vmem:[%s1 + $0xcd0] sm:$0xf]
    %v852 = vld [vmem:[%s1 + $0xcd4] sm:$0xf]
    %v853 = vld [vmem:[%s1 + $0xcd8] sm:$0xf]
    %v854 = vld [vmem:[%s1 + $0xcdc] sm:$0xf]
    %v855 = vld [vmem:[%s1 + $0xce0] sm:$0xf]
    %v856 = vld [vmem:[%s1 + $0xce4] sm:$0xf]
    %v857 = vld [vmem:[%s1 + $0xce8] sm:$0xf]
    %v858 = vld [vmem:[%s1 + $0xcec] sm:$0xf]
    %v859 = vld [vmem:[%s1 + $0xcf0] sm:$0xf]
    %v860 = vld [vmem:[%s1 + $0xcf4] sm:$0xf]
    %v861 = vld [vmem:[%s1 + $0xcf8] sm:$0xf]
    %v862 = vld [vmem:[%s1 + $0xcfc] sm:$0xf]
    %v863 = vld [vmem:[%s1 + $0xd00] sm:$0xf]
    %v864 = vld [vmem:[%s1 + $0xd04] sm:$0xf]
    %v865 = vld [vmem:[%s1 + $0xd08] sm:$0xf]
    %v866 = vld [vmem:[%s1 + $0xd0c] sm:$0xf]
    %v867 = vld [vmem:[%s1 + $0xd10] sm:$0xf]
    %v868 = vld [vmem:[%s1 + $0xd14] sm:$0xf]
    %v869 = vld [vmem:[%s1 + $0xd18] sm:$0xf]
    %v870 = vld [vmem:[%s1 + $0xd1c] sm:$0xf]
    %v871 = vld [vmem:[%s1 + $0xd20] sm:$0xf]
    %v872 = vld [vmem:[%s1 + $0xd24] sm:$0xf]
    %v873 = vld [vmem:[%s1 + $0xd28] sm:$0xf]
    %v874 = vld [vmem:[%s1 + $0xd2c] sm:$0xf]
    %v875 = vld [vmem:[%s1 + $0xd30] sm:$0xf]
    %v876 = vld [vmem:[%s1 + $0xd34] sm:$0xf]
    %v877 = vld [vmem:[%s1 + $0xd38] sm:$0xf]
    %v878 = vld [vmem:[%s1 + $0xd3c] sm:$0xf]
    %v879 = vld [vmem:[%s1 + $0xd40] sm:$0xf]
    %v880 = vld [vmem:[%s1 + $0xd44] sm:$0xf]
    %v881 = vld [vmem:[%s1 + $0xd48] sm:$0xf]
    %v882 = vld [vmem:[%s1 + $0xd4c] sm:$0xf]
    %v883 = vld [vmem:[%s1 + $0xd50] sm:$0xf]
    %v884 = vld [vmem:[%s1 + $0xd54] sm:$0xf]
    %v885 = vld [vmem:[%s1 + $0xd58] sm:$0xf]
    %v886 = vld [vmem:[%s1 + $0xd5c] sm:$0xf]
    %v887 = vld [vmem:[%s1 + $0xd60] sm:$0xf]
    %v888 = vld [vmem:[%s1 + $0xd64] sm:$0xf]
    %v889 = vld [vmem:[%s1 + $0xd68] sm:$0xf]
    %v890 = vld [vmem:[%s1 + $0xd6c] sm:$0xf]
    %v891 = vld [vmem:[%s1 + $0xd70] sm:$0xf]
    %v892 = vld [vmem:[%s1 + $0xd74] sm:$0xf]
    %v893 = vld [vmem:[%s1 + $0xd78] sm:$0xf]
    %v894 = vld [vmem:[%s1 + $0xd7c] sm:$0xf]
    %v895 = vld [vmem:[%s1 + $0xd80] sm:$0xf]
    %v896 = vld [vmem:[%s1 + $0xd84] sm:$0xf]
    %v897 = vld [vmem:[%s1 + $0xd88] sm:$0xf]
    %v898 = vld [vmem:[%s1 + $0xd8c] sm:$0xf]
    %v899 = vld [vmem:[%s1 + $0xd90] sm:$0xf]
    %v900 = vld [vmem:[%s1 + $0xd94] sm:$0xf]
    %v901 = vld [vmem:[%s1 + $0xd98] sm:$0xf]
    %v902 = vld [vmem:[%s1 + $0xd9c] sm:$0xf]
    %v903 = vld [vmem:[%s1 + $0xda0] sm:$0xf]
    %v904 = vld [vmem:[%s1 + $0xda4] sm:$0xf]
    %v905 = vld [vmem:[%s1 + $0xda8] sm:$0xf]
    %v906 = vld [vmem:[%s1 + $0xdac] sm:$0xf]
    %v907 = vld [vmem:[%s1 + $0xdb0] sm:$0xf]
    %v908 = vld [vmem:[%s1 + $0xdb4] sm:$0xf]
    %v909 = vld [vmem:[%s1 + $0xdb8] sm:$0xf]
    %v910 = vld [vmem:[%s1 + $0xdbc] sm:$0xf]
    %v911 = vld [vmem:[%s1 + $0xdc0] sm:$0xf]
    %v912 = vld [vmem:[%s1 + $0xdc4] sm:$0xf]
    %v913 = vld [vmem:[%s1 + $0xdc8] sm:$0xf]
    %v914 = vld [vmem:[%s1 + $0xdcc] sm:$0xf]
    %v915 = vld [vmem:[%s1 + $0xdd0] sm:$0xf]
    %v916 = vld [vmem:[%s1 + $0xdd4] sm:$0xf]
    %v917 = vld [vmem:[%s1 + $0xdd8] sm:$0xf]
    %v918 = vld [vmem:[%s1 + $0xddc] sm:$0xf]
    %v919 = vld [vmem:[%s1 + $0xde0] sm:$0xf]
    %v920 = vld [vmem:[%s1 + $0xde4] sm:$0xf]
    %v921 = vld [vmem:[%s1 + $0xde8] sm:$0xf]
    %v922 = vld [vmem:[%s1 + $0xdec] sm:$0xf]
    %v923 = vld [vmem:[%s1 + $0xdf0] sm:$0xf]
    %v924 = vld [vmem:[%s1 + $0xdf4] sm:$0xf]
    %v925 = vld [vmem:[%s1 + $0xdf8] sm:$0xf]
    %v926 = vld [vmem:[%s1 + $0xdfc] sm:$0xf]
    %v927 = vld [vmem:[%s1 + $0xe00] sm:$0xf]
    %v928 = vld [vmem:[%s1 + $0xe04] sm:$0xf]
    %v929 = vld [vmem:[%s1 + $0xe08] sm:$0xf]
    %v930 = vld [vmem:[%s1 + $0xe0c] sm:$0xf]
    %v931 = vld [vmem:[%s1 + $0xe10] sm:$0xf]
    %v932 = vld [vmem:[%s1 + $0xe14] sm:$0xf]
    %v933 = vld [vmem:[%s1 + $0xe18] sm:$0xf]
    %v934 = vld [vmem:[%s1 + $0xe1c] sm:$0xf]
    %v935 = vld [vmem:[%s1 + $0xe20] sm:$0xf]
    %v936 = vld [vmem:[%s1 + $0xe24] sm:$0xf]
    %v937 = vld [vmem:[%s1 + $0xe28] sm:$0xf]
    %v938 = vld [vmem:[%s1 + $0xe2c] sm:$0xf]
    %v939 = vld [vmem:[%s1 + $0xe30] sm:$0xf]
    %v940 = vld [vmem:[%s1 + $0xe34] sm:$0xf]
    %v941 = vld [vmem:[%s1 + $0xe38] sm:$0xf]
    %v942 = vld [vmem:[%s1 + $0xe3c] sm:$0xf]
    %v943 = vld [vmem:[%s1 + $0xe40] sm:$0xf]
    %v944 = vld [vmem:[%s1 + $0xe44] sm:$0xf]
    %v945 = vld [vmem:[%s1 + $0xe48] sm:$0xf]
    %v946 = vld [vmem:[%s1 + $0xe4c] sm:$0xf]
    %v947 = vld [vmem:[%s1 + $0xe50] sm:$0xf]
    %v948 = vld [vmem:[%s1 + $0xe54] sm:$0xf]
    %v949 = vld [vmem:[%s1 + $0xe58] sm:$0xf]
    %v950 = vld [vmem:[%s1 + $0xe5c] sm:$0xf]
    %v951 = vld [vmem:[%s1 + $0xe60] sm:$0xf]
    %v952 = vld [vmem:[%s1 + $0xe64] sm:$0xf]
    %v953 = vld [vmem:[%s1 + $0xe68] sm:$0xf]
    %v954 = vld [vmem:[%s1 + $0xe6c] sm:$0xf]
    %v955 = vld [vmem:[%s1 + $0xe70] sm:$0xf]
    %v956 = vld [vmem:[%s1 + $0xe74] sm:$0xf]
    %v957 = vld [vmem:[%s1 + $0xe78] sm:$0xf]
    %v958 = vld [vmem:[%s1 + $0xe7c] sm:$0xf]
    %v959 = vld [vmem:[%s1 + $0xe80] sm:$0xf]
    %v960 = vld [vmem:[%s1 + $0xe84] sm:$0xf]
    %v961 = vld [vmem:[%s1 + $0xe88] sm:$0xf]
    %v962 = vld [vmem:[%s1 + $0xe8c] sm:$0xf]
    %v963 = vld [vmem:[%s1 + $0xe90] sm:$0xf]
    %v964 = vld [vmem:[%s1 + $0xe94] sm:$0xf]
    %v965 = vld [vmem:[%s1 + $0xe98] sm:$0xf]
    %v966 = vld [vmem:[%s1 + $0xe9c] sm:$0xf]
    %v967 = vld [vmem:[%s1 + $0xea0] sm:$0xf]
    %v968 = vld [vmem:[%s1 + $0xea4] sm:$0xf]
    %v969 = vld [vmem:[%s1 + $0xea8] sm:$0xf]
    %v970 = vld [vmem:[%s1 + $0xeac] sm:$0xf]
    %v971 = vld [vmem:[%s1 + $0xeb0] sm:$0xf]
    %v972 = vld [vmem:[%s1 + $0xeb4] sm:$0xf]
    %v973 = vld [vmem:[%s1 + $0xeb8] sm:$0xf]
    %v974 = vld [vmem:[%s1 + $0xebc] sm:$0xf]
    %v975 = vld [vmem:[%s1 + $0xec0] sm:$0xf]
    %v976 = vld [vmem:[%s1 + $0xec4] sm:$0xf]
    %v977 = vld [vmem:[%s1 + $0xec8] sm:$0xf]
    %v978 = vld [vmem:[%s1 + $0xecc] sm:$0xf]
    %v979 = vld [vmem:[%s1 + $0xed0] sm:$0xf]
    %v980 = vld [vmem:[%s1 + $0xed4] sm:$0xf]
    %v981 = vld [vmem:[%s1 + $0xed8] sm:$0xf]
    %v982 = vld [vmem:[%s1 + $0xedc] sm:$0xf]
    %v983 = vld [vmem:[%s1 + $0xee0] sm:$0xf]
    %v984 = vld [vmem:[%s1 + $0xee4] sm:$0xf]
    %v985 = vld [vmem:[%s1 + $0xee8] sm:$0xf]
    %v986 = vld [vmem:[%s1 + $0xeec] sm:$0xf]
    %v987 = vld [vmem:[%s1 + $0xef0] sm:$0xf]
    %v988 = vld [vmem:[%s1 + $0xef4] sm:$0xf]
    %v989 = vld [vmem:[%s1 + $0xef8] sm:$0xf]
    %v990 = vld [vmem:[%s1 + $0xefc] sm:$0xf]
    %v991 = vld [vmem:[%s1 + $0xf00] sm:$0xf]
    %v992 = vld [vmem:[%s1 + $0xf04] sm:$0xf]
    %v993 = vld [vmem:[%s1 + $0xf08] sm:$0xf]
    %v994 = vld [vmem:[%s1 + $0xf0c] sm:$0xf]
    %v995 = vld [vmem:[%s1 + $0xf10] sm:$0xf]
    %v996 = vld [vmem:[%s1 + $0xf14] sm:$0xf]
    %v997 = vld [vmem:[%s1 + $0xf18] sm:$0xf]
    %v998 = vld [vmem:[%s1 + $0xf1c] sm:$0xf]
    %v999 = vld [vmem:[%s1 + $0xf20] sm:$0xf]
    %v1000 = vld [vmem:[%s1 + $0xf24] sm:$0xf]
    %v1001 = vld [vmem:[%s1 + $0xf28] sm:$0xf]
    %v1002 = vld [vmem:[%s1 + $0xf2c] sm:$0xf]
    %v1003 = vld [vmem:[%s1 + $0xf30] sm:$0xf]
    %v1004 = vld [vmem:[%s1 + $0xf34] sm:$0xf]
    %v1005 = vld [vmem:[%s1 + $0xf38] sm:$0xf]
    %v1006 = vld [vmem:[%s1 + $0xf3c] sm:$0xf]
    %v1007 = vld [vmem:[%s1 + $0xf40] sm:$0xf]
    %v1008 = vld [vmem:[%s1 + $0xf44] sm:$0xf]
    %v1009 = vld [vmem:[%s1 + $0xf48] sm:$0xf]
    %v1010 = vld [vmem:[%s1 + $0xf4c] sm:$0xf]
    %v1011 = vld [vmem:[%s1 + $0xf50] sm:$0xf]
    %v1012 = vld [vmem:[%s1 + $0xf54] sm:$0xf]
    %v1013 = vld [vmem:[%s1 + $0xf58] sm:$0xf]
    %v1014 = vld [vmem:[%s1 + $0xf5c] sm:$0xf]
    %v1015 = vld [vmem:[%s1 + $0xf60] sm:$0xf]
    %v1016 = vld [vmem:[%s1 + $0xf64] sm:$0xf]
    %v1017 = vld [vmem:[%s1 + $0xf68] sm:$0xf]
    %v1018 = vld [vmem:[%s1 + $0xf6c] sm:$0xf]
    %v1019 = vld [vmem:[%s1 + $0xf70] sm:$0xf]
    %v1020 = vld [vmem:[%s1 + $0xf74] sm:$0xf]
    %v1021 = vld [vmem:[%s1 + $0xf78] sm:$0xf]
    %v1022 = vld [vmem:[%s1 + $0xf7c] sm:$0xf]
    %v1023 = vld [vmem:[%s1 + $0xf80] sm:$0xf]
    %v1024 = vld [vmem:[%s1 + $0xf84] sm:$0xf]
    %v1025 = vld [vmem:[%s1 + $0xf88] sm:$0xf]
    %v1026 = vld [vmem:[%s1 + $0xf8c] sm:$0xf]
    %v1027 = vld [vmem:[%s1 + $0xf90] sm:$0xf]
    %v1028 = vld [vmem:[%s1 + $0xf94] sm:$0xf]
    %v1029 = vld [vmem:[%s1 + $0xf98] sm:$0xf]
    %v1030 = vld [vmem:[%s1 + $0xf9c] sm:$0xf]
    %v1031 = vld [vmem:[%s1 + $0xfa0] sm:$0xf]
    %v1032 = vld [vmem:[%s1 + $0xfa4] sm:$0xf]
    %v1033 = vld [vmem:[%s1 + $0xfa8] sm:$0xf]
    %v1034 = vld [vmem:[%s1 + $0xfac] sm:$0xf]
    %v1035 = vld [vmem:[%s1 + $0xfb0] sm:$0xf]
    %v1036 = vld [vmem:[%s1 + $0xfb4] sm:$0xf]
    %v1037 = vld [vmem:[%s1 + $0xfb8] sm:$0xf]
    %v1038 = vld [vmem:[%s1 + $0xfbc] sm:$0xf]
    %v1039 = vld [vmem:[%s1 + $0xfc0] sm:$0xf]
    %v1040 = vld [vmem:[%s1 + $0xfc4] sm:$0xf]
    %v1041 = vld [vmem:[%s1 + $0xfc8] sm:$0xf]
    %v1042 = vld [vmem:[%s1 + $0xfcc] sm:$0xf]
    %v1043 = vld [vmem:[%s1 + $0xfd0] sm:$0xf]
    %v1044 = vld [vmem:[%s1 + $0xfd4] sm:$0xf]
    %v1045 = vld [vmem:[%s1 + $0xfd8] sm:$0xf]
    %v1046 = vld [vmem:[%s1 + $0xfdc] sm:$0xf]
    %v1047 = vld [vmem:[%s1 + $0xfe0] sm:$0xf]
    %v1048 = vld [vmem:[%s1 + $0xfe4] sm:$0xf]
    %v1049 = vld [vmem:[%s1 + $0xfe8] sm:$0xf]
    %v1050 = vld [vmem:[%s1 + $0xfec] sm:$0xf]
    %v1051 = vld [vmem:[%s1 + $0xff0] sm:$0xf]
    %v1052 = vld [vmem:[%s1 + $0xff4] sm:$0xf]
    %v1053 = vld [vmem:[%s1 + $0xff8] sm:$0xf]
    %v1054 = vld [vmem:[%s1 + $0xffc] sm:$0xf]
    %v1055 = vld [vmem:[%s1 + $0x1000] sm:$0xf]
    %v1056 = vld [vmem:[%s1 + $0x1004] sm:$0xf]
    %v1057 = vld [vmem:[%s1 + $0x1008] sm:$0xf]
    %v1058 = vld [vmem:[%s1 + $0x100c] sm:$0xf]
    %v1059 = vld [vmem:[%s1 + $0x1010] sm:$0xf]
    %v1060 = vld [vmem:[%s1 + $0x1014] sm:$0xf]
    %v1061 = vld [vmem:[%s1 + $0x1018] sm:$0xf]
    %v1062 = vld [vmem:[%s1 + $0x101c] sm:$0xf]
    %v1063 = vld [vmem:[%s1 + $0x1020] sm:$0xf]
    %v1064 = vld [vmem:[%s1 + $0x1024] sm:$0xf]
    %v1065 = vld [vmem:[%s1 + $0x1028] sm:$0xf]
    %v1066 = vld [vmem:[%s1 + $0x102c] sm:$0xf]
    %v1067 = vld [vmem:[%s1 + $0x1030] sm:$0xf]
    %v1068 = vld [vmem:[%s1 + $0x1034] sm:$0xf]
    %v1069 = vld [vmem:[%s1 + $0x1038] sm:$0xf]
    %v1070 = vld [vmem:[%s1 + $0x103c] sm:$0xf]
    %v1071 = vld [vmem:[%s1 + $0x1040] sm:$0xf]
    %v1072 = vld [vmem:[%s1 + $0x1044] sm:$0xf]
    %v1073 = vld [vmem:[%s1 + $0x1048] sm:$0xf]
    %v1074 = vld [vmem:[%s1 + $0x104c] sm:$0xf]
    %v1075 = vld [vmem:[%s1 + $0x1050] sm:$0xf]
    %v1076 = vld [vmem:[%s1 + $0x1054] sm:$0xf]
    %v1077 = vld [vmem:[%s1 + $0x1058] sm:$0xf]
    %v1078 = vld [vmem:[%s1 + $0x105c] sm:$0xf]
    %v1079 = vld [vmem:[%s1 + $0x1060] sm:$0xf]
    %v1080 = vld [vmem:[%s1 + $0x1064] sm:$0xf]
    %v1081 = vld [vmem:[%s1 + $0x1068] sm:$0xf]
    %v1082 = vld [vmem:[%s1 + $0x106c] sm:$0xf]
    %v1083 = vld [vmem:[%s1 + $0x1070] sm:$0xf]
    %v1084 = vld [vmem:[%s1 + $0x1074] sm:$0xf]
    %v1085 = vld [vmem:[%s1 + $0x1078] sm:$0xf]
    %v1086 = vld [vmem:[%s1 + $0x107c] sm:$0xf]
    %v1087 = vld [vmem:[%s1 + $0x1080] sm:$0xf]
    %v1088 = vld [vmem:[%s1 + $0x1084] sm:$0xf]
    %v1089 = vld [vmem:[%s1 + $0x1088] sm:$0xf]
    %v1090 = vld [vmem:[%s1 + $0x108c] sm:$0xf]
    %v1091 = vld [vmem:[%s1 + $0x1090] sm:$0xf]
    %v1092 = vld [vmem:[%s1 + $0x1094] sm:$0xf]
    %v1093 = vld [vmem:[%s1 + $0x1098] sm:$0xf]
    %v1094 = vld [vmem:[%s1 + $0x109c] sm:$0xf]
    %v1095 = vld [vmem:[%s1 + $0x10a0] sm:$0xf]
    %v1096 = vld [vmem:[%s1 + $0x10a4] sm:$0xf]
    %v1097 = vld [vmem:[%s1 + $0x10a8] sm:$0xf]
    %v1098 = vld [vmem:[%s1 + $0x10ac] sm:$0xf]
    %v1099 = vld [vmem:[%s1 + $0x10b0] sm:$0xf]
    %v1100 = vld [vmem:[%s1 + $0x10b4] sm:$0xf]
    %v1101 = vld [vmem:[%s1 + $0x10b8] sm:$0xf]
    %v1102 = vld [vmem:[%s1 + $0x10bc] sm:$0xf]
    %v1103 = vld [vmem:[%s1 + $0x10c0] sm:$0xf]
    %v1104 = vld [vmem:[%s1 + $0x10c4] sm:$0xf]
    %v1105 = vld [vmem:[%s1 + $0x10c8] sm:$0xf]
    %v1106 = vld [vmem:[%s1 + $0x10cc] sm:$0xf]
    %v1107 = vld [vmem:[%s1 + $0x10d0] sm:$0xf]
    %v1108 = vld [vmem:[%s1 + $0x10d4] sm:$0xf]
    %v1109 = vld [vmem:[%s1 + $0x10d8] sm:$0xf]
    %v1110 = vld [vmem:[%s1 + $0x10dc] sm:$0xf]
    %v1111 = vld [vmem:[%s1 + $0x10e0] sm:$0xf]
    %v1112 = vld [vmem:[%s1 + $0x10e4] sm:$0xf]
    %v1113 = vld [vmem:[%s1 + $0x10e8] sm:$0xf]
    %v1114 = vld [vmem:[%s1 + $0x10ec] sm:$0xf]
    %v1115 = vld [vmem:[%s1 + $0x10f0] sm:$0xf]
    %v1116 = vld [vmem:[%s1 + $0x10f4] sm:$0xf]
    %v1117 = vld [vmem:[%s1 + $0x10f8] sm:$0xf]
    %v1118 = vld [vmem:[%s1 + $0x10fc] sm:$0xf]
    %v1119 = vld [vmem:[%s1 + $0x1100] sm:$0xf]
    %v1120 = vld [vmem:[%s1 + $0x1104] sm:$0xf]
    %v1121 = vld [vmem:[%s1 + $0x1108] sm:$0xf]
    %v1122 = vld [vmem:[%s1 + $0x110c] sm:$0xf]
    %v1123 = vld [vmem:[%s1 + $0x1110] sm:$0xf]
    %v1124 = vld [vmem:[%s1 + $0x1114] sm:$0xf]
    %v1125 = vld [vmem:[%s1 + $0x1118] sm:$0xf]
    %v1126 = vld [vmem:[%s1 + $0x111c] sm:$0xf]
    %v1127 = vld [vmem:[%s1 + $0x1120] sm:$0xf]
    %v1128 = vld [vmem:[%s1 + $0x1124] sm:$0xf]
    %v1129 = vld [vmem:[%s1 + $0x1128] sm:$0xf]
    %v1130 = vld [vmem:[%s1 + $0x112c] sm:$0xf]
    %v1131 = vld [vmem:[%s1 + $0x1130] sm:$0xf]
    %v1132 = vld [vmem:[%s1 + $0x1134] sm:$0xf]
    %v1133 = vld [vmem:[%s1 + $0x1138] sm:$0xf]
    %v1134 = vld [vmem:[%s1 + $0x113c] sm:$0xf]
    %v1135 = vld [vmem:[%s1 + $0x1140] sm:$0xf]
    %v1136 = vld [vmem:[%s1 + $0x1144] sm:$0xf]
    %v1137 = vld [vmem:[%s1 + $0x1148] sm:$0xf]
    %v1138 = vld [vmem:[%s1 + $0x114c] sm:$0xf]
    %v1139 = vld [vmem:[%s1 + $0x1150] sm:$0xf]
    %v1140 = vld [vmem:[%s1 + $0x1154] sm:$0xf]
    %v1141 = vld [vmem:[%s1 + $0x1158] sm:$0xf]
    %v1142 = vld [vmem:[%s1 + $0x115c] sm:$0xf]
    %v1143 = vld [vmem:[%s1 + $0x1160] sm:$0xf]
    %v1144 = vld [vmem:[%s1 + $0x1164] sm:$0xf]
    %v1145 = vld [vmem:[%s1 + $0x1168] sm:$0xf]
    %v1146 = vld [vmem:[%s1 + $0x116c] sm:$0xf]
    %v1147 = vld [vmem:[%s1 + $0x1170] sm:$0xf]
    %v1148 = vld [vmem:[%s1 + $0x1174] sm:$0xf]
    %v1149 = vld [vmem:[%s1 + $0x1178] sm:$0xf]
    %v1150 = vld [vmem:[%s1 + $0x117c] sm:$0xf]
    %v1151 = vld [vmem:[%s1 + $0x1180] sm:$0xf]
    %v1152 = vld [vmem:[%s1 + $0x1184] sm:$0xf]
    %v1153 = vld [vmem:[%s1 + $0x1188] sm:$0xf]
    %v1154 = vld [vmem:[%s1 + $0x118c] sm:$0xf]
    %v1155 = vld [vmem:[%s1 + $0x1190] sm:$0xf]
    %v1156 = vld [vmem:[%s1 + $0x1194] sm:$0xf]
    %v1157 = vld [vmem:[%s1 + $0x1198] sm:$0xf]
    %v1158 = vld [vmem:[%s1 + $0x119c] sm:$0xf]
    %v1159 = vld [vmem:[%s1 + $0x11a0] sm:$0xf]
    %v1160 = vld [vmem:[%s1 + $0x11a4] sm:$0xf]
    %v1161 = vld [vmem:[%s1 + $0x11a8] sm:$0xf]
    %v1162 = vld [vmem:[%s1 + $0x11ac] sm:$0xf]
    %v1163 = vld [vmem:[%s1 + $0x11b0] sm:$0xf]
    %v1164 = vld [vmem:[%s1 + $0x11b4] sm:$0xf]
    %v1165 = vld [vmem:[%s1 + $0x11b8] sm:$0xf]
    %v1166 = vld [vmem:[%s1 + $0x11bc] sm:$0xf]
    %v1167 = vld [vmem:[%s1 + $0x11c0] sm:$0xf]
    %v1168 = vld [vmem:[%s1 + $0x11c4] sm:$0xf]
    %v1169 = vld [vmem:[%s1 + $0x11c8] sm:$0xf]
    %v1170 = vld [vmem:[%s1 + $0x11cc] sm:$0xf]
    %v1171 = vld [vmem:[%s1 + $0x11d0] sm:$0xf]
    %v1172 = vld [vmem:[%s1 + $0x11d4] sm:$0xf]
    %v1173 = vld [vmem:[%s1 + $0x11d8] sm:$0xf]
    %v1174 = vld [vmem:[%s1 + $0x11dc] sm:$0xf]
    %v1175 = vld [vmem:[%s1 + $0x11e0] sm:$0xf]
    %v1176 = vld [vmem:[%s1 + $0x11e4] sm:$0xf]
    %v1177 = vld [vmem:[%s1 + $0x11e8] sm:$0xf]
    %v1178 = vld [vmem:[%s1 + $0x11ec] sm:$0xf]
    %v1179 = vld [vmem:[%s1 + $0x11f0] sm:$0xf]
    %v1180 = vld [vmem:[%s1 + $0x11f4] sm:$0xf]
    %v1181 = vld [vmem:[%s1 + $0x11f8] sm:$0xf]
    %v1182 = vld [vmem:[%s1 + $0x11fc] sm:$0xf]
    %v1183 = vld [vmem:[%s2] sm:$0x1]
    %v1185 = vlaneseq
    %v1186 = vshrl.u32 %v1185, 7
    %v1187 = vsub.s32 0, %v1186
    %v1188 = vrot.slane %v1183, %v1187
    %v1199 = vcombine.high %v22, %v22
    %v1201 = vunpack.c.l.s4 1966171168
    %v1202 = vunpack.c.0.s8 %v1201
    %v1203 = vlaneseq
    %v1204 = vshrl.u32 %v1203, 7
    %v1205 = vsub.s32 %v1202, %v1204
    %v1206 = vrot.slane %v22, %v1205
    %v1208 = vunpack.c.l.s4 1966171168
    %v1209 = vunpack.c.0.s8 %v1208
    %v1210 = vlaneseq
    %v1211 = vshrl.u32 %v1210, 7
    %v1212 = vsub.s32 %v1209, %v1211
    %v1213 = vrot.slane %v1199, %v1212
    %v1214 = vcombine.high %v1206, %v1206
    %v1215 = vcombine.high %v1213, %v1213
    %v1217 = vunpack.c.l.s4 1966171168
    %v1218 = vunpack.c.0.s8 %v1217
    %v1219 = vlaneseq
    %v1220 = vshrl.u32 %v1219, 7
    %v1221 = vsub.s32 %v1218, %v1220
    %v1222 = vrot.slane %v1206, %v1221
    %v1224 = vunpack.c.l.s4 1966171168
    %v1225 = vunpack.c.0.s8 %v1224
    %v1226 = vlaneseq
    %v1227 = vshrl.u32 %v1226, 7
    %v1228 = vsub.s32 %v1225, %v1227
    %v1229 = vrot.slane %v1213, %v1228
    %v1231 = vunpack.c.l.s4 1966171168
    %v1232 = vunpack.c.0.s8 %v1231
    %v1233 = vlaneseq
    %v1234 = vshrl.u32 %v1233, 7
    %v1235 = vsub.s32 %v1232, %v1234
    %v1236 = vrot.slane %v1214, %v1235
    %v1238 = vunpack.c.l.s4 1966171168
    %v1239 = vunpack.c.0.s8 %v1238
    %v1240 = vlaneseq
    %v1241 = vshrl.u32 %v1240, 7
    %v1242 = vsub.s32 %v1239, %v1241
    %v1243 = vrot.slane %v1215, %v1242
    %v1244 = vcombine.high %v1222, %v1222
    %v1245 = vcombine.high %v1229, %v1229
    %v1246 = vcombine.high %v1236, %v1236
    %v1247 = vcombine.high %v1243, %v1243
    %v1248 = vcombine.high %v23, %v23
    %v1250 = vunpack.c.l.s4 1966171168
    %v1251 = vunpack.c.0.s8 %v1250
    %v1252 = vlaneseq
    %v1253 = vshrl.u32 %v1252, 7
    %v1254 = vsub.s32 %v1251, %v1253
    %v1255 = vrot.slane %v23, %v1254
    %v1257 = vunpack.c.l.s4 1966171168
    %v1258 = vunpack.c.0.s8 %v1257
    %v1259 = vlaneseq
    %v1260 = vshrl.u32 %v1259, 7
    %v1261 = vsub.s32 %v1258, %v1260
    %v1262 = vrot.slane %v1248, %v1261
    %v1263 = vcombine.high %v1255, %v1255
    %v1264 = vcombine.high %v1262, %v1262
    %v1266 = vunpack.c.l.s4 1966171168
    %v1267 = vunpack.c.0.s8 %v1266
    %v1268 = vlaneseq
    %v1269 = vshrl.u32 %v1268, 7
    %v1270 = vsub.s32 %v1267, %v1269
    %v1271 = vrot.slane %v1255, %v1270
    %v1273 = vunpack.c.l.s4 1966171168
    %v1274 = vunpack.c.0.s8 %v1273
    %v1275 = vlaneseq
    %v1276 = vshrl.u32 %v1275, 7
    %v1277 = vsub.s32 %v1274, %v1276
    %v1278 = vrot.slane %v1262, %v1277
    %v1280 = vunpack.c.l.s4 1966171168
    %v1281 = vunpack.c.0.s8 %v1280
    %v1282 = vlaneseq
    %v1283 = vshrl.u32 %v1282, 7
    %v1284 = vsub.s32 %v1281, %v1283
    %v1285 = vrot.slane %v1263, %v1284
    %v1287 = vunpack.c.l.s4 1966171168
    %v1288 = vunpack.c.0.s8 %v1287
    %v1289 = vlaneseq
    %v1290 = vshrl.u32 %v1289, 7
    %v1291 = vsub.s32 %v1288, %v1290
    %v1292 = vrot.slane %v1264, %v1291
    %v1293 = vcombine.high %v1271, %v1271
    %v1294 = vcombine.high %v1278, %v1278
    %v1295 = vcombine.high %v1285, %v1285
    %v1296 = vcombine.high %v1292, %v1292
    %v1297 = vcombine.high %v24, %v24
    %v1299 = vunpack.c.l.s4 1966171168
    %v1300 = vunpack.c.0.s8 %v1299
    %v1301 = vlaneseq
    %v1302 = vshrl.u32 %v1301, 7
    %v1303 = vsub.s32 %v1300, %v1302
    %v1304 = vrot.slane %v24, %v1303
    %v1306 = vunpack.c.l.s4 1966171168
    %v1307 = vunpack.c.0.s8 %v1306
    %v1308 = vlaneseq
    %v1309 = vshrl.u32 %v1308, 7
    %v1310 = vsub.s32 %v1307, %v1309
    %v1311 = vrot.slane %v1297, %v1310
    %v1312 = vcombine.high %v1304, %v1304
    %v1313 = vcombine.high %v1311, %v1311
    %v1315 = vunpack.c.l.s4 1966171168
    %v1316 = vunpack.c.0.s8 %v1315
    %v1317 = vlaneseq
    %v1318 = vshrl.u32 %v1317, 7
    %v1319 = vsub.s32 %v1316, %v1318
    %v1320 = vrot.slane %v1304, %v1319
    %v1322 = vunpack.c.l.s4 1966171168
    %v1323 = vunpack.c.0.s8 %v1322
    %v1324 = vlaneseq
    %v1325 = vshrl.u32 %v1324, 7
    %v1326 = vsub.s32 %v1323, %v1325
    %v1327 = vrot.slane %v1311, %v1326
    %v1329 = vunpack.c.l.s4 1966171168
    %v1330 = vunpack.c.0.s8 %v1329
    %v1331 = vlaneseq
    %v1332 = vshrl.u32 %v1331, 7
    %v1333 = vsub.s32 %v1330, %v1332
    %v1334 = vrot.slane %v1312, %v1333
    %v1336 = vunpack.c.l.s4 1966171168
    %v1337 = vunpack.c.0.s8 %v1336
    %v1338 = vlaneseq
    %v1339 = vshrl.u32 %v1338, 7
    %v1340 = vsub.s32 %v1337, %v1339
    %v1341 = vrot.slane %v1313, %v1340
    %v1342 = vcombine.high %v1320, %v1320
    %v1343 = vcombine.high %v1327, %v1327
    %v1344 = vcombine.high %v1334, %v1334
    %v1345 = vcombine.high %v1341, %v1341
    %v1346 = vcombine.high %v25, %v25
    %v1348 = vunpack.c.l.s4 1966171168
    %v1349 = vunpack.c.0.s8 %v1348
    %v1350 = vlaneseq
    %v1351 = vshrl.u32 %v1350, 7
    %v1352 = vsub.s32 %v1349, %v1351
    %v1353 = vrot.slane %v25, %v1352
    %v1355 = vunpack.c.l.s4 1966171168
    %v1356 = vunpack.c.0.s8 %v1355
    %v1357 = vlaneseq
    %v1358 = vshrl.u32 %v1357, 7
    %v1359 = vsub.s32 %v1356, %v1358
    %v1360 = vrot.slane %v1346, %v1359
    %v1361 = vcombine.high %v1353, %v1353
    %v1362 = vcombine.high %v1360, %v1360
    %v1364 = vunpack.c.l.s4 1966171168
    %v1365 = vunpack.c.0.s8 %v1364
    %v1366 = vlaneseq
    %v1367 = vshrl.u32 %v1366, 7
    %v1368 = vsub.s32 %v1365, %v1367
    %v1369 = vrot.slane %v1353, %v1368
    %v1371 = vunpack.c.l.s4 1966171168
    %v1372 = vunpack.c.0.s8 %v1371
    %v1373 = vlaneseq
    %v1374 = vshrl.u32 %v1373, 7
    %v1375 = vsub.s32 %v1372, %v1374
    %v1376 = vrot.slane %v1360, %v1375
    %v1378 = vunpack.c.l.s4 1966171168
    %v1379 = vunpack.c.0.s8 %v1378
    %v1380 = vlaneseq
    %v1381 = vshrl.u32 %v1380, 7
    %v1382 = vsub.s32 %v1379, %v1381
    %v1383 = vrot.slane %v1361, %v1382
    %v1385 = vunpack.c.l.s4 1966171168
    %v1386 = vunpack.c.0.s8 %v1385
    %v1387 = vlaneseq
    %v1388 = vshrl.u32 %v1387, 7
    %v1389 = vsub.s32 %v1386, %v1388
    %v1390 = vrot.slane %v1362, %v1389
    %v1391 = vcombine.high %v1369, %v1369
    %v1392 = vcombine.high %v1376, %v1376
    %v1393 = vcombine.high %v1383, %v1383
    %v1394 = vcombine.high %v1390, %v1390
    %v1395 = vcombine.high %v26, %v26
    %v1397 = vunpack.c.l.s4 1966171168
    %v1398 = vunpack.c.0.s8 %v1397
    %v1399 = vlaneseq
    %v1400 = vshrl.u32 %v1399, 7
    %v1401 = vsub.s32 %v1398, %v1400
    %v1402 = vrot.slane %v26, %v1401
    %v1404 = vunpack.c.l.s4 1966171168
    %v1405 = vunpack.c.0.s8 %v1404
    %v1406 = vlaneseq
    %v1407 = vshrl.u32 %v1406, 7
    %v1408 = vsub.s32 %v1405, %v1407
    %v1409 = vrot.slane %v1395, %v1408
    %v1410 = vcombine.high %v1402, %v1402
    %v1411 = vcombine.high %v1409, %v1409
    %v1413 = vunpack.c.l.s4 1966171168
    %v1414 = vunpack.c.0.s8 %v1413
    %v1415 = vlaneseq
    %v1416 = vshrl.u32 %v1415, 7
    %v1417 = vsub.s32 %v1414, %v1416
    %v1418 = vrot.slane %v1402, %v1417
    %v1420 = vunpack.c.l.s4 1966171168
    %v1421 = vunpack.c.0.s8 %v1420
    %v1422 = vlaneseq
    %v1423 = vshrl.u32 %v1422, 7
    %v1424 = vsub.s32 %v1421, %v1423
    %v1425 = vrot.slane %v1409, %v1424
    %v1427 = vunpack.c.l.s4 1966171168
    %v1428 = vunpack.c.0.s8 %v1427
    %v1429 = vlaneseq
    %v1430 = vshrl.u32 %v1429, 7
    %v1431 = vsub.s32 %v1428, %v1430
    %v1432 = vrot.slane %v1410, %v1431
    %v1434 = vunpack.c.l.s4 1966171168
    %v1435 = vunpack.c.0.s8 %v1434
    %v1436 = vlaneseq
    %v1437 = vshrl.u32 %v1436, 7
    %v1438 = vsub.s32 %v1435, %v1437
    %v1439 = vrot.slane %v1411, %v1438
    %v1440 = vcombine.high %v1418, %v1418
    %v1441 = vcombine.high %v1425, %v1425
    %v1442 = vcombine.high %v1432, %v1432
    %v1443 = vcombine.high %v1439, %v1439
    %v1444 = vcombine.high %v27, %v27
    %v1446 = vunpack.c.l.s4 1966171168
    %v1447 = vunpack.c.0.s8 %v1446
    %v1448 = vlaneseq
    %v1449 = vshrl.u32 %v1448, 7
    %v1450 = vsub.s32 %v1447, %v1449
    %v1451 = vrot.slane %v27, %v1450
    %v1453 = vunpack.c.l.s4 1966171168
    %v1454 = vunpack.c.0.s8 %v1453
    %v1455 = vlaneseq
    %v1456 = vshrl.u32 %v1455, 7
    %v1457 = vsub.s32 %v1454, %v1456
    %v1458 = vrot.slane %v1444, %v1457
    %v1459 = vcombine.high %v1451, %v1451
    %v1460 = vcombine.high %v1458, %v1458
    %v1462 = vunpack.c.l.s4 1966171168
    %v1463 = vunpack.c.0.s8 %v1462
    %v1464 = vlaneseq
    %v1465 = vshrl.u32 %v1464, 7
    %v1466 = vsub.s32 %v1463, %v1465
    %v1467 = vrot.slane %v1451, %v1466
    %v1469 = vunpack.c.l.s4 1966171168
    %v1470 = vunpack.c.0.s8 %v1469
    %v1471 = vlaneseq
    %v1472 = vshrl.u32 %v1471, 7
    %v1473 = vsub.s32 %v1470, %v1472
    %v1474 = vrot.slane %v1458, %v1473
    %v1476 = vunpack.c.l.s4 1966171168
    %v1477 = vunpack.c.0.s8 %v1476
    %v1478 = vlaneseq
    %v1479 = vshrl.u32 %v1478, 7
    %v1480 = vsub.s32 %v1477, %v1479
    %v1481 = vrot.slane %v1459, %v1480
    %v1483 = vunpack.c.l.s4 1966171168
    %v1484 = vunpack.c.0.s8 %v1483
    %v1485 = vlaneseq
    %v1486 = vshrl.u32 %v1485, 7
    %v1487 = vsub.s32 %v1484, %v1486
    %v1488 = vrot.slane %v1460, %v1487
    %v1489 = vcombine.high %v1467, %v1467
    %v1490 = vcombine.high %v1474, %v1474
    %v1491 = vcombine.high %v1481, %v1481
    %v1492 = vcombine.high %v1488, %v1488
    %v1493 = vcombine.high %v28, %v28
    %v1495 = vunpack.c.l.s4 1966171168
    %v1496 = vunpack.c.0.s8 %v1495
    %v1497 = vlaneseq
    %v1498 = vshrl.u32 %v1497, 7
    %v1499 = vsub.s32 %v1496, %v1498
    %v1500 = vrot.slane %v28, %v1499
    %v1502 = vunpack.c.l.s4 1966171168
    %v1503 = vunpack.c.0.s8 %v1502
    %v1504 = vlaneseq
    %v1505 = vshrl.u32 %v1504, 7
    %v1506 = vsub.s32 %v1503, %v1505
    %v1507 = vrot.slane %v1493, %v1506
    %v1508 = vcombine.high %v1500, %v1500
    %v1509 = vcombine.high %v1507, %v1507
    %v1511 = vunpack.c.l.s4 1966171168
    %v1512 = vunpack.c.0.s8 %v1511
    %v1513 = vlaneseq
    %v1514 = vshrl.u32 %v1513, 7
    %v1515 = vsub.s32 %v1512, %v1514
    %v1516 = vrot.slane %v1500, %v1515
    %v1518 = vunpack.c.l.s4 1966171168
    %v1519 = vunpack.c.0.s8 %v1518
    %v1520 = vlaneseq
    %v1521 = vshrl.u32 %v1520, 7
    %v1522 = vsub.s32 %v1519, %v1521
    %v1523 = vrot.slane %v1507, %v1522
    %v1525 = vunpack.c.l.s4 1966171168
    %v1526 = vunpack.c.0.s8 %v1525
    %v1527 = vlaneseq
    %v1528 = vshrl.u32 %v1527, 7
    %v1529 = vsub.s32 %v1526, %v1528
    %v1530 = vrot.slane %v1508, %v1529
    %v1532 = vunpack.c.l.s4 1966171168
    %v1533 = vunpack.c.0.s8 %v1532
    %v1534 = vlaneseq
    %v1535 = vshrl.u32 %v1534, 7
    %v1536 = vsub.s32 %v1533, %v1535
    %v1537 = vrot.slane %v1509, %v1536
    %v1538 = vcombine.high %v1516, %v1516
    %v1539 = vcombine.high %v1523, %v1523
    %v1540 = vcombine.high %v1530, %v1530
    %v1541 = vcombine.high %v1537, %v1537
    %v1542 = vcombine.high %v29, %v29
    %v1544 = vunpack.c.l.s4 1966171168
    %v1545 = vunpack.c.0.s8 %v1544
    %v1546 = vlaneseq
    %v1547 = vshrl.u32 %v1546, 7
    %v1548 = vsub.s32 %v1545, %v1547
    %v1549 = vrot.slane %v29, %v1548
    %v1551 = vunpack.c.l.s4 1966171168
    %v1552 = vunpack.c.0.s8 %v1551
    %v1553 = vlaneseq
    %v1554 = vshrl.u32 %v1553, 7
    %v1555 = vsub.s32 %v1552, %v1554
    %v1556 = vrot.slane %v1542, %v1555
    %v1557 = vcombine.high %v1549, %v1549
    %v1558 = vcombine.high %v1556, %v1556
    %v1560 = vunpack.c.l.s4 1966171168
    %v1561 = vunpack.c.0.s8 %v1560
    %v1562 = vlaneseq
    %v1563 = vshrl.u32 %v1562, 7
    %v1564 = vsub.s32 %v1561, %v1563
    %v1565 = vrot.slane %v1549, %v1564
    %v1567 = vunpack.c.l.s4 1966171168
    %v1568 = vunpack.c.0.s8 %v1567
    %v1569 = vlaneseq
    %v1570 = vshrl.u32 %v1569, 7
    %v1571 = vsub.s32 %v1568, %v1570
    %v1572 = vrot.slane %v1556, %v1571
    %v1574 = vunpack.c.l.s4 1966171168
    %v1575 = vunpack.c.0.s8 %v1574
    %v1576 = vlaneseq
    %v1577 = vshrl.u32 %v1576, 7
    %v1578 = vsub.s32 %v1575, %v1577
    %v1579 = vrot.slane %v1557, %v1578
    %v1581 = vunpack.c.l.s4 1966171168
    %v1582 = vunpack.c.0.s8 %v1581
    %v1583 = vlaneseq
    %v1584 = vshrl.u32 %v1583, 7
    %v1585 = vsub.s32 %v1582, %v1584
    %v1586 = vrot.slane %v1558, %v1585
    %v1587 = vcombine.high %v1565, %v1565
    %v1588 = vcombine.high %v1572, %v1572
    %v1589 = vcombine.high %v1579, %v1579
    %v1590 = vcombine.high %v1586, %v1586
    %v1591 = vcombine.high %v30, %v30
    %v1593 = vunpack.c.l.s4 1966171168
    %v1594 = vunpack.c.0.s8 %v1593
    %v1595 = vlaneseq
    %v1596 = vshrl.u32 %v1595, 7
    %v1597 = vsub.s32 %v1594, %v1596
    %v1598 = vrot.slane %v30, %v1597
    %v1600 = vunpack.c.l.s4 1966171168
    %v1601 = vunpack.c.0.s8 %v1600
    %v1602 = vlaneseq
    %v1603 = vshrl.u32 %v1602, 7
    %v1604 = vsub.s32 %v1601, %v1603
    %v1605 = vrot.slane %v1591, %v1604
    %v1606 = vcombine.high %v1598, %v1598
    %v1607 = vcombine.high %v1605, %v1605
    %v1609 = vunpack.c.l.s4 1966171168
    %v1610 = vunpack.c.0.s8 %v1609
    %v1611 = vlaneseq
    %v1612 = vshrl.u32 %v1611, 7
    %v1613 = vsub.s32 %v1610, %v1612
    %v1614 = vrot.slane %v1598, %v1613
    %v1616 = vunpack.c.l.s4 1966171168
    %v1617 = vunpack.c.0.s8 %v1616
    %v1618 = vlaneseq
    %v1619 = vshrl.u32 %v1618, 7
    %v1620 = vsub.s32 %v1617, %v1619
    %v1621 = vrot.slane %v1605, %v1620
    %v1623 = vunpack.c.l.s4 1966171168
    %v1624 = vunpack.c.0.s8 %v1623
    %v1625 = vlaneseq
    %v1626 = vshrl.u32 %v1625, 7
    %v1627 = vsub.s32 %v1624, %v1626
    %v1628 = vrot.slane %v1606, %v1627
    %v1630 = vunpack.c.l.s4 1966171168
    %v1631 = vunpack.c.0.s8 %v1630
    %v1632 = vlaneseq
    %v1633 = vshrl.u32 %v1632, 7
    %v1634 = vsub.s32 %v1631, %v1633
    %v1635 = vrot.slane %v1607, %v1634
    %v1636 = vcombine.high %v1614, %v1614
    %v1637 = vcombine.high %v1621, %v1621
    %v1638 = vcombine.high %v1628, %v1628
    %v1639 = vcombine.high %v1635, %v1635
    %v2864 = vunpack.c.l.b16 %v31
    %v2865 = vunpack.c.l.b16 %v32
    %v2866 = vunpack.c.l.b16 %v33
    %v2867 = vunpack.c.l.b16 %v34
    %v2868 = vunpack.c.l.b16 %v35
    %v2869 = vunpack.c.l.b16 %v36
    %v2870 = vunpack.c.l.b16 %v37
    %v2871 = vunpack.c.l.b16 %v38
    %v2872 = vunpack.c.l.b16 %v39
    %v2873 = vunpack.c.l.b16 %v40
    %v2874 = vunpack.c.l.b16 %v41
    %v2875 = vunpack.c.l.b16 %v42
    %v2876 = vunpack.c.l.b16 %v43
    %v2877 = vunpack.c.l.b16 %v44
    %v2878 = vunpack.c.l.b16 %v45
    %v2879 = vunpack.c.l.b16 %v46
    %v2880 = vunpack.c.l.b16 %v47
    %v2881 = vunpack.c.l.b16 %v48
    %v2882 = vunpack.c.l.b16 %v49
    %v2883 = vunpack.c.l.b16 %v50
    %v2884 = vunpack.c.l.b16 %v51
    %v2885 = vunpack.c.l.b16 %v52
    %v2886 = vunpack.c.l.b16 %v53
    %v2887 = vunpack.c.l.b16 %v54
    %v2888 = vunpack.c.l.b16 %v55
    %v2889 = vunpack.c.l.b16 %v56
    %v2890 = vunpack.c.l.b16 %v57
    %v2891 = vunpack.c.l.b16 %v58
    %v2892 = vunpack.c.l.b16 %v59
    %v2893 = vunpack.c.l.b16 %v60
    %v2894 = vunpack.c.l.b16 %v61
    %v2895 = vunpack.c.l.b16 %v62
    %v2896 = vunpack.c.l.b16 %v63
    %v2897 = vunpack.c.l.b16 %v64
    %v2898 = vunpack.c.l.b16 %v65
    %v2899 = vunpack.c.l.b16 %v66
    %v2900 = vunpack.c.l.b16 %v67
    %v2901 = vunpack.c.l.b16 %v68
    %v2902 = vunpack.c.l.b16 %v69
    %v2903 = vunpack.c.l.b16 %v70
    %v2904 = vunpack.c.l.b16 %v71
    %v2905 = vunpack.c.l.b16 %v72
    %v2906 = vunpack.c.l.b16 %v73
    %v2907 = vunpack.c.l.b16 %v74
    %v2908 = vunpack.c.l.b16 %v75
    %v2909 = vunpack.c.l.b16 %v76
    %v2910 = vunpack.c.l.b16 %v77
    %v2911 = vunpack.c.l.b16 %v78
    %v2912 = vunpack.c.l.b16 %v79
    %v2913 = vunpack.c.l.b16 %v80
    %v2914 = vunpack.c.l.b16 %v81
    %v2915 = vunpack.c.l.b16 %v82
    %v2916 = vunpack.c.l.b16 %v83
    %v2917 = vunpack.c.l.b16 %v84
    %v2918 = vunpack.c.l.b16 %v85
    %v2919 = vunpack.c.l.b16 %v86
    %v2920 = vunpack.c.l.b16 %v87
    %v2921 = vunpack.c.l.b16 %v88
    %v2922 = vunpack.c.l.b16 %v89
    %v2923 = vunpack.c.l.b16 %v90
    %v2924 = vunpack.c.l.b16 %v91
    %v2925 = vunpack.c.l.b16 %v92
    %v2926 = vunpack.c.l.b16 %v93
    %v2927 = vunpack.c.l.b16 %v94
    %v2928 = vunpack.c.l.b16 %v95
    %v2929 = vunpack.c.l.b16 %v96
    %v2930 = vunpack.c.l.b16 %v97
    %v2931 = vunpack.c.l.b16 %v98
    %v2932 = vunpack.c.l.b16 %v99
    %v2933 = vunpack.c.l.b16 %v100
    %v2934 = vunpack.c.l.b16 %v101
    %v2935 = vunpack.c.l.b16 %v102
    %v2936 = vunpack.c.l.b16 %v103
    %v2937 = vunpack.c.l.b16 %v104
    %v2938 = vunpack.c.l.b16 %v105
    %v2939 = vunpack.c.l.b16 %v106
    %v2940 = vunpack.c.l.b16 %v107
    %v2941 = vunpack.c.l.b16 %v108
    %v2942 = vunpack.c.l.b16 %v109
    %v2943 = vunpack.c.l.b16 %v110
    %v2944 = vunpack.c.l.b16 %v111
    %v2945 = vunpack.c.l.b16 %v112
    %v2946 = vunpack.c.l.b16 %v113
    %v2947 = vunpack.c.l.b16 %v114
    %v2948 = vunpack.c.l.b16 %v115
    %v2949 = vunpack.c.l.b16 %v116
    %v2950 = vunpack.c.l.b16 %v117
    %v2951 = vunpack.c.l.b16 %v118
    %v2952 = vunpack.c.l.b16 %v119
    %v2953 = vunpack.c.l.b16 %v120
    %v2954 = vunpack.c.l.b16 %v121
    %v2955 = vunpack.c.l.b16 %v122
    %v2956 = vunpack.c.l.b16 %v123
    %v2957 = vunpack.c.l.b16 %v124
    %v2958 = vunpack.c.l.b16 %v125
    %v2959 = vunpack.c.l.b16 %v126
    %v2960 = vunpack.c.l.b16 %v127
    %v2961 = vunpack.c.l.b16 %v128
    %v2962 = vunpack.c.l.b16 %v129
    %v2963 = vunpack.c.l.b16 %v130
    %v2964 = vunpack.c.l.b16 %v131
    %v2965 = vunpack.c.l.b16 %v132
    %v2966 = vunpack.c.l.b16 %v133
    %v2967 = vunpack.c.l.b16 %v134
    %v2968 = vunpack.c.l.b16 %v135
    %v2969 = vunpack.c.l.b16 %v136
    %v2970 = vunpack.c.l.b16 %v137
    %v2971 = vunpack.c.l.b16 %v138
    %v2972 = vunpack.c.l.b16 %v139
    %v2973 = vunpack.c.l.b16 %v140
    %v2974 = vunpack.c.l.b16 %v141
    %v2975 = vunpack.c.l.b16 %v142
    %v2976 = vunpack.c.l.b16 %v143
    %v2977 = vunpack.c.l.b16 %v144
    %v2978 = vunpack.c.l.b16 %v145
    %v2979 = vunpack.c.l.b16 %v146
    %v2980 = vunpack.c.l.b16 %v147
    %v2981 = vunpack.c.l.b16 %v148
    %v2982 = vunpack.c.l.b16 %v149
    %v2983 = vunpack.c.l.b16 %v150
    %v2984 = vunpack.c.l.b16 %v151
    %v2985 = vunpack.c.l.b16 %v152
    %v2986 = vunpack.c.l.b16 %v153
    %v2987 = vunpack.c.l.b16 %v154
    %v2988 = vunpack.c.l.b16 %v155
    %v2989 = vunpack.c.l.b16 %v156
    %v2990 = vunpack.c.l.b16 %v157
    %v2991 = vunpack.c.l.b16 %v158
    %v2992 = vunpack.c.l.b16 %v159
    %v2993 = vunpack.c.l.b16 %v160
    %v2994 = vunpack.c.l.b16 %v161
    %v2995 = vunpack.c.l.b16 %v162
    %v2996 = vunpack.c.l.b16 %v163
    %v2997 = vunpack.c.l.b16 %v164
    %v2998 = vunpack.c.l.b16 %v165
    %v2999 = vunpack.c.l.b16 %v166
    %v3000 = vunpack.c.l.b16 %v167
    %v3001 = vunpack.c.l.b16 %v168
    %v3002 = vunpack.c.l.b16 %v169
    %v3003 = vunpack.c.l.b16 %v170
    %v3004 = vunpack.c.l.b16 %v171
    %v3005 = vunpack.c.l.b16 %v172
    %v3006 = vunpack.c.l.b16 %v173
    %v3007 = vunpack.c.l.b16 %v174
    %v3008 = vunpack.c.l.b16 %v175
    %v3009 = vunpack.c.l.b16 %v176
    %v3010 = vunpack.c.l.b16 %v177
    %v3011 = vunpack.c.l.b16 %v178
    %v3012 = vunpack.c.l.b16 %v179
    %v3013 = vunpack.c.l.b16 %v180
    %v3014 = vunpack.c.l.b16 %v181
    %v3015 = vunpack.c.l.b16 %v182
    %v3016 = vunpack.c.l.b16 %v183
    %v3017 = vunpack.c.l.b16 %v184
    %v3018 = vunpack.c.l.b16 %v185
    %v3019 = vunpack.c.l.b16 %v186
    %v3020 = vunpack.c.l.b16 %v187
    %v3021 = vunpack.c.l.b16 %v188
    %v3022 = vunpack.c.l.b16 %v189
    %v3023 = vunpack.c.l.b16 %v190
    %v3024 = vunpack.c.l.b16 %v191
    %v3025 = vunpack.c.l.b16 %v192
    %v3026 = vunpack.c.l.b16 %v193
    %v3027 = vunpack.c.l.b16 %v194
    %v3028 = vunpack.c.l.b16 %v195
    %v3029 = vunpack.c.l.b16 %v196
    %v3030 = vunpack.c.l.b16 %v197
    %v3031 = vunpack.c.l.b16 %v198
    %v3032 = vunpack.c.l.b16 %v199
    %v3033 = vunpack.c.l.b16 %v200
    %v3034 = vunpack.c.l.b16 %v201
    %v3035 = vunpack.c.l.b16 %v202
    %v3036 = vunpack.c.l.b16 %v203
    %v3037 = vunpack.c.l.b16 %v204
    %v3038 = vunpack.c.l.b16 %v205
    %v3039 = vunpack.c.l.b16 %v206
    %v3040 = vunpack.c.l.b16 %v207
    %v3041 = vunpack.c.l.b16 %v208
    %v3042 = vunpack.c.l.b16 %v209
    %v3043 = vunpack.c.l.b16 %v210
    %v3044 = vunpack.c.l.b16 %v211
    %v3045 = vunpack.c.l.b16 %v212
    %v3046 = vunpack.c.l.b16 %v213
    %v3047 = vunpack.c.l.b16 %v214
    %v3048 = vunpack.c.l.b16 %v215
    %v3049 = vunpack.c.l.b16 %v216
    %v3050 = vunpack.c.l.b16 %v217
    %v3051 = vunpack.c.l.b16 %v218
    %v3052 = vunpack.c.l.b16 %v219
    %v3053 = vunpack.c.l.b16 %v220
    %v3054 = vunpack.c.l.b16 %v221
    %v3055 = vunpack.c.l.b16 %v222
    %v3056 = vunpack.c.l.b16 %v223
    %v3057 = vunpack.c.l.b16 %v224
    %v3058 = vunpack.c.l.b16 %v225
    %v3059 = vunpack.c.l.b16 %v226
    %v3060 = vunpack.c.l.b16 %v227
    %v3061 = vunpack.c.l.b16 %v228
    %v3062 = vunpack.c.l.b16 %v229
    %v3063 = vunpack.c.l.b16 %v230
    %v3064 = vunpack.c.l.b16 %v231
    %v3065 = vunpack.c.l.b16 %v232
    %v3066 = vunpack.c.l.b16 %v233
    %v3067 = vunpack.c.l.b16 %v234
    %v3068 = vunpack.c.l.b16 %v235
    %v3069 = vunpack.c.l.b16 %v236
    %v3070 = vunpack.c.l.b16 %v237
    %v3071 = vunpack.c.l.b16 %v238
    %v3072 = vunpack.c.l.b16 %v239
    %v3073 = vunpack.c.l.b16 %v240
    %v3074 = vunpack.c.l.b16 %v241
    %v3075 = vunpack.c.l.b16 %v242
    %v3076 = vunpack.c.l.b16 %v243
    %v3077 = vunpack.c.l.b16 %v244
    %v3078 = vunpack.c.l.b16 %v245
    %v3079 = vunpack.c.l.b16 %v246
    %v3080 = vunpack.c.l.b16 %v247
    %v3081 = vunpack.c.l.b16 %v248
    %v3082 = vunpack.c.l.b16 %v249
    %v3083 = vunpack.c.l.b16 %v250
    %v3084 = vunpack.c.l.b16 %v251
    %v3085 = vunpack.c.l.b16 %v252
    %v3086 = vunpack.c.l.b16 %v253
    %v3087 = vunpack.c.l.b16 %v254
    %v3088 = vunpack.c.l.b16 %v255
    %v3089 = vunpack.c.l.b16 %v256
    %v3090 = vunpack.c.l.b16 %v257
    %v3091 = vunpack.c.l.b16 %v258
    %v3092 = vunpack.c.l.b16 %v259
    %v3093 = vunpack.c.l.b16 %v260
    %v3094 = vunpack.c.l.b16 %v261
    %v3095 = vunpack.c.l.b16 %v262
    %v3096 = vunpack.c.l.b16 %v263
    %v3097 = vunpack.c.l.b16 %v264
    %v3098 = vunpack.c.l.b16 %v265
    %v3099 = vunpack.c.l.b16 %v266
    %v3100 = vunpack.c.l.b16 %v267
    %v3101 = vunpack.c.l.b16 %v268
    %v3102 = vunpack.c.l.b16 %v269
    %v3103 = vunpack.c.l.b16 %v270
    %v3104 = vunpack.c.l.b16 %v271
    %v3105 = vunpack.c.l.b16 %v272
    %v3106 = vunpack.c.l.b16 %v273
    %v3107 = vunpack.c.l.b16 %v274
    %v3108 = vunpack.c.l.b16 %v275
    %v3109 = vunpack.c.l.b16 %v276
    %v3110 = vunpack.c.l.b16 %v277
    %v3111 = vunpack.c.l.b16 %v278
    %v3112 = vunpack.c.l.b16 %v279
    %v3113 = vunpack.c.l.b16 %v280
    %v3114 = vunpack.c.l.b16 %v281
    %v3115 = vunpack.c.l.b16 %v282
    %v3116 = vunpack.c.l.b16 %v283
    %v3117 = vunpack.c.l.b16 %v284
    %v3118 = vunpack.c.l.b16 %v285
    %v3119 = vunpack.c.l.b16 %v286
    %v3120 = vunpack.c.l.b16 %v287
    %v3121 = vunpack.c.l.b16 %v288
    %v3122 = vunpack.c.l.b16 %v289
    %v3123 = vunpack.c.l.b16 %v290
    %v3124 = vunpack.c.l.b16 %v291
    %v3125 = vunpack.c.l.b16 %v292
    %v3126 = vunpack.c.l.b16 %v293
    %v3127 = vunpack.c.l.b16 %v294
    %v3128 = vunpack.c.l.b16 %v295
    %v3129 = vunpack.c.l.b16 %v296
    %v3130 = vunpack.c.l.b16 %v297
    %v3131 = vunpack.c.l.b16 %v298
    %v3132 = vunpack.c.l.b16 %v299
    %v3133 = vunpack.c.l.b16 %v300
    %v3134 = vunpack.c.l.b16 %v301
    %v3135 = vunpack.c.l.b16 %v302
    %v3136 = vunpack.c.l.b16 %v303
    %v3137 = vunpack.c.l.b16 %v304
    %v3138 = vunpack.c.l.b16 %v305
    %v3139 = vunpack.c.l.b16 %v306
    %v3140 = vunpack.c.l.b16 %v307
    %v3141 = vunpack.c.l.b16 %v308
    %v3142 = vunpack.c.l.b16 %v309
    %v3143 = vunpack.c.l.b16 %v310
    %v3144 = vunpack.c.l.b16 %v311
    %v3145 = vunpack.c.l.b16 %v312
    %v3146 = vunpack.c.l.b16 %v313
    %v3147 = vunpack.c.l.b16 %v314
    %v3148 = vunpack.c.l.b16 %v315
    %v3149 = vunpack.c.l.b16 %v316
    %v3150 = vunpack.c.l.b16 %v317
    %v3151 = vunpack.c.l.b16 %v318
    %v3152 = vunpack.c.l.b16 %v319
    %v3153 = vunpack.c.l.b16 %v320
    %v3154 = vunpack.c.l.b16 %v321
    %v3155 = vunpack.c.l.b16 %v322
    %v3156 = vunpack.c.l.b16 %v323
    %v3157 = vunpack.c.l.b16 %v324
    %v3158 = vunpack.c.l.b16 %v325
    %v3159 = vunpack.c.l.b16 %v326
    %v3160 = vunpack.c.l.b16 %v327
    %v3161 = vunpack.c.l.b16 %v328
    %v3162 = vunpack.c.l.b16 %v329
    %v3163 = vunpack.c.l.b16 %v330
    %v3164 = vunpack.c.l.b16 %v331
    %v3165 = vunpack.c.l.b16 %v332
    %v3166 = vunpack.c.l.b16 %v333
    %v3167 = vunpack.c.l.b16 %v334
    %v3168 = vunpack.c.l.b16 %v335
    %v3169 = vunpack.c.l.b16 %v336
    %v3170 = vunpack.c.l.b16 %v337
    %v3171 = vunpack.c.l.b16 %v338
    %v3172 = vunpack.c.l.b16 %v339
    %v3173 = vunpack.c.l.b16 %v340
    %v3174 = vunpack.c.l.b16 %v341
    %v3175 = vunpack.c.l.b16 %v342
    %v3176 = vunpack.c.l.b16 %v343
    %v3177 = vunpack.c.l.b16 %v344
    %v3178 = vunpack.c.l.b16 %v345
    %v3179 = vunpack.c.l.b16 %v346
    %v3180 = vunpack.c.l.b16 %v347
    %v3181 = vunpack.c.l.b16 %v348
    %v3182 = vunpack.c.l.b16 %v349
    %v3183 = vunpack.c.l.b16 %v350
    %v3184 = vunpack.c.l.b16 %v351
    %v3185 = vunpack.c.l.b16 %v352
    %v3186 = vunpack.c.l.b16 %v353
    %v3187 = vunpack.c.l.b16 %v354
    %v3188 = vunpack.c.l.b16 %v355
    %v3189 = vunpack.c.l.b16 %v356
    %v3190 = vunpack.c.l.b16 %v357
    %v3191 = vunpack.c.l.b16 %v358
    %v3192 = vunpack.c.l.b16 %v359
    %v3193 = vunpack.c.l.b16 %v360
    %v3194 = vunpack.c.l.b16 %v361
    %v3195 = vunpack.c.l.b16 %v362
    %v3196 = vunpack.c.l.b16 %v363
    %v3197 = vunpack.c.l.b16 %v364
    %v3198 = vunpack.c.l.b16 %v365
    %v3199 = vunpack.c.l.b16 %v366
    %v3200 = vunpack.c.l.b16 %v367
    %v3201 = vunpack.c.l.b16 %v368
    %v3202 = vunpack.c.l.b16 %v369
    %v3203 = vunpack.c.l.b16 %v370
    %v3204 = vunpack.c.l.b16 %v371
    %v3205 = vunpack.c.l.b16 %v372
    %v3206 = vunpack.c.l.b16 %v373
    %v3207 = vunpack.c.l.b16 %v374
    %v3208 = vunpack.c.l.b16 %v375
    %v3209 = vunpack.c.l.b16 %v376
    %v3210 = vunpack.c.l.b16 %v377
    %v3211 = vunpack.c.l.b16 %v378
    %v3212 = vunpack.c.l.b16 %v379
    %v3213 = vunpack.c.l.b16 %v380
    %v3214 = vunpack.c.l.b16 %v381
    %v3215 = vunpack.c.l.b16 %v382
    %v3216 = vunpack.c.l.b16 %v383
    %v3217 = vunpack.c.l.b16 %v384
    %v3218 = vunpack.c.l.b16 %v385
    %v3219 = vunpack.c.l.b16 %v386
    %v3220 = vunpack.c.l.b16 %v387
    %v3221 = vunpack.c.l.b16 %v388
    %v3222 = vunpack.c.l.b16 %v389
    %v3223 = vunpack.c.l.b16 %v390
    %v3224 = vunpack.c.l.b16 %v391
    %v3225 = vunpack.c.l.b16 %v392
    %v3226 = vunpack.c.l.b16 %v393
    %v3227 = vunpack.c.l.b16 %v394
    %v3228 = vunpack.c.l.b16 %v395
    %v3229 = vunpack.c.l.b16 %v396
    %v3230 = vunpack.c.l.b16 %v397
    %v3231 = vunpack.c.l.b16 %v398
    %v3232 = vunpack.c.l.b16 %v399
    %v3233 = vunpack.c.l.b16 %v400
    %v3234 = vunpack.c.l.b16 %v401
    %v3235 = vunpack.c.l.b16 %v402
    %v3236 = vunpack.c.l.b16 %v403
    %v3237 = vunpack.c.l.b16 %v404
    %v3238 = vunpack.c.l.b16 %v405
    %v3239 = vunpack.c.l.b16 %v406
    %v3240 = vunpack.c.l.b16 %v407
    %v3241 = vunpack.c.l.b16 %v408
    %v3242 = vunpack.c.l.b16 %v409
    %v3243 = vunpack.c.l.b16 %v410
    %v3244 = vunpack.c.l.b16 %v411
    %v3245 = vunpack.c.l.b16 %v412
    %v3246 = vunpack.c.l.b16 %v413
    %v3247 = vunpack.c.l.b16 %v414
    %v3248 = vunpack.c.l.b16 %v415
    %v3249 = vunpack.c.l.b16 %v416
    %v3250 = vunpack.c.l.b16 %v417
    %v3251 = vunpack.c.l.b16 %v418
    %v3252 = vunpack.c.l.b16 %v419
    %v3253 = vunpack.c.l.b16 %v420
    %v3254 = vunpack.c.l.b16 %v421
    %v3255 = vunpack.c.l.b16 %v422
    %v3256 = vunpack.c.l.b16 %v423
    %v3257 = vunpack.c.l.b16 %v424
    %v3258 = vunpack.c.l.b16 %v425
    %v3259 = vunpack.c.l.b16 %v426
    %v3260 = vunpack.c.l.b16 %v427
    %v3261 = vunpack.c.l.b16 %v428
    %v3262 = vunpack.c.l.b16 %v429
    %v3263 = vunpack.c.l.b16 %v430
    %v3264 = vunpack.c.l.b16 %v431
    %v3265 = vunpack.c.l.b16 %v432
    %v3266 = vunpack.c.l.b16 %v433
    %v3267 = vunpack.c.l.b16 %v434
    %v3268 = vunpack.c.l.b16 %v435
    %v3269 = vunpack.c.l.b16 %v436
    %v3270 = vunpack.c.l.b16 %v437
    %v3271 = vunpack.c.l.b16 %v438
    %v3272 = vunpack.c.l.b16 %v439
    %v3273 = vunpack.c.l.b16 %v440
    %v3274 = vunpack.c.l.b16 %v441
    %v3275 = vunpack.c.l.b16 %v442
    %v3276 = vunpack.c.l.b16 %v443
    %v3277 = vunpack.c.l.b16 %v444
    %v3278 = vunpack.c.l.b16 %v445
    %v3279 = vunpack.c.l.b16 %v446
    %v3280 = vunpack.c.l.b16 %v447
    %v3281 = vunpack.c.l.b16 %v448
    %v3282 = vunpack.c.l.b16 %v449
    %v3283 = vunpack.c.l.b16 %v450
    %v3284 = vunpack.c.l.b16 %v451
    %v3285 = vunpack.c.l.b16 %v452
    %v3286 = vunpack.c.l.b16 %v453
    %v3287 = vunpack.c.l.b16 %v454
    %v3288 = vunpack.c.l.b16 %v455
    %v3289 = vunpack.c.l.b16 %v456
    %v3290 = vunpack.c.l.b16 %v457
    %v3291 = vunpack.c.l.b16 %v458
    %v3292 = vunpack.c.l.b16 %v459
    %v3293 = vunpack.c.l.b16 %v460
    %v3294 = vunpack.c.l.b16 %v461
    %v3295 = vunpack.c.l.b16 %v462
    %v3296 = vunpack.c.l.b16 %v463
    %v3297 = vunpack.c.l.b16 %v464
    %v3298 = vunpack.c.l.b16 %v465
    %v3299 = vunpack.c.l.b16 %v466
    %v3300 = vunpack.c.l.b16 %v467
    %v3301 = vunpack.c.l.b16 %v468
    %v3302 = vunpack.c.l.b16 %v469
    %v3303 = vunpack.c.l.b16 %v470
    %v3304 = vunpack.c.l.b16 %v471
    %v3305 = vunpack.c.l.b16 %v472
    %v3306 = vunpack.c.l.b16 %v473
    %v3307 = vunpack.c.l.b16 %v474
    %v3308 = vunpack.c.l.b16 %v475
    %v3309 = vunpack.c.l.b16 %v476
    %v3310 = vunpack.c.l.b16 %v477
    %v3311 = vunpack.c.l.b16 %v478
    %v3312 = vunpack.c.l.b16 %v479
    %v3313 = vunpack.c.l.b16 %v480
    %v3314 = vunpack.c.l.b16 %v481
    %v3315 = vunpack.c.l.b16 %v482
    %v3316 = vunpack.c.l.b16 %v483
    %v3317 = vunpack.c.l.b16 %v484
    %v3318 = vunpack.c.l.b16 %v485
    %v3319 = vunpack.c.l.b16 %v486
    %v3320 = vunpack.c.l.b16 %v487
    %v3321 = vunpack.c.l.b16 %v488
    %v3322 = vunpack.c.l.b16 %v489
    %v3323 = vunpack.c.l.b16 %v490
    %v3324 = vunpack.c.l.b16 %v491
    %v3325 = vunpack.c.l.b16 %v492
    %v3326 = vunpack.c.l.b16 %v493
    %v3327 = vunpack.c.l.b16 %v494
    %v3328 = vunpack.c.l.b16 %v495
    %v3329 = vunpack.c.l.b16 %v496
    %v3330 = vunpack.c.l.b16 %v497
    %v3331 = vunpack.c.l.b16 %v498
    %v3332 = vunpack.c.l.b16 %v499
    %v3333 = vunpack.c.l.b16 %v500
    %v3334 = vunpack.c.l.b16 %v501
    %v3335 = vunpack.c.l.b16 %v502
    %v3336 = vunpack.c.l.b16 %v503
    %v3337 = vunpack.c.l.b16 %v504
    %v3338 = vunpack.c.l.b16 %v505
    %v3339 = vunpack.c.l.b16 %v506
    %v3340 = vunpack.c.l.b16 %v507
    %v3341 = vunpack.c.l.b16 %v508
    %v3342 = vunpack.c.l.b16 %v509
    %v3343 = vunpack.c.l.b16 %v510
    %v3344 = vunpack.c.l.b16 %v511
    %v3345 = vunpack.c.l.b16 %v512
    %v3346 = vunpack.c.l.b16 %v513
    %v3347 = vunpack.c.l.b16 %v514
    %v3348 = vunpack.c.l.b16 %v515
    %v3349 = vunpack.c.l.b16 %v516
    %v3350 = vunpack.c.l.b16 %v517
    %v3351 = vunpack.c.l.b16 %v518
    %v3352 = vunpack.c.l.b16 %v519
    %v3353 = vunpack.c.l.b16 %v520
    %v3354 = vunpack.c.l.b16 %v521
    %v3355 = vunpack.c.l.b16 %v522
    %v3356 = vunpack.c.l.b16 %v523
    %v3357 = vunpack.c.l.b16 %v524
    %v3358 = vunpack.c.l.b16 %v525
    %v3359 = vunpack.c.l.b16 %v526
    %v3360 = vunpack.c.l.b16 %v527
    %v3361 = vunpack.c.l.b16 %v528
    %v3362 = vunpack.c.l.b16 %v529
    %v3363 = vunpack.c.l.b16 %v530
    %v3364 = vunpack.c.l.b16 %v531
    %v3365 = vunpack.c.l.b16 %v532
    %v3366 = vunpack.c.l.b16 %v533
    %v3367 = vunpack.c.l.b16 %v534
    %v3368 = vunpack.c.l.b16 %v535
    %v3369 = vunpack.c.l.b16 %v536
    %v3370 = vunpack.c.l.b16 %v537
    %v3371 = vunpack.c.l.b16 %v538
    %v3372 = vunpack.c.l.b16 %v539
    %v3373 = vunpack.c.l.b16 %v540
    %v3374 = vunpack.c.l.b16 %v541
    %v3375 = vunpack.c.l.b16 %v542
    %v3376 = vunpack.c.l.b16 %v543
    %v3377 = vunpack.c.l.b16 %v544
    %v3378 = vunpack.c.l.b16 %v545
    %v3379 = vunpack.c.l.b16 %v546
    %v3380 = vunpack.c.l.b16 %v547
    %v3381 = vunpack.c.l.b16 %v548
    %v3382 = vunpack.c.l.b16 %v549
    %v3383 = vunpack.c.l.b16 %v550
    %v3384 = vunpack.c.l.b16 %v551
    %v3385 = vunpack.c.l.b16 %v552
    %v3386 = vunpack.c.l.b16 %v553
    %v3387 = vunpack.c.l.b16 %v554
    %v3388 = vunpack.c.l.b16 %v555
    %v3389 = vunpack.c.l.b16 %v556
    %v3390 = vunpack.c.l.b16 %v557
    %v3391 = vunpack.c.l.b16 %v558
    %v3392 = vunpack.c.l.b16 %v559
    %v3393 = vunpack.c.l.b16 %v560
    %v3394 = vunpack.c.l.b16 %v561
    %v3395 = vunpack.c.l.b16 %v562
    %v3396 = vunpack.c.l.b16 %v563
    %v3397 = vunpack.c.l.b16 %v564
    %v3398 = vunpack.c.l.b16 %v565
    %v3399 = vunpack.c.l.b16 %v566
    %v3400 = vunpack.c.l.b16 %v567
    %v3401 = vunpack.c.l.b16 %v568
    %v3402 = vunpack.c.l.b16 %v569
    %v3403 = vunpack.c.l.b16 %v570
    %v3404 = vunpack.c.l.b16 %v571
    %v3405 = vunpack.c.l.b16 %v572
    %v3406 = vunpack.c.l.b16 %v573
    %v3407 = vunpack.c.l.b16 %v574
    %v3408 = vunpack.c.l.b16 %v575
    %v3409 = vunpack.c.l.b16 %v576
    %v3410 = vunpack.c.l.b16 %v577
    %v3411 = vunpack.c.l.b16 %v578
    %v3412 = vunpack.c.l.b16 %v579
    %v3413 = vunpack.c.l.b16 %v580
    %v3414 = vunpack.c.l.b16 %v581
    %v3415 = vunpack.c.l.b16 %v582
    %v3416 = vunpack.c.l.b16 %v583
    %v3417 = vunpack.c.l.b16 %v584
    %v3418 = vunpack.c.l.b16 %v585
    %v3419 = vunpack.c.l.b16 %v586
    %v3420 = vunpack.c.l.b16 %v587
    %v3421 = vunpack.c.l.b16 %v588
    %v3422 = vunpack.c.l.b16 %v589
    %v3423 = vunpack.c.l.b16 %v590
    %v3424 = vunpack.c.l.b16 %v591
    %v3425 = vunpack.c.l.b16 %v592
    %v3426 = vunpack.c.l.b16 %v593
    %v3427 = vunpack.c.l.b16 %v594
    %v3428 = vunpack.c.l.b16 %v595
    %v3429 = vunpack.c.l.b16 %v596
    %v3430 = vunpack.c.l.b16 %v597
    %v3431 = vunpack.c.l.b16 %v598
    %v3432 = vunpack.c.l.b16 %v599
    %v3433 = vunpack.c.l.b16 %v600
    %v3434 = vunpack.c.l.b16 %v601
    %v3435 = vunpack.c.l.b16 %v602
    %v3436 = vunpack.c.l.b16 %v603
    %v3437 = vunpack.c.l.b16 %v604
    %v3438 = vunpack.c.l.b16 %v605
    %v3439 = vunpack.c.l.b16 %v606
    %v3440 = vunpack.c.l.b16 %v607
    %v3441 = vunpack.c.l.b16 %v608
    %v3442 = vunpack.c.l.b16 %v609
    %v3443 = vunpack.c.l.b16 %v610
    %v3444 = vunpack.c.l.b16 %v611
    %v3445 = vunpack.c.l.b16 %v612
    %v3446 = vunpack.c.l.b16 %v613
    %v3447 = vunpack.c.l.b16 %v614
    %v3448 = vunpack.c.l.b16 %v615
    %v3449 = vunpack.c.l.b16 %v616
    %v3450 = vunpack.c.l.b16 %v617
    %v3451 = vunpack.c.l.b16 %v618
    %v3452 = vunpack.c.l.b16 %v619
    %v3453 = vunpack.c.l.b16 %v620
    %v3454 = vunpack.c.l.b16 %v621
    %v3455 = vunpack.c.l.b16 %v622
    %v3456 = vunpack.c.l.b16 %v623
    %v3457 = vunpack.c.l.b16 %v624
    %v3458 = vunpack.c.l.b16 %v625
    %v3459 = vunpack.c.l.b16 %v626
    %v3460 = vunpack.c.l.b16 %v627
    %v3461 = vunpack.c.l.b16 %v628
    %v3462 = vunpack.c.l.b16 %v629
    %v3463 = vunpack.c.l.b16 %v630
    %v3464 = vunpack.c.l.b16 %v631
    %v3465 = vunpack.c.l.b16 %v632
    %v3466 = vunpack.c.l.b16 %v633
    %v3467 = vunpack.c.l.b16 %v634
    %v3468 = vunpack.c.l.b16 %v635
    %v3469 = vunpack.c.l.b16 %v636
    %v3470 = vunpack.c.l.b16 %v637
    %v3471 = vunpack.c.l.b16 %v638
    %v3472 = vunpack.c.l.b16 %v639
    %v3473 = vunpack.c.l.b16 %v640
    %v3474 = vunpack.c.l.b16 %v641
    %v3475 = vunpack.c.l.b16 %v642
    %v3476 = vunpack.c.l.b16 %v643
    %v3477 = vunpack.c.l.b16 %v644
    %v3478 = vunpack.c.l.b16 %v645
    %v3479 = vunpack.c.l.b16 %v646
    %v3480 = vunpack.c.l.b16 %v647
    %v3481 = vunpack.c.l.b16 %v648
    %v3482 = vunpack.c.l.b16 %v649
    %v3483 = vunpack.c.l.b16 %v650
    %v3484 = vunpack.c.l.b16 %v651
    %v3485 = vunpack.c.l.b16 %v652
    %v3486 = vunpack.c.l.b16 %v653
    %v3487 = vunpack.c.l.b16 %v654
    %v3488 = vunpack.c.l.b16 %v655
    %v3489 = vunpack.c.l.b16 %v656
    %v3490 = vunpack.c.l.b16 %v657
    %v3491 = vunpack.c.l.b16 %v658
    %v3492 = vunpack.c.l.b16 %v659
    %v3493 = vunpack.c.l.b16 %v660
    %v3494 = vunpack.c.l.b16 %v661
    %v3495 = vunpack.c.l.b16 %v662
    %v3496 = vunpack.c.l.b16 %v663
    %v3497 = vunpack.c.l.b16 %v664
    %v3498 = vunpack.c.l.b16 %v665
    %v3499 = vunpack.c.l.b16 %v666
    %v3500 = vunpack.c.l.b16 %v667
    %v3501 = vunpack.c.l.b16 %v668
    %v3502 = vunpack.c.l.b16 %v669
    %v3503 = vunpack.c.l.b16 %v670
    %v3504 = vunpack.c.l.b16 %v671
    %v3505 = vunpack.c.l.b16 %v672
    %v3506 = vunpack.c.l.b16 %v673
    %v3507 = vunpack.c.l.b16 %v674
    %v3508 = vunpack.c.l.b16 %v675
    %v3509 = vunpack.c.l.b16 %v676
    %v3510 = vunpack.c.l.b16 %v677
    %v3511 = vunpack.c.l.b16 %v678
    %v3512 = vunpack.c.l.b16 %v679
    %v3513 = vunpack.c.l.b16 %v680
    %v3514 = vunpack.c.l.b16 %v681
    %v3515 = vunpack.c.l.b16 %v682
    %v3516 = vunpack.c.l.b16 %v683
    %v3517 = vunpack.c.l.b16 %v684
    %v3518 = vunpack.c.l.b16 %v685
    %v3519 = vunpack.c.l.b16 %v686
    %v3520 = vunpack.c.l.b16 %v687
    %v3521 = vunpack.c.l.b16 %v688
    %v3522 = vunpack.c.l.b16 %v689
    %v3523 = vunpack.c.l.b16 %v690
    %v3524 = vunpack.c.l.b16 %v691
    %v3525 = vunpack.c.l.b16 %v692
    %v3526 = vunpack.c.l.b16 %v693
    %v3527 = vunpack.c.l.b16 %v694
    %v3528 = vunpack.c.l.b16 %v695
    %v3529 = vunpack.c.l.b16 %v696
    %v3530 = vunpack.c.l.b16 %v697
    %v3531 = vunpack.c.l.b16 %v698
    %v3532 = vunpack.c.l.b16 %v699
    %v3533 = vunpack.c.l.b16 %v700
    %v3534 = vunpack.c.l.b16 %v701
    %v3535 = vunpack.c.l.b16 %v702
    %v3536 = vunpack.c.l.b16 %v703
    %v3537 = vunpack.c.l.b16 %v704
    %v3538 = vunpack.c.l.b16 %v705
    %v3539 = vunpack.c.l.b16 %v706
    %v3540 = vunpack.c.l.b16 %v707
    %v3541 = vunpack.c.l.b16 %v708
    %v3542 = vunpack.c.l.b16 %v709
    %v3543 = vunpack.c.l.b16 %v710
    %v3544 = vunpack.c.l.b16 %v711
    %v3545 = vunpack.c.l.b16 %v712
    %v3546 = vunpack.c.l.b16 %v713
    %v3547 = vunpack.c.l.b16 %v714
    %v3548 = vunpack.c.l.b16 %v715
    %v3549 = vunpack.c.l.b16 %v716
    %v3550 = vunpack.c.l.b16 %v717
    %v3551 = vunpack.c.l.b16 %v718
    %v3552 = vunpack.c.l.b16 %v719
    %v3553 = vunpack.c.l.b16 %v720
    %v3554 = vunpack.c.l.b16 %v721
    %v3555 = vunpack.c.l.b16 %v722
    %v3556 = vunpack.c.l.b16 %v723
    %v3557 = vunpack.c.l.b16 %v724
    %v3558 = vunpack.c.l.b16 %v725
    %v3559 = vunpack.c.l.b16 %v726
    %v3560 = vunpack.c.l.b16 %v727
    %v3561 = vunpack.c.l.b16 %v728
    %v3562 = vunpack.c.l.b16 %v729
    %v3563 = vunpack.c.l.b16 %v730
    %v3564 = vunpack.c.l.b16 %v731
    %v3565 = vunpack.c.l.b16 %v732
    %v3566 = vunpack.c.l.b16 %v733
    %v3567 = vunpack.c.l.b16 %v734
    %v3568 = vunpack.c.l.b16 %v735
    %v3569 = vunpack.c.l.b16 %v736
    %v3570 = vunpack.c.l.b16 %v737
    %v3571 = vunpack.c.l.b16 %v738
    %v3572 = vunpack.c.l.b16 %v739
    %v3573 = vunpack.c.l.b16 %v740
    %v3574 = vunpack.c.l.b16 %v741
    %v3575 = vunpack.c.l.b16 %v742
    %v3576 = vunpack.c.l.b16 %v743
    %v3577 = vunpack.c.l.b16 %v744
    %v3578 = vunpack.c.l.b16 %v745
    %v3579 = vunpack.c.l.b16 %v746
    %v3580 = vunpack.c.l.b16 %v747
    %v3581 = vunpack.c.l.b16 %v748
    %v3582 = vunpack.c.l.b16 %v749
    %v3583 = vunpack.c.l.b16 %v750
    %v3584 = vunpack.c.l.b16 %v751
    %v3585 = vunpack.c.l.b16 %v752
    %v3586 = vunpack.c.l.b16 %v753
    %v3587 = vunpack.c.l.b16 %v754
    %v3588 = vunpack.c.l.b16 %v755
    %v3589 = vunpack.c.l.b16 %v756
    %v3590 = vunpack.c.l.b16 %v757
    %v3591 = vunpack.c.l.b16 %v758
    %v3592 = vunpack.c.l.b16 %v759
    %v3593 = vunpack.c.l.b16 %v760
    %v3594 = vunpack.c.l.b16 %v761
    %v3595 = vunpack.c.l.b16 %v762
    %v3596 = vunpack.c.l.b16 %v763
    %v3597 = vunpack.c.l.b16 %v764
    %v3598 = vunpack.c.l.b16 %v765
    %v3599 = vunpack.c.l.b16 %v766
    %v3600 = vunpack.c.l.b16 %v767
    %v3601 = vunpack.c.l.b16 %v768
    %v3602 = vunpack.c.l.b16 %v769
    %v3603 = vunpack.c.l.b16 %v770
    %v3604 = vunpack.c.l.b16 %v771
    %v3605 = vunpack.c.l.b16 %v772
    %v3606 = vunpack.c.l.b16 %v773
    %v3607 = vunpack.c.l.b16 %v774
    %v3608 = vunpack.c.l.b16 %v775
    %v3609 = vunpack.c.l.b16 %v776
    %v3610 = vunpack.c.l.b16 %v777
    %v3611 = vunpack.c.l.b16 %v778
    %v3612 = vunpack.c.l.b16 %v779
    %v3613 = vunpack.c.l.b16 %v780
    %v3614 = vunpack.c.l.b16 %v781
    %v3615 = vunpack.c.l.b16 %v782
    %v3616 = vunpack.c.l.b16 %v783
    %v3617 = vunpack.c.l.b16 %v784
    %v3618 = vunpack.c.l.b16 %v785
    %v3619 = vunpack.c.l.b16 %v786
    %v3620 = vunpack.c.l.b16 %v787
    %v3621 = vunpack.c.l.b16 %v788
    %v3622 = vunpack.c.l.b16 %v789
    %v3623 = vunpack.c.l.b16 %v790
    %v3624 = vunpack.c.l.b16 %v791
    %v3625 = vunpack.c.l.b16 %v792
    %v3626 = vunpack.c.l.b16 %v793
    %v3627 = vunpack.c.l.b16 %v794
    %v3628 = vunpack.c.l.b16 %v795
    %v3629 = vunpack.c.l.b16 %v796
    %v3630 = vunpack.c.l.b16 %v797
    %v3631 = vunpack.c.l.b16 %v798
    %v3632 = vunpack.c.l.b16 %v799
    %v3633 = vunpack.c.l.b16 %v800
    %v3634 = vunpack.c.l.b16 %v801
    %v3635 = vunpack.c.l.b16 %v802
    %v3636 = vunpack.c.l.b16 %v803
    %v3637 = vunpack.c.l.b16 %v804
    %v3638 = vunpack.c.l.b16 %v805
    %v3639 = vunpack.c.l.b16 %v806
    %v3640 = vunpack.c.l.b16 %v807
    %v3641 = vunpack.c.l.b16 %v808
    %v3642 = vunpack.c.l.b16 %v809
    %v3643 = vunpack.c.l.b16 %v810
    %v3644 = vunpack.c.l.b16 %v811
    %v3645 = vunpack.c.l.b16 %v812
    %v3646 = vunpack.c.l.b16 %v813
    %v3647 = vunpack.c.l.b16 %v814
    %v3648 = vunpack.c.l.b16 %v815
    %v3649 = vunpack.c.l.b16 %v816
    %v3650 = vunpack.c.l.b16 %v817
    %v3651 = vunpack.c.l.b16 %v818
    %v3652 = vunpack.c.l.b16 %v819
    %v3653 = vunpack.c.l.b16 %v820
    %v3654 = vunpack.c.l.b16 %v821
    %v3655 = vunpack.c.l.b16 %v822
    %v3656 = vunpack.c.l.b16 %v823
    %v3657 = vunpack.c.l.b16 %v824
    %v3658 = vunpack.c.l.b16 %v825
    %v3659 = vunpack.c.l.b16 %v826
    %v3660 = vunpack.c.l.b16 %v827
    %v3661 = vunpack.c.l.b16 %v828
    %v3662 = vunpack.c.l.b16 %v829
    %v3663 = vunpack.c.l.b16 %v830
    %v3664 = vunpack.c.l.b16 %v831
    %v3665 = vunpack.c.l.b16 %v832
    %v3666 = vunpack.c.l.b16 %v833
    %v3667 = vunpack.c.l.b16 %v834
    %v3668 = vunpack.c.l.b16 %v835
    %v3669 = vunpack.c.l.b16 %v836
    %v3670 = vunpack.c.l.b16 %v837
    %v3671 = vunpack.c.l.b16 %v838
    %v3672 = vunpack.c.l.b16 %v839
    %v3673 = vunpack.c.l.b16 %v840
    %v3674 = vunpack.c.l.b16 %v841
    %v3675 = vunpack.c.l.b16 %v842
    %v3676 = vunpack.c.l.b16 %v843
    %v3677 = vunpack.c.l.b16 %v844
    %v3678 = vunpack.c.l.b16 %v845
    %v3679 = vunpack.c.l.b16 %v846
    %v3680 = vunpack.c.l.b16 %v847
    %v3681 = vunpack.c.l.b16 %v848
    %v3682 = vunpack.c.l.b16 %v849
    %v3683 = vunpack.c.l.b16 %v850
    %v3684 = vunpack.c.l.b16 %v851
    %v3685 = vunpack.c.l.b16 %v852
    %v3686 = vunpack.c.l.b16 %v853
    %v3687 = vunpack.c.l.b16 %v854
    %v3688 = vunpack.c.l.b16 %v855
    %v3689 = vunpack.c.l.b16 %v856
    %v3690 = vunpack.c.l.b16 %v857
    %v3691 = vunpack.c.l.b16 %v858
    %v3692 = vunpack.c.l.b16 %v859
    %v3693 = vunpack.c.l.b16 %v860
    %v3694 = vunpack.c.l.b16 %v861
    %v3695 = vunpack.c.l.b16 %v862
    %v3696 = vunpack.c.l.b16 %v863
    %v3697 = vunpack.c.l.b16 %v864
    %v3698 = vunpack.c.l.b16 %v865
    %v3699 = vunpack.c.l.b16 %v866
    %v3700 = vunpack.c.l.b16 %v867
    %v3701 = vunpack.c.l.b16 %v868
    %v3702 = vunpack.c.l.b16 %v869
    %v3703 = vunpack.c.l.b16 %v870
    %v3704 = vunpack.c.l.b16 %v871
    %v3705 = vunpack.c.l.b16 %v872
    %v3706 = vunpack.c.l.b16 %v873
    %v3707 = vunpack.c.l.b16 %v874
    %v3708 = vunpack.c.l.b16 %v875
    %v3709 = vunpack.c.l.b16 %v876
    %v3710 = vunpack.c.l.b16 %v877
    %v3711 = vunpack.c.l.b16 %v878
    %v3712 = vunpack.c.l.b16 %v879
    %v3713 = vunpack.c.l.b16 %v880
    %v3714 = vunpack.c.l.b16 %v881
    %v3715 = vunpack.c.l.b16 %v882
    %v3716 = vunpack.c.l.b16 %v883
    %v3717 = vunpack.c.l.b16 %v884
    %v3718 = vunpack.c.l.b16 %v885
    %v3719 = vunpack.c.l.b16 %v886
    %v3720 = vunpack.c.l.b16 %v887
    %v3721 = vunpack.c.l.b16 %v888
    %v3722 = vunpack.c.l.b16 %v889
    %v3723 = vunpack.c.l.b16 %v890
    %v3724 = vunpack.c.l.b16 %v891
    %v3725 = vunpack.c.l.b16 %v892
    %v3726 = vunpack.c.l.b16 %v893
    %v3727 = vunpack.c.l.b16 %v894
    %v3728 = vunpack.c.l.b16 %v895
    %v3729 = vunpack.c.l.b16 %v896
    %v3730 = vunpack.c.l.b16 %v897
    %v3731 = vunpack.c.l.b16 %v898
    %v3732 = vunpack.c.l.b16 %v899
    %v3733 = vunpack.c.l.b16 %v900
    %v3734 = vunpack.c.l.b16 %v901
    %v3735 = vunpack.c.l.b16 %v902
    %v3736 = vunpack.c.l.b16 %v903
    %v3737 = vunpack.c.l.b16 %v904
    %v3738 = vunpack.c.l.b16 %v905
    %v3739 = vunpack.c.l.b16 %v906
    %v3740 = vunpack.c.l.b16 %v907
    %v3741 = vunpack.c.l.b16 %v908
    %v3742 = vunpack.c.l.b16 %v909
    %v3743 = vunpack.c.l.b16 %v910
    %v3744 = vunpack.c.l.b16 %v911
    %v3745 = vunpack.c.l.b16 %v912
    %v3746 = vunpack.c.l.b16 %v913
    %v3747 = vunpack.c.l.b16 %v914
    %v3748 = vunpack.c.l.b16 %v915
    %v3749 = vunpack.c.l.b16 %v916
    %v3750 = vunpack.c.l.b16 %v917
    %v3751 = vunpack.c.l.b16 %v918
    %v3752 = vunpack.c.l.b16 %v919
    %v3753 = vunpack.c.l.b16 %v920
    %v3754 = vunpack.c.l.b16 %v921
    %v3755 = vunpack.c.l.b16 %v922
    %v3756 = vunpack.c.l.b16 %v923
    %v3757 = vunpack.c.l.b16 %v924
    %v3758 = vunpack.c.l.b16 %v925
    %v3759 = vunpack.c.l.b16 %v926
    %v3760 = vunpack.c.l.b16 %v927
    %v3761 = vunpack.c.l.b16 %v928
    %v3762 = vunpack.c.l.b16 %v929
    %v3763 = vunpack.c.l.b16 %v930
    %v3764 = vunpack.c.l.b16 %v931
    %v3765 = vunpack.c.l.b16 %v932
    %v3766 = vunpack.c.l.b16 %v933
    %v3767 = vunpack.c.l.b16 %v934
    %v3768 = vunpack.c.l.b16 %v935
    %v3769 = vunpack.c.l.b16 %v936
    %v3770 = vunpack.c.l.b16 %v937
    %v3771 = vunpack.c.l.b16 %v938
    %v3772 = vunpack.c.l.b16 %v939
    %v3773 = vunpack.c.l.b16 %v940
    %v3774 = vunpack.c.l.b16 %v941
    %v3775 = vunpack.c.l.b16 %v942
    %v3776 = vunpack.c.l.b16 %v943
    %v3777 = vunpack.c.l.b16 %v944
    %v3778 = vunpack.c.l.b16 %v945
    %v3779 = vunpack.c.l.b16 %v946
    %v3780 = vunpack.c.l.b16 %v947
    %v3781 = vunpack.c.l.b16 %v948
    %v3782 = vunpack.c.l.b16 %v949
    %v3783 = vunpack.c.l.b16 %v950
    %v3784 = vunpack.c.l.b16 %v951
    %v3785 = vunpack.c.l.b16 %v952
    %v3786 = vunpack.c.l.b16 %v953
    %v3787 = vunpack.c.l.b16 %v954
    %v3788 = vunpack.c.l.b16 %v955
    %v3789 = vunpack.c.l.b16 %v956
    %v3790 = vunpack.c.l.b16 %v957
    %v3791 = vunpack.c.l.b16 %v958
    %v3792 = vunpack.c.l.b16 %v959
    %v3793 = vunpack.c.l.b16 %v960
    %v3794 = vunpack.c.l.b16 %v961
    %v3795 = vunpack.c.l.b16 %v962
    %v3796 = vunpack.c.l.b16 %v963
    %v3797 = vunpack.c.l.b16 %v964
    %v3798 = vunpack.c.l.b16 %v965
    %v3799 = vunpack.c.l.b16 %v966
    %v3800 = vunpack.c.l.b16 %v967
    %v3801 = vunpack.c.l.b16 %v968
    %v3802 = vunpack.c.l.b16 %v969
    %v3803 = vunpack.c.l.b16 %v970
    %v3804 = vunpack.c.l.b16 %v971
    %v3805 = vunpack.c.l.b16 %v972
    %v3806 = vunpack.c.l.b16 %v973
    %v3807 = vunpack.c.l.b16 %v974
    %v3808 = vunpack.c.l.b16 %v975
    %v3809 = vunpack.c.l.b16 %v976
    %v3810 = vunpack.c.l.b16 %v977
    %v3811 = vunpack.c.l.b16 %v978
    %v3812 = vunpack.c.l.b16 %v979
    %v3813 = vunpack.c.l.b16 %v980
    %v3814 = vunpack.c.l.b16 %v981
    %v3815 = vunpack.c.l.b16 %v982
    %v3816 = vunpack.c.l.b16 %v983
    %v3817 = vunpack.c.l.b16 %v984
    %v3818 = vunpack.c.l.b16 %v985
    %v3819 = vunpack.c.l.b16 %v986
    %v3820 = vunpack.c.l.b16 %v987
    %v3821 = vunpack.c.l.b16 %v988
    %v3822 = vunpack.c.l.b16 %v989
    %v3823 = vunpack.c.l.b16 %v990
    %v3824 = vunpack.c.l.b16 %v991
    %v3825 = vunpack.c.l.b16 %v992
    %v3826 = vunpack.c.l.b16 %v993
    %v3827 = vunpack.c.l.b16 %v994
    %v3828 = vunpack.c.l.b16 %v995
    %v3829 = vunpack.c.l.b16 %v996
    %v3830 = vunpack.c.l.b16 %v997
    %v3831 = vunpack.c.l.b16 %v998
    %v3832 = vunpack.c.l.b16 %v999
    %v3833 = vunpack.c.l.b16 %v1000
    %v3834 = vunpack.c.l.b16 %v1001
    %v3835 = vunpack.c.l.b16 %v1002
    %v3836 = vunpack.c.l.b16 %v1003
    %v3837 = vunpack.c.l.b16 %v1004
    %v3838 = vunpack.c.l.b16 %v1005
    %v3839 = vunpack.c.l.b16 %v1006
    %v3840 = vunpack.c.l.b16 %v1007
    %v3841 = vunpack.c.l.b16 %v1008
    %v3842 = vunpack.c.l.b16 %v1009
    %v3843 = vunpack.c.l.b16 %v1010
    %v3844 = vunpack.c.l.b16 %v1011
    %v3845 = vunpack.c.l.b16 %v1012
    %v3846 = vunpack.c.l.b16 %v1013
    %v3847 = vunpack.c.l.b16 %v1014
    %v3848 = vunpack.c.l.b16 %v1015
    %v3849 = vunpack.c.l.b16 %v1016
    %v3850 = vunpack.c.l.b16 %v1017
    %v3851 = vunpack.c.l.b16 %v1018
    %v3852 = vunpack.c.l.b16 %v1019
    %v3853 = vunpack.c.l.b16 %v1020
    %v3854 = vunpack.c.l.b16 %v1021
    %v3855 = vunpack.c.l.b16 %v1022
    %v3856 = vunpack.c.l.b16 %v1023
    %v3857 = vunpack.c.l.b16 %v1024
    %v3858 = vunpack.c.l.b16 %v1025
    %v3859 = vunpack.c.l.b16 %v1026
    %v3860 = vunpack.c.l.b16 %v1027
    %v3861 = vunpack.c.l.b16 %v1028
    %v3862 = vunpack.c.l.b16 %v1029
    %v3863 = vunpack.c.l.b16 %v1030
    %v3864 = vunpack.c.l.b16 %v1031
    %v3865 = vunpack.c.l.b16 %v1032
    %v3866 = vunpack.c.l.b16 %v1033
    %v3867 = vunpack.c.l.b16 %v1034
    %v3868 = vunpack.c.l.b16 %v1035
    %v3869 = vunpack.c.l.b16 %v1036
    %v3870 = vunpack.c.l.b16 %v1037
    %v3871 = vunpack.c.l.b16 %v1038
    %v3872 = vunpack.c.l.b16 %v1039
    %v3873 = vunpack.c.l.b16 %v1040
    %v3874 = vunpack.c.l.b16 %v1041
    %v3875 = vunpack.c.l.b16 %v1042
    %v3876 = vunpack.c.l.b16 %v1043
    %v3877 = vunpack.c.l.b16 %v1044
    %v3878 = vunpack.c.l.b16 %v1045
    %v3879 = vunpack.c.l.b16 %v1046
    %v3880 = vunpack.c.l.b16 %v1047
    %v3881 = vunpack.c.l.b16 %v1048
    %v3882 = vunpack.c.l.b16 %v1049
    %v3883 = vunpack.c.l.b16 %v1050
    %v3884 = vunpack.c.l.b16 %v1051
    %v3885 = vunpack.c.l.b16 %v1052
    %v3886 = vunpack.c.l.b16 %v1053
    %v3887 = vunpack.c.l.b16 %v1054
    %v3888 = vunpack.c.l.b16 %v1055
    %v3889 = vunpack.c.l.b16 %v1056
    %v3890 = vunpack.c.l.b16 %v1057
    %v3891 = vunpack.c.l.b16 %v1058
    %v3892 = vunpack.c.l.b16 %v1059
    %v3893 = vunpack.c.l.b16 %v1060
    %v3894 = vunpack.c.l.b16 %v1061
    %v3895 = vunpack.c.l.b16 %v1062
    %v3896 = vunpack.c.l.b16 %v1063
    %v3897 = vunpack.c.l.b16 %v1064
    %v3898 = vunpack.c.l.b16 %v1065
    %v3899 = vunpack.c.l.b16 %v1066
    %v3900 = vunpack.c.l.b16 %v1067
    %v3901 = vunpack.c.l.b16 %v1068
    %v3902 = vunpack.c.l.b16 %v1069
    %v3903 = vunpack.c.l.b16 %v1070
    %v3904 = vunpack.c.l.b16 %v1071
    %v3905 = vunpack.c.l.b16 %v1072
    %v3906 = vunpack.c.l.b16 %v1073
    %v3907 = vunpack.c.l.b16 %v1074
    %v3908 = vunpack.c.l.b16 %v1075
    %v3909 = vunpack.c.l.b16 %v1076
    %v3910 = vunpack.c.l.b16 %v1077
    %v3911 = vunpack.c.l.b16 %v1078
    %v3912 = vunpack.c.l.b16 %v1079
    %v3913 = vunpack.c.l.b16 %v1080
    %v3914 = vunpack.c.l.b16 %v1081
    %v3915 = vunpack.c.l.b16 %v1082
    %v3916 = vunpack.c.l.b16 %v1083
    %v3917 = vunpack.c.l.b16 %v1084
    %v3918 = vunpack.c.l.b16 %v1085
    %v3919 = vunpack.c.l.b16 %v1086
    %v3920 = vunpack.c.l.b16 %v1087
    %v3921 = vunpack.c.l.b16 %v1088
    %v3922 = vunpack.c.l.b16 %v1089
    %v3923 = vunpack.c.l.b16 %v1090
    %v3924 = vunpack.c.l.b16 %v1091
    %v3925 = vunpack.c.l.b16 %v1092
    %v3926 = vunpack.c.l.b16 %v1093
    %v3927 = vunpack.c.l.b16 %v1094
    %v3928 = vunpack.c.l.b16 %v1095
    %v3929 = vunpack.c.l.b16 %v1096
    %v3930 = vunpack.c.l.b16 %v1097
    %v3931 = vunpack.c.l.b16 %v1098
    %v3932 = vunpack.c.l.b16 %v1099
    %v3933 = vunpack.c.l.b16 %v1100
    %v3934 = vunpack.c.l.b16 %v1101
    %v3935 = vunpack.c.l.b16 %v1102
    %v3936 = vunpack.c.l.b16 %v1103
    %v3937 = vunpack.c.l.b16 %v1104
    %v3938 = vunpack.c.l.b16 %v1105
    %v3939 = vunpack.c.l.b16 %v1106
    %v3940 = vunpack.c.l.b16 %v1107
    %v3941 = vunpack.c.l.b16 %v1108
    %v3942 = vunpack.c.l.b16 %v1109
    %v3943 = vunpack.c.l.b16 %v1110
    %v3944 = vunpack.c.l.b16 %v1111
    %v3945 = vunpack.c.l.b16 %v1112
    %v3946 = vunpack.c.l.b16 %v1113
    %v3947 = vunpack.c.l.b16 %v1114
    %v3948 = vunpack.c.l.b16 %v1115
    %v3949 = vunpack.c.l.b16 %v1116
    %v3950 = vunpack.c.l.b16 %v1117
    %v3951 = vunpack.c.l.b16 %v1118
    %v3952 = vunpack.c.l.b16 %v1119
    %v3953 = vunpack.c.l.b16 %v1120
    %v3954 = vunpack.c.l.b16 %v1121
    %v3955 = vunpack.c.l.b16 %v1122
    %v3956 = vunpack.c.l.b16 %v1123
    %v3957 = vunpack.c.l.b16 %v1124
    %v3958 = vunpack.c.l.b16 %v1125
    %v3959 = vunpack.c.l.b16 %v1126
    %v3960 = vunpack.c.l.b16 %v1127
    %v3961 = vunpack.c.l.b16 %v1128
    %v3962 = vunpack.c.l.b16 %v1129
    %v3963 = vunpack.c.l.b16 %v1130
    %v3964 = vunpack.c.l.b16 %v1131
    %v3965 = vunpack.c.l.b16 %v1132
    %v3966 = vunpack.c.l.b16 %v1133
    %v3967 = vunpack.c.l.b16 %v1134
    %v3968 = vunpack.c.l.b16 %v1135
    %v3969 = vunpack.c.l.b16 %v1136
    %v3970 = vunpack.c.l.b16 %v1137
    %v3971 = vunpack.c.l.b16 %v1138
    %v3972 = vunpack.c.l.b16 %v1139
    %v3973 = vunpack.c.l.b16 %v1140
    %v3974 = vunpack.c.l.b16 %v1141
    %v3975 = vunpack.c.l.b16 %v1142
    %v3976 = vunpack.c.l.b16 %v1143
    %v3977 = vunpack.c.l.b16 %v1144
    %v3978 = vunpack.c.l.b16 %v1145
    %v3979 = vunpack.c.l.b16 %v1146
    %v3980 = vunpack.c.l.b16 %v1147
    %v3981 = vunpack.c.l.b16 %v1148
    %v3982 = vunpack.c.l.b16 %v1149
    %v3983 = vunpack.c.l.b16 %v1150
    %v3984 = vunpack.c.l.b16 %v1151
    %v3985 = vunpack.c.l.b16 %v1152
    %v3986 = vunpack.c.l.b16 %v1153
    %v3987 = vunpack.c.l.b16 %v1154
    %v3988 = vunpack.c.l.b16 %v1155
    %v3989 = vunpack.c.l.b16 %v1156
    %v3990 = vunpack.c.l.b16 %v1157
    %v3991 = vunpack.c.l.b16 %v1158
    %v3992 = vunpack.c.l.b16 %v1159
    %v3993 = vunpack.c.l.b16 %v1160
    %v3994 = vunpack.c.l.b16 %v1161
    %v3995 = vunpack.c.l.b16 %v1162
    %v3996 = vunpack.c.l.b16 %v1163
    %v3997 = vunpack.c.l.b16 %v1164
    %v3998 = vunpack.c.l.b16 %v1165
    %v3999 = vunpack.c.l.b16 %v1166
    %v4000 = vunpack.c.l.b16 %v1167
    %v4001 = vunpack.c.l.b16 %v1168
    %v4002 = vunpack.c.l.b16 %v1169
    %v4003 = vunpack.c.l.b16 %v1170
    %v4004 = vunpack.c.l.b16 %v1171
    %v4005 = vunpack.c.l.b16 %v1172
    %v4006 = vunpack.c.l.b16 %v1173
    %v4007 = vunpack.c.l.b16 %v1174
    %v4008 = vunpack.c.l.b16 %v1175
    %v4009 = vunpack.c.l.b16 %v1176
    %v4010 = vunpack.c.l.b16 %v1177
    %v4011 = vunpack.c.l.b16 %v1178
    %v4012 = vunpack.c.l.b16 %v1179
    %v4013 = vunpack.c.l.b16 %v1180
    %v4014 = vunpack.c.l.b16 %v1181
    %v4015 = vunpack.c.l.b16 %v1182
    %v4016 = vpack.c.b16 %v2865, %v2864
    %v4017 = vpack.c.b16 %v2867, %v2866
    %v4018 = vpack.c.b16 %v2869, %v2868
    %v4019 = vpack.c.b16 %v2871, %v2870
    %v4020 = vpack.c.b16 %v2873, %v2872
    %v4021 = vpack.c.b16 %v2875, %v2874
    %v4022 = vpack.c.b16 %v2877, %v2876
    %v4023 = vpack.c.b16 %v2879, %v2878
    %v4024 = vpack.c.b16 %v2881, %v2880
    %v4025 = vpack.c.b16 %v2883, %v2882
    %v4026 = vpack.c.b16 %v2885, %v2884
    %v4027 = vpack.c.b16 %v2887, %v2886
    %v4028 = vpack.c.b16 %v2889, %v2888
    %v4029 = vpack.c.b16 %v2891, %v2890
    %v4030 = vpack.c.b16 %v2893, %v2892
    %v4031 = vpack.c.b16 %v2895, %v2894
    %v4032 = vpack.c.b16 %v2897, %v2896
    %v4033 = vpack.c.b16 %v2899, %v2898
    %v4034 = vpack.c.b16 %v2901, %v2900
    %v4035 = vpack.c.b16 %v2903, %v2902
    %v4036 = vpack.c.b16 %v2905, %v2904
    %v4037 = vpack.c.b16 %v2907, %v2906
    %v4038 = vpack.c.b16 %v2909, %v2908
    %v4039 = vpack.c.b16 %v2911, %v2910
    %v4040 = vpack.c.b16 %v2913, %v2912
    %v4041 = vpack.c.b16 %v2915, %v2914
    %v4042 = vpack.c.b16 %v2917, %v2916
    %v4043 = vpack.c.b16 %v2919, %v2918
    %v4044 = vpack.c.b16 %v2921, %v2920
    %v4045 = vpack.c.b16 %v2923, %v2922
    %v4046 = vpack.c.b16 %v2925, %v2924
    %v4047 = vpack.c.b16 %v2927, %v2926
    %v4048 = vpack.c.b16 %v2929, %v2928
    %v4049 = vpack.c.b16 %v2931, %v2930
    %v4050 = vpack.c.b16 %v2933, %v2932
    %v4051 = vpack.c.b16 %v2935, %v2934
    %v4052 = vpack.c.b16 %v2937, %v2936
    %v4053 = vpack.c.b16 %v2939, %v2938
    %v4054 = vpack.c.b16 %v2941, %v2940
    %v4055 = vpack.c.b16 %v2943, %v2942
    %v4056 = vpack.c.b16 %v2945, %v2944
    %v4057 = vpack.c.b16 %v2947, %v2946
    %v4058 = vpack.c.b16 %v2949, %v2948
    %v4059 = vpack.c.b16 %v2951, %v2950
    %v4060 = vpack.c.b16 %v2953, %v2952
    %v4061 = vpack.c.b16 %v2955, %v2954
    %v4062 = vpack.c.b16 %v2957, %v2956
    %v4063 = vpack.c.b16 %v2959, %v2958
    %v4064 = vpack.c.b16 %v2961, %v2960
    %v4065 = vpack.c.b16 %v2963, %v2962
    %v4066 = vpack.c.b16 %v2965, %v2964
    %v4067 = vpack.c.b16 %v2967, %v2966
    %v4068 = vpack.c.b16 %v2969, %v2968
    %v4069 = vpack.c.b16 %v2971, %v2970
    %v4070 = vpack.c.b16 %v2973, %v2972
    %v4071 = vpack.c.b16 %v2975, %v2974
    %v4072 = vpack.c.b16 %v2977, %v2976
    %v4073 = vpack.c.b16 %v2979, %v2978
    %v4074 = vpack.c.b16 %v2981, %v2980
    %v4075 = vpack.c.b16 %v2983, %v2982
    %v4076 = vpack.c.b16 %v2985, %v2984
    %v4077 = vpack.c.b16 %v2987, %v2986
    %v4078 = vpack.c.b16 %v2989, %v2988
    %v4079 = vpack.c.b16 %v2991, %v2990
    %v4080 = vpack.c.b16 %v2993, %v2992
    %v4081 = vpack.c.b16 %v2995, %v2994
    %v4082 = vpack.c.b16 %v2997, %v2996
    %v4083 = vpack.c.b16 %v2999, %v2998
    %v4084 = vpack.c.b16 %v3001, %v3000
    %v4085 = vpack.c.b16 %v3003, %v3002
    %v4086 = vpack.c.b16 %v3005, %v3004
    %v4087 = vpack.c.b16 %v3007, %v3006
    %v4088 = vpack.c.b16 %v3009, %v3008
    %v4089 = vpack.c.b16 %v3011, %v3010
    %v4090 = vpack.c.b16 %v3013, %v3012
    %v4091 = vpack.c.b16 %v3015, %v3014
    %v4092 = vpack.c.b16 %v3017, %v3016
    %v4093 = vpack.c.b16 %v3019, %v3018
    %v4094 = vpack.c.b16 %v3021, %v3020
    %v4095 = vpack.c.b16 %v3023, %v3022
    %v4096 = vpack.c.b16 %v3025, %v3024
    %v4097 = vpack.c.b16 %v3027, %v3026
    %v4098 = vpack.c.b16 %v3029, %v3028
    %v4099 = vpack.c.b16 %v3031, %v3030
    %v4100 = vpack.c.b16 %v3033, %v3032
    %v4101 = vpack.c.b16 %v3035, %v3034
    %v4102 = vpack.c.b16 %v3037, %v3036
    %v4103 = vpack.c.b16 %v3039, %v3038
    %v4104 = vpack.c.b16 %v3041, %v3040
    %v4105 = vpack.c.b16 %v3043, %v3042
    %v4106 = vpack.c.b16 %v3045, %v3044
    %v4107 = vpack.c.b16 %v3047, %v3046
    %v4108 = vpack.c.b16 %v3049, %v3048
    %v4109 = vpack.c.b16 %v3051, %v3050
    %v4110 = vpack.c.b16 %v3053, %v3052
    %v4111 = vpack.c.b16 %v3055, %v3054
    %v4112 = vpack.c.b16 %v3057, %v3056
    %v4113 = vpack.c.b16 %v3059, %v3058
    %v4114 = vpack.c.b16 %v3061, %v3060
    %v4115 = vpack.c.b16 %v3063, %v3062
    %v4116 = vpack.c.b16 %v3065, %v3064
    %v4117 = vpack.c.b16 %v3067, %v3066
    %v4118 = vpack.c.b16 %v3069, %v3068
    %v4119 = vpack.c.b16 %v3071, %v3070
    %v4120 = vpack.c.b16 %v3073, %v3072
    %v4121 = vpack.c.b16 %v3075, %v3074
    %v4122 = vpack.c.b16 %v3077, %v3076
    %v4123 = vpack.c.b16 %v3079, %v3078
    %v4124 = vpack.c.b16 %v3081, %v3080
    %v4125 = vpack.c.b16 %v3083, %v3082
    %v4126 = vpack.c.b16 %v3085, %v3084
    %v4127 = vpack.c.b16 %v3087, %v3086
    %v4128 = vpack.c.b16 %v3089, %v3088
    %v4129 = vpack.c.b16 %v3091, %v3090
    %v4130 = vpack.c.b16 %v3093, %v3092
    %v4131 = vpack.c.b16 %v3095, %v3094
    %v4132 = vpack.c.b16 %v3097, %v3096
    %v4133 = vpack.c.b16 %v3099, %v3098
    %v4134 = vpack.c.b16 %v3101, %v3100
    %v4135 = vpack.c.b16 %v3103, %v3102
    %v4136 = vpack.c.b16 %v3105, %v3104
    %v4137 = vpack.c.b16 %v3107, %v3106
    %v4138 = vpack.c.b16 %v3109, %v3108
    %v4139 = vpack.c.b16 %v3111, %v3110
    %v4140 = vpack.c.b16 %v3113, %v3112
    %v4141 = vpack.c.b16 %v3115, %v3114
    %v4142 = vpack.c.b16 %v3117, %v3116
    %v4143 = vpack.c.b16 %v3119, %v3118
    %v4144 = vpack.c.b16 %v3121, %v3120
    %v4145 = vpack.c.b16 %v3123, %v3122
    %v4146 = vpack.c.b16 %v3125, %v3124
    %v4147 = vpack.c.b16 %v3127, %v3126
    %v4148 = vpack.c.b16 %v3129, %v3128
    %v4149 = vpack.c.b16 %v3131, %v3130
    %v4150 = vpack.c.b16 %v3133, %v3132
    %v4151 = vpack.c.b16 %v3135, %v3134
    %v4152 = vpack.c.b16 %v3137, %v3136
    %v4153 = vpack.c.b16 %v3139, %v3138
    %v4154 = vpack.c.b16 %v3141, %v3140
    %v4155 = vpack.c.b16 %v3143, %v3142
    %v4156 = vpack.c.b16 %v3145, %v3144
    %v4157 = vpack.c.b16 %v3147, %v3146
    %v4158 = vpack.c.b16 %v3149, %v3148
    %v4159 = vpack.c.b16 %v3151, %v3150
    %v4160 = vpack.c.b16 %v3153, %v3152
    %v4161 = vpack.c.b16 %v3155, %v3154
    %v4162 = vpack.c.b16 %v3157, %v3156
    %v4163 = vpack.c.b16 %v3159, %v3158
    %v4164 = vpack.c.b16 %v3161, %v3160
    %v4165 = vpack.c.b16 %v3163, %v3162
    %v4166 = vpack.c.b16 %v3165, %v3164
    %v4167 = vpack.c.b16 %v3167, %v3166
    %v4168 = vpack.c.b16 %v3169, %v3168
    %v4169 = vpack.c.b16 %v3171, %v3170
    %v4170 = vpack.c.b16 %v3173, %v3172
    %v4171 = vpack.c.b16 %v3175, %v3174
    %v4172 = vpack.c.b16 %v3177, %v3176
    %v4173 = vpack.c.b16 %v3179, %v3178
    %v4174 = vpack.c.b16 %v3181, %v3180
    %v4175 = vpack.c.b16 %v3183, %v3182
    %v4176 = vpack.c.b16 %v3185, %v3184
    %v4177 = vpack.c.b16 %v3187, %v3186
    %v4178 = vpack.c.b16 %v3189, %v3188
    %v4179 = vpack.c.b16 %v3191, %v3190
    %v4180 = vpack.c.b16 %v3193, %v3192
    %v4181 = vpack.c.b16 %v3195, %v3194
    %v4182 = vpack.c.b16 %v3197, %v3196
    %v4183 = vpack.c.b16 %v3199, %v3198
    %v4184 = vpack.c.b16 %v3201, %v3200
    %v4185 = vpack.c.b16 %v3203, %v3202
    %v4186 = vpack.c.b16 %v3205, %v3204
    %v4187 = vpack.c.b16 %v3207, %v3206
    %v4188 = vpack.c.b16 %v3209, %v3208
    %v4189 = vpack.c.b16 %v3211, %v3210
    %v4190 = vpack.c.b16 %v3213, %v3212
    %v4191 = vpack.c.b16 %v3215, %v3214
    %v4192 = vpack.c.b16 %v3217, %v3216
    %v4193 = vpack.c.b16 %v3219, %v3218
    %v4194 = vpack.c.b16 %v3221, %v3220
    %v4195 = vpack.c.b16 %v3223, %v3222
    %v4196 = vpack.c.b16 %v3225, %v3224
    %v4197 = vpack.c.b16 %v3227, %v3226
    %v4198 = vpack.c.b16 %v3229, %v3228
    %v4199 = vpack.c.b16 %v3231, %v3230
    %v4200 = vpack.c.b16 %v3233, %v3232
    %v4201 = vpack.c.b16 %v3235, %v3234
    %v4202 = vpack.c.b16 %v3237, %v3236
    %v4203 = vpack.c.b16 %v3239, %v3238
    %v4204 = vpack.c.b16 %v3241, %v3240
    %v4205 = vpack.c.b16 %v3243, %v3242
    %v4206 = vpack.c.b16 %v3245, %v3244
    %v4207 = vpack.c.b16 %v3247, %v3246
    %v4208 = vpack.c.b16 %v3249, %v3248
    %v4209 = vpack.c.b16 %v3251, %v3250
    %v4210 = vpack.c.b16 %v3253, %v3252
    %v4211 = vpack.c.b16 %v3255, %v3254
    %v4212 = vpack.c.b16 %v3257, %v3256
    %v4213 = vpack.c.b16 %v3259, %v3258
    %v4214 = vpack.c.b16 %v3261, %v3260
    %v4215 = vpack.c.b16 %v3263, %v3262
    %v4216 = vpack.c.b16 %v3265, %v3264
    %v4217 = vpack.c.b16 %v3267, %v3266
    %v4218 = vpack.c.b16 %v3269, %v3268
    %v4219 = vpack.c.b16 %v3271, %v3270
    %v4220 = vpack.c.b16 %v3273, %v3272
    %v4221 = vpack.c.b16 %v3275, %v3274
    %v4222 = vpack.c.b16 %v3277, %v3276
    %v4223 = vpack.c.b16 %v3279, %v3278
    %v4224 = vpack.c.b16 %v3281, %v3280
    %v4225 = vpack.c.b16 %v3283, %v3282
    %v4226 = vpack.c.b16 %v3285, %v3284
    %v4227 = vpack.c.b16 %v3287, %v3286
    %v4228 = vpack.c.b16 %v3289, %v3288
    %v4229 = vpack.c.b16 %v3291, %v3290
    %v4230 = vpack.c.b16 %v3293, %v3292
    %v4231 = vpack.c.b16 %v3295, %v3294
    %v4232 = vpack.c.b16 %v3297, %v3296
    %v4233 = vpack.c.b16 %v3299, %v3298
    %v4234 = vpack.c.b16 %v3301, %v3300
    %v4235 = vpack.c.b16 %v3303, %v3302
    %v4236 = vpack.c.b16 %v3305, %v3304
    %v4237 = vpack.c.b16 %v3307, %v3306
    %v4238 = vpack.c.b16 %v3309, %v3308
    %v4239 = vpack.c.b16 %v3311, %v3310
    %v4240 = vpack.c.b16 %v3313, %v3312
    %v4241 = vpack.c.b16 %v3315, %v3314
    %v4242 = vpack.c.b16 %v3317, %v3316
    %v4243 = vpack.c.b16 %v3319, %v3318
    %v4244 = vpack.c.b16 %v3321, %v3320
    %v4245 = vpack.c.b16 %v3323, %v3322
    %v4246 = vpack.c.b16 %v3325, %v3324
    %v4247 = vpack.c.b16 %v3327, %v3326
    %v4248 = vpack.c.b16 %v3329, %v3328
    %v4249 = vpack.c.b16 %v3331, %v3330
    %v4250 = vpack.c.b16 %v3333, %v3332
    %v4251 = vpack.c.b16 %v3335, %v3334
    %v4252 = vpack.c.b16 %v3337, %v3336
    %v4253 = vpack.c.b16 %v3339, %v3338
    %v4254 = vpack.c.b16 %v3341, %v3340
    %v4255 = vpack.c.b16 %v3343, %v3342
    %v4256 = vpack.c.b16 %v3345, %v3344
    %v4257 = vpack.c.b16 %v3347, %v3346
    %v4258 = vpack.c.b16 %v3349, %v3348
    %v4259 = vpack.c.b16 %v3351, %v3350
    %v4260 = vpack.c.b16 %v3353, %v3352
    %v4261 = vpack.c.b16 %v3355, %v3354
    %v4262 = vpack.c.b16 %v3357, %v3356
    %v4263 = vpack.c.b16 %v3359, %v3358
    %v4264 = vpack.c.b16 %v3361, %v3360
    %v4265 = vpack.c.b16 %v3363, %v3362
    %v4266 = vpack.c.b16 %v3365, %v3364
    %v4267 = vpack.c.b16 %v3367, %v3366
    %v4268 = vpack.c.b16 %v3369, %v3368
    %v4269 = vpack.c.b16 %v3371, %v3370
    %v4270 = vpack.c.b16 %v3373, %v3372
    %v4271 = vpack.c.b16 %v3375, %v3374
    %v4272 = vpack.c.b16 %v3377, %v3376
    %v4273 = vpack.c.b16 %v3379, %v3378
    %v4274 = vpack.c.b16 %v3381, %v3380
    %v4275 = vpack.c.b16 %v3383, %v3382
    %v4276 = vpack.c.b16 %v3385, %v3384
    %v4277 = vpack.c.b16 %v3387, %v3386
    %v4278 = vpack.c.b16 %v3389, %v3388
    %v4279 = vpack.c.b16 %v3391, %v3390
    %v4280 = vpack.c.b16 %v3393, %v3392
    %v4281 = vpack.c.b16 %v3395, %v3394
    %v4282 = vpack.c.b16 %v3397, %v3396
    %v4283 = vpack.c.b16 %v3399, %v3398
    %v4284 = vpack.c.b16 %v3401, %v3400
    %v4285 = vpack.c.b16 %v3403, %v3402
    %v4286 = vpack.c.b16 %v3405, %v3404
    %v4287 = vpack.c.b16 %v3407, %v3406
    %v4288 = vpack.c.b16 %v3409, %v3408
    %v4289 = vpack.c.b16 %v3411, %v3410
    %v4290 = vpack.c.b16 %v3413, %v3412
    %v4291 = vpack.c.b16 %v3415, %v3414
    %v4292 = vpack.c.b16 %v3417, %v3416
    %v4293 = vpack.c.b16 %v3419, %v3418
    %v4294 = vpack.c.b16 %v3421, %v3420
    %v4295 = vpack.c.b16 %v3423, %v3422
    %v4296 = vpack.c.b16 %v3425, %v3424
    %v4297 = vpack.c.b16 %v3427, %v3426
    %v4298 = vpack.c.b16 %v3429, %v3428
    %v4299 = vpack.c.b16 %v3431, %v3430
    %v4300 = vpack.c.b16 %v3433, %v3432
    %v4301 = vpack.c.b16 %v3435, %v3434
    %v4302 = vpack.c.b16 %v3437, %v3436
    %v4303 = vpack.c.b16 %v3439, %v3438
    %v4304 = vpack.c.b16 %v3441, %v3440
    %v4305 = vpack.c.b16 %v3443, %v3442
    %v4306 = vpack.c.b16 %v3445, %v3444
    %v4307 = vpack.c.b16 %v3447, %v3446
    %v4308 = vpack.c.b16 %v3449, %v3448
    %v4309 = vpack.c.b16 %v3451, %v3450
    %v4310 = vpack.c.b16 %v3453, %v3452
    %v4311 = vpack.c.b16 %v3455, %v3454
    %v4312 = vpack.c.b16 %v3457, %v3456
    %v4313 = vpack.c.b16 %v3459, %v3458
    %v4314 = vpack.c.b16 %v3461, %v3460
    %v4315 = vpack.c.b16 %v3463, %v3462
    %v4316 = vpack.c.b16 %v3465, %v3464
    %v4317 = vpack.c.b16 %v3467, %v3466
    %v4318 = vpack.c.b16 %v3469, %v3468
    %v4319 = vpack.c.b16 %v3471, %v3470
    %v4320 = vpack.c.b16 %v3473, %v3472
    %v4321 = vpack.c.b16 %v3475, %v3474
    %v4322 = vpack.c.b16 %v3477, %v3476
    %v4323 = vpack.c.b16 %v3479, %v3478
    %v4324 = vpack.c.b16 %v3481, %v3480
    %v4325 = vpack.c.b16 %v3483, %v3482
    %v4326 = vpack.c.b16 %v3485, %v3484
    %v4327 = vpack.c.b16 %v3487, %v3486
    %v4328 = vpack.c.b16 %v3489, %v3488
    %v4329 = vpack.c.b16 %v3491, %v3490
    %v4330 = vpack.c.b16 %v3493, %v3492
    %v4331 = vpack.c.b16 %v3495, %v3494
    %v4332 = vpack.c.b16 %v3497, %v3496
    %v4333 = vpack.c.b16 %v3499, %v3498
    %v4334 = vpack.c.b16 %v3501, %v3500
    %v4335 = vpack.c.b16 %v3503, %v3502
    %v4336 = vpack.c.b16 %v3505, %v3504
    %v4337 = vpack.c.b16 %v3507, %v3506
    %v4338 = vpack.c.b16 %v3509, %v3508
    %v4339 = vpack.c.b16 %v3511, %v3510
    %v4340 = vpack.c.b16 %v3513, %v3512
    %v4341 = vpack.c.b16 %v3515, %v3514
    %v4342 = vpack.c.b16 %v3517, %v3516
    %v4343 = vpack.c.b16 %v3519, %v3518
    %v4344 = vpack.c.b16 %v3521, %v3520
    %v4345 = vpack.c.b16 %v3523, %v3522
    %v4346 = vpack.c.b16 %v3525, %v3524
    %v4347 = vpack.c.b16 %v3527, %v3526
    %v4348 = vpack.c.b16 %v3529, %v3528
    %v4349 = vpack.c.b16 %v3531, %v3530
    %v4350 = vpack.c.b16 %v3533, %v3532
    %v4351 = vpack.c.b16 %v3535, %v3534
    %v4352 = vpack.c.b16 %v3537, %v3536
    %v4353 = vpack.c.b16 %v3539, %v3538
    %v4354 = vpack.c.b16 %v3541, %v3540
    %v4355 = vpack.c.b16 %v3543, %v3542
    %v4356 = vpack.c.b16 %v3545, %v3544
    %v4357 = vpack.c.b16 %v3547, %v3546
    %v4358 = vpack.c.b16 %v3549, %v3548
    %v4359 = vpack.c.b16 %v3551, %v3550
    %v4360 = vpack.c.b16 %v3553, %v3552
    %v4361 = vpack.c.b16 %v3555, %v3554
    %v4362 = vpack.c.b16 %v3557, %v3556
    %v4363 = vpack.c.b16 %v3559, %v3558
    %v4364 = vpack.c.b16 %v3561, %v3560
    %v4365 = vpack.c.b16 %v3563, %v3562
    %v4366 = vpack.c.b16 %v3565, %v3564
    %v4367 = vpack.c.b16 %v3567, %v3566
    %v4368 = vpack.c.b16 %v3569, %v3568
    %v4369 = vpack.c.b16 %v3571, %v3570
    %v4370 = vpack.c.b16 %v3573, %v3572
    %v4371 = vpack.c.b16 %v3575, %v3574
    %v4372 = vpack.c.b16 %v3577, %v3576
    %v4373 = vpack.c.b16 %v3579, %v3578
    %v4374 = vpack.c.b16 %v3581, %v3580
    %v4375 = vpack.c.b16 %v3583, %v3582
    %v4376 = vpack.c.b16 %v3585, %v3584
    %v4377 = vpack.c.b16 %v3587, %v3586
    %v4378 = vpack.c.b16 %v3589, %v3588
    %v4379 = vpack.c.b16 %v3591, %v3590
    %v4380 = vpack.c.b16 %v3593, %v3592
    %v4381 = vpack.c.b16 %v3595, %v3594
    %v4382 = vpack.c.b16 %v3597, %v3596
    %v4383 = vpack.c.b16 %v3599, %v3598
    %v4384 = vpack.c.b16 %v3601, %v3600
    %v4385 = vpack.c.b16 %v3603, %v3602
    %v4386 = vpack.c.b16 %v3605, %v3604
    %v4387 = vpack.c.b16 %v3607, %v3606
    %v4388 = vpack.c.b16 %v3609, %v3608
    %v4389 = vpack.c.b16 %v3611, %v3610
    %v4390 = vpack.c.b16 %v3613, %v3612
    %v4391 = vpack.c.b16 %v3615, %v3614
    %v4392 = vpack.c.b16 %v3617, %v3616
    %v4393 = vpack.c.b16 %v3619, %v3618
    %v4394 = vpack.c.b16 %v3621, %v3620
    %v4395 = vpack.c.b16 %v3623, %v3622
    %v4396 = vpack.c.b16 %v3625, %v3624
    %v4397 = vpack.c.b16 %v3627, %v3626
    %v4398 = vpack.c.b16 %v3629, %v3628
    %v4399 = vpack.c.b16 %v3631, %v3630
    %v4400 = vpack.c.b16 %v3633, %v3632
    %v4401 = vpack.c.b16 %v3635, %v3634
    %v4402 = vpack.c.b16 %v3637, %v3636
    %v4403 = vpack.c.b16 %v3639, %v3638
    %v4404 = vpack.c.b16 %v3641, %v3640
    %v4405 = vpack.c.b16 %v3643, %v3642
    %v4406 = vpack.c.b16 %v3645, %v3644
    %v4407 = vpack.c.b16 %v3647, %v3646
    %v4408 = vpack.c.b16 %v3649, %v3648
    %v4409 = vpack.c.b16 %v3651, %v3650
    %v4410 = vpack.c.b16 %v3653, %v3652
    %v4411 = vpack.c.b16 %v3655, %v3654
    %v4412 = vpack.c.b16 %v3657, %v3656
    %v4413 = vpack.c.b16 %v3659, %v3658
    %v4414 = vpack.c.b16 %v3661, %v3660
    %v4415 = vpack.c.b16 %v3663, %v3662
    %v4416 = vpack.c.b16 %v3665, %v3664
    %v4417 = vpack.c.b16 %v3667, %v3666
    %v4418 = vpack.c.b16 %v3669, %v3668
    %v4419 = vpack.c.b16 %v3671, %v3670
    %v4420 = vpack.c.b16 %v3673, %v3672
    %v4421 = vpack.c.b16 %v3675, %v3674
    %v4422 = vpack.c.b16 %v3677, %v3676
    %v4423 = vpack.c.b16 %v3679, %v3678
    %v4424 = vpack.c.b16 %v3681, %v3680
    %v4425 = vpack.c.b16 %v3683, %v3682
    %v4426 = vpack.c.b16 %v3685, %v3684
    %v4427 = vpack.c.b16 %v3687, %v3686
    %v4428 = vpack.c.b16 %v3689, %v3688
    %v4429 = vpack.c.b16 %v3691, %v3690
    %v4430 = vpack.c.b16 %v3693, %v3692
    %v4431 = vpack.c.b16 %v3695, %v3694
    %v4432 = vpack.c.b16 %v3697, %v3696
    %v4433 = vpack.c.b16 %v3699, %v3698
    %v4434 = vpack.c.b16 %v3701, %v3700
    %v4435 = vpack.c.b16 %v3703, %v3702
    %v4436 = vpack.c.b16 %v3705, %v3704
    %v4437 = vpack.c.b16 %v3707, %v3706
    %v4438 = vpack.c.b16 %v3709, %v3708
    %v4439 = vpack.c.b16 %v3711, %v3710
    %v4440 = vpack.c.b16 %v3713, %v3712
    %v4441 = vpack.c.b16 %v3715, %v3714
    %v4442 = vpack.c.b16 %v3717, %v3716
    %v4443 = vpack.c.b16 %v3719, %v3718
    %v4444 = vpack.c.b16 %v3721, %v3720
    %v4445 = vpack.c.b16 %v3723, %v3722
    %v4446 = vpack.c.b16 %v3725, %v3724
    %v4447 = vpack.c.b16 %v3727, %v3726
    %v4448 = vpack.c.b16 %v3729, %v3728
    %v4449 = vpack.c.b16 %v3731, %v3730
    %v4450 = vpack.c.b16 %v3733, %v3732
    %v4451 = vpack.c.b16 %v3735, %v3734
    %v4452 = vpack.c.b16 %v3737, %v3736
    %v4453 = vpack.c.b16 %v3739, %v3738
    %v4454 = vpack.c.b16 %v3741, %v3740
    %v4455 = vpack.c.b16 %v3743, %v3742
    %v4456 = vpack.c.b16 %v3745, %v3744
    %v4457 = vpack.c.b16 %v3747, %v3746
    %v4458 = vpack.c.b16 %v3749, %v3748
    %v4459 = vpack.c.b16 %v3751, %v3750
    %v4460 = vpack.c.b16 %v3753, %v3752
    %v4461 = vpack.c.b16 %v3755, %v3754
    %v4462 = vpack.c.b16 %v3757, %v3756
    %v4463 = vpack.c.b16 %v3759, %v3758
    %v4464 = vpack.c.b16 %v3761, %v3760
    %v4465 = vpack.c.b16 %v3763, %v3762
    %v4466 = vpack.c.b16 %v3765, %v3764
    %v4467 = vpack.c.b16 %v3767, %v3766
    %v4468 = vpack.c.b16 %v3769, %v3768
    %v4469 = vpack.c.b16 %v3771, %v3770
    %v4470 = vpack.c.b16 %v3773, %v3772
    %v4471 = vpack.c.b16 %v3775, %v3774
    %v4472 = vpack.c.b16 %v3777, %v3776
    %v4473 = vpack.c.b16 %v3779, %v3778
    %v4474 = vpack.c.b16 %v3781, %v3780
    %v4475 = vpack.c.b16 %v3783, %v3782
    %v4476 = vpack.c.b16 %v3785, %v3784
    %v4477 = vpack.c.b16 %v3787, %v3786
    %v4478 = vpack.c.b16 %v3789, %v3788
    %v4479 = vpack.c.b16 %v3791, %v3790
    %v4480 = vpack.c.b16 %v3793, %v3792
    %v4481 = vpack.c.b16 %v3795, %v3794
    %v4482 = vpack.c.b16 %v3797, %v3796
    %v4483 = vpack.c.b16 %v3799, %v3798
    %v4484 = vpack.c.b16 %v3801, %v3800
    %v4485 = vpack.c.b16 %v3803, %v3802
    %v4486 = vpack.c.b16 %v3805, %v3804
    %v4487 = vpack.c.b16 %v3807, %v3806
    %v4488 = vpack.c.b16 %v3809, %v3808
    %v4489 = vpack.c.b16 %v3811, %v3810
    %v4490 = vpack.c.b16 %v3813, %v3812
    %v4491 = vpack.c.b16 %v3815, %v3814
    %v4492 = vpack.c.b16 %v3817, %v3816
    %v4493 = vpack.c.b16 %v3819, %v3818
    %v4494 = vpack.c.b16 %v3821, %v3820
    %v4495 = vpack.c.b16 %v3823, %v3822
    %v4496 = vpack.c.b16 %v3825, %v3824
    %v4497 = vpack.c.b16 %v3827, %v3826
    %v4498 = vpack.c.b16 %v3829, %v3828
    %v4499 = vpack.c.b16 %v3831, %v3830
    %v4500 = vpack.c.b16 %v3833, %v3832
    %v4501 = vpack.c.b16 %v3835, %v3834
    %v4502 = vpack.c.b16 %v3837, %v3836
    %v4503 = vpack.c.b16 %v3839, %v3838
    %v4504 = vpack.c.b16 %v3841, %v3840
    %v4505 = vpack.c.b16 %v3843, %v3842
    %v4506 = vpack.c.b16 %v3845, %v3844
    %v4507 = vpack.c.b16 %v3847, %v3846
    %v4508 = vpack.c.b16 %v3849, %v3848
    %v4509 = vpack.c.b16 %v3851, %v3850
    %v4510 = vpack.c.b16 %v3853, %v3852
    %v4511 = vpack.c.b16 %v3855, %v3854
    %v4512 = vpack.c.b16 %v3857, %v3856
    %v4513 = vpack.c.b16 %v3859, %v3858
    %v4514 = vpack.c.b16 %v3861, %v3860
    %v4515 = vpack.c.b16 %v3863, %v3862
    %v4516 = vpack.c.b16 %v3865, %v3864
    %v4517 = vpack.c.b16 %v3867, %v3866
    %v4518 = vpack.c.b16 %v3869, %v3868
    %v4519 = vpack.c.b16 %v3871, %v3870
    %v4520 = vpack.c.b16 %v3873, %v3872
    %v4521 = vpack.c.b16 %v3875, %v3874
    %v4522 = vpack.c.b16 %v3877, %v3876
    %v4523 = vpack.c.b16 %v3879, %v3878
    %v4524 = vpack.c.b16 %v3881, %v3880
    %v4525 = vpack.c.b16 %v3883, %v3882
    %v4526 = vpack.c.b16 %v3885, %v3884
    %v4527 = vpack.c.b16 %v3887, %v3886
    %v4528 = vpack.c.b16 %v3889, %v3888
    %v4529 = vpack.c.b16 %v3891, %v3890
    %v4530 = vpack.c.b16 %v3893, %v3892
    %v4531 = vpack.c.b16 %v3895, %v3894
    %v4532 = vpack.c.b16 %v3897, %v3896
    %v4533 = vpack.c.b16 %v3899, %v3898
    %v4534 = vpack.c.b16 %v3901, %v3900
    %v4535 = vpack.c.b16 %v3903, %v3902
    %v4536 = vpack.c.b16 %v3905, %v3904
    %v4537 = vpack.c.b16 %v3907, %v3906
    %v4538 = vpack.c.b16 %v3909, %v3908
    %v4539 = vpack.c.b16 %v3911, %v3910
    %v4540 = vpack.c.b16 %v3913, %v3912
    %v4541 = vpack.c.b16 %v3915, %v3914
    %v4542 = vpack.c.b16 %v3917, %v3916
    %v4543 = vpack.c.b16 %v3919, %v3918
    %v4544 = vpack.c.b16 %v3921, %v3920
    %v4545 = vpack.c.b16 %v3923, %v3922
    %v4546 = vpack.c.b16 %v3925, %v3924
    %v4547 = vpack.c.b16 %v3927, %v3926
    %v4548 = vpack.c.b16 %v3929, %v3928
    %v4549 = vpack.c.b16 %v3931, %v3930
    %v4550 = vpack.c.b16 %v3933, %v3932
    %v4551 = vpack.c.b16 %v3935, %v3934
    %v4552 = vpack.c.b16 %v3937, %v3936
    %v4553 = vpack.c.b16 %v3939, %v3938
    %v4554 = vpack.c.b16 %v3941, %v3940
    %v4555 = vpack.c.b16 %v3943, %v3942
    %v4556 = vpack.c.b16 %v3945, %v3944
    %v4557 = vpack.c.b16 %v3947, %v3946
    %v4558 = vpack.c.b16 %v3949, %v3948
    %v4559 = vpack.c.b16 %v3951, %v3950
    %v4560 = vpack.c.b16 %v3953, %v3952
    %v4561 = vpack.c.b16 %v3955, %v3954
    %v4562 = vpack.c.b16 %v3957, %v3956
    %v4563 = vpack.c.b16 %v3959, %v3958
    %v4564 = vpack.c.b16 %v3961, %v3960
    %v4565 = vpack.c.b16 %v3963, %v3962
    %v4566 = vpack.c.b16 %v3965, %v3964
    %v4567 = vpack.c.b16 %v3967, %v3966
    %v4568 = vpack.c.b16 %v3969, %v3968
    %v4569 = vpack.c.b16 %v3971, %v3970
    %v4570 = vpack.c.b16 %v3973, %v3972
    %v4571 = vpack.c.b16 %v3975, %v3974
    %v4572 = vpack.c.b16 %v3977, %v3976
    %v4573 = vpack.c.b16 %v3979, %v3978
    %v4574 = vpack.c.b16 %v3981, %v3980
    %v4575 = vpack.c.b16 %v3983, %v3982
    %v4576 = vpack.c.b16 %v3985, %v3984
    %v4577 = vpack.c.b16 %v3987, %v3986
    %v4578 = vpack.c.b16 %v3989, %v3988
    %v4579 = vpack.c.b16 %v3991, %v3990
    %v4580 = vpack.c.b16 %v3993, %v3992
    %v4581 = vpack.c.b16 %v3995, %v3994
    %v4582 = vpack.c.b16 %v3997, %v3996
    %v4583 = vpack.c.b16 %v3999, %v3998
    %v4584 = vpack.c.b16 %v4001, %v4000
    %v4585 = vpack.c.b16 %v4003, %v4002
    %v4586 = vpack.c.b16 %v4005, %v4004
    %v4587 = vpack.c.b16 %v4007, %v4006
    %v4588 = vpack.c.b16 %v4009, %v4008
    %v4589 = vpack.c.b16 %v4011, %v4010
    %v4590 = vpack.c.b16 %v4013, %v4012
    %v4591 = vpack.c.b16 %v4015, %v4014
    %5168 = vmatprep.subr.bf16.mxu0 0
    %5169 = vmatpush1.bf16.msra.mxu0 %v4016
    %5170 = vmatprep.subr.bf16.mxu0 0
    %5171 = vmatpush1.bf16.msra.mxu0 %v4017
    %5172 = vmatprep.subr.bf16.mxu0 0
    %5173 = vmatpush1.bf16.msra.mxu0 %v4018
    %5174 = vmatprep.subr.bf16.mxu0 0
    %5175 = vmatpush1.bf16.msra.mxu0 %v4019
    %5176 = vmatprep.subr.bf16.mxu0 0
    %5177 = vmatpush1.bf16.msra.mxu0 %v4020
    %5178 = vmatprep.subr.bf16.mxu0 0
    %5179 = vmatpush1.bf16.msra.mxu0 %v4021
    %5180 = vmatprep.subr.bf16.mxu0 0
    %5181 = vmatpush1.bf16.msra.mxu0 %v4022
    %5182 = vmatprep.subr.bf16.mxu0 0
    %5183 = vmatpush1.bf16.msra.mxu0 %v4023
    %5184 = vmatprep.subr.bf16.mxu0 0
    %5185 = vmatpush1.bf16.msra.mxu0 %v4024
    %5186 = vmatprep.subr.bf16.mxu0 0
    %5187 = vmatpush1.bf16.msra.mxu0 %v4025
    %5188 = vmatprep.subr.bf16.mxu0 0
    %5189 = vmatpush1.bf16.msra.mxu0 %v4026
    %5190 = vmatprep.subr.bf16.mxu0 0
    %5191 = vmatpush1.bf16.msra.mxu0 %v4027
    %5192 = vmatprep.subr.bf16.mxu0 0
    %5193 = vmatpush1.bf16.msra.mxu0 %v4028
    %5194 = vmatprep.subr.bf16.mxu0 0
    %5195 = vmatpush1.bf16.msra.mxu0 %v4029
    %5196 = vmatprep.subr.bf16.mxu0 0
    %5197 = vmatpush1.bf16.msra.mxu0 %v4030
    %5198 = vmatprep.subr.bf16.mxu0 0
    %5199 = vmatpush1.bf16.msra.mxu0 %v4031
    %5200 = vmatprep.mubr.bf16.mxu0 %v1236
    %5201 = vmatmul.mubr.bf16.gmra.mrb[0].mxu0 %v1222
    %v5202 = vpop.f32.mrb[0].mxu0
    %v5203 = vadd.f32 %v1188, %v5202
    %v5204 = vpop.f32.mrb[0].mxu0
    %v5205 = vpop.f32.mrb[0].mxu0
    %v5206 = vpop.f32.mrb[0].mxu0
    %5207 = vdwg.mxu0
    %5208 = vmatprep.subr.bf16.mxu0 0
    %5209 = vmatpush1.bf16.msra.mxu0 %v4032
    %5210 = vmatprep.subr.bf16.mxu0 0
    %5211 = vmatpush1.bf16.msra.mxu0 %v4033
    %5212 = vmatprep.subr.bf16.mxu0 0
    %5213 = vmatpush1.bf16.msra.mxu0 %v4034
    %5214 = vmatprep.subr.bf16.mxu0 0
    %5215 = vmatpush1.bf16.msra.mxu0 %v4035
    %5216 = vmatprep.subr.bf16.mxu0 0
    %5217 = vmatpush1.bf16.msra.mxu0 %v4036
    %5218 = vmatprep.subr.bf16.mxu0 0
    %5219 = vmatpush1.bf16.msra.mxu0 %v4037
    %5220 = vmatprep.subr.bf16.mxu0 0
    %5221 = vmatpush1.bf16.msra.mxu0 %v4038
    %5222 = vmatprep.subr.bf16.mxu0 0
    %5223 = vmatpush1.bf16.msra.mxu0 %v4039
    %5224 = vmatprep.subr.bf16.mxu0 0
    %5225 = vmatpush1.bf16.msra.mxu0 %v4040
    %5226 = vmatprep.subr.bf16.mxu0 0
    %5227 = vmatpush1.bf16.msra.mxu0 %v4041
    %5228 = vmatprep.subr.bf16.mxu0 0
    %5229 = vmatpush1.bf16.msra.mxu0 %v4042
    %5230 = vmatprep.subr.bf16.mxu0 0
    %5231 = vmatpush1.bf16.msra.mxu0 %v4043
    %5232 = vmatprep.subr.bf16.mxu0 0
    %5233 = vmatpush1.bf16.msra.mxu0 %v4044
    %5234 = vmatprep.subr.bf16.mxu0 0
    %5235 = vmatpush1.bf16.msra.mxu0 %v4045
    %5236 = vmatprep.subr.bf16.mxu0 0
    %5237 = vmatpush1.bf16.msra.mxu0 %v4046
    %5238 = vmatprep.subr.bf16.mxu0 0
    %5239 = vmatpush1.bf16.msra.mxu0 %v4047
    %5240 = vmatprep.mubr.bf16.mxu0 %v1246
    %5241 = vmatmul.mubr.bf16.gmra.mrb[0].mxu0 %v1244
    %v5242 = vpop.f32.mrb[0].mxu0
    %v5243 = vadd.f32 %v5203, %v5242
    %v5244 = vpop.f32.mrb[0].mxu0
    %v5245 = vpop.f32.mrb[0].mxu0
    %v5246 = vpop.f32.mrb[0].mxu0
    %5247 = vdwg.mxu0
    %5248 = vmatprep.subr.bf16.mxu0 0
    %5249 = vmatpush1.bf16.msra.mxu0 %v4048
    %5250 = vmatprep.subr.bf16.mxu0 0
    %5251 = vmatpush1.bf16.msra.mxu0 %v4049
    %5252 = vmatprep.subr.bf16.mxu0 0
    %5253 = vmatpush1.bf16.msra.mxu0 %v4050
    %5254 = vmatprep.subr.bf16.mxu0 0
    %5255 = vmatpush1.bf16.msra.mxu0 %v4051
    %5256 = vmatprep.subr.bf16.mxu0 0
    %5257 = vmatpush1.bf16.msra.mxu0 %v4052
    %5258 = vmatprep.subr.bf16.mxu0 0
    %5259 = vmatpush1.bf16.msra.mxu0 %v4053
    %5260 = vmatprep.subr.bf16.mxu0 0
    %5261 = vmatpush1.bf16.msra.mxu0 %v4054
    %5262 = vmatprep.subr.bf16.mxu0 0
    %5263 = vmatpush1.bf16.msra.mxu0 %v4055
    %5264 = vmatprep.subr.bf16.mxu0 0
    %5265 = vmatpush1.bf16.msra.mxu0 %v4056
    %5266 = vmatprep.subr.bf16.mxu0 0
    %5267 = vmatpush1.bf16.msra.mxu0 %v4057
    %5268 = vmatprep.subr.bf16.mxu0 0
    %5269 = vmatpush1.bf16.msra.mxu0 %v4058
    %5270 = vmatprep.subr.bf16.mxu0 0
    %5271 = vmatpush1.bf16.msra.mxu0 %v4059
    %5272 = vmatprep.subr.bf16.mxu0 0
    %5273 = vmatpush1.bf16.msra.mxu0 %v4060
    %5274 = vmatprep.subr.bf16.mxu0 0
    %5275 = vmatpush1.bf16.msra.mxu0 %v4061
    %5276 = vmatprep.subr.bf16.mxu0 0
    %5277 = vmatpush1.bf16.msra.mxu0 %v4062
    %5278 = vmatprep.subr.bf16.mxu0 0
    %5279 = vmatpush1.bf16.msra.mxu0 %v4063
    %5280 = vmatprep.mubr.bf16.mxu0 %v1243
    %5281 = vmatmul.mubr.bf16.gmra.mrb[0].mxu0 %v1229
    %v5282 = vpop.f32.mrb[0].mxu0
    %v5283 = vadd.f32 %v5243, %v5282
    %v5284 = vpop.f32.mrb[0].mxu0
    %v5285 = vpop.f32.mrb[0].mxu0
    %v5286 = vpop.f32.mrb[0].mxu0
    %5287 = vdwg.mxu0
    %5288 = vmatprep.subr.bf16.mxu0 0
    %5289 = vmatpush1.bf16.msra.mxu0 %v4064
    %5290 = vmatprep.subr.bf16.mxu0 0
    %5291 = vmatpush1.bf16.msra.mxu0 %v4065
    %5292 = vmatprep.subr.bf16.mxu0 0
    %5293 = vmatpush1.bf16.msra.mxu0 %v4066
    %5294 = vmatprep.subr.bf16.mxu0 0
    %5295 = vmatpush1.bf16.msra.mxu0 %v4067
    %5296 = vmatprep.subr.bf16.mxu0 0
    %5297 = vmatpush1.bf16.msra.mxu0 %v4068
    %5298 = vmatprep.subr.bf16.mxu0 0
    %5299 = vmatpush1.bf16.msra.mxu0 %v4069
    %5300 = vmatprep.subr.bf16.mxu0 0
    %5301 = vmatpush1.bf16.msra.mxu0 %v4070
    %5302 = vmatprep.subr.bf16.mxu0 0
    %5303 = vmatpush1.bf16.msra.mxu0 %v4071
    %5304 = vmatprep.subr.bf16.mxu0 0
    %5305 = vmatpush1.bf16.msra.mxu0 %v4072
    %5306 = vmatprep.subr.bf16.mxu0 0
    %5307 = vmatpush1.bf16.msra.mxu0 %v4073
    %5308 = vmatprep.subr.bf16.mxu0 0
    %5309 = vmatpush1.bf16.msra.mxu0 %v4074
    %5310 = vmatprep.subr.bf16.mxu0 0
    %5311 = vmatpush1.bf16.msra.mxu0 %v4075
    %5312 = vmatprep.subr.bf16.mxu0 0
    %5313 = vmatpush1.bf16.msra.mxu0 %v4076
    %5314 = vmatprep.subr.bf16.mxu0 0
    %5315 = vmatpush1.bf16.msra.mxu0 %v4077
    %5316 = vmatprep.subr.bf16.mxu0 0
    %5317 = vmatpush1.bf16.msra.mxu0 %v4078
    %5318 = vmatprep.subr.bf16.mxu0 0
    %5319 = vmatpush1.bf16.msra.mxu0 %v4079
    %5320 = vmatprep.mubr.bf16.mxu0 %v1247
    %5321 = vmatmul.mubr.bf16.gmra.mrb[0].mxu0 %v1245
    %v5322 = vpop.f32.mrb[0].mxu0
    %v5323 = vadd.f32 %v5283, %v5322
    %v5324 = vpop.f32.mrb[0].mxu0
    %v5325 = vpop.f32.mrb[0].mxu0
    %v5326 = vpop.f32.mrb[0].mxu0
    %5327 = vdwg.mxu0
    %5328 = vmatprep.subr.bf16.mxu0 0
    %5329 = vmatpush1.bf16.msra.mxu0 %v4080
    %5330 = vmatprep.subr.bf16.mxu0 0
    %5331 = vmatpush1.bf16.msra.mxu0 %v4081
    %5332 = vmatprep.subr.bf16.mxu0 0
    %5333 = vmatpush1.bf16.msra.mxu0 %v4082
    %5334 = vmatprep.subr.bf16.mxu0 0
    %5335 = vmatpush1.bf16.msra.mxu0 %v4083
    %5336 = vmatprep.subr.bf16.mxu0 0
    %5337 = vmatpush1.bf16.msra.mxu0 %v4084
    %5338 = vmatprep.subr.bf16.mxu0 0
    %5339 = vmatpush1.bf16.msra.mxu0 %v4085
    %5340 = vmatprep.subr.bf16.mxu0 0
    %5341 = vmatpush1.bf16.msra.mxu0 %v4086
    %5342 = vmatprep.subr.bf16.mxu0 0
    %5343 = vmatpush1.bf16.msra.mxu0 %v4087
    %5344 = vmatprep.subr.bf16.mxu0 0
    %5345 = vmatpush1.bf16.msra.mxu0 %v4088
    %5346 = vmatprep.subr.bf16.mxu0 0
    %5347 = vmatpush1.bf16.msra.mxu0 %v4089
    %5348 = vmatprep.subr.bf16.mxu0 0
    %5349 = vmatpush1.bf16.msra.mxu0 %v4090
    %5350 = vmatprep.subr.bf16.mxu0 0
    %5351 = vmatpush1.bf16.msra.mxu0 %v4091
    %5352 = vmatprep.subr.bf16.mxu0 0
    %5353 = vmatpush1.bf16.msra.mxu0 %v4092
    %5354 = vmatprep.subr.bf16.mxu0 0
    %5355 = vmatpush1.bf16.msra.mxu0 %v4093
    %5356 = vmatprep.subr.bf16.mxu0 0
    %5357 = vmatpush1.bf16.msra.mxu0 %v4094
    %5358 = vmatprep.subr.bf16.mxu0 0
    %5359 = vmatpush1.bf16.msra.mxu0 %v4095
    %5360 = vmatprep.mubr.bf16.mxu0 %v1285
    %5361 = vmatmul.mubr.bf16.gmra.mrb[0].mxu0 %v1271
    %v5362 = vpop.f32.mrb[0].mxu0
    %v5363 = vadd.f32 %v5323, %v5362
    %v5364 = vpop.f32.mrb[0].mxu0
    %v5365 = vpop.f32.mrb[0].mxu0
    %v5366 = vpop.f32.mrb[0].mxu0
    %5367 = vdwg.mxu0
    %5368 = vmatprep.subr.bf16.mxu0 0
    %5369 = vmatpush1.bf16.msra.mxu0 %v4096
    %5370 = vmatprep.subr.bf16.mxu0 0
    %5371 = vmatpush1.bf16.msra.mxu0 %v4097
    %5372 = vmatprep.subr.bf16.mxu0 0
    %5373 = vmatpush1.bf16.msra.mxu0 %v4098
    %5374 = vmatprep.subr.bf16.mxu0 0
    %5375 = vmatpush1.bf16.msra.mxu0 %v4099
    %5376 = vmatprep.subr.bf16.mxu0 0
    %5377 = vmatpush1.bf16.msra.mxu0 %v4100
    %5378 = vmatprep.subr.bf16.mxu0 0
    %5379 = vmatpush1.bf16.msra.mxu0 %v4101
    %5380 = vmatprep.subr.bf16.mxu0 0
    %5381 = vmatpush1.bf16.msra.mxu0 %v4102
    %5382 = vmatprep.subr.bf16.mxu0 0
    %5383 = vmatpush1.bf16.msra.mxu0 %v4103
    %5384 = vmatprep.subr.bf16.mxu0 0
    %5385 = vmatpush1.bf16.msra.mxu0 %v4104
    %5386 = vmatprep.subr.bf16.mxu0 0
    %5387 = vmatpush1.bf16.msra.mxu0 %v4105
    %5388 = vmatprep.subr.bf16.mxu0 0
    %5389 = vmatpush1.bf16.msra.mxu0 %v4106
    %5390 = vmatprep.subr.bf16.mxu0 0
    %5391 = vmatpush1.bf16.msra.mxu0 %v4107
    %5392 = vmatprep.subr.bf16.mxu0 0
    %5393 = vmatpush1.bf16.msra.mxu0 %v4108
    %5394 = vmatprep.subr.bf16.mxu0 0
    %5395 = vmatpush1.bf16.msra.mxu0 %v4109
    %5396 = vmatprep.subr.bf16.mxu0 0
    %5397 = vmatpush1.bf16.msra.mxu0 %v4110
    %5398 = vmatprep.subr.bf16.mxu0 0
    %5399 = vmatpush1.bf16.msra.mxu0 %v4111
    %5400 = vmatprep.mubr.bf16.mxu0 %v1295
    %5401 = vmatmul.mubr.bf16.gmra.mrb[0].mxu0 %v1293
    %v5402 = vpop.f32.mrb[0].mxu0
    %v5403 = vadd.f32 %v5363, %v5402
    %v5404 = vpop.f32.mrb[0].mxu0
    %v5405 = vpop.f32.mrb[0].mxu0
    %v5406 = vpop.f32.mrb[0].mxu0
    %5407 = vdwg.mxu0
    %5408 = vmatprep.subr.bf16.mxu0 0
    %5409 = vmatpush1.bf16.msra.mxu0 %v4112
    %5410 = vmatprep.subr.bf16.mxu0 0
    %5411 = vmatpush1.bf16.msra.mxu0 %v4113
    %5412 = vmatprep.subr.bf16.mxu0 0
    %5413 = vmatpush1.bf16.msra.mxu0 %v4114
    %5414 = vmatprep.subr.bf16.mxu0 0
    %5415 = vmatpush1.bf16.msra.mxu0 %v4115
    %5416 = vmatprep.subr.bf16.mxu0 0
    %5417 = vmatpush1.bf16.msra.mxu0 %v4116
    %5418 = vmatprep.subr.bf16.mxu0 0
    %5419 = vmatpush1.bf16.msra.mxu0 %v4117
    %5420 = vmatprep.subr.bf16.mxu0 0
    %5421 = vmatpush1.bf16.msra.mxu0 %v4118
    %5422 = vmatprep.subr.bf16.mxu0 0
    %5423 = vmatpush1.bf16.msra.mxu0 %v4119
    %5424 = vmatprep.subr.bf16.mxu0 0
    %5425 = vmatpush1.bf16.msra.mxu0 %v4120
    %5426 = vmatprep.subr.bf16.mxu0 0
    %5427 = vmatpush1.bf16.msra.mxu0 %v4121
    %5428 = vmatprep.subr.bf16.mxu0 0
    %5429 = vmatpush1.bf16.msra.mxu0 %v4122
    %5430 = vmatprep.subr.bf16.mxu0 0
    %5431 = vmatpush1.bf16.msra.mxu0 %v4123
    %5432 = vmatprep.subr.bf16.mxu0 0
    %5433 = vmatpush1.bf16.msra.mxu0 %v4124
    %5434 = vmatprep.subr.bf16.mxu0 0
    %5435 = vmatpush1.bf16.msra.mxu0 %v4125
    %5436 = vmatprep.subr.bf16.mxu0 0
    %5437 = vmatpush1.bf16.msra.mxu0 %v4126
    %5438 = vmatprep.subr.bf16.mxu0 0
    %5439 = vmatpush1.bf16.msra.mxu0 %v4127
    %5440 = vmatprep.mubr.bf16.mxu0 %v1292
    %5441 = vmatmul.mubr.bf16.gmra.mrb[0].mxu0 %v1278
    %v5442 = vpop.f32.mrb[0].mxu0
    %v5443 = vadd.f32 %v5403, %v5442
    %v5444 = vpop.f32.mrb[0].mxu0
    %v5445 = vpop.f32.mrb[0].mxu0
    %v5446 = vpop.f32.mrb[0].mxu0
    %5447 = vdwg.mxu0
    %5448 = vmatprep.subr.bf16.mxu0 0
    %5449 = vmatpush1.bf16.msra.mxu0 %v4128
    %5450 = vmatprep.subr.bf16.mxu0 0
    %5451 = vmatpush1.bf16.msra.mxu0 %v4129
    %5452 = vmatprep.subr.bf16.mxu0 0
    %5453 = vmatpush1.bf16.msra.mxu0 %v4130
    %5454 = vmatprep.subr.bf16.mxu0 0
    %5455 = vmatpush1.bf16.msra.mxu0 %v4131
    %5456 = vmatprep.subr.bf16.mxu0 0
    %5457 = vmatpush1.bf16.msra.mxu0 %v4132
    %5458 = vmatprep.subr.bf16.mxu0 0
    %5459 = vmatpush1.bf16.msra.mxu0 %v4133
    %5460 = vmatprep.subr.bf16.mxu0 0
    %5461 = vmatpush1.bf16.msra.mxu0 %v4134
    %5462 = vmatprep.subr.bf16.mxu0 0
    %5463 = vmatpush1.bf16.msra.mxu0 %v4135
    %5464 = vmatprep.subr.bf16.mxu0 0
    %5465 = vmatpush1.bf16.msra.mxu0 %v4136
    %5466 = vmatprep.subr.bf16.mxu0 0
    %5467 = vmatpush1.bf16.msra.mxu0 %v4137
    %5468 = vmatprep.subr.bf16.mxu0 0
    %5469 = vmatpush1.bf16.msra.mxu0 %v4138
    %5470 = vmatprep.subr.bf16.mxu0 0
    %5471 = vmatpush1.bf16.msra.mxu0 %v4139
    %5472 = vmatprep.subr.bf16.mxu0 0
    %5473 = vmatpush1.bf16.msra.mxu0 %v4140
    %5474 = vmatprep.subr.bf16.mxu0 0
    %5475 = vmatpush1.bf16.msra.mxu0 %v4141
    %5476 = vmatprep.subr.bf16.mxu0 0
    %5477 = vmatpush1.bf16.msra.mxu0 %v4142
    %5478 = vmatprep.subr.bf16.mxu0 0
    %5479 = vmatpush1.bf16.msra.mxu0 %v4143
    %5480 = vmatprep.mubr.bf16.mxu0 %v1296
    %5481 = vmatmul.mubr.bf16.gmra.mrb[0].mxu0 %v1294
    %v5482 = vpop.f32.mrb[0].mxu0
    %v5483 = vadd.f32 %v5443, %v5482
    %v5484 = vpop.f32.mrb[0].mxu0
    %v5485 = vpop.f32.mrb[0].mxu0
    %v5486 = vpop.f32.mrb[0].mxu0
    %5487 = vdwg.mxu0
    %5488 = vmatprep.subr.bf16.mxu0 0
    %5489 = vmatpush1.bf16.msra.mxu0 %v4144
    %5490 = vmatprep.subr.bf16.mxu0 0
    %5491 = vmatpush1.bf16.msra.mxu0 %v4145
    %5492 = vmatprep.subr.bf16.mxu0 0
    %5493 = vmatpush1.bf16.msra.mxu0 %v4146
    %5494 = vmatprep.subr.bf16.mxu0 0
    %5495 = vmatpush1.bf16.msra.mxu0 %v4147
    %5496 = vmatprep.subr.bf16.mxu0 0
    %5497 = vmatpush1.bf16.msra.mxu0 %v4148
    %5498 = vmatprep.subr.bf16.mxu0 0
    %5499 = vmatpush1.bf16.msra.mxu0 %v4149
    %5500 = vmatprep.subr.bf16.mxu0 0
    %5501 = vmatpush1.bf16.msra.mxu0 %v4150
    %5502 = vmatprep.subr.bf16.mxu0 0
    %5503 = vmatpush1.bf16.msra.mxu0 %v4151
    %5504 = vmatprep.subr.bf16.mxu0 0
    %5505 = vmatpush1.bf16.msra.mxu0 %v4152
    %5506 = vmatprep.subr.bf16.mxu0 0
    %5507 = vmatpush1.bf16.msra.mxu0 %v4153
    %5508 = vmatprep.subr.bf16.mxu0 0
    %5509 = vmatpush1.bf16.msra.mxu0 %v4154
    %5510 = vmatprep.subr.bf16.mxu0 0
    %5511 = vmatpush1.bf16.msra.mxu0 %v4155
    %5512 = vmatprep.subr.bf16.mxu0 0
    %5513 = vmatpush1.bf16.msra.mxu0 %v4156
    %5514 = vmatprep.subr.bf16.mxu0 0
    %5515 = vmatpush1.bf16.msra.mxu0 %v4157
    %5516 = vmatprep.subr.bf16.mxu0 0
    %5517 = vmatpush1.bf16.msra.mxu0 %v4158
    %5518 = vmatprep.subr.bf16.mxu0 0
    %5519 = vmatpush1.bf16.msra.mxu0 %v4159
    %5520 = vmatprep.mubr.bf16.mxu0 %v1334
    %5521 = vmatmul.mubr.bf16.gmra.mrb[0].mxu0 %v1320
    %v5522 = vpop.f32.mrb[0].mxu0
    %v5523 = vadd.f32 %v5483, %v5522
    %v5524 = vpop.f32.mrb[0].mxu0
    %v5525 = vpop.f32.mrb[0].mxu0
    %v5526 = vpop.f32.mrb[0].mxu0
    %5527 = vdwg.mxu0
    %5528 = vmatprep.subr.bf16.mxu0 0
    %5529 = vmatpush1.bf16.msra.mxu0 %v4160
    %5530 = vmatprep.subr.bf16.mxu0 0
    %5531 = vmatpush1.bf16.msra.mxu0 %v4161
    %5532 = vmatprep.subr.bf16.mxu0 0
    %5533 = vmatpush1.bf16.msra.mxu0 %v4162
    %5534 = vmatprep.subr.bf16.mxu0 0
    %5535 = vmatpush1.bf16.msra.mxu0 %v4163
    %5536 = vmatprep.subr.bf16.mxu0 0
    %5537 = vmatpush1.bf16.msra.mxu0 %v4164
    %5538 = vmatprep.subr.bf16.mxu0 0
    %5539 = vmatpush1.bf16.msra.mxu0 %v4165
    %5540 = vmatprep.subr.bf16.mxu0 0
    %5541 = vmatpush1.bf16.msra.mxu0 %v4166
    %5542 = vmatprep.subr.bf16.mxu0 0
    %5543 = vmatpush1.bf16.msra.mxu0 %v4167
    %5544 = vmatprep.subr.bf16.mxu0 0
    %5545 = vmatpush1.bf16.msra.mxu0 %v4168
    %5546 = vmatprep.subr.bf16.mxu0 0
    %5547 = vmatpush1.bf16.msra.mxu0 %v4169
    %5548 = vmatprep.subr.bf16.mxu0 0
    %5549 = vmatpush1.bf16.msra.mxu0 %v4170
    %5550 = vmatprep.subr.bf16.mxu0 0
    %5551 = vmatpush1.bf16.msra.mxu0 %v4171
    %5552 = vmatprep.subr.bf16.mxu0 0
    %5553 = vmatpush1.bf16.msra.mxu0 %v4172
    %5554 = vmatprep.subr.bf16.mxu0 0
    %5555 = vmatpush1.bf16.msra.mxu0 %v4173
    %5556 = vmatprep.subr.bf16.mxu0 0
    %5557 = vmatpush1.bf16.msra.mxu0 %v4174
    %5558 = vmatprep.subr.bf16.mxu0 0
    %5559 = vmatpush1.bf16.msra.mxu0 %v4175
    %5560 = vmatprep.mubr.bf16.mxu0 %v1344
    %5561 = vmatmul.mubr.bf16.gmra.mrb[0].mxu0 %v1342
    %v5562 = vpop.f32.mrb[0].mxu0
    %v5563 = vadd.f32 %v5523, %v5562
    %v5564 = vpop.f32.mrb[0].mxu0
    %v5565 = vpop.f32.mrb[0].mxu0
    %v5566 = vpop.f32.mrb[0].mxu0
    %5567 = vdwg.mxu0
    %5568 = vmatprep.subr.bf16.mxu0 0
    %5569 = vmatpush1.bf16.msra.mxu0 %v4176
    %5570 = vmatprep.subr.bf16.mxu0 0
    %5571 = vmatpush1.bf16.msra.mxu0 %v4177
    %5572 = vmatprep.subr.bf16.mxu0 0
    %5573 = vmatpush1.bf16.msra.mxu0 %v4178
    %5574 = vmatprep.subr.bf16.mxu0 0
    %5575 = vmatpush1.bf16.msra.mxu0 %v4179
    %5576 = vmatprep.subr.bf16.mxu0 0
    %5577 = vmatpush1.bf16.msra.mxu0 %v4180
    %5578 = vmatprep.subr.bf16.mxu0 0
    %5579 = vmatpush1.bf16.msra.mxu0 %v4181
    %5580 = vmatprep.subr.bf16.mxu0 0
    %5581 = vmatpush1.bf16.msra.mxu0 %v4182
    %5582 = vmatprep.subr.bf16.mxu0 0
    %5583 = vmatpush1.bf16.msra.mxu0 %v4183
    %5584 = vmatprep.subr.bf16.mxu0 0
    %5585 = vmatpush1.bf16.msra.mxu0 %v4184
    %5586 = vmatprep.subr.bf16.mxu0 0
    %5587 = vmatpush1.bf16.msra.mxu0 %v4185
    %5588 = vmatprep.subr.bf16.mxu0 0
    %5589 = vmatpush1.bf16.msra.mxu0 %v4186
    %5590 = vmatprep.subr.bf16.mxu0 0
    %5591 = vmatpush1.bf16.msra.mxu0 %v4187
    %5592 = vmatprep.subr.bf16.mxu0 0
    %5593 = vmatpush1.bf16.msra.mxu0 %v4188
    %5594 = vmatprep.subr.bf16.mxu0 0
    %5595 = vmatpush1.bf16.msra.mxu0 %v4189
    %5596 = vmatprep.subr.bf16.mxu0 0
    %5597 = vmatpush1.bf16.msra.mxu0 %v4190
    %5598 = vmatprep.subr.bf16.mxu0 0
    %5599 = vmatpush1.bf16.msra.mxu0 %v4191
    %5600 = vmatprep.mubr.bf16.mxu0 %v1341
    %5601 = vmatmul.mubr.bf16.gmra.mrb[0].mxu0 %v1327
    %v5602 = vpop.f32.mrb[0].mxu0
    %v5603 = vadd.f32 %v5563, %v5602
    %v5604 = vpop.f32.mrb[0].mxu0
    %v5605 = vpop.f32.mrb[0].mxu0
    %v5606 = vpop.f32.mrb[0].mxu0
    %5607 = vdwg.mxu0
    %5608 = vmatprep.subr.bf16.mxu0 0
    %5609 = vmatpush1.bf16.msra.mxu0 %v4192
    %5610 = vmatprep.subr.bf16.mxu0 0
    %5611 = vmatpush1.bf16.msra.mxu0 %v4193
    %5612 = vmatprep.subr.bf16.mxu0 0
    %5613 = vmatpush1.bf16.msra.mxu0 %v4194
    %5614 = vmatprep.subr.bf16.mxu0 0
    %5615 = vmatpush1.bf16.msra.mxu0 %v4195
    %5616 = vmatprep.subr.bf16.mxu0 0
    %5617 = vmatpush1.bf16.msra.mxu0 %v4196
    %5618 = vmatprep.subr.bf16.mxu0 0
    %5619 = vmatpush1.bf16.msra.mxu0 %v4197
    %5620 = vmatprep.subr.bf16.mxu0 0
    %5621 = vmatpush1.bf16.msra.mxu0 %v4198
    %5622 = vmatprep.subr.bf16.mxu0 0
    %5623 = vmatpush1.bf16.msra.mxu0 %v4199
    %5624 = vmatprep.subr.bf16.mxu0 0
    %5625 = vmatpush1.bf16.msra.mxu0 %v4200
    %5626 = vmatprep.subr.bf16.mxu0 0
    %5627 = vmatpush1.bf16.msra.mxu0 %v4201
    %5628 = vmatprep.subr.bf16.mxu0 0
    %5629 = vmatpush1.bf16.msra.mxu0 %v4202
    %5630 = vmatprep.subr.bf16.mxu0 0
    %5631 = vmatpush1.bf16.msra.mxu0 %v4203
    %5632 = vmatprep.subr.bf16.mxu0 0
    %5633 = vmatpush1.bf16.msra.mxu0 %v4204
    %5634 = vmatprep.subr.bf16.mxu0 0
    %5635 = vmatpush1.bf16.msra.mxu0 %v4205
    %5636 = vmatprep.subr.bf16.mxu0 0
    %5637 = vmatpush1.bf16.msra.mxu0 %v4206
    %5638 = vmatprep.subr.bf16.mxu0 0
    %5639 = vmatpush1.bf16.msra.mxu0 %v4207
    %5640 = vmatprep.mubr.bf16.mxu0 %v1345
    %5641 = vmatmul.mubr.bf16.gmra.mrb[0].mxu0 %v1343
    %v5642 = vpop.f32.mrb[0].mxu0
    %v5643 = vadd.f32 %v5603, %v5642
    %v5644 = vpop.f32.mrb[0].mxu0
    %v5645 = vpop.f32.mrb[0].mxu0
    %v5646 = vpop.f32.mrb[0].mxu0
    %5647 = vdwg.mxu0
    %5648 = vmatprep.subr.bf16.mxu0 0
    %5649 = vmatpush1.bf16.msra.mxu0 %v4208
    %5650 = vmatprep.subr.bf16.mxu0 0
    %5651 = vmatpush1.bf16.msra.mxu0 %v4209
    %5652 = vmatprep.subr.bf16.mxu0 0
    %5653 = vmatpush1.bf16.msra.mxu0 %v4210
    %5654 = vmatprep.subr.bf16.mxu0 0
    %5655 = vmatpush1.bf16.msra.mxu0 %v4211
    %5656 = vmatprep.subr.bf16.mxu0 0
    %5657 = vmatpush1.bf16.msra.mxu0 %v4212
    %5658 = vmatprep.subr.bf16.mxu0 0
    %5659 = vmatpush1.bf16.msra.mxu0 %v4213
    %5660 = vmatprep.subr.bf16.mxu0 0
    %5661 = vmatpush1.bf16.msra.mxu0 %v4214
    %5662 = vmatprep.subr.bf16.mxu0 0
    %5663 = vmatpush1.bf16.msra.mxu0 %v4215
    %5664 = vmatprep.subr.bf16.mxu0 0
    %5665 = vmatpush1.bf16.msra.mxu0 %v4216
    %5666 = vmatprep.subr.bf16.mxu0 0
    %5667 = vmatpush1.bf16.msra.mxu0 %v4217
    %5668 = vmatprep.subr.bf16.mxu0 0
    %5669 = vmatpush1.bf16.msra.mxu0 %v4218
    %5670 = vmatprep.subr.bf16.mxu0 0
    %5671 = vmatpush1.bf16.msra.mxu0 %v4219
    %5672 = vmatprep.subr.bf16.mxu0 0
    %5673 = vmatpush1.bf16.msra.mxu0 %v4220
    %5674 = vmatprep.subr.bf16.mxu0 0
    %5675 = vmatpush1.bf16.msra.mxu0 %v4221
    %5676 = vmatprep.subr.bf16.mxu0 0
    %5677 = vmatpush1.bf16.msra.mxu0 %v4222
    %5678 = vmatprep.subr.bf16.mxu0 0
    %5679 = vmatpush1.bf16.msra.mxu0 %v4223
    %5680 = vmatprep.mubr.bf16.mxu0 %v1383
    %5681 = vmatmul.mubr.bf16.gmra.mrb[0].mxu0 %v1369
    %v5682 = vpop.f32.mrb[0].mxu0
    %v5683 = vadd.f32 %v5643, %v5682
    %v5684 = vpop.f32.mrb[0].mxu0
    %v5685 = vpop.f32.mrb[0].mxu0
    %v5686 = vpop.f32.mrb[0].mxu0
    %5687 = vdwg.mxu0
    %5688 = vmatprep.subr.bf16.mxu0 0
    %5689 = vmatpush1.bf16.msra.mxu0 %v4224
    %5690 = vmatprep.subr.bf16.mxu0 0
    %5691 = vmatpush1.bf16.msra.mxu0 %v4225
    %5692 = vmatprep.subr.bf16.mxu0 0
    %5693 = vmatpush1.bf16.msra.mxu0 %v4226
    %5694 = vmatprep.subr.bf16.mxu0 0
    %5695 = vmatpush1.bf16.msra.mxu0 %v4227
    %5696 = vmatprep.subr.bf16.mxu0 0
    %5697 = vmatpush1.bf16.msra.mxu0 %v4228
    %5698 = vmatprep.subr.bf16.mxu0 0
    %5699 = vmatpush1.bf16.msra.mxu0 %v4229
    %5700 = vmatprep.subr.bf16.mxu0 0
    %5701 = vmatpush1.bf16.msra.mxu0 %v4230
    %5702 = vmatprep.subr.bf16.mxu0 0
    %5703 = vmatpush1.bf16.msra.mxu0 %v4231
    %5704 = vmatprep.subr.bf16.mxu0 0
    %5705 = vmatpush1.bf16.msra.mxu0 %v4232
    %5706 = vmatprep.subr.bf16.mxu0 0
    %5707 = vmatpush1.bf16.msra.mxu0 %v4233
    %5708 = vmatprep.subr.bf16.mxu0 0
    %5709 = vmatpush1.bf16.msra.mxu0 %v4234
    %5710 = vmatprep.subr.bf16.mxu0 0
    %5711 = vmatpush1.bf16.msra.mxu0 %v4235
    %5712 = vmatprep.subr.bf16.mxu0 0
    %5713 = vmatpush1.bf16.msra.mxu0 %v4236
    %5714 = vmatprep.subr.bf16.mxu0 0
    %5715 = vmatpush1.bf16.msra.mxu0 %v4237
    %5716 = vmatprep.subr.bf16.mxu0 0
    %5717 = vmatpush1.bf16.msra.mxu0 %v4238
    %5718 = vmatprep.subr.bf16.mxu0 0
    %5719 = vmatpush1.bf16.msra.mxu0 %v4239
    %5720 = vmatprep.mubr.bf16.mxu0 %v1393
    %5721 = vmatmul.mubr.bf16.gmra.mrb[0].mxu0 %v1391
    %v5722 = vpop.f32.mrb[0].mxu0
    %v5723 = vadd.f32 %v5683, %v5722
    %v5724 = vpop.f32.mrb[0].mxu0
    %v5725 = vpop.f32.mrb[0].mxu0
    %v5726 = vpop.f32.mrb[0].mxu0
    %5727 = vdwg.mxu0
    %5728 = vmatprep.subr.bf16.mxu0 0
    %5729 = vmatpush1.bf16.msra.mxu0 %v4240
    %5730 = vmatprep.subr.bf16.mxu0 0
    %5731 = vmatpush1.bf16.msra.mxu0 %v4241
    %5732 = vmatprep.subr.bf16.mxu0 0
    %5733 = vmatpush1.bf16.msra.mxu0 %v4242
    %5734 = vmatprep.subr.bf16.mxu0 0
    %5735 = vmatpush1.bf16.msra.mxu0 %v4243
    %5736 = vmatprep.subr.bf16.mxu0 0
    %5737 = vmatpush1.bf16.msra.mxu0 %v4244
    %5738 = vmatprep.subr.bf16.mxu0 0
    %5739 = vmatpush1.bf16.msra.mxu0 %v4245
    %5740 = vmatprep.subr.bf16.mxu0 0
    %5741 = vmatpush1.bf16.msra.mxu0 %v4246
    %5742 = vmatprep.subr.bf16.mxu0 0
    %5743 = vmatpush1.bf16.msra.mxu0 %v4247
    %5744 = vmatprep.subr.bf16.mxu0 0
    %5745 = vmatpush1.bf16.msra.mxu0 %v4248
    %5746 = vmatprep.subr.bf16.mxu0 0
    %5747 = vmatpush1.bf16.msra.mxu0 %v4249
    %5748 = vmatprep.subr.bf16.mxu0 0
    %5749 = vmatpush1.bf16.msra.mxu0 %v4250
    %5750 = vmatprep.subr.bf16.mxu0 0
    %5751 = vmatpush1.bf16.msra.mxu0 %v4251
    %5752 = vmatprep.subr.bf16.mxu0 0
    %5753 = vmatpush1.bf16.msra.mxu0 %v4252
    %5754 = vmatprep.subr.bf16.mxu0 0
    %5755 = vmatpush1.bf16.msra.mxu0 %v4253
    %5756 = vmatprep.subr.bf16.mxu0 0
    %5757 = vmatpush1.bf16.msra.mxu0 %v4254
    %5758 = vmatprep.subr.bf16.mxu0 0
    %5759 = vmatpush1.bf16.msra.mxu0 %v4255
    %5760 = vmatprep.mubr.bf16.mxu0 %v1390
    %5761 = vmatmul.mubr.bf16.gmra.mrb[0].mxu0 %v1376
    %v5762 = vpop.f32.mrb[0].mxu0
    %v5763 = vadd.f32 %v5723, %v5762
    %v5764 = vpop.f32.mrb[0].mxu0
    %v5765 = vpop.f32.mrb[0].mxu0
    %v5766 = vpop.f32.mrb[0].mxu0
    %5767 = vdwg.mxu0
    %5768 = vmatprep.subr.bf16.mxu0 0
    %5769 = vmatpush1.bf16.msra.mxu0 %v4256
    %5770 = vmatprep.subr.bf16.mxu0 0
    %5771 = vmatpush1.bf16.msra.mxu0 %v4257
    %5772 = vmatprep.subr.bf16.mxu0 0
    %5773 = vmatpush1.bf16.msra.mxu0 %v4258
    %5774 = vmatprep.subr.bf16.mxu0 0
    %5775 = vmatpush1.bf16.msra.mxu0 %v4259
    %5776 = vmatprep.subr.bf16.mxu0 0
    %5777 = vmatpush1.bf16.msra.mxu0 %v4260
    %5778 = vmatprep.subr.bf16.mxu0 0
    %5779 = vmatpush1.bf16.msra.mxu0 %v4261
    %5780 = vmatprep.subr.bf16.mxu0 0
    %5781 = vmatpush1.bf16.msra.mxu0 %v4262
    %5782 = vmatprep.subr.bf16.mxu0 0
    %5783 = vmatpush1.bf16.msra.mxu0 %v4263
    %5784 = vmatprep.subr.bf16.mxu0 0
    %5785 = vmatpush1.bf16.msra.mxu0 %v4264
    %5786 = vmatprep.subr.bf16.mxu0 0
    %5787 = vmatpush1.bf16.msra.mxu0 %v4265
    %5788 = vmatprep.subr.bf16.mxu0 0
    %5789 = vmatpush1.bf16.msra.mxu0 %v4266
    %5790 = vmatprep.subr.bf16.mxu0 0
    %5791 = vmatpush1.bf16.msra.mxu0 %v4267
    %5792 = vmatprep.subr.bf16.mxu0 0
    %5793 = vmatpush1.bf16.msra.mxu0 %v4268
    %5794 = vmatprep.subr.bf16.mxu0 0
    %5795 = vmatpush1.bf16.msra.mxu0 %v4269
    %5796 = vmatprep.subr.bf16.mxu0 0
    %5797 = vmatpush1.bf16.msra.mxu0 %v4270
    %5798 = vmatprep.subr.bf16.mxu0 0
    %5799 = vmatpush1.bf16.msra.mxu0 %v4271
    %5800 = vmatprep.mubr.bf16.mxu0 %v1394
    %5801 = vmatmul.mubr.bf16.gmra.mrb[0].mxu0 %v1392
    %v5802 = vpop.f32.mrb[0].mxu0
    %v5803 = vadd.f32 %v5763, %v5802
    %v5804 = vpop.f32.mrb[0].mxu0
    %v5805 = vpop.f32.mrb[0].mxu0
    %v5806 = vpop.f32.mrb[0].mxu0
    %5807 = vdwg.mxu0
    %5808 = vmatprep.subr.bf16.mxu0 0
    %5809 = vmatpush1.bf16.msra.mxu0 %v4272
    %5810 = vmatprep.subr.bf16.mxu0 0
    %5811 = vmatpush1.bf16.msra.mxu0 %v4273
    %5812 = vmatprep.subr.bf16.mxu0 0
    %5813 = vmatpush1.bf16.msra.mxu0 %v4274
    %5814 = vmatprep.subr.bf16.mxu0 0
    %5815 = vmatpush1.bf16.msra.mxu0 %v4275
    %5816 = vmatprep.subr.bf16.mxu0 0
    %5817 = vmatpush1.bf16.msra.mxu0 %v4276
    %5818 = vmatprep.subr.bf16.mxu0 0
    %5819 = vmatpush1.bf16.msra.mxu0 %v4277
    %5820 = vmatprep.subr.bf16.mxu0 0
    %5821 = vmatpush1.bf16.msra.mxu0 %v4278
    %5822 = vmatprep.subr.bf16.mxu0 0
    %5823 = vmatpush1.bf16.msra.mxu0 %v4279
    %5824 = vmatprep.subr.bf16.mxu0 0
    %5825 = vmatpush1.bf16.msra.mxu0 %v4280
    %5826 = vmatprep.subr.bf16.mxu0 0
    %5827 = vmatpush1.bf16.msra.mxu0 %v4281
    %5828 = vmatprep.subr.bf16.mxu0 0
    %5829 = vmatpush1.bf16.msra.mxu0 %v4282
    %5830 = vmatprep.subr.bf16.mxu0 0
    %5831 = vmatpush1.bf16.msra.mxu0 %v4283
    %5832 = vmatprep.subr.bf16.mxu0 0
    %5833 = vmatpush1.bf16.msra.mxu0 %v4284
    %5834 = vmatprep.subr.bf16.mxu0 0
    %5835 = vmatpush1.bf16.msra.mxu0 %v4285
    %5836 = vmatprep.subr.bf16.mxu0 0
    %5837 = vmatpush1.bf16.msra.mxu0 %v4286
    %5838 = vmatprep.subr.bf16.mxu0 0
    %5839 = vmatpush1.bf16.msra.mxu0 %v4287
    %5840 = vmatprep.mubr.bf16.mxu0 %v1432
    %5841 = vmatmul.mubr.bf16.gmra.mrb[0].mxu0 %v1418
    %v5842 = vpop.f32.mrb[0].mxu0
    %v5843 = vadd.f32 %v5803, %v5842
    %v5844 = vpop.f32.mrb[0].mxu0
    %v5845 = vpop.f32.mrb[0].mxu0
    %v5846 = vpop.f32.mrb[0].mxu0
    %5847 = vdwg.mxu0
    %5848 = vmatprep.subr.bf16.mxu0 0
    %5849 = vmatpush1.bf16.msra.mxu0 %v4288
    %5850 = vmatprep.subr.bf16.mxu0 0
    %5851 = vmatpush1.bf16.msra.mxu0 %v4289
    %5852 = vmatprep.subr.bf16.mxu0 0
    %5853 = vmatpush1.bf16.msra.mxu0 %v4290
    %5854 = vmatprep.subr.bf16.mxu0 0
    %5855 = vmatpush1.bf16.msra.mxu0 %v4291
    %5856 = vmatprep.subr.bf16.mxu0 0
    %5857 = vmatpush1.bf16.msra.mxu0 %v4292
    %5858 = vmatprep.subr.bf16.mxu0 0
    %5859 = vmatpush1.bf16.msra.mxu0 %v4293
    %5860 = vmatprep.subr.bf16.mxu0 0
    %5861 = vmatpush1.bf16.msra.mxu0 %v4294
    %5862 = vmatprep.subr.bf16.mxu0 0
    %5863 = vmatpush1.bf16.msra.mxu0 %v4295
    %5864 = vmatprep.subr.bf16.mxu0 0
    %5865 = vmatpush1.bf16.msra.mxu0 %v4296
    %5866 = vmatprep.subr.bf16.mxu0 0
    %5867 = vmatpush1.bf16.msra.mxu0 %v4297
    %5868 = vmatprep.subr.bf16.mxu0 0
    %5869 = vmatpush1.bf16.msra.mxu0 %v4298
    %5870 = vmatprep.subr.bf16.mxu0 0
    %5871 = vmatpush1.bf16.msra.mxu0 %v4299
    %5872 = vmatprep.subr.bf16.mxu0 0
    %5873 = vmatpush1.bf16.msra.mxu0 %v4300
    %5874 = vmatprep.subr.bf16.mxu0 0
    %5875 = vmatpush1.bf16.msra.mxu0 %v4301
    %5876 = vmatprep.subr.bf16.mxu0 0
    %5877 = vmatpush1.bf16.msra.mxu0 %v4302
    %5878 = vmatprep.subr.bf16.mxu0 0
    %5879 = vmatpush1.bf16.msra.mxu0 %v4303
    %5880 = vmatprep.mubr.bf16.mxu0 %v1442
    %5881 = vmatmul.mubr.bf16.gmra.mrb[0].mxu0 %v1440
    %v5882 = vpop.f32.mrb[0].mxu0
    %v5883 = vadd.f32 %v5843, %v5882
    %v5884 = vpop.f32.mrb[0].mxu0
    %v5885 = vpop.f32.mrb[0].mxu0
    %v5886 = vpop.f32.mrb[0].mxu0
    %5887 = vdwg.mxu0
    %5888 = vmatprep.subr.bf16.mxu0 0
    %5889 = vmatpush1.bf16.msra.mxu0 %v4304
    %5890 = vmatprep.subr.bf16.mxu0 0
    %5891 = vmatpush1.bf16.msra.mxu0 %v4305
    %5892 = vmatprep.subr.bf16.mxu0 0
    %5893 = vmatpush1.bf16.msra.mxu0 %v4306
    %5894 = vmatprep.subr.bf16.mxu0 0
    %5895 = vmatpush1.bf16.msra.mxu0 %v4307
    %5896 = vmatprep.subr.bf16.mxu0 0
    %5897 = vmatpush1.bf16.msra.mxu0 %v4308
    %5898 = vmatprep.subr.bf16.mxu0 0
    %5899 = vmatpush1.bf16.msra.mxu0 %v4309
    %5900 = vmatprep.subr.bf16.mxu0 0
    %5901 = vmatpush1.bf16.msra.mxu0 %v4310
    %5902 = vmatprep.subr.bf16.mxu0 0
    %5903 = vmatpush1.bf16.msra.mxu0 %v4311
    %5904 = vmatprep.subr.bf16.mxu0 0
    %5905 = vmatpush1.bf16.msra.mxu0 %v4312
    %5906 = vmatprep.subr.bf16.mxu0 0
    %5907 = vmatpush1.bf16.msra.mxu0 %v4313
    %5908 = vmatprep.subr.bf16.mxu0 0
    %5909 = vmatpush1.bf16.msra.mxu0 %v4314
    %5910 = vmatprep.subr.bf16.mxu0 0
    %5911 = vmatpush1.bf16.msra.mxu0 %v4315
    %5912 = vmatprep.subr.bf16.mxu0 0
    %5913 = vmatpush1.bf16.msra.mxu0 %v4316
    %5914 = vmatprep.subr.bf16.mxu0 0
    %5915 = vmatpush1.bf16.msra.mxu0 %v4317
    %5916 = vmatprep.subr.bf16.mxu0 0
    %5917 = vmatpush1.bf16.msra.mxu0 %v4318
    %5918 = vmatprep.subr.bf16.mxu0 0
    %5919 = vmatpush1.bf16.msra.mxu0 %v4319
    %5920 = vmatprep.mubr.bf16.mxu0 %v1439
    %5921 = vmatmul.mubr.bf16.gmra.mrb[0].mxu0 %v1425
    %v5922 = vpop.f32.mrb[0].mxu0
    %v5923 = vadd.f32 %v5883, %v5922
    %v5924 = vpop.f32.mrb[0].mxu0
    %v5925 = vpop.f32.mrb[0].mxu0
    %v5926 = vpop.f32.mrb[0].mxu0
    %5927 = vdwg.mxu0
    %5928 = vmatprep.subr.bf16.mxu0 0
    %5929 = vmatpush1.bf16.msra.mxu0 %v4320
    %5930 = vmatprep.subr.bf16.mxu0 0
    %5931 = vmatpush1.bf16.msra.mxu0 %v4321
    %5932 = vmatprep.subr.bf16.mxu0 0
    %5933 = vmatpush1.bf16.msra.mxu0 %v4322
    %5934 = vmatprep.subr.bf16.mxu0 0
    %5935 = vmatpush1.bf16.msra.mxu0 %v4323
    %5936 = vmatprep.subr.bf16.mxu0 0
    %5937 = vmatpush1.bf16.msra.mxu0 %v4324
    %5938 = vmatprep.subr.bf16.mxu0 0
    %5939 = vmatpush1.bf16.msra.mxu0 %v4325
    %5940 = vmatprep.subr.bf16.mxu0 0
    %5941 = vmatpush1.bf16.msra.mxu0 %v4326
    %5942 = vmatprep.subr.bf16.mxu0 0
    %5943 = vmatpush1.bf16.msra.mxu0 %v4327
    %5944 = vmatprep.subr.bf16.mxu0 0
    %5945 = vmatpush1.bf16.msra.mxu0 %v4328
    %5946 = vmatprep.subr.bf16.mxu0 0
    %5947 = vmatpush1.bf16.msra.mxu0 %v4329
    %5948 = vmatprep.subr.bf16.mxu0 0
    %5949 = vmatpush1.bf16.msra.mxu0 %v4330
    %5950 = vmatprep.subr.bf16.mxu0 0
    %5951 = vmatpush1.bf16.msra.mxu0 %v4331
    %5952 = vmatprep.subr.bf16.mxu0 0
    %5953 = vmatpush1.bf16.msra.mxu0 %v4332
    %5954 = vmatprep.subr.bf16.mxu0 0
    %5955 = vmatpush1.bf16.msra.mxu0 %v4333
    %5956 = vmatprep.subr.bf16.mxu0 0
    %5957 = vmatpush1.bf16.msra.mxu0 %v4334
    %5958 = vmatprep.subr.bf16.mxu0 0
    %5959 = vmatpush1.bf16.msra.mxu0 %v4335
    %5960 = vmatprep.mubr.bf16.mxu0 %v1443
    %5961 = vmatmul.mubr.bf16.gmra.mrb[0].mxu0 %v1441
    %v5962 = vpop.f32.mrb[0].mxu0
    %v5963 = vadd.f32 %v5923, %v5962
    %v5964 = vpop.f32.mrb[0].mxu0
    %v5965 = vpop.f32.mrb[0].mxu0
    %v5966 = vpop.f32.mrb[0].mxu0
    %5967 = vdwg.mxu0
    %5968 = vmatprep.subr.bf16.mxu0 0
    %5969 = vmatpush1.bf16.msra.mxu0 %v4336
    %5970 = vmatprep.subr.bf16.mxu0 0
    %5971 = vmatpush1.bf16.msra.mxu0 %v4337
    %5972 = vmatprep.subr.bf16.mxu0 0
    %5973 = vmatpush1.bf16.msra.mxu0 %v4338
    %5974 = vmatprep.subr.bf16.mxu0 0
    %5975 = vmatpush1.bf16.msra.mxu0 %v4339
    %5976 = vmatprep.subr.bf16.mxu0 0
    %5977 = vmatpush1.bf16.msra.mxu0 %v4340
    %5978 = vmatprep.subr.bf16.mxu0 0
    %5979 = vmatpush1.bf16.msra.mxu0 %v4341
    %5980 = vmatprep.subr.bf16.mxu0 0
    %5981 = vmatpush1.bf16.msra.mxu0 %v4342
    %5982 = vmatprep.subr.bf16.mxu0 0
    %5983 = vmatpush1.bf16.msra.mxu0 %v4343
    %5984 = vmatprep.subr.bf16.mxu0 0
    %5985 = vmatpush1.bf16.msra.mxu0 %v4344
    %5986 = vmatprep.subr.bf16.mxu0 0
    %5987 = vmatpush1.bf16.msra.mxu0 %v4345
    %5988 = vmatprep.subr.bf16.mxu0 0
    %5989 = vmatpush1.bf16.msra.mxu0 %v4346
    %5990 = vmatprep.subr.bf16.mxu0 0
    %5991 = vmatpush1.bf16.msra.mxu0 %v4347
    %5992 = vmatprep.subr.bf16.mxu0 0
    %5993 = vmatpush1.bf16.msra.mxu0 %v4348
    %5994 = vmatprep.subr.bf16.mxu0 0
    %5995 = vmatpush1.bf16.msra.mxu0 %v4349
    %5996 = vmatprep.subr.bf16.mxu0 0
    %5997 = vmatpush1.bf16.msra.mxu0 %v4350
    %5998 = vmatprep.subr.bf16.mxu0 0
    %5999 = vmatpush1.bf16.msra.mxu0 %v4351
    %6000 = vmatprep.mubr.bf16.mxu0 %v1481
    %6001 = vmatmul.mubr.bf16.gmra.mrb[0].mxu0 %v1467
    %v6002 = vpop.f32.mrb[0].mxu0
    %v6003 = vadd.f32 %v5963, %v6002
    %v6004 = vpop.f32.mrb[0].mxu0
    %v6005 = vpop.f32.mrb[0].mxu0
    %v6006 = vpop.f32.mrb[0].mxu0
    %6007 = vdwg.mxu0
    %6008 = vmatprep.subr.bf16.mxu0 0
    %6009 = vmatpush1.bf16.msra.mxu0 %v4352
    %6010 = vmatprep.subr.bf16.mxu0 0
    %6011 = vmatpush1.bf16.msra.mxu0 %v4353
    %6012 = vmatprep.subr.bf16.mxu0 0
    %6013 = vmatpush1.bf16.msra.mxu0 %v4354
    %6014 = vmatprep.subr.bf16.mxu0 0
    %6015 = vmatpush1.bf16.msra.mxu0 %v4355
    %6016 = vmatprep.subr.bf16.mxu0 0
    %6017 = vmatpush1.bf16.msra.mxu0 %v4356
    %6018 = vmatprep.subr.bf16.mxu0 0
    %6019 = vmatpush1.bf16.msra.mxu0 %v4357
    %6020 = vmatprep.subr.bf16.mxu0 0
    %6021 = vmatpush1.bf16.msra.mxu0 %v4358
    %6022 = vmatprep.subr.bf16.mxu0 0
    %6023 = vmatpush1.bf16.msra.mxu0 %v4359
    %6024 = vmatprep.subr.bf16.mxu0 0
    %6025 = vmatpush1.bf16.msra.mxu0 %v4360
    %6026 = vmatprep.subr.bf16.mxu0 0
    %6027 = vmatpush1.bf16.msra.mxu0 %v4361
    %6028 = vmatprep.subr.bf16.mxu0 0
    %6029 = vmatpush1.bf16.msra.mxu0 %v4362
    %6030 = vmatprep.subr.bf16.mxu0 0
    %6031 = vmatpush1.bf16.msra.mxu0 %v4363
    %6032 = vmatprep.subr.bf16.mxu0 0
    %6033 = vmatpush1.bf16.msra.mxu0 %v4364
    %6034 = vmatprep.subr.bf16.mxu0 0
    %6035 = vmatpush1.bf16.msra.mxu0 %v4365
    %6036 = vmatprep.subr.bf16.mxu0 0
    %6037 = vmatpush1.bf16.msra.mxu0 %v4366
    %6038 = vmatprep.subr.bf16.mxu0 0
    %6039 = vmatpush1.bf16.msra.mxu0 %v4367
    %6040 = vmatprep.mubr.bf16.mxu0 %v1491
    %6041 = vmatmul.mubr.bf16.gmra.mrb[0].mxu0 %v1489
    %v6042 = vpop.f32.mrb[0].mxu0
    %v6043 = vadd.f32 %v6003, %v6042
    %v6044 = vpop.f32.mrb[0].mxu0
    %v6045 = vpop.f32.mrb[0].mxu0
    %v6046 = vpop.f32.mrb[0].mxu0
    %6047 = vdwg.mxu0
    %6048 = vmatprep.subr.bf16.mxu0 0
    %6049 = vmatpush1.bf16.msra.mxu0 %v4368
    %6050 = vmatprep.subr.bf16.mxu0 0
    %6051 = vmatpush1.bf16.msra.mxu0 %v4369
    %6052 = vmatprep.subr.bf16.mxu0 0
    %6053 = vmatpush1.bf16.msra.mxu0 %v4370
    %6054 = vmatprep.subr.bf16.mxu0 0
    %6055 = vmatpush1.bf16.msra.mxu0 %v4371
    %6056 = vmatprep.subr.bf16.mxu0 0
    %6057 = vmatpush1.bf16.msra.mxu0 %v4372
    %6058 = vmatprep.subr.bf16.mxu0 0
    %6059 = vmatpush1.bf16.msra.mxu0 %v4373
    %6060 = vmatprep.subr.bf16.mxu0 0
    %6061 = vmatpush1.bf16.msra.mxu0 %v4374
    %6062 = vmatprep.subr.bf16.mxu0 0
    %6063 = vmatpush1.bf16.msra.mxu0 %v4375
    %6064 = vmatprep.subr.bf16.mxu0 0
    %6065 = vmatpush1.bf16.msra.mxu0 %v4376
    %6066 = vmatprep.subr.bf16.mxu0 0
    %6067 = vmatpush1.bf16.msra.mxu0 %v4377
    %6068 = vmatprep.subr.bf16.mxu0 0
    %6069 = vmatpush1.bf16.msra.mxu0 %v4378
    %6070 = vmatprep.subr.bf16.mxu0 0
    %6071 = vmatpush1.bf16.msra.mxu0 %v4379
    %6072 = vmatprep.subr.bf16.mxu0 0
    %6073 = vmatpush1.bf16.msra.mxu0 %v4380
    %6074 = vmatprep.subr.bf16.mxu0 0
    %6075 = vmatpush1.bf16.msra.mxu0 %v4381
    %6076 = vmatprep.subr.bf16.mxu0 0
    %6077 = vmatpush1.bf16.msra.mxu0 %v4382
    %6078 = vmatprep.subr.bf16.mxu0 0
    %6079 = vmatpush1.bf16.msra.mxu0 %v4383
    %6080 = vmatprep.mubr.bf16.mxu0 %v1488
    %6081 = vmatmul.mubr.bf16.gmra.mrb[0].mxu0 %v1474
    %v6082 = vpop.f32.mrb[0].mxu0
    %v6083 = vadd.f32 %v6043, %v6082
    %v6084 = vpop.f32.mrb[0].mxu0
    %v6085 = vpop.f32.mrb[0].mxu0
    %v6086 = vpop.f32.mrb[0].mxu0
    %6087 = vdwg.mxu0
    %6088 = vmatprep.subr.bf16.mxu0 0
    %6089 = vmatpush1.bf16.msra.mxu0 %v4384
    %6090 = vmatprep.subr.bf16.mxu0 0
    %6091 = vmatpush1.bf16.msra.mxu0 %v4385
    %6092 = vmatprep.subr.bf16.mxu0 0
    %6093 = vmatpush1.bf16.msra.mxu0 %v4386
    %6094 = vmatprep.subr.bf16.mxu0 0
    %6095 = vmatpush1.bf16.msra.mxu0 %v4387
    %6096 = vmatprep.subr.bf16.mxu0 0
    %6097 = vmatpush1.bf16.msra.mxu0 %v4388
    %6098 = vmatprep.subr.bf16.mxu0 0
    %6099 = vmatpush1.bf16.msra.mxu0 %v4389
    %6100 = vmatprep.subr.bf16.mxu0 0
    %6101 = vmatpush1.bf16.msra.mxu0 %v4390
    %6102 = vmatprep.subr.bf16.mxu0 0
    %6103 = vmatpush1.bf16.msra.mxu0 %v4391
    %6104 = vmatprep.subr.bf16.mxu0 0
    %6105 = vmatpush1.bf16.msra.mxu0 %v4392
    %6106 = vmatprep.subr.bf16.mxu0 0
    %6107 = vmatpush1.bf16.msra.mxu0 %v4393
    %6108 = vmatprep.subr.bf16.mxu0 0
    %6109 = vmatpush1.bf16.msra.mxu0 %v4394
    %6110 = vmatprep.subr.bf16.mxu0 0
    %6111 = vmatpush1.bf16.msra.mxu0 %v4395
    %6112 = vmatprep.subr.bf16.mxu0 0
    %6113 = vmatpush1.bf16.msra.mxu0 %v4396
    %6114 = vmatprep.subr.bf16.mxu0 0
    %6115 = vmatpush1.bf16.msra.mxu0 %v4397
    %6116 = vmatprep.subr.bf16.mxu0 0
    %6117 = vmatpush1.bf16.msra.mxu0 %v4398
    %6118 = vmatprep.subr.bf16.mxu0 0
    %6119 = vmatpush1.bf16.msra.mxu0 %v4399
    %6120 = vmatprep.mubr.bf16.mxu0 %v1492
    %6121 = vmatmul.mubr.bf16.gmra.mrb[0].mxu0 %v1490
    %v6122 = vpop.f32.mrb[0].mxu0
    %v6123 = vadd.f32 %v6083, %v6122
    %v6124 = vpop.f32.mrb[0].mxu0
    %v6125 = vpop.f32.mrb[0].mxu0
    %v6126 = vpop.f32.mrb[0].mxu0
    %6127 = vdwg.mxu0
    %6128 = vmatprep.subr.bf16.mxu0 0
    %6129 = vmatpush1.bf16.msra.mxu0 %v4400
    %6130 = vmatprep.subr.bf16.mxu0 0
    %6131 = vmatpush1.bf16.msra.mxu0 %v4401
    %6132 = vmatprep.subr.bf16.mxu0 0
    %6133 = vmatpush1.bf16.msra.mxu0 %v4402
    %6134 = vmatprep.subr.bf16.mxu0 0
    %6135 = vmatpush1.bf16.msra.mxu0 %v4403
    %6136 = vmatprep.subr.bf16.mxu0 0
    %6137 = vmatpush1.bf16.msra.mxu0 %v4404
    %6138 = vmatprep.subr.bf16.mxu0 0
    %6139 = vmatpush1.bf16.msra.mxu0 %v4405
    %6140 = vmatprep.subr.bf16.mxu0 0
    %6141 = vmatpush1.bf16.msra.mxu0 %v4406
    %6142 = vmatprep.subr.bf16.mxu0 0
    %6143 = vmatpush1.bf16.msra.mxu0 %v4407
    %6144 = vmatprep.subr.bf16.mxu0 0
    %6145 = vmatpush1.bf16.msra.mxu0 %v4408
    %6146 = vmatprep.subr.bf16.mxu0 0
    %6147 = vmatpush1.bf16.msra.mxu0 %v4409
    %6148 = vmatprep.subr.bf16.mxu0 0
    %6149 = vmatpush1.bf16.msra.mxu0 %v4410
    %6150 = vmatprep.subr.bf16.mxu0 0
    %6151 = vmatpush1.bf16.msra.mxu0 %v4411
    %6152 = vmatprep.subr.bf16.mxu0 0
    %6153 = vmatpush1.bf16.msra.mxu0 %v4412
    %6154 = vmatprep.subr.bf16.mxu0 0
    %6155 = vmatpush1.bf16.msra.mxu0 %v4413
    %6156 = vmatprep.subr.bf16.mxu0 0
    %6157 = vmatpush1.bf16.msra.mxu0 %v4414
    %6158 = vmatprep.subr.bf16.mxu0 0
    %6159 = vmatpush1.bf16.msra.mxu0 %v4415
    %6160 = vmatprep.mubr.bf16.mxu0 %v1530
    %6161 = vmatmul.mubr.bf16.gmra.mrb[0].mxu0 %v1516
    %v6162 = vpop.f32.mrb[0].mxu0
    %v6163 = vadd.f32 %v6123, %v6162
    %v6164 = vpop.f32.mrb[0].mxu0
    %v6165 = vpop.f32.mrb[0].mxu0
    %v6166 = vpop.f32.mrb[0].mxu0
    %6167 = vdwg.mxu0
    %6168 = vmatprep.subr.bf16.mxu0 0
    %6169 = vmatpush1.bf16.msra.mxu0 %v4416
    %6170 = vmatprep.subr.bf16.mxu0 0
    %6171 = vmatpush1.bf16.msra.mxu0 %v4417
    %6172 = vmatprep.subr.bf16.mxu0 0
    %6173 = vmatpush1.bf16.msra.mxu0 %v4418
    %6174 = vmatprep.subr.bf16.mxu0 0
    %6175 = vmatpush1.bf16.msra.mxu0 %v4419
    %6176 = vmatprep.subr.bf16.mxu0 0
    %6177 = vmatpush1.bf16.msra.mxu0 %v4420
    %6178 = vmatprep.subr.bf16.mxu0 0
    %6179 = vmatpush1.bf16.msra.mxu0 %v4421
    %6180 = vmatprep.subr.bf16.mxu0 0
    %6181 = vmatpush1.bf16.msra.mxu0 %v4422
    %6182 = vmatprep.subr.bf16.mxu0 0
    %6183 = vmatpush1.bf16.msra.mxu0 %v4423
    %6184 = vmatprep.subr.bf16.mxu0 0
    %6185 = vmatpush1.bf16.msra.mxu0 %v4424
    %6186 = vmatprep.subr.bf16.mxu0 0
    %6187 = vmatpush1.bf16.msra.mxu0 %v4425
    %6188 = vmatprep.subr.bf16.mxu0 0
    %6189 = vmatpush1.bf16.msra.mxu0 %v4426
    %6190 = vmatprep.subr.bf16.mxu0 0
    %6191 = vmatpush1.bf16.msra.mxu0 %v4427
    %6192 = vmatprep.subr.bf16.mxu0 0
    %6193 = vmatpush1.bf16.msra.mxu0 %v4428
    %6194 = vmatprep.subr.bf16.mxu0 0
    %6195 = vmatpush1.bf16.msra.mxu0 %v4429
    %6196 = vmatprep.subr.bf16.mxu0 0
    %6197 = vmatpush1.bf16.msra.mxu0 %v4430
    %6198 = vmatprep.subr.bf16.mxu0 0
    %6199 = vmatpush1.bf16.msra.mxu0 %v4431
    %6200 = vmatprep.mubr.bf16.mxu0 %v1540
    %6201 = vmatmul.mubr.bf16.gmra.mrb[0].mxu0 %v1538
    %v6202 = vpop.f32.mrb[0].mxu0
    %v6203 = vadd.f32 %v6163, %v6202
    %v6204 = vpop.f32.mrb[0].mxu0
    %v6205 = vpop.f32.mrb[0].mxu0
    %v6206 = vpop.f32.mrb[0].mxu0
    %6207 = vdwg.mxu0
    %6208 = vmatprep.subr.bf16.mxu0 0
    %6209 = vmatpush1.bf16.msra.mxu0 %v4432
    %6210 = vmatprep.subr.bf16.mxu0 0
    %6211 = vmatpush1.bf16.msra.mxu0 %v4433
    %6212 = vmatprep.subr.bf16.mxu0 0
    %6213 = vmatpush1.bf16.msra.mxu0 %v4434
    %6214 = vmatprep.subr.bf16.mxu0 0
    %6215 = vmatpush1.bf16.msra.mxu0 %v4435
    %6216 = vmatprep.subr.bf16.mxu0 0
    %6217 = vmatpush1.bf16.msra.mxu0 %v4436
    %6218 = vmatprep.subr.bf16.mxu0 0
    %6219 = vmatpush1.bf16.msra.mxu0 %v4437
    %6220 = vmatprep.subr.bf16.mxu0 0
    %6221 = vmatpush1.bf16.msra.mxu0 %v4438
    %6222 = vmatprep.subr.bf16.mxu0 0
    %6223 = vmatpush1.bf16.msra.mxu0 %v4439
    %6224 = vmatprep.subr.bf16.mxu0 0
    %6225 = vmatpush1.bf16.msra.mxu0 %v4440
    %6226 = vmatprep.subr.bf16.mxu0 0
    %6227 = vmatpush1.bf16.msra.mxu0 %v4441
    %6228 = vmatprep.subr.bf16.mxu0 0
    %6229 = vmatpush1.bf16.msra.mxu0 %v4442
    %6230 = vmatprep.subr.bf16.mxu0 0
    %6231 = vmatpush1.bf16.msra.mxu0 %v4443
    %6232 = vmatprep.subr.bf16.mxu0 0
    %6233 = vmatpush1.bf16.msra.mxu0 %v4444
    %6234 = vmatprep.subr.bf16.mxu0 0
    %6235 = vmatpush1.bf16.msra.mxu0 %v4445
    %6236 = vmatprep.subr.bf16.mxu0 0
    %6237 = vmatpush1.bf16.msra.mxu0 %v4446
    %6238 = vmatprep.subr.bf16.mxu0 0
    %6239 = vmatpush1.bf16.msra.mxu0 %v4447
    %6240 = vmatprep.mubr.bf16.mxu0 %v1537
    %6241 = vmatmul.mubr.bf16.gmra.mrb[0].mxu0 %v1523
    %v6242 = vpop.f32.mrb[0].mxu0
    %v6243 = vadd.f32 %v6203, %v6242
    %v6244 = vpop.f32.mrb[0].mxu0
    %v6245 = vpop.f32.mrb[0].mxu0
    %v6246 = vpop.f32.mrb[0].mxu0
    %6247 = vdwg.mxu0
    %6248 = vmatprep.subr.bf16.mxu0 0
    %6249 = vmatpush1.bf16.msra.mxu0 %v4448
    %6250 = vmatprep.subr.bf16.mxu0 0
    %6251 = vmatpush1.bf16.msra.mxu0 %v4449
    %6252 = vmatprep.subr.bf16.mxu0 0
    %6253 = vmatpush1.bf16.msra.mxu0 %v4450
    %6254 = vmatprep.subr.bf16.mxu0 0
    %6255 = vmatpush1.bf16.msra.mxu0 %v4451
    %6256 = vmatprep.subr.bf16.mxu0 0
    %6257 = vmatpush1.bf16.msra.mxu0 %v4452
    %6258 = vmatprep.subr.bf16.mxu0 0
    %6259 = vmatpush1.bf16.msra.mxu0 %v4453
    %6260 = vmatprep.subr.bf16.mxu0 0
    %6261 = vmatpush1.bf16.msra.mxu0 %v4454
    %6262 = vmatprep.subr.bf16.mxu0 0
    %6263 = vmatpush1.bf16.msra.mxu0 %v4455
    %6264 = vmatprep.subr.bf16.mxu0 0
    %6265 = vmatpush1.bf16.msra.mxu0 %v4456
    %6266 = vmatprep.subr.bf16.mxu0 0
    %6267 = vmatpush1.bf16.msra.mxu0 %v4457
    %6268 = vmatprep.subr.bf16.mxu0 0
    %6269 = vmatpush1.bf16.msra.mxu0 %v4458
    %6270 = vmatprep.subr.bf16.mxu0 0
    %6271 = vmatpush1.bf16.msra.mxu0 %v4459
    %6272 = vmatprep.subr.bf16.mxu0 0
    %6273 = vmatpush1.bf16.msra.mxu0 %v4460
    %6274 = vmatprep.subr.bf16.mxu0 0
    %6275 = vmatpush1.bf16.msra.mxu0 %v4461
    %6276 = vmatprep.subr.bf16.mxu0 0
    %6277 = vmatpush1.bf16.msra.mxu0 %v4462
    %6278 = vmatprep.subr.bf16.mxu0 0
    %6279 = vmatpush1.bf16.msra.mxu0 %v4463
    %6280 = vmatprep.mubr.bf16.mxu0 %v1541
    %6281 = vmatmul.mubr.bf16.gmra.mrb[0].mxu0 %v1539
    %v6282 = vpop.f32.mrb[0].mxu0
    %v6283 = vadd.f32 %v6243, %v6282
    %v6284 = vpop.f32.mrb[0].mxu0
    %v6285 = vpop.f32.mrb[0].mxu0
    %v6286 = vpop.f32.mrb[0].mxu0
    %6287 = vdwg.mxu0
    %6288 = vmatprep.subr.bf16.mxu0 0
    %6289 = vmatpush1.bf16.msra.mxu0 %v4464
    %6290 = vmatprep.subr.bf16.mxu0 0
    %6291 = vmatpush1.bf16.msra.mxu0 %v4465
    %6292 = vmatprep.subr.bf16.mxu0 0
    %6293 = vmatpush1.bf16.msra.mxu0 %v4466
    %6294 = vmatprep.subr.bf16.mxu0 0
    %6295 = vmatpush1.bf16.msra.mxu0 %v4467
    %6296 = vmatprep.subr.bf16.mxu0 0
    %6297 = vmatpush1.bf16.msra.mxu0 %v4468
    %6298 = vmatprep.subr.bf16.mxu0 0
    %6299 = vmatpush1.bf16.msra.mxu0 %v4469
    %6300 = vmatprep.subr.bf16.mxu0 0
    %6301 = vmatpush1.bf16.msra.mxu0 %v4470
    %6302 = vmatprep.subr.bf16.mxu0 0
    %6303 = vmatpush1.bf16.msra.mxu0 %v4471
    %6304 = vmatprep.subr.bf16.mxu0 0
    %6305 = vmatpush1.bf16.msra.mxu0 %v4472
    %6306 = vmatprep.subr.bf16.mxu0 0
    %6307 = vmatpush1.bf16.msra.mxu0 %v4473
    %6308 = vmatprep.subr.bf16.mxu0 0
    %6309 = vmatpush1.bf16.msra.mxu0 %v4474
    %6310 = vmatprep.subr.bf16.mxu0 0
    %6311 = vmatpush1.bf16.msra.mxu0 %v4475
    %6312 = vmatprep.subr.bf16.mxu0 0
    %6313 = vmatpush1.bf16.msra.mxu0 %v4476
    %6314 = vmatprep.subr.bf16.mxu0 0
    %6315 = vmatpush1.bf16.msra.mxu0 %v4477
    %6316 = vmatprep.subr.bf16.mxu0 0
    %6317 = vmatpush1.bf16.msra.mxu0 %v4478
    %6318 = vmatprep.subr.bf16.mxu0 0
    %6319 = vmatpush1.bf16.msra.mxu0 %v4479
    %6320 = vmatprep.mubr.bf16.mxu0 %v1579
    %6321 = vmatmul.mubr.bf16.gmra.mrb[0].mxu0 %v1565
    %v6322 = vpop.f32.mrb[0].mxu0
    %v6323 = vadd.f32 %v6283, %v6322
    %v6324 = vpop.f32.mrb[0].mxu0
    %v6325 = vpop.f32.mrb[0].mxu0
    %v6326 = vpop.f32.mrb[0].mxu0
    %6327 = vdwg.mxu0
    %6328 = vmatprep.subr.bf16.mxu0 0
    %6329 = vmatpush1.bf16.msra.mxu0 %v4480
    %6330 = vmatprep.subr.bf16.mxu0 0
    %6331 = vmatpush1.bf16.msra.mxu0 %v4481
    %6332 = vmatprep.subr.bf16.mxu0 0
    %6333 = vmatpush1.bf16.msra.mxu0 %v4482
    %6334 = vmatprep.subr.bf16.mxu0 0
    %6335 = vmatpush1.bf16.msra.mxu0 %v4483
    %6336 = vmatprep.subr.bf16.mxu0 0
    %6337 = vmatpush1.bf16.msra.mxu0 %v4484
    %6338 = vmatprep.subr.bf16.mxu0 0
    %6339 = vmatpush1.bf16.msra.mxu0 %v4485
    %6340 = vmatprep.subr.bf16.mxu0 0
    %6341 = vmatpush1.bf16.msra.mxu0 %v4486
    %6342 = vmatprep.subr.bf16.mxu0 0
    %6343 = vmatpush1.bf16.msra.mxu0 %v4487
    %6344 = vmatprep.subr.bf16.mxu0 0
    %6345 = vmatpush1.bf16.msra.mxu0 %v4488
    %6346 = vmatprep.subr.bf16.mxu0 0
    %6347 = vmatpush1.bf16.msra.mxu0 %v4489
    %6348 = vmatprep.subr.bf16.mxu0 0
    %6349 = vmatpush1.bf16.msra.mxu0 %v4490
    %6350 = vmatprep.subr.bf16.mxu0 0
    %6351 = vmatpush1.bf16.msra.mxu0 %v4491
    %6352 = vmatprep.subr.bf16.mxu0 0
    %6353 = vmatpush1.bf16.msra.mxu0 %v4492
    %6354 = vmatprep.subr.bf16.mxu0 0
    %6355 = vmatpush1.bf16.msra.mxu0 %v4493
    %6356 = vmatprep.subr.bf16.mxu0 0
    %6357 = vmatpush1.bf16.msra.mxu0 %v4494
    %6358 = vmatprep.subr.bf16.mxu0 0
    %6359 = vmatpush1.bf16.msra.mxu0 %v4495
    %6360 = vmatprep.mubr.bf16.mxu0 %v1589
    %6361 = vmatmul.mubr.bf16.gmra.mrb[0].mxu0 %v1587
    %v6362 = vpop.f32.mrb[0].mxu0
    %v6363 = vadd.f32 %v6323, %v6362
    %v6364 = vpop.f32.mrb[0].mxu0
    %v6365 = vpop.f32.mrb[0].mxu0
    %v6366 = vpop.f32.mrb[0].mxu0
    %6367 = vdwg.mxu0
    %6368 = vmatprep.subr.bf16.mxu0 0
    %6369 = vmatpush1.bf16.msra.mxu0 %v4496
    %6370 = vmatprep.subr.bf16.mxu0 0
    %6371 = vmatpush1.bf16.msra.mxu0 %v4497
    %6372 = vmatprep.subr.bf16.mxu0 0
    %6373 = vmatpush1.bf16.msra.mxu0 %v4498
    %6374 = vmatprep.subr.bf16.mxu0 0
    %6375 = vmatpush1.bf16.msra.mxu0 %v4499
    %6376 = vmatprep.subr.bf16.mxu0 0
    %6377 = vmatpush1.bf16.msra.mxu0 %v4500
    %6378 = vmatprep.subr.bf16.mxu0 0
    %6379 = vmatpush1.bf16.msra.mxu0 %v4501
    %6380 = vmatprep.subr.bf16.mxu0 0
    %6381 = vmatpush1.bf16.msra.mxu0 %v4502
    %6382 = vmatprep.subr.bf16.mxu0 0
    %6383 = vmatpush1.bf16.msra.mxu0 %v4503
    %6384 = vmatprep.subr.bf16.mxu0 0
    %6385 = vmatpush1.bf16.msra.mxu0 %v4504
    %6386 = vmatprep.subr.bf16.mxu0 0
    %6387 = vmatpush1.bf16.msra.mxu0 %v4505
    %6388 = vmatprep.subr.bf16.mxu0 0
    %6389 = vmatpush1.bf16.msra.mxu0 %v4506
    %6390 = vmatprep.subr.bf16.mxu0 0
    %6391 = vmatpush1.bf16.msra.mxu0 %v4507
    %6392 = vmatprep.subr.bf16.mxu0 0
    %6393 = vmatpush1.bf16.msra.mxu0 %v4508
    %6394 = vmatprep.subr.bf16.mxu0 0
    %6395 = vmatpush1.bf16.msra.mxu0 %v4509
    %6396 = vmatprep.subr.bf16.mxu0 0
    %6397 = vmatpush1.bf16.msra.mxu0 %v4510
    %6398 = vmatprep.subr.bf16.mxu0 0
    %6399 = vmatpush1.bf16.msra.mxu0 %v4511
    %6400 = vmatprep.mubr.bf16.mxu0 %v1586
    %6401 = vmatmul.mubr.bf16.gmra.mrb[0].mxu0 %v1572
    %v6402 = vpop.f32.mrb[0].mxu0
    %v6403 = vadd.f32 %v6363, %v6402
    %v6404 = vpop.f32.mrb[0].mxu0
    %v6405 = vpop.f32.mrb[0].mxu0
    %v6406 = vpop.f32.mrb[0].mxu0
    %6407 = vdwg.mxu0
    %6408 = vmatprep.subr.bf16.mxu0 0
    %6409 = vmatpush1.bf16.msra.mxu0 %v4512
    %6410 = vmatprep.subr.bf16.mxu0 0
    %6411 = vmatpush1.bf16.msra.mxu0 %v4513
    %6412 = vmatprep.subr.bf16.mxu0 0
    %6413 = vmatpush1.bf16.msra.mxu0 %v4514
    %6414 = vmatprep.subr.bf16.mxu0 0
    %6415 = vmatpush1.bf16.msra.mxu0 %v4515
    %6416 = vmatprep.subr.bf16.mxu0 0
    %6417 = vmatpush1.bf16.msra.mxu0 %v4516
    %6418 = vmatprep.subr.bf16.mxu0 0
    %6419 = vmatpush1.bf16.msra.mxu0 %v4517
    %6420 = vmatprep.subr.bf16.mxu0 0
    %6421 = vmatpush1.bf16.msra.mxu0 %v4518
    %6422 = vmatprep.subr.bf16.mxu0 0
    %6423 = vmatpush1.bf16.msra.mxu0 %v4519
    %6424 = vmatprep.subr.bf16.mxu0 0
    %6425 = vmatpush1.bf16.msra.mxu0 %v4520
    %6426 = vmatprep.subr.bf16.mxu0 0
    %6427 = vmatpush1.bf16.msra.mxu0 %v4521
    %6428 = vmatprep.subr.bf16.mxu0 0
    %6429 = vmatpush1.bf16.msra.mxu0 %v4522
    %6430 = vmatprep.subr.bf16.mxu0 0
    %6431 = vmatpush1.bf16.msra.mxu0 %v4523
    %6432 = vmatprep.subr.bf16.mxu0 0
    %6433 = vmatpush1.bf16.msra.mxu0 %v4524
    %6434 = vmatprep.subr.bf16.mxu0 0
    %6435 = vmatpush1.bf16.msra.mxu0 %v4525
    %6436 = vmatprep.subr.bf16.mxu0 0
    %6437 = vmatpush1.bf16.msra.mxu0 %v4526
    %6438 = vmatprep.subr.bf16.mxu0 0
    %6439 = vmatpush1.bf16.msra.mxu0 %v4527
    %6440 = vmatprep.mubr.bf16.mxu0 %v1590
    %6441 = vmatmul.mubr.bf16.gmra.mrb[0].mxu0 %v1588
    %v6442 = vpop.f32.mrb[0].mxu0
    %v6443 = vadd.f32 %v6403, %v6442
    %v6444 = vpop.f32.mrb[0].mxu0
    %v6445 = vpop.f32.mrb[0].mxu0
    %v6446 = vpop.f32.mrb[0].mxu0
    %6447 = vdwg.mxu0
    %6448 = vmatprep.subr.bf16.mxu0 0
    %6449 = vmatpush1.bf16.msra.mxu0 %v4528
    %6450 = vmatprep.subr.bf16.mxu0 0
    %6451 = vmatpush1.bf16.msra.mxu0 %v4529
    %6452 = vmatprep.subr.bf16.mxu0 0
    %6453 = vmatpush1.bf16.msra.mxu0 %v4530
    %6454 = vmatprep.subr.bf16.mxu0 0
    %6455 = vmatpush1.bf16.msra.mxu0 %v4531
    %6456 = vmatprep.subr.bf16.mxu0 0
    %6457 = vmatpush1.bf16.msra.mxu0 %v4532
    %6458 = vmatprep.subr.bf16.mxu0 0
    %6459 = vmatpush1.bf16.msra.mxu0 %v4533
    %6460 = vmatprep.subr.bf16.mxu0 0
    %6461 = vmatpush1.bf16.msra.mxu0 %v4534
    %6462 = vmatprep.subr.bf16.mxu0 0
    %6463 = vmatpush1.bf16.msra.mxu0 %v4535
    %6464 = vmatprep.subr.bf16.mxu0 0
    %6465 = vmatpush1.bf16.msra.mxu0 %v4536
    %6466 = vmatprep.subr.bf16.mxu0 0
    %6467 = vmatpush1.bf16.msra.mxu0 %v4537
    %6468 = vmatprep.subr.bf16.mxu0 0
    %6469 = vmatpush1.bf16.msra.mxu0 %v4538
    %6470 = vmatprep.subr.bf16.mxu0 0
    %6471 = vmatpush1.bf16.msra.mxu0 %v4539
    %6472 = vmatprep.subr.bf16.mxu0 0
    %6473 = vmatpush1.bf16.msra.mxu0 %v4540
    %6474 = vmatprep.subr.bf16.mxu0 0
    %6475 = vmatpush1.bf16.msra.mxu0 %v4541
    %6476 = vmatprep.subr.bf16.mxu0 0
    %6477 = vmatpush1.bf16.msra.mxu0 %v4542
    %6478 = vmatprep.subr.bf16.mxu0 0
    %6479 = vmatpush1.bf16.msra.mxu0 %v4543
    %6480 = vmatprep.mubr.bf16.mxu0 %v1628
    %6481 = vmatmul.mubr.bf16.gmra.mrb[0].mxu0 %v1614
    %v6482 = vpop.f32.mrb[0].mxu0
    %v6483 = vadd.f32 %v6443, %v6482
    %v6484 = vpop.f32.mrb[0].mxu0
    %v6485 = vpop.f32.mrb[0].mxu0
    %v6486 = vpop.f32.mrb[0].mxu0
    %6487 = vdwg.mxu0
    %6488 = vmatprep.subr.bf16.mxu0 0
    %6489 = vmatpush1.bf16.msra.mxu0 %v4544
    %6490 = vmatprep.subr.bf16.mxu0 0
    %6491 = vmatpush1.bf16.msra.mxu0 %v4545
    %6492 = vmatprep.subr.bf16.mxu0 0
    %6493 = vmatpush1.bf16.msra.mxu0 %v4546
    %6494 = vmatprep.subr.bf16.mxu0 0
    %6495 = vmatpush1.bf16.msra.mxu0 %v4547
    %6496 = vmatprep.subr.bf16.mxu0 0
    %6497 = vmatpush1.bf16.msra.mxu0 %v4548
    %6498 = vmatprep.subr.bf16.mxu0 0
    %6499 = vmatpush1.bf16.msra.mxu0 %v4549
    %6500 = vmatprep.subr.bf16.mxu0 0
    %6501 = vmatpush1.bf16.msra.mxu0 %v4550
    %6502 = vmatprep.subr.bf16.mxu0 0
    %6503 = vmatpush1.bf16.msra.mxu0 %v4551
    %6504 = vmatprep.subr.bf16.mxu0 0
    %6505 = vmatpush1.bf16.msra.mxu0 %v4552
    %6506 = vmatprep.subr.bf16.mxu0 0
    %6507 = vmatpush1.bf16.msra.mxu0 %v4553
    %6508 = vmatprep.subr.bf16.mxu0 0
    %6509 = vmatpush1.bf16.msra.mxu0 %v4554
    %6510 = vmatprep.subr.bf16.mxu0 0
    %6511 = vmatpush1.bf16.msra.mxu0 %v4555
    %6512 = vmatprep.subr.bf16.mxu0 0
    %6513 = vmatpush1.bf16.msra.mxu0 %v4556
    %6514 = vmatprep.subr.bf16.mxu0 0
    %6515 = vmatpush1.bf16.msra.mxu0 %v4557
    %6516 = vmatprep.subr.bf16.mxu0 0
    %6517 = vmatpush1.bf16.msra.mxu0 %v4558
    %6518 = vmatprep.subr.bf16.mxu0 0
    %6519 = vmatpush1.bf16.msra.mxu0 %v4559
    %6520 = vmatprep.mubr.bf16.mxu0 %v1638
    %6521 = vmatmul.mubr.bf16.gmra.mrb[0].mxu0 %v1636
    %v6522 = vpop.f32.mrb[0].mxu0
    %v6523 = vadd.f32 %v6483, %v6522
    %v6524 = vpop.f32.mrb[0].mxu0
    %v6525 = vpop.f32.mrb[0].mxu0
    %v6526 = vpop.f32.mrb[0].mxu0
    %6527 = vdwg.mxu0
    %6528 = vmatprep.subr.bf16.mxu0 0
    %6529 = vmatpush1.bf16.msra.mxu0 %v4560
    %6530 = vmatprep.subr.bf16.mxu0 0
    %6531 = vmatpush1.bf16.msra.mxu0 %v4561
    %6532 = vmatprep.subr.bf16.mxu0 0
    %6533 = vmatpush1.bf16.msra.mxu0 %v4562
    %6534 = vmatprep.subr.bf16.mxu0 0
    %6535 = vmatpush1.bf16.msra.mxu0 %v4563
    %6536 = vmatprep.subr.bf16.mxu0 0
    %6537 = vmatpush1.bf16.msra.mxu0 %v4564
    %6538 = vmatprep.subr.bf16.mxu0 0
    %6539 = vmatpush1.bf16.msra.mxu0 %v4565
    %6540 = vmatprep.subr.bf16.mxu0 0
    %6541 = vmatpush1.bf16.msra.mxu0 %v4566
    %6542 = vmatprep.subr.bf16.mxu0 0
    %6543 = vmatpush1.bf16.msra.mxu0 %v4567
    %6544 = vmatprep.subr.bf16.mxu0 0
    %6545 = vmatpush1.bf16.msra.mxu0 %v4568
    %6546 = vmatprep.subr.bf16.mxu0 0
    %6547 = vmatpush1.bf16.msra.mxu0 %v4569
    %6548 = vmatprep.subr.bf16.mxu0 0
    %6549 = vmatpush1.bf16.msra.mxu0 %v4570
    %6550 = vmatprep.subr.bf16.mxu0 0
    %6551 = vmatpush1.bf16.msra.mxu0 %v4571
    %6552 = vmatprep.subr.bf16.mxu0 0
    %6553 = vmatpush1.bf16.msra.mxu0 %v4572
    %6554 = vmatprep.subr.bf16.mxu0 0
    %6555 = vmatpush1.bf16.msra.mxu0 %v4573
    %6556 = vmatprep.subr.bf16.mxu0 0
    %6557 = vmatpush1.bf16.msra.mxu0 %v4574
    %6558 = vmatprep.subr.bf16.mxu0 0
    %6559 = vmatpush1.bf16.msra.mxu0 %v4575
    %6560 = vmatprep.mubr.bf16.mxu0 %v1635
    %6561 = vmatmul.mubr.bf16.gmra.mrb[0].mxu0 %v1621
    %v6562 = vpop.f32.mrb[0].mxu0
    %v6563 = vadd.f32 %v6523, %v6562
    %v6564 = vpop.f32.mrb[0].mxu0
    %v6565 = vpop.f32.mrb[0].mxu0
    %v6566 = vpop.f32.mrb[0].mxu0
    %6567 = vdwg.mxu0
    %6568 = vmatprep.subr.bf16.mxu0 0
    %6569 = vmatpush1.bf16.msra.mxu0 %v4576
    %6570 = vmatprep.subr.bf16.mxu0 0
    %6571 = vmatpush1.bf16.msra.mxu0 %v4577
    %6572 = vmatprep.subr.bf16.mxu0 0
    %6573 = vmatpush1.bf16.msra.mxu0 %v4578
    %6574 = vmatprep.subr.bf16.mxu0 0
    %6575 = vmatpush1.bf16.msra.mxu0 %v4579
    %6576 = vmatprep.subr.bf16.mxu0 0
    %6577 = vmatpush1.bf16.msra.mxu0 %v4580
    %6578 = vmatprep.subr.bf16.mxu0 0
    %6579 = vmatpush1.bf16.msra.mxu0 %v4581
    %6580 = vmatprep.subr.bf16.mxu0 0
    %6581 = vmatpush1.bf16.msra.mxu0 %v4582
    %6582 = vmatprep.subr.bf16.mxu0 0
    %6583 = vmatpush1.bf16.msra.mxu0 %v4583
    %6584 = vmatprep.subr.bf16.mxu0 0
    %6585 = vmatpush1.bf16.msra.mxu0 %v4584
    %6586 = vmatprep.subr.bf16.mxu0 0
    %6587 = vmatpush1.bf16.msra.mxu0 %v4585
    %6588 = vmatprep.subr.bf16.mxu0 0
    %6589 = vmatpush1.bf16.msra.mxu0 %v4586
    %6590 = vmatprep.subr.bf16.mxu0 0
    %6591 = vmatpush1.bf16.msra.mxu0 %v4587
    %6592 = vmatprep.subr.bf16.mxu0 0
    %6593 = vmatpush1.bf16.msra.mxu0 %v4588
    %6594 = vmatprep.subr.bf16.mxu0 0
    %6595 = vmatpush1.bf16.msra.mxu0 %v4589
    %6596 = vmatprep.subr.bf16.mxu0 0
    %6597 = vmatpush1.bf16.msra.mxu0 %v4590
    %6598 = vmatprep.subr.bf16.mxu0 0
    %6599 = vmatpush1.bf16.msra.mxu0 %v4591
    %6600 = vmatprep.mubr.bf16.mxu0 %v1639
    %6601 = vmatmul.mubr.bf16.gmra.mrb[0].mxu0 %v1637
    %v6602 = vpop.f32.mrb[0].mxu0
    %v6603 = vadd.f32 %v6563, %v6602
    %v6604 = vpop.f32.mrb[0].mxu0
    %v6605 = vpop.f32.mrb[0].mxu0
    %v6606 = vpop.f32.mrb[0].mxu0
    %6607 = vdwg.mxu0
    %v6608 = vmax.f32 %v6603, 0.0
    %v6609 = vpack.c.bf16 %v6608, %v6608
    %v6610 = vld [vmem:[%s3] sm:$0xf]
    %v6611 = vld [vmem:[%s3 + $0x4] sm:$0xf]
    %v6612 = vld [vmem:[%s3 + $0x8] sm:$0xf]
    %v6613 = vld [vmem:[%s3 + $0xc] sm:$0xf]
    %v6614 = vld [vmem:[%s3 + $0x10] sm:$0xf]
    %v6615 = vld [vmem:[%s3 + $0x14] sm:$0xf]
    %v6616 = vld [vmem:[%s3 + $0x18] sm:$0xf]
    %v6617 = vld [vmem:[%s3 + $0x1c] sm:$0xf]
    %v6618 = vld [vmem:[%s3 + $0x20] sm:$0xf]
    %v6619 = vld [vmem:[%s3 + $0x24] sm:$0xf]
    %v6620 = vld [vmem:[%s3 + $0x28] sm:$0xf]
    %v6621 = vld [vmem:[%s3 + $0x2c] sm:$0xf]
    %v6622 = vld [vmem:[%s3 + $0x30] sm:$0xf]
    %v6623 = vld [vmem:[%s3 + $0x34] sm:$0xf]
    %v6624 = vld [vmem:[%s3 + $0x38] sm:$0xf]
    %v6625 = vld [vmem:[%s3 + $0x3c] sm:$0xf]
    %v6626 = vld [vmem:[%s4] sm:$0x1]
    %v6628 = vlaneseq
    %v6629 = vshrl.u32 %v6628, 7
    %v6630 = vsub.s32 0, %v6629
    %v6631 = vrot.slane %v6626, %v6630
    %v6649 = vunpack.c.l.b16 %v6610
    %v6650 = vunpack.c.l.b16 %v6611
    %v6651 = vunpack.c.l.b16 %v6612
    %v6652 = vunpack.c.l.b16 %v6613
    %v6653 = vunpack.c.l.b16 %v6614
    %v6654 = vunpack.c.l.b16 %v6615
    %v6655 = vunpack.c.l.b16 %v6616
    %v6656 = vunpack.c.l.b16 %v6617
    %v6657 = vunpack.c.l.b16 %v6618
    %v6658 = vunpack.c.l.b16 %v6619
    %v6659 = vunpack.c.l.b16 %v6620
    %v6660 = vunpack.c.l.b16 %v6621
    %v6661 = vunpack.c.l.b16 %v6622
    %v6662 = vunpack.c.l.b16 %v6623
    %v6663 = vunpack.c.l.b16 %v6624
    %v6664 = vunpack.c.l.b16 %v6625
    %v6665 = vpack.c.b16 %v6650, %v6649
    %v6666 = vpack.c.b16 %v6652, %v6651
    %v6667 = vpack.c.b16 %v6654, %v6653
    %v6668 = vpack.c.b16 %v6656, %v6655
    %v6669 = vpack.c.b16 %v6658, %v6657
    %v6670 = vpack.c.b16 %v6660, %v6659
    %v6671 = vpack.c.b16 %v6662, %v6661
    %v6672 = vpack.c.b16 %v6664, %v6663
    %6681 = vmatprep.subr.bf16.mxu0 0
    %6682 = vmatpush1.bf16.msra.mxu0 %v6665
    %6683 = vmatprep.subr.bf16.mxu0 0
    %6684 = vmatpush1.bf16.msra.mxu0 %v6666
    %6685 = vmatprep.subr.bf16.mxu0 0
    %6686 = vmatpush1.bf16.msra.mxu0 %v6667
    %6687 = vmatprep.subr.bf16.mxu0 0
    %6688 = vmatpush1.bf16.msra.mxu0 %v6668
    %6689 = vmatprep.subr.bf16.mxu0 0
    %6690 = vmatpush1.bf16.msra.mxu0 %v6669
    %6691 = vmatprep.subr.bf16.mxu0 0
    %6692 = vmatpush1.bf16.msra.mxu0 %v6670
    %6693 = vmatprep.subr.bf16.mxu0 0
    %6694 = vmatpush1.bf16.msra.mxu0 %v6671
    %6695 = vmatprep.subr.bf16.mxu0 0
    %6696 = vmatpush1.bf16.msra.mxu0 %v6672
    %6697 = vmatprep.subr.bf16.mxu0 0
    %6698 = vmatpush1.bf16.msra.mxu0 0
    %6699 = vmatprep.subr.bf16.mxu0 0
    %6700 = vmatpush1.bf16.msra.mxu0 0
    %6701 = vmatprep.subr.bf16.mxu0 0
    %6702 = vmatpush1.bf16.msra.mxu0 0
    %6703 = vmatprep.subr.bf16.mxu0 0
    %6704 = vmatpush1.bf16.msra.mxu0 0
    %6705 = vmatprep.subr.bf16.mxu0 0
    %6706 = vmatpush1.bf16.msra.mxu0 0
    %6707 = vmatprep.subr.bf16.mxu0 0
    %6708 = vmatpush1.bf16.msra.mxu0 0
    %6709 = vmatprep.subr.bf16.mxu0 0
    %6710 = vmatpush1.bf16.msra.mxu0 0
    %6711 = vmatprep.subr.bf16.mxu0 0
    %6712 = vmatpush1.bf16.msra.mxu0 0
    %6713 = vmatprep.mubr.bf16.mxu0 0
    %6714 = vmatmul.mubr.bf16.gmra.mrb[0].mxu0 %v6609
    %v6715 = vpop.f32.mrb[0].mxu0
    %v6716 = vadd.f32 %v6631, %v6715
    %v6717 = vpop.f32.mrb[0].mxu0
    %v6718 = vpop.f32.mrb[0].mxu0
    %v6719 = vpop.f32.mrb[0].mxu0
    %6720 = vdwg.mxu0
    %vm6721 = vcmask 74752
    %v6722 = vsel %vm6721, %v6716, -inf
    %6723 = vmax.xlane.f32.xlu0 %v6722
    %v6724 = vpop.xlane.xlu0 %6723
    %v6725 = vsub.f32 %v6716, %v6724
    %v6726 = vmul.f32 %v6725, 1.442695
    %v6727 = vpow.pop %v6726
    %v6728 = vsel %vm6721, %v6727, 0.0
    %6729 = vadd.xlane.f32.xlu0 %v6728
    %v6730 = vpop.xlane.xlu0 %6729
    %v6731 = vlog2.pop %v6730
    %v6732 = vmul.f32 %v6731, 0.6931472
    %v6733 = vsub.f32 %v6725, %v6732
    %6734 = vst.msk [vmem:[#allocation2] sm:$0x3] %vm6721, %v6733
    // Predicated region
    $region22: #{net_forward.5} parent=1 // pred_check
      _
    $region23: #{net_forward.5} parent=1 // pred_check_branch
      %6736 = sbr.rel (0) target = $region25
    $region24: #{net_forward.5} parent=1 // pred_region
      %s6738 = ssub.s32 32, 32
      %6739 = vsyncadd [#allocation3], %s6738
      %s6741 = sshll.u32 [#allocation2], 4
      %s6742 = int_to_ptr.vmem [resolvable:$true] %s6741
      %6744 = dma.vmem_to_hbm [thread:$0]  %s6742, 32, %s5, [#allocation3]
    $region25: #{net_forward.5} parent=1 // pred_fallthru
      _
    // Predicated region
    $region26: #{net_forward.5} parent=1 // pred_check
      _
    $region27: #{net_forward.5} parent=1 // pred_check_branch
      %6746 = sbr.rel (0) target = $region29
    $region28: #{net_forward.5} parent=1 // pred_region
      %6747 = dma.done [#allocation3], 32
    $region29: #{net_forward.5} parent=1 // pred_fallthru
      _
    %6748 = vsyncpa [#allocation3], 1

</llo_original>
